<compile_context>
chip_gen: v5e
topology: v5e:2x2
jax: 0.10.0
libtpu: 0.0.40
codegen_flags: <defaults>
</compile_context>

<pallas_src>
import jax
import jax.numpy as jnp
from jax import lax
from jax.experimental import pallas as pl
from jax.experimental.pallas import tpu as pltpu


# ------------------------------ sizes / padding ------------------------------ #
C1 = 30                            # conv1 real output channels
C2 = 50                            # conv2 real output channels
C_PAD = 128                        # lane-padded conv output channels
K1, K1_PAD = 5 * 5 * 3, 128        # conv1 im2col patch size (pad for lane-aligned loads)
K2, K2_PAD = 5 * 5 * C1, 768       # conv2 im2col patch size (real conv1 channels only)
KF, KF_PAD = 5 * 5 * C2, 1280      # fc1 input features (real conv2 channels only)
F1, F1_PAD = 572, 640              # fc1 output features
F4, F4_PAD = 6, 128                # fc4 output features (logits)
NEG_INF = -1e30                    # bias on padded logits -> exp underflows to 0


# ------------------------------- Pallas kernels ------------------------------ #

def _conv_tanh_pool_kernel(x_ref, w_ref, b_ref, o_ref):
    """Fused conv(im2col matmul) + bias + tanh + 2x2 max-pool for TB images.

    x_ref : (4, M, K) bf16   im2col patches, quadrant-outermost; M = TB * R
                             pooled pixels (row = b*R + hp*Wq + wq)
    w_ref : (K, 128)  bf16   packed conv weights (patch-major, channel-last)
    b_ref : (1, 128)  f32
    o_ref : (M, 128)  bf16   pooled tanh activations
    """
    w = w_ref[...]
    # tanh is monotone and the bias is per-channel uniform -> pool the
    # pre-activations (max over the 4 quadrant matmuls), then bias + tanh once.
    acc = jnp.dot(x_ref[0], w, preferred_element_type=jnp.float32)
    for q in range(1, 4):
        acc = jnp.maximum(
            acc, jnp.dot(x_ref[q], w, preferred_element_type=jnp.float32))
    o_ref[...] = jnp.tanh(acc + b_ref[...]).astype(o_ref.dtype)


def _fc_stack_kernel(x_ref, w1, b1, w2, b2, w3, b3, w4, b4, o_ref):
    """fc1+relu -> fc2+relu -> fc3+relu -> fc4 -> log_softmax, fully fused.

    All four weight matrices stay resident in VMEM; only the (TM, K) row tile
    of activations moves per grid step.  fc4 is padded 6->128 with bias -1e30
    on padded lanes so the 128-lane log_softmax ignores them (slice outside).
    """
    h = jnp.dot(x_ref[...], w1[...], preferred_element_type=jnp.float32) + b1[...]
    h = jnp.maximum(h, 0.0).astype(jnp.bfloat16)
    h = jnp.dot(h, w2[...], preferred_element_type=jnp.float32) + b2[...]
    h = jnp.maximum(h, 0.0).astype(jnp.bfloat16)
    h = jnp.dot(h, w3[...], preferred_element_type=jnp.float32) + b3[...]
    h = jnp.maximum(h, 0.0).astype(jnp.bfloat16)
    logits = jnp.dot(h, w4[...], preferred_element_type=jnp.float32) + b4[...]
    m = jnp.max(logits, axis=-1, keepdims=True)
    s = logits - m
    lse = jnp.log(jnp.sum(jnp.exp(s), axis=-1, keepdims=True))
    o_ref[...] = (s - lse).astype(o_ref.dtype)


# ------------------------------ kernel wrappers ------------------------------ #

def _pick_tb(batch, rows, max_tb):
    """Largest TB <= max_tb with TB | batch and (TB*rows) % 8 == 0 so every
    row block is sublane-aligned; otherwise fall back to one full-array block."""
    for tb in range(max_tb, 0, -1):
        if batch % tb == 0 and (tb * rows) % 8 == 0:
            return tb
    return batch


def _im2col_quadrants(x, k):
    """x: (B, H, W, C) -> (4, B*R, k*k*C) im2col patches grouped by 2x2 pool
    quadrant, quadrant-outermost so Pallas blocks are contiguous row ranges.
    Patch feature index = (dy*k + dx)*C + c, matching the packed weights."""
    B, H, W, C = x.shape
    Ho, Wo = H - k + 1, W - k + 1
    Hp, Wq = Ho // 2, Wo // 2
    K = k * k * C
    cols = jnp.concatenate(
        [x[:, dy:dy + Ho, dx:dx + Wo, :] for dy in range(k) for dx in range(k)],
        axis=-1)                                                 # (B, Ho, Wo, K)
    cols = cols.reshape(B, Hp, 2, Wq, 2, K)
    cols = cols.transpose(2, 4, 0, 1, 3, 5)                      # (2, 2, B, Hp, Wq, K)
    return cols.reshape(4, B * Hp * Wq, K)


def conv_tanh_pool(x, wmat, bias, k, max_tb):
    """x: (B, H, W, C) bf16 NHWC -> (B, Hp, Wq, 128) bf16 (valid conv, tanh, 2x2 pool)."""
    B, H, W, _ = x.shape
    Hp, Wq = (H - k + 1) // 2, (W - k + 1) // 2
    R = Hp * Wq
    Kpad, Cpad = wmat.shape

    cols = _im2col_quadrants(x, k)                               # (4, B*R, K)
    if cols.shape[-1] != Kpad:                                   # zero-pad K (exact: zero weights)
        cols = jnp.pad(cols, ((0, 0), (0, 0), (0, Kpad - cols.shape[-1])))

    TB = _pick_tb(B, R, max_tb)
    M = TB * R
    out = pl.pallas_call(
        _conv_tanh_pool_kernel,
        out_shape=jax.ShapeDtypeStruct((B * R, Cpad), jnp.bfloat16),
        grid=(B // TB,),
        in_specs=[
            pl.BlockSpec((4, M, Kpad), lambda i: (0, i, 0)),
            pl.BlockSpec((Kpad, Cpad), lambda i: (0, 0)),
            pl.BlockSpec((1, Cpad), lambda i: (0, 0)),
        ],
        out_specs=pl.BlockSpec((M, Cpad), lambda i: (i, 0)),
        compiler_params=pltpu.CompilerParams(
            dimension_semantics=("parallel",)),
    )(cols, wmat, bias)
    return out.reshape(B, Hp, Wq, Cpad)


def fc_stack(x, p, tm=128):
    """x: (B, 1280) bf16 -> (B, 128) f32 log-probs (lanes >= 6 are padding)."""
    B, K = x.shape
    TM = B if B <= tm else tm

    def full(arr):
        return pl.BlockSpec(arr.shape, lambda i: (0, 0))

    return pl.pallas_call(
        _fc_stack_kernel,
        out_shape=jax.ShapeDtypeStruct((B, F4_PAD), jnp.float32),
        grid=(pl.cdiv(B, TM),),
        in_specs=[pl.BlockSpec((TM, K), lambda i: (i, 0)),
                  full(p["fc1_w"]), full(p["fc1_b"]),
                  full(p["fc2_w"]), full(p["fc2_b"]),
                  full(p["fc3_w"]), full(p["fc3_b"]),
                  full(p["fc4_w"]), full(p["fc4_b"])],
        out_specs=pl.BlockSpec((TM, F4_PAD), lambda i: (i, 0)),
        compiler_params=pltpu.CompilerParams(
            dimension_semantics=("parallel",)),
    )(x, p["fc1_w"], p["fc1_b"], p["fc2_w"], p["fc2_b"],
      p["fc3_w"], p["fc3_b"], p["fc4_w"], p["fc4_b"])


# -------------------------------- parameters --------------------------------- #

def init_params(key):
    """Raw parameters in PyTorch layouts (Conv2d: (Cout,Cin,k,k); Linear: (out,in))."""
    def u(k, shape, fan_in):
        bound = 1.0 / float(fan_in) ** 0.5
        return jax.random.uniform(k, shape, jnp.float32, -bound, bound)

    ks = jax.random.split(key, 12)
    return {
        "w1": u(ks[0], (C1, 3, 5, 5), 3 * 5 * 5), "b1": u(ks[1], (C1,), 3 * 5 * 5),
        "w2": u(ks[2], (C2, C1, 5, 5), C1 * 5 * 5), "b2": u(ks[3], (C2,), C1 * 5 * 5),
        "fc1_w": u(ks[4], (F1, KF), KF), "fc1_b": u(ks[5], (F1,), KF),
        "fc2_w": u(ks[6], (256, F1), F1), "fc2_b": u(ks[7], (256,), F1),
        "fc3_w": u(ks[8], (128, 256), 256), "fc3_b": u(ks[9], (128,), 256),
        "fc4_w": u(ks[10], (F4, 128), 128), "fc4_b": u(ks[11], (F4,), 128),
    }


def prepare_params(raw):
    """Pack PyTorch-layout params once: patch-major channel-last conv weights,
    zero-padded K / 128-lane outputs, bf16 weights, f32 (1, N) biases."""
    p = {}

    def conv_pack(w, b, kpad, cout_pad):
        cout, cin, k, _ = w.shape
        wm = jnp.transpose(w, (2, 3, 1, 0)).reshape(k * k * cin, cout)
        wm = jnp.pad(wm, ((0, kpad - k * k * cin), (0, cout_pad - cout)))
        bm = jnp.pad(b, (0, cout_pad - cout)).reshape(1, cout_pad)
        return wm.astype(jnp.bfloat16), bm.astype(jnp.float32)

    def fc_pack(w, b, kpad, npad, pad_bias=0.0):
        n, kk = w.shape
        wm = jnp.pad(w.T, ((0, kpad - kk), (0, npad - n)))
        bm = jnp.pad(b, (0, npad - n), constant_values=pad_bias)
        return wm.astype(jnp.bfloat16), bm.reshape(1, npad).astype(jnp.float32)

    p["w1"], p["b1"] = conv_pack(raw["w1"], raw["b1"], K1_PAD, C_PAD)   # (128, 128)
    p["w2"], p["b2"] = conv_pack(raw["w2"], raw["b2"], K2_PAD, C_PAD)   # (768, 128)

    # fc1: PyTorch flattens (c, h, w); our activations flatten (h, w, c), so
    # permute the weight's K dimension to match, then pad 1250 -> 1280.
    w = raw["fc1_w"].reshape(F1, C2, 5, 5)                     # (N, C, H, W)
    w = jnp.transpose(w, (2, 3, 1, 0)).reshape(KF, F1)         # (H*W*C, N)
    p["fc1_w"] = jnp.pad(w, ((0, KF_PAD - KF), (0, F1_PAD - F1))).astype(jnp.bfloat16)
    p["fc1_b"] = jnp.pad(raw["fc1_b"], (0, F1_PAD - F1)).reshape(1, F1_PAD).astype(jnp.float32)

    p["fc2_w"], p["fc2_b"] = fc_pack(raw["fc2_w"], raw["fc2_b"], F1_PAD, 256)
    p["fc3_w"], p["fc3_b"] = fc_pack(raw["fc3_w"], raw["fc3_b"], 256, 128)
    # fc4: pad 6 logits to 128 lanes; padded bias = -1e30 so softmax ignores them.
    p["fc4_w"], p["fc4_b"] = fc_pack(raw["fc4_w"], raw["fc4_b"], 128, F4_PAD,
                                     pad_bias=NEG_INF)
    return p


# ---------------------------------- forward ---------------------------------- #

def lenet5b_forward(params, x):
    """x: (B, 3, 32, 32) f32 NCHW (PyTorch layout) -> (B, 6) f32 log-probs."""
    B = x.shape[0]
    h = jnp.transpose(x, (0, 2, 3, 1)).astype(jnp.bfloat16)            # NHWC bf16
    h = conv_tanh_pool(h, params["w1"], params["b1"], 5, max_tb=8)     # (B,14,14,128)
    # feed only the 30 real conv1 channels into conv2's im2col (no dead K)
    h = conv_tanh_pool(h[..., :C1], params["w2"], params["b2"], 5,
                       max_tb=16)                                      # (B, 5, 5,128)
    # flatten only the 50 real conv2 channels, pad 1250 -> 1280 for the FC stack
    v = h[..., :C2].reshape(B, KF)
    v = jnp.pad(v, ((0, 0), (0, KF_PAD - KF)))                         # (B, 1280)
    out = fc_stack(v, params)                                          # (B, 128) f32
    return out[:, :F4]                                                 # (B, 6)


# ------------------------ plain-JAX mirror (checking) ------------------------ #

def _ref_forward(p, x):
    """Plain-JAX mirror of the kernel computation (same packed params, same
    bf16 casts); used only to validate the Pallas kernels."""
    B = x.shape[0]
    h = jnp.transpose(x, (0, 2, 3, 1)).astype(jnp.bfloat16)

    def conv_ref(h, wmat, bias, k):
        _, H, W, _ = h.shape
        Ho, Wo = H - k + 1, W - k + 1
        cols = jnp.concatenate(
            [h[:, dy:dy + Ho, dx:dx + Wo, :] for dy in range(k) for dx in range(k)],
            axis=-1)
        kpad = wmat.shape[0]
        if cols.shape[-1] != kpad:
            cols = jnp.pad(cols, ((0, 0), (0, 0), (0, 0), (0, kpad - cols.shape[-1])))
        y = lax.dot_general(cols, wmat, (((3,), (0,)), ((), ())),
                            preferred_element_type=jnp.float32)
        y = jnp.tanh(y + bias)
        y = y.reshape(B, Ho // 2, 2, Wo // 2, 2, y.shape[-1]).max(axis=(2, 4))
        return y.astype(jnp.bfloat16)

    h = conv_ref(h, p["w1"], p["b1"], 5)
    h = conv_ref(h[..., :C1], p["w2"], p["b2"], 5)
    v = h[..., :C2].reshape(B, KF)
    v = jnp.pad(v, ((0, 0), (0, KF_PAD - KF)))

    def dense(a, w, b):
        return lax.dot_general(a, w, (((1,), (0,)), ((), ())),
                               preferred_element_type=jnp.float32) + b

    v = jnp.maximum(dense(v, p["fc1_w"], p["fc1_b"]), 0.0).astype(jnp.bfloat16)
    v = jnp.maximum(dense(v, p["fc2_w"], p["fc2_b"]), 0.0).astype(jnp.bfloat16)
    v = jnp.maximum(dense(v, p["fc3_w"], p["fc3_b"]), 0.0).astype(jnp.bfloat16)
    logits = dense(v, p["fc4_w"], p["fc4_b"])
    return jax.nn.log_softmax(logits, axis=-1)[:, :F4]


if __name__ == "__main__":
    key = jax.random.PRNGKey(0)
    pkey, xkey = jax.random.split(key)
    params = prepare_params(init_params(pkey))

    # 32x32 spatial is required by the 50*5*5 flatten in the module.
    x = jax.random.normal(xkey, (2, 3, 32, 32), dtype=jnp.float32)

    out = jax.block_until_ready(jax.jit(lenet5b_forward)(params, x))

    assert out.shape == (2, F4), out.shape
    assert bool(jnp.all(jnp.isfinite(out)))
    # rows of log_softmax must exponentiate-sum to ~1
    assert jnp.allclose(jnp.exp(out).sum(axis=1), 1.0, atol=1e-4)
    # match a plain-JAX mirror of the same (packed, bf16-input) computation
    ref = _ref_forward(params, x)
    assert jnp.allclose(out, ref, atol=3e-2), float(jnp.max(jnp.abs(out - ref)))
    print("KERNEL_OK")
</pallas_src>

<mosaic_0001>
module attributes {stable_mosaic.version = 11 : i64} {
  func.func @_conv_tanh_pool_kernel(%arg0: i32, %arg1: memref<4x392x128xbf16, #tpu.memory_space<vmem>>, %arg2: memref<128x128xbf16, #tpu.memory_space<vmem>>, %arg3: memref<1x128xf32, #tpu.memory_space<vmem>>, %arg4: memref<392x128xbf16, #tpu.memory_space<vmem>>) attributes {dimension_semantics = [#tpu.dimension_semantics<parallel>], iteration_bounds = array<i64: 1>, scalar_prefetch = 0 : i64, scratch_operands = 0 : i64, tpu.core_type = #tpu.core_type<tc>, window_params = [{transform_indices = @transform_0, window_bounds = array<i64: 4, 392, 128>}, {pipeline_mode = #tpu.pipeline_mode<synchronous>, transform_indices = @transform_1, window_bounds = array<i64: 128, 128>}, {pipeline_mode = #tpu.pipeline_mode<synchronous>, transform_indices = @transform_2, window_bounds = array<i64: 1, 128>}, {transform_indices = @transform_3, window_bounds = array<i64: 392, 128>}]} {
    %c0 = arith.constant 0 : index
    %c0_0 = arith.constant 0 : index
    %0 = vector.load %arg2[%c0, %c0_0] : memref<128x128xbf16, #tpu.memory_space<vmem>>, vector<128x128xbf16>
    %c0_1 = arith.constant 0 : index
    %c0_2 = arith.constant 0 : index
    %c0_3 = arith.constant 0 : index
    %1 = vector.load %arg1[%c0_1, %c0_2, %c0_3] : memref<4x392x128xbf16, #tpu.memory_space<vmem>>, vector<1x392x128xbf16>
    %2 = vector.shape_cast %1 : vector<1x392x128xbf16> to vector<392x128xbf16>
    %cst = arith.constant dense<0.000000e+00> : vector<392x128xf32>
    %3 = tpu.matmul %2, %0, %cst {dimension_numbers = #tpu.dot_dimension_numbers<[1], [0], [0], [1], [0, 0, 1, 1], [], []>} : vector<392x128xbf16>, vector<128x128xbf16>, vector<392x128xf32> -> vector<392x128xf32>
    %c1 = arith.constant 1 : index
    %c0_4 = arith.constant 0 : index
    %c0_5 = arith.constant 0 : index
    %4 = vector.load %arg1[%c1, %c0_4, %c0_5] : memref<4x392x128xbf16, #tpu.memory_space<vmem>>, vector<1x392x128xbf16>
    %5 = vector.shape_cast %4 : vector<1x392x128xbf16> to vector<392x128xbf16>
    %cst_6 = arith.constant dense<0.000000e+00> : vector<392x128xf32>
    %6 = tpu.matmul %5, %0, %cst_6 {dimension_numbers = #tpu.dot_dimension_numbers<[1], [0], [0], [1], [0, 0, 1, 1], [], []>} : vector<392x128xbf16>, vector<128x128xbf16>, vector<392x128xf32> -> vector<392x128xf32>
    %7 = arith.maximumf %3, %6 : vector<392x128xf32>
    %c2 = arith.constant 2 : index
    %c0_7 = arith.constant 0 : index
    %c0_8 = arith.constant 0 : index
    %8 = vector.load %arg1[%c2, %c0_7, %c0_8] : memref<4x392x128xbf16, #tpu.memory_space<vmem>>, vector<1x392x128xbf16>
    %9 = vector.shape_cast %8 : vector<1x392x128xbf16> to vector<392x128xbf16>
    %cst_9 = arith.constant dense<0.000000e+00> : vector<392x128xf32>
    %10 = tpu.matmul %9, %0, %cst_9 {dimension_numbers = #tpu.dot_dimension_numbers<[1], [0], [0], [1], [0, 0, 1, 1], [], []>} : vector<392x128xbf16>, vector<128x128xbf16>, vector<392x128xf32> -> vector<392x128xf32>
    %11 = arith.maximumf %7, %10 : vector<392x128xf32>
    %c3 = arith.constant 3 : index
    %c0_10 = arith.constant 0 : index
    %c0_11 = arith.constant 0 : index
    %12 = vector.load %arg1[%c3, %c0_10, %c0_11] : memref<4x392x128xbf16, #tpu.memory_space<vmem>>, vector<1x392x128xbf16>
    %13 = vector.shape_cast %12 : vector<1x392x128xbf16> to vector<392x128xbf16>
    %cst_12 = arith.constant dense<0.000000e+00> : vector<392x128xf32>
    %14 = tpu.matmul %13, %0, %cst_12 {dimension_numbers = #tpu.dot_dimension_numbers<[1], [0], [0], [1], [0, 0, 1, 1], [], []>} : vector<392x128xbf16>, vector<128x128xbf16>, vector<392x128xf32> -> vector<392x128xf32>
    %15 = arith.maximumf %11, %14 : vector<392x128xf32>
    %c0_13 = arith.constant 0 : index
    %c0_14 = arith.constant 0 : index
    %16 = vector.load %arg3[%c0_13, %c0_14] : memref<1x128xf32, #tpu.memory_space<vmem>>, vector<1x128xf32>
    %17 = vector.broadcast %16 : vector<1x128xf32> to vector<392x128xf32>
    %18 = arith.addf %15, %17 : vector<392x128xf32>
    %19 = math.tanh %18 : vector<392x128xf32>
    %20 = arith.truncf %19 : vector<392x128xf32> to vector<392x128xbf16>
    %c0_15 = arith.constant 0 : index
    %c0_16 = arith.constant 0 : index
    %21 = vector.load %arg4[%c0_15, %c0_16] : memref<392x128xbf16, #tpu.memory_space<vmem>>, vector<392x128xbf16>
    tpu.vector_store %arg4[%c0_15, %c0_16], %20 {strides = array<i32>} : memref<392x128xbf16, #tpu.memory_space<vmem>>, vector<392x128xbf16>,
    return
  }
  func.func @transform_0(%arg0: i32) -> (i32, i32, i32) {
    %c0_i32 = arith.constant 0 : i32
    %c0_i32_0 = arith.constant 0 : i32
    %c0_i32_1 = arith.constant 0 : i32
    return %c0_i32, %arg0, %c0_i32_0 : i32, i32, i32
  }
  func.func @transform_1(%arg0: i32) -> (i32, i32) {
    %c0_i32 = arith.constant 0 : i32
    %c0_i32_0 = arith.constant 0 : i32
    %c0_i32_1 = arith.constant 0 : i32
    return %c0_i32, %c0_i32_0 : i32, i32
  }
  func.func @transform_2(%arg0: i32) -> (i32, i32) {
    %c0_i32 = arith.constant 0 : i32
    %c0_i32_0 = arith.constant 0 : i32
    %c0_i32_1 = arith.constant 0 : i32
    return %c0_i32, %c0_i32_0 : i32, i32
  }
  func.func @transform_3(%arg0: i32) -> (i32, i32) {
    %c0_i32 = arith.constant 0 : i32
    %c0_i32_0 = arith.constant 0 : i32
    return %arg0, %c0_i32 : i32, i32
  }
}

module attributes {stable_mosaic.version = 11 : i64} {
  func.func @_conv_tanh_pool_kernel(%arg0: i32, %arg1: memref<4x50x768xbf16, #tpu.memory_space<vmem>>, %arg2: memref<768x128xbf16, #tpu.memory_space<vmem>>, %arg3: memref<1x128xf32, #tpu.memory_space<vmem>>, %arg4: memref<50x128xbf16, #tpu.memory_space<vmem>>) attributes {dimension_semantics = [#tpu.dimension_semantics<parallel>], iteration_bounds = array<i64: 1>, scalar_prefetch = 0 : i64, scratch_operands = 0 : i64, tpu.core_type = #tpu.core_type<tc>, window_params = [{transform_indices = @transform_0, window_bounds = array<i64: 4, 50, 768>}, {pipeline_mode = #tpu.pipeline_mode<synchronous>, transform_indices = @transform_1, window_bounds = array<i64: 768, 128>}, {pipeline_mode = #tpu.pipeline_mode<synchronous>, transform_indices = @transform_2, window_bounds = array<i64: 1, 128>}, {transform_indices = @transform_3, window_bounds = array<i64: 50, 128>}]} {
    %c0 = arith.constant 0 : index
    %c0_0 = arith.constant 0 : index
    %0 = vector.load %arg2[%c0, %c0_0] : memref<768x128xbf16, #tpu.memory_space<vmem>>, vector<768x128xbf16>
    %c0_1 = arith.constant 0 : index
    %c0_2 = arith.constant 0 : index
    %c0_3 = arith.constant 0 : index
    %1 = vector.load %arg1[%c0_1, %c0_2, %c0_3] : memref<4x50x768xbf16, #tpu.memory_space<vmem>>, vector<1x50x768xbf16>
    %2 = vector.shape_cast %1 : vector<1x50x768xbf16> to vector<50x768xbf16>
    %cst = arith.constant dense<0.000000e+00> : vector<50x128xf32>
    %3 = tpu.matmul %2, %0, %cst {dimension_numbers = #tpu.dot_dimension_numbers<[1], [0], [0], [1], [0, 0, 1, 1], [], []>} : vector<50x768xbf16>, vector<768x128xbf16>, vector<50x128xf32> -> vector<50x128xf32>
    %c1 = arith.constant 1 : index
    %c0_4 = arith.constant 0 : index
    %c0_5 = arith.constant 0 : index
    %4 = vector.load %arg1[%c1, %c0_4, %c0_5] : memref<4x50x768xbf16, #tpu.memory_space<vmem>>, vector<1x50x768xbf16>
    %5 = vector.shape_cast %4 : vector<1x50x768xbf16> to vector<50x768xbf16>
    %cst_6 = arith.constant dense<0.000000e+00> : vector<50x128xf32>
    %6 = tpu.matmul %5, %0, %cst_6 {dimension_numbers = #tpu.dot_dimension_numbers<[1], [0], [0], [1], [0, 0, 1, 1], [], []>} : vector<50x768xbf16>, vector<768x128xbf16>, vector<50x128xf32> -> vector<50x128xf32>
    %7 = arith.maximumf %3, %6 : vector<50x128xf32>
    %c2 = arith.constant 2 : index
    %c0_7 = arith.constant 0 : index
    %c0_8 = arith.constant 0 : index
    %8 = vector.load %arg1[%c2, %c0_7, %c0_8] : memref<4x50x768xbf16, #tpu.memory_space<vmem>>, vector<1x50x768xbf16>
    %9 = vector.shape_cast %8 : vector<1x50x768xbf16> to vector<50x768xbf16>
    %cst_9 = arith.constant dense<0.000000e+00> : vector<50x128xf32>
    %10 = tpu.matmul %9, %0, %cst_9 {dimension_numbers = #tpu.dot_dimension_numbers<[1], [0], [0], [1], [0, 0, 1, 1], [], []>} : vector<50x768xbf16>, vector<768x128xbf16>, vector<50x128xf32> -> vector<50x128xf32>
    %11 = arith.maximumf %7, %10 : vector<50x128xf32>
    %c3 = arith.constant 3 : index
    %c0_10 = arith.constant 0 : index
    %c0_11 = arith.constant 0 : index
    %12 = vector.load %arg1[%c3, %c0_10, %c0_11] : memref<4x50x768xbf16, #tpu.memory_space<vmem>>, vector<1x50x768xbf16>
    %13 = vector.shape_cast %12 : vector<1x50x768xbf16> to vector<50x768xbf16>
    %cst_12 = arith.constant dense<0.000000e+00> : vector<50x128xf32>
    %14 = tpu.matmul %13, %0, %cst_12 {dimension_numbers = #tpu.dot_dimension_numbers<[1], [0], [0], [1], [0, 0, 1, 1], [], []>} : vector<50x768xbf16>, vector<768x128xbf16>, vector<50x128xf32> -> vector<50x128xf32>
    %15 = arith.maximumf %11, %14 : vector<50x128xf32>
    %c0_13 = arith.constant 0 : index
    %c0_14 = arith.constant 0 : index
    %16 = vector.load %arg3[%c0_13, %c0_14] : memref<1x128xf32, #tpu.memory_space<vmem>>, vector<1x128xf32>
    %17 = vector.broadcast %16 : vector<1x128xf32> to vector<50x128xf32>
    %18 = arith.addf %15, %17 : vector<50x128xf32>
    %19 = math.tanh %18 : vector<50x128xf32>
    %20 = arith.truncf %19 : vector<50x128xf32> to vector<50x128xbf16>
    %c0_15 = arith.constant 0 : index
    %c0_16 = arith.constant 0 : index
    %21 = vector.load %arg4[%c0_15, %c0_16] : memref<50x128xbf16, #tpu.memory_space<vmem>>, vector<50x128xbf16>
    tpu.vector_store %arg4[%c0_15, %c0_16], %20 {strides = array<i32>} : memref<50x128xbf16, #tpu.memory_space<vmem>>, vector<50x128xbf16>,
    return
  }
  func.func @transform_0(%arg0: i32) -> (i32, i32, i32) {
    %c0_i32 = arith.constant 0 : i32
    %c0_i32_0 = arith.constant 0 : i32
    %c0_i32_1 = arith.constant 0 : i32
    return %c0_i32, %arg0, %c0_i32_0 : i32, i32, i32
  }
  func.func @transform_1(%arg0: i32) -> (i32, i32) {
    %c0_i32 = arith.constant 0 : i32
    %c0_i32_0 = arith.constant 0 : i32
    %c0_i32_1 = arith.constant 0 : i32
    return %c0_i32, %c0_i32_0 : i32, i32
  }
  func.func @transform_2(%arg0: i32) -> (i32, i32) {
    %c0_i32 = arith.constant 0 : i32
    %c0_i32_0 = arith.constant 0 : i32
    %c0_i32_1 = arith.constant 0 : i32
    return %c0_i32, %c0_i32_0 : i32, i32
  }
  func.func @transform_3(%arg0: i32) -> (i32, i32) {
    %c0_i32 = arith.constant 0 : i32
    %c0_i32_0 = arith.constant 0 : i32
    return %arg0, %c0_i32 : i32, i32
  }
}

module attributes {stable_mosaic.version = 11 : i64} {
  func.func @_fc_stack_kernel(%arg0: i32, %arg1: memref<2x1280xbf16, #tpu.memory_space<vmem>>, %arg2: memref<1280x640xbf16, #tpu.memory_space<vmem>>, %arg3: memref<1x640xf32, #tpu.memory_space<vmem>>, %arg4: memref<640x256xbf16, #tpu.memory_space<vmem>>, %arg5: memref<1x256xf32, #tpu.memory_space<vmem>>, %arg6: memref<256x128xbf16, #tpu.memory_space<vmem>>, %arg7: memref<1x128xf32, #tpu.memory_space<vmem>>, %arg8: memref<128x128xbf16, #tpu.memory_space<vmem>>, %arg9: memref<1x128xf32, #tpu.memory_space<vmem>>, %arg10: memref<2x128xf32, #tpu.memory_space<vmem>>) attributes {dimension_semantics = [#tpu.dimension_semantics<parallel>], iteration_bounds = array<i64: 1>, scalar_prefetch = 0 : i64, scratch_operands = 0 : i64, tpu.core_type = #tpu.core_type<tc>, window_params = [{transform_indices = @transform_0, window_bounds = array<i64: 2, 1280>}, {pipeline_mode = #tpu.pipeline_mode<synchronous>, transform_indices = @transform_1, window_bounds = array<i64: 1280, 640>}, {pipeline_mode = #tpu.pipeline_mode<synchronous>, transform_indices = @transform_2, window_bounds = array<i64: 1, 640>}, {pipeline_mode = #tpu.pipeline_mode<synchronous>, transform_indices = @transform_3, window_bounds = array<i64: 640, 256>}, {pipeline_mode = #tpu.pipeline_mode<synchronous>, transform_indices = @transform_4, window_bounds = array<i64: 1, 256>}, {pipeline_mode = #tpu.pipeline_mode<synchronous>, transform_indices = @transform_5, window_bounds = array<i64: 256, 128>}, {pipeline_mode = #tpu.pipeline_mode<synchronous>, transform_indices = @transform_6, window_bounds = array<i64: 1, 128>}, {pipeline_mode = #tpu.pipeline_mode<synchronous>, transform_indices = @transform_7, window_bounds = array<i64: 128, 128>}, {pipeline_mode = #tpu.pipeline_mode<synchronous>, transform_indices = @transform_8, window_bounds = array<i64: 1, 128>}, {transform_indices = @transform_9, window_bounds = array<i64: 2, 128>}]} {
    %c0 = arith.constant 0 : index
    %c0_0 = arith.constant 0 : index
    %0 = vector.load %arg1[%c0, %c0_0] : memref<2x1280xbf16, #tpu.memory_space<vmem>>, vector<2x1280xbf16>
    %c0_1 = arith.constant 0 : index
    %c0_2 = arith.constant 0 : index
    %1 = vector.load %arg2[%c0_1, %c0_2] : memref<1280x640xbf16, #tpu.memory_space<vmem>>, vector<1280x640xbf16>
    %cst = arith.constant dense<0.000000e+00> : vector<2x640xf32>
    %2 = tpu.matmul %0, %1, %cst {dimension_numbers = #tpu.dot_dimension_numbers<[1], [0], [0], [1], [0, 0, 1, 1], [], []>} : vector<2x1280xbf16>, vector<1280x640xbf16>, vector<2x640xf32> -> vector<2x640xf32>
    %c0_3 = arith.constant 0 : index
    %c0_4 = arith.constant 0 : index
    %3 = vector.load %arg3[%c0_3, %c0_4] : memref<1x640xf32, #tpu.memory_space<vmem>>, vector<1x640xf32>
    %4 = vector.broadcast %3 : vector<1x640xf32> to vector<2x640xf32>
    %5 = arith.addf %2, %4 : vector<2x640xf32>
    %cst_5 = arith.constant 0.000000e+00 : f32
    %6 = vector.broadcast %cst_5 : f32 to vector<2x640xf32>
    %7 = arith.maximumf %5, %6 : vector<2x640xf32>
    %8 = arith.truncf %7 : vector<2x640xf32> to vector<2x640xbf16>
    %c0_6 = arith.constant 0 : index
    %c0_7 = arith.constant 0 : index
    %9 = vector.load %arg4[%c0_6, %c0_7] : memref<640x256xbf16, #tpu.memory_space<vmem>>, vector<640x256xbf16>
    %cst_8 = arith.constant dense<0.000000e+00> : vector<2x256xf32>
    %10 = tpu.matmul %8, %9, %cst_8 {dimension_numbers = #tpu.dot_dimension_numbers<[1], [0], [0], [1], [0, 0, 1, 1], [], []>} : vector<2x640xbf16>, vector<640x256xbf16>, vector<2x256xf32> -> vector<2x256xf32>
    %c0_9 = arith.constant 0 : index
    %c0_10 = arith.constant 0 : index
    %11 = vector.load %arg5[%c0_9, %c0_10] : memref<1x256xf32, #tpu.memory_space<vmem>>, vector<1x256xf32>
    %12 = vector.broadcast %11 : vector<1x256xf32> to vector<2x256xf32>
    %13 = arith.addf %10, %12 : vector<2x256xf32>
    %cst_11 = arith.constant 0.000000e+00 : f32
    %14 = vector.broadcast %cst_11 : f32 to vector<2x256xf32>
    %15 = arith.maximumf %13, %14 : vector<2x256xf32>
    %16 = arith.truncf %15 : vector<2x256xf32> to vector<2x256xbf16>
    %c0_12 = arith.constant 0 : index
    %c0_13 = arith.constant 0 : index
    %17 = vector.load %arg6[%c0_12, %c0_13] : memref<256x128xbf16, #tpu.memory_space<vmem>>, vector<256x128xbf16>
    %cst_14 = arith.constant dense<0.000000e+00> : vector<2x128xf32>
    %18 = tpu.matmul %16, %17, %cst_14 {dimension_numbers = #tpu.dot_dimension_numbers<[1], [0], [0], [1], [0, 0, 1, 1], [], []>} : vector<2x256xbf16>, vector<256x128xbf16>, vector<2x128xf32> -> vector<2x128xf32>
    %c0_15 = arith.constant 0 : index
    %c0_16 = arith.constant 0 : index
    %19 = vector.load %arg7[%c0_15, %c0_16] : memref<1x128xf32, #tpu.memory_space<vmem>>, vector<1x128xf32>
    %20 = vector.broadcast %19 : vector<1x128xf32> to vector<2x128xf32>
    %21 = arith.addf %18, %20 : vector<2x128xf32>
    %cst_17 = arith.constant 0.000000e+00 : f32
    %22 = vector.broadcast %cst_17 : f32 to vector<2x128xf32>
    %23 = arith.maximumf %21, %22 : vector<2x128xf32>
    %24 = arith.truncf %23 : vector<2x128xf32> to vector<2x128xbf16>
    %c0_18 = arith.constant 0 : index
    %c0_19 = arith.constant 0 : index
    %25 = vector.load %arg8[%c0_18, %c0_19] : memref<128x128xbf16, #tpu.memory_space<vmem>>, vector<128x128xbf16>
    %cst_20 = arith.constant dense<0.000000e+00> : vector<2x128xf32>
    %26 = tpu.matmul %24, %25, %cst_20 {dimension_numbers = #tpu.dot_dimension_numbers<[1], [0], [0], [1], [0, 0, 1, 1], [], []>} : vector<2x128xbf16>, vector<128x128xbf16>, vector<2x128xf32> -> vector<2x128xf32>
    %c0_21 = arith.constant 0 : index
    %c0_22 = arith.constant 0 : index
    %27 = vector.load %arg9[%c0_21, %c0_22] : memref<1x128xf32, #tpu.memory_space<vmem>>, vector<1x128xf32>
    %28 = vector.broadcast %27 : vector<1x128xf32> to vector<2x128xf32>
    %29 = arith.addf %26, %28 : vector<2x128xf32>
    %cst_23 = arith.constant dense<0xFF800000> : vector<2xf32>
    %30 = vector.multi_reduction <maximumf>, %29, %cst_23 [1] : vector<2x128xf32> to vector<2xf32>
    %31 = vector.shape_cast %30 : vector<2xf32> to vector<2x1xf32>
    %32 = vector.broadcast %31 : vector<2x1xf32> to vector<2x128xf32>
    %33 = arith.subf %29, %32 : vector<2x128xf32>
    %34 = math.exp %33 : vector<2x128xf32>
    %cst_24 = arith.constant dense<0.000000e+00> : vector<2xf32>
    %35 = vector.multi_reduction <add>, %34, %cst_24 [1] : vector<2x128xf32> to vector<2xf32>
    %36 = vector.shape_cast %35 : vector<2xf32> to vector<2x1xf32>
    %37 = math.log %36 : vector<2x1xf32>
    %38 = vector.broadcast %37 : vector<2x1xf32> to vector<2x128xf32>
    %39 = arith.subf %33, %38 : vector<2x128xf32>
    %c0_25 = arith.constant 0 : index
    %c0_26 = arith.constant 0 : index
    %40 = vector.load %arg10[%c0_25, %c0_26] : memref<2x128xf32, #tpu.memory_space<vmem>>, vector<2x128xf32>
    tpu.vector_store %arg10[%c0_25, %c0_26], %39 {strides = array<i32>} : memref<2x128xf32, #tpu.memory_space<vmem>>, vector<2x128xf32>,
    return
  }
  func.func @transform_0(%arg0: i32) -> (i32, i32) {
    %c0_i32 = arith.constant 0 : i32
    %c0_i32_0 = arith.constant 0 : i32
    return %arg0, %c0_i32 : i32, i32
  }
  func.func @transform_1(%arg0: i32) -> (i32, i32) {
    %c0_i32 = arith.constant 0 : i32
    %c0_i32_0 = arith.constant 0 : i32
    %c0_i32_1 = arith.constant 0 : i32
    return %c0_i32, %c0_i32_0 : i32, i32
  }
  func.func @transform_2(%arg0: i32) -> (i32, i32) {
    %c0_i32 = arith.constant 0 : i32
    %c0_i32_0 = arith.constant 0 : i32
    %c0_i32_1 = arith.constant 0 : i32
    return %c0_i32, %c0_i32_0 : i32, i32
  }
  func.func @transform_3(%arg0: i32) -> (i32, i32) {
    %c0_i32 = arith.constant 0 : i32
    %c0_i32_0 = arith.constant 0 : i32
    %c0_i32_1 = arith.constant 0 : i32
    return %c0_i32, %c0_i32_0 : i32, i32
  }
  func.func @transform_4(%arg0: i32) -> (i32, i32) {
    %c0_i32 = arith.constant 0 : i32
    %c0_i32_0 = arith.constant 0 : i32
    %c0_i32_1 = arith.constant 0 : i32
    return %c0_i32, %c0_i32_0 : i32, i32
  }
  func.func @transform_5(%arg0: i32) -> (i32, i32) {
    %c0_i32 = arith.constant 0 : i32
    %c0_i32_0 = arith.constant 0 : i32
    %c0_i32_1 = arith.constant 0 : i32
    return %c0_i32, %c0_i32_0 : i32, i32
  }
  func.func @transform_6(%arg0: i32) -> (i32, i32) {
    %c0_i32 = arith.constant 0 : i32
    %c0_i32_0 = arith.constant 0 : i32
    %c0_i32_1 = arith.constant 0 : i32
    return %c0_i32, %c0_i32_0 : i32, i32
  }
  func.func @transform_7(%arg0: i32) -> (i32, i32) {
    %c0_i32 = arith.constant 0 : i32
    %c0_i32_0 = arith.constant 0 : i32
    %c0_i32_1 = arith.constant 0 : i32
    return %c0_i32, %c0_i32_0 : i32, i32
  }
  func.func @transform_8(%arg0: i32) -> (i32, i32) {
    %c0_i32 = arith.constant 0 : i32
    %c0_i32_0 = arith.constant 0 : i32
    %c0_i32_1 = arith.constant 0 : i32
    return %c0_i32, %c0_i32_0 : i32, i32
  }
  func.func @transform_9(%arg0: i32) -> (i32, i32) {
    %c0_i32 = arith.constant 0 : i32
    %c0_i32_0 = arith.constant 0 : i32
    return %arg0, %c0_i32 : i32, i32
  }
}

</mosaic_0001>

<llo_original>
// kernel: lenet5b_forward.3
$region0: #{lenet5b_forward.3}
  #allocation0 [shape = 'u32[]', space=smem, size = 0x4, offset = 0x4, fixed_abs, tag = 'smem constant byte address 0x4 - core index']
  #allocation1 [shape = 'u32[72,128]{1,0:T(1,128)}', space=vmem, size = 0x9000, scoped, tag = 'internal scratch']
  %s0 = inlined_call_operand.vmem [shape: bf16[4,392,128], index: 0, kind: input, shape index: {}]
  %s1 = inlined_call_operand.vmem [shape: bf16[128,128], index: 1, kind: input, shape index: {}]
  %s2 = inlined_call_operand.vmem [shape: f32[1,128], index: 2, kind: input, shape index: {}]
  %s3 = inlined_call_operand.vmem [shape: bf16[392,128], index: 3, kind: output, shape index: {}]
  %s4 = sld [smem:[#allocation0]]
  $region22: #{lenet5b_forward.3} parent=0
    _
  %s6 = ssub.s32 1, %s4
  %s7 = scalar_select 0, %s6, %s4
  // Predicated region
  $region2: #{lenet5b_forward.3} parent=0 // pred_check
    _
  $region3: #{lenet5b_forward.3} parent=0 // pred_check_branch
    %9 = sbr.rel (0) target = $region5
  $region4: #{lenet5b_forward.3} parent=0 // pred_region
    _
  $region5: #{lenet5b_forward.3} parent=0 // pred_fallthru
    _
  // Predicated region
  $region6: #{lenet5b_forward.3} parent=0 // pred_check
    _
  $region7: #{lenet5b_forward.3} parent=0 // pred_check_branch
    %11 = sbr.rel (0) target = $region9
  $region8: #{lenet5b_forward.3} parent=0 // pred_region
    _
  $region9: #{lenet5b_forward.3} parent=0 // pred_fallthru
    _
  // Predicated region
  $region10: #{lenet5b_forward.3} parent=0 // pred_check
    _
  $region11: #{lenet5b_forward.3} parent=0 // pred_check_branch
    %13 = sbr.rel (0) target = $region13
  $region12: #{lenet5b_forward.3} parent=0 // pred_region
    _
  $region13: #{lenet5b_forward.3} parent=0 // pred_fallthru
    _
  %v14 = vld [vmem:[%s1] sm:$0xf]
  %v15 = vld [vmem:[%s1 + $0x4] sm:$0xf]
  %v16 = vld [vmem:[%s1 + $0x8] sm:$0xf]
  %v17 = vld [vmem:[%s1 + $0xc] sm:$0xf]
  %v18 = vld [vmem:[%s1 + $0x10] sm:$0xf]
  %v19 = vld [vmem:[%s1 + $0x14] sm:$0xf]
  %v20 = vld [vmem:[%s1 + $0x18] sm:$0xf]
  %v21 = vld [vmem:[%s1 + $0x1c] sm:$0xf]
  %v22 = vld [vmem:[%s1 + $0x20] sm:$0xf]
  %v23 = vld [vmem:[%s1 + $0x24] sm:$0xf]
  %v24 = vld [vmem:[%s1 + $0x28] sm:$0xf]
  %v25 = vld [vmem:[%s1 + $0x2c] sm:$0xf]
  %v26 = vld [vmem:[%s1 + $0x30] sm:$0xf]
  %v27 = vld [vmem:[%s1 + $0x34] sm:$0xf]
  %v28 = vld [vmem:[%s1 + $0x38] sm:$0xf]
  %v29 = vld [vmem:[%s1 + $0x3c] sm:$0xf]
  %v30 = vld [vmem:[%s0] sm:$0xf]
  %v31 = vld [vmem:[%s0 + $0x4] sm:$0xf]
  %v32 = vld [vmem:[%s0 + $0x8] sm:$0xf]
  %v33 = vld [vmem:[%s0 + $0xc] sm:$0xf]
  %v34 = vld [vmem:[%s0 + $0x10] sm:$0xf]
  %v35 = vld [vmem:[%s0 + $0x14] sm:$0xf]
  %v36 = vld [vmem:[%s0 + $0x18] sm:$0xf]
  %v37 = vld [vmem:[%s0 + $0x1c] sm:$0xf]
  %v38 = vld [vmem:[%s0 + $0x20] sm:$0xf]
  %v39 = vld [vmem:[%s0 + $0x24] sm:$0xf]
  %v40 = vld [vmem:[%s0 + $0x28] sm:$0xf]
  %v41 = vld [vmem:[%s0 + $0x2c] sm:$0xf]
  %v42 = vld [vmem:[%s0 + $0x30] sm:$0xf]
  %v43 = vld [vmem:[%s0 + $0x34] sm:$0xf]
  %v44 = vld [vmem:[%s0 + $0x38] sm:$0xf]
  %v45 = vld [vmem:[%s0 + $0x3c] sm:$0xf]
  %v46 = vld [vmem:[%s0 + $0x40] sm:$0xf]
  %v47 = vld [vmem:[%s0 + $0x44] sm:$0xf]
  %v48 = vld [vmem:[%s0 + $0x48] sm:$0xf]
  %v49 = vld [vmem:[%s0 + $0x4c] sm:$0xf]
  %v50 = vld [vmem:[%s0 + $0x50] sm:$0xf]
  %v51 = vld [vmem:[%s0 + $0x54] sm:$0xf]
  %v52 = vld [vmem:[%s0 + $0x58] sm:$0xf]
  %v53 = vld [vmem:[%s0 + $0x5c] sm:$0xf]
  %v54 = vld [vmem:[%s0 + $0x60] sm:$0xf]
  %v55 = vld [vmem:[%s0 + $0x64] sm:$0xf]
  %v56 = vld [vmem:[%s0 + $0x68] sm:$0xf]
  %v57 = vld [vmem:[%s0 + $0x6c] sm:$0xf]
  %v58 = vld [vmem:[%s0 + $0x70] sm:$0xf]
  %v59 = vld [vmem:[%s0 + $0x74] sm:$0xf]
  %v60 = vld [vmem:[%s0 + $0x78] sm:$0xf]
  %v61 = vld [vmem:[%s0 + $0x7c] sm:$0xf]
  %v62 = vld [vmem:[%s0 + $0x80] sm:$0xf]
  %v63 = vld [vmem:[%s0 + $0x84] sm:$0xf]
  %v64 = vld [vmem:[%s0 + $0x88] sm:$0xf]
  %v65 = vld [vmem:[%s0 + $0x8c] sm:$0xf]
  %v66 = vld [vmem:[%s0 + $0x90] sm:$0xf]
  %v67 = vld [vmem:[%s0 + $0x94] sm:$0xf]
  %v68 = vld [vmem:[%s0 + $0x98] sm:$0xf]
  %v69 = vld [vmem:[%s0 + $0x9c] sm:$0xf]
  %v70 = vld [vmem:[%s0 + $0xa0] sm:$0xf]
  %v71 = vld [vmem:[%s0 + $0xa4] sm:$0xf]
  %v72 = vld [vmem:[%s0 + $0xa8] sm:$0xf]
  %v73 = vld [vmem:[%s0 + $0xac] sm:$0xf]
  %v74 = vld [vmem:[%s0 + $0xb0] sm:$0xf]
  %v75 = vld [vmem:[%s0 + $0xb4] sm:$0xf]
  %v76 = vld [vmem:[%s0 + $0xb8] sm:$0xf]
  %v77 = vld [vmem:[%s0 + $0xbc] sm:$0xf]
  %v78 = vld [vmem:[%s0 + $0xc0] sm:$0xf]
  %v128 = vunpack.c.l.b16 %v30
  %v129 = vunpack.c.l.b16 %v31
  %v130 = vunpack.c.l.b16 %v32
  %v131 = vunpack.c.l.b16 %v33
  %v132 = vunpack.c.l.b16 %v34
  %v133 = vunpack.c.l.b16 %v35
  %v134 = vunpack.c.l.b16 %v36
  %v135 = vunpack.c.l.b16 %v37
  %v136 = vunpack.c.l.b16 %v38
  %v137 = vunpack.c.l.b16 %v39
  %v138 = vunpack.c.l.b16 %v40
  %v139 = vunpack.c.l.b16 %v41
  %v140 = vunpack.c.l.b16 %v42
  %v141 = vunpack.c.l.b16 %v43
  %v142 = vunpack.c.l.b16 %v44
  %v143 = vunpack.c.l.b16 %v45
  %v144 = vunpack.c.l.b16 %v46
  %v145 = vunpack.c.l.b16 %v47
  %v146 = vunpack.c.l.b16 %v48
  %v147 = vunpack.c.l.b16 %v49
  %v148 = vunpack.c.l.b16 %v50
  %v149 = vunpack.c.l.b16 %v51
  %v150 = vunpack.c.l.b16 %v52
  %v151 = vunpack.c.l.b16 %v53
  %v152 = vunpack.c.l.b16 %v54
  %v153 = vunpack.c.l.b16 %v55
  %v154 = vunpack.c.l.b16 %v56
  %v155 = vunpack.c.l.b16 %v57
  %v156 = vunpack.c.l.b16 %v58
  %v157 = vunpack.c.l.b16 %v59
  %v158 = vunpack.c.l.b16 %v60
  %v159 = vunpack.c.l.b16 %v61
  %v160 = vunpack.c.l.b16 %v62
  %v161 = vunpack.c.l.b16 %v63
  %v162 = vunpack.c.l.b16 %v64
  %v163 = vunpack.c.l.b16 %v65
  %v164 = vunpack.c.l.b16 %v66
  %v165 = vunpack.c.l.b16 %v67
  %v166 = vunpack.c.l.b16 %v68
  %v167 = vunpack.c.l.b16 %v69
  %v168 = vunpack.c.l.b16 %v70
  %v169 = vunpack.c.l.b16 %v71
  %v170 = vunpack.c.l.b16 %v72
  %v171 = vunpack.c.l.b16 %v73
  %v172 = vunpack.c.l.b16 %v74
  %v173 = vunpack.c.l.b16 %v75
  %v174 = vunpack.c.l.b16 %v76
  %v175 = vunpack.c.l.b16 %v77
  %v176 = vunpack.c.l.b16 %v78
  %v177 = vpack.c.b16 %v129, %v128
  %v178 = vpack.c.b16 %v131, %v130
  %v179 = vpack.c.b16 %v133, %v132
  %v180 = vpack.c.b16 %v135, %v134
  %v181 = vpack.c.b16 %v137, %v136
  %v182 = vpack.c.b16 %v139, %v138
  %v183 = vpack.c.b16 %v141, %v140
  %v184 = vpack.c.b16 %v143, %v142
  %v185 = vpack.c.b16 %v145, %v144
  %v186 = vpack.c.b16 %v147, %v146
  %v187 = vpack.c.b16 %v149, %v148
  %v188 = vpack.c.b16 %v151, %v150
  %v189 = vpack.c.b16 %v153, %v152
  %v190 = vpack.c.b16 %v155, %v154
  %v191 = vpack.c.b16 %v157, %v156
  %v192 = vpack.c.b16 %v159, %v158
  %v193 = vpack.c.b16 %v161, %v160
  %v194 = vpack.c.b16 %v163, %v162
  %v195 = vpack.c.b16 %v165, %v164
  %v196 = vpack.c.b16 %v167, %v166
  %v197 = vpack.c.b16 %v169, %v168
  %v198 = vpack.c.b16 %v171, %v170
  %v199 = vpack.c.b16 %v173, %v172
  %v200 = vpack.c.b16 %v175, %v174
  %v201 = vpack.c.b16 %v176, %v176
  %v243 = vunpack.c.l.b16 %v14
  %v244 = vunpack.c.l.b16 %v15
  %v245 = vunpack.c.l.b16 %v16
  %v246 = vunpack.c.l.b16 %v17
  %v247 = vunpack.c.l.b16 %v18
  %v248 = vunpack.c.l.b16 %v19
  %v249 = vunpack.c.l.b16 %v20
  %v250 = vunpack.c.l.b16 %v21
  %v251 = vunpack.c.l.b16 %v22
  %v252 = vunpack.c.l.b16 %v23
  %v253 = vunpack.c.l.b16 %v24
  %v254 = vunpack.c.l.b16 %v25
  %v255 = vunpack.c.l.b16 %v26
  %v256 = vunpack.c.l.b16 %v27
  %v257 = vunpack.c.l.b16 %v28
  %v258 = vunpack.c.l.b16 %v29
  %v259 = vpack.c.b16 %v244, %v243
  %v260 = vpack.c.b16 %v246, %v245
  %v261 = vpack.c.b16 %v248, %v247
  %v262 = vpack.c.b16 %v250, %v249
  %v263 = vpack.c.b16 %v252, %v251
  %v264 = vpack.c.b16 %v254, %v253
  %v265 = vpack.c.b16 %v256, %v255
  %v266 = vpack.c.b16 %v258, %v257
  %275 = vmatpush.bf16.msra.mxu0 %v266
  %276 = vmatpush.bf16.msra.mxu0 %v265
  %277 = vmatpush.bf16.msra.mxu0 %v264
  %278 = vmatpush.bf16.msra.mxu0 %v263
  %279 = vmatpush.bf16.msra.mxu0 %v262
  %280 = vmatpush.bf16.msra.mxu0 %v261
  %281 = vmatpush.bf16.msra.mxu0 %v260
  %282 = vmatpush.bf16.msra.mxu0 %v259
  %283 = vmatmul.bf16.gmra.mxu0 %v177
  %v284 = vpop.f32.mrf.mxu0
  %v285 = vadd.f32 0.0, %v284
  %v286 = vpop.f32.mrf.mxu0
  %v287 = vadd.f32 0.0, %v286
  %288 = vmatmul.bf16.gmra.mxu0 %v178
  %v289 = vpop.f32.mrf.mxu0
  %v290 = vadd.f32 0.0, %v289
  %v291 = vpop.f32.mrf.mxu0
  %v292 = vadd.f32 0.0, %v291
  %293 = vmatmul.bf16.gmra.mxu0 %v179
  %v294 = vpop.f32.mrf.mxu0
  %v295 = vadd.f32 0.0, %v294
  %v296 = vpop.f32.mrf.mxu0
  %v297 = vadd.f32 0.0, %v296
  %298 = vmatmul.bf16.gmra.mxu0 %v180
  %v299 = vpop.f32.mrf.mxu0
  %v300 = vadd.f32 0.0, %v299
  %v301 = vpop.f32.mrf.mxu0
  %v302 = vadd.f32 0.0, %v301
  %303 = vmatmul.bf16.gmra.mxu0 %v181
  %v304 = vpop.f32.mrf.mxu0
  %v305 = vadd.f32 0.0, %v304
  %v306 = vpop.f32.mrf.mxu0
  %v307 = vadd.f32 0.0, %v306
  %308 = vmatmul.bf16.gmra.mxu0 %v182
  %v309 = vpop.f32.mrf.mxu0
  %v310 = vadd.f32 0.0, %v309
  %v311 = vpop.f32.mrf.mxu0
  %v312 = vadd.f32 0.0, %v311
  %313 = vmatmul.bf16.gmra.mxu0 %v183
  %v314 = vpop.f32.mrf.mxu0
  %v315 = vadd.f32 0.0, %v314
  %v316 = vpop.f32.mrf.mxu0
  %v317 = vadd.f32 0.0, %v316
  %318 = vmatmul.bf16.gmra.mxu0 %v184
  %v319 = vpop.f32.mrf.mxu0
  %v320 = vadd.f32 0.0, %v319
  %v321 = vpop.f32.mrf.mxu0
  %v322 = vadd.f32 0.0, %v321
  %323 = vmatmul.bf16.gmra.mxu0 %v185
  %v324 = vpop.f32.mrf.mxu0
  %v325 = vadd.f32 0.0, %v324
  %v326 = vpop.f32.mrf.mxu0
  %v327 = vadd.f32 0.0, %v326
  %328 = vmatmul.bf16.gmra.mxu0 %v186
  %v329 = vpop.f32.mrf.mxu0
  %v330 = vadd.f32 0.0, %v329
  %v331 = vpop.f32.mrf.mxu0
  %v332 = vadd.f32 0.0, %v331
  %333 = vmatmul.bf16.gmra.mxu0 %v187
  %v334 = vpop.f32.mrf.mxu0
  %v335 = vadd.f32 0.0, %v334
  %v336 = vpop.f32.mrf.mxu0
  %v337 = vadd.f32 0.0, %v336
  %338 = vmatmul.bf16.gmra.mxu0 %v188
  %v339 = vpop.f32.mrf.mxu0
  %v340 = vadd.f32 0.0, %v339
  %v341 = vpop.f32.mrf.mxu0
  %v342 = vadd.f32 0.0, %v341
  %343 = vmatmul.bf16.gmra.mxu0 %v189
  %v344 = vpop.f32.mrf.mxu0
  %v345 = vadd.f32 0.0, %v344
  %v346 = vpop.f32.mrf.mxu0
  %v347 = vadd.f32 0.0, %v346
  %348 = vmatmul.bf16.gmra.mxu0 %v190
  %v349 = vpop.f32.mrf.mxu0
  %v350 = vadd.f32 0.0, %v349
  %v351 = vpop.f32.mrf.mxu0
  %v352 = vadd.f32 0.0, %v351
  %353 = vmatmul.bf16.gmra.mxu0 %v191
  %v354 = vpop.f32.mrf.mxu0
  %v355 = vadd.f32 0.0, %v354
  %v356 = vpop.f32.mrf.mxu0
  %v357 = vadd.f32 0.0, %v356
  %358 = vmatmul.bf16.gmra.mxu0 %v192
  %v359 = vpop.f32.mrf.mxu0
  %v360 = vadd.f32 0.0, %v359
  %v361 = vpop.f32.mrf.mxu0
  %v362 = vadd.f32 0.0, %v361
  %363 = vmatmul.bf16.gmra.mxu0 %v193
  %v364 = vpop.f32.mrf.mxu0
  %v365 = vadd.f32 0.0, %v364
  %v366 = vpop.f32.mrf.mxu0
  %v367 = vadd.f32 0.0, %v366
  %368 = vmatmul.bf16.gmra.mxu0 %v194
  %v369 = vpop.f32.mrf.mxu0
  %v370 = vadd.f32 0.0, %v369
  %v371 = vpop.f32.mrf.mxu0
  %v372 = vadd.f32 0.0, %v371
  %373 = vmatmul.bf16.gmra.mxu0 %v195
  %v374 = vpop.f32.mrf.mxu0
  %v375 = vadd.f32 0.0, %v374
  %v376 = vpop.f32.mrf.mxu0
  %v377 = vadd.f32 0.0, %v376
  %378 = vmatmul.bf16.gmra.mxu0 %v196
  %v379 = vpop.f32.mrf.mxu0
  %v380 = vadd.f32 0.0, %v379
  %v381 = vpop.f32.mrf.mxu0
  %v382 = vadd.f32 0.0, %v381
  %383 = vmatmul.bf16.gmra.mxu0 %v197
  %v384 = vpop.f32.mrf.mxu0
  %v385 = vadd.f32 0.0, %v384
  %v386 = vpop.f32.mrf.mxu0
  %v387 = vadd.f32 0.0, %v386
  %388 = vmatmul.bf16.gmra.mxu0 %v198
  %v389 = vpop.f32.mrf.mxu0
  %v390 = vadd.f32 0.0, %v389
  %v391 = vpop.f32.mrf.mxu0
  %v392 = vadd.f32 0.0, %v391
  %393 = vmatmul.bf16.gmra.mxu0 %v199
  %v394 = vpop.f32.mrf.mxu0
  %v395 = vadd.f32 0.0, %v394
  %v396 = vpop.f32.mrf.mxu0
  %v397 = vadd.f32 0.0, %v396
  %398 = vmatmul.bf16.gmra.mxu0 %v200
  %v399 = vpop.f32.mrf.mxu0
  %v400 = vadd.f32 0.0, %v399
  %v401 = vpop.f32.mrf.mxu0
  %v402 = vadd.f32 0.0, %v401
  %403 = vmatmul.bf16.gmra.mxu0 %v201
  %v404 = vpop.f32.mrf.mxu0
  %v405 = vadd.f32 0.0, %v404
  %v406 = vpop.f32.mrf.mxu0
  %407 = vdwg.mxu0
  %s408 = scalar_lea.vmem %s0, 196
  %v409 = vld [vmem:[%s408] sm:$0xf]
  %v410 = vld [vmem:[%s408 + $0x4] sm:$0xf]
  %v411 = vld [vmem:[%s408 + $0x8] sm:$0xf]
  %v412 = vld [vmem:[%s408 + $0xc] sm:$0xf]
  %v413 = vld [vmem:[%s408 + $0x10] sm:$0xf]
  %v414 = vld [vmem:[%s408 + $0x14] sm:$0xf]
  %v415 = vld [vmem:[%s408 + $0x18] sm:$0xf]
  %v416 = vld [vmem:[%s408 + $0x1c] sm:$0xf]
  %v417 = vld [vmem:[%s408 + $0x20] sm:$0xf]
  %v418 = vld [vmem:[%s408 + $0x24] sm:$0xf]
  %v419 = vld [vmem:[%s408 + $0x28] sm:$0xf]
  %v420 = vld [vmem:[%s408 + $0x2c] sm:$0xf]
  %v421 = vld [vmem:[%s408 + $0x30] sm:$0xf]
  %v422 = vld [vmem:[%s408 + $0x34] sm:$0xf]
  %v423 = vld [vmem:[%s408 + $0x38] sm:$0xf]
  %v424 = vld [vmem:[%s408 + $0x3c] sm:$0xf]
  %v425 = vld [vmem:[%s408 + $0x40] sm:$0xf]
  %v426 = vld [vmem:[%s408 + $0x44] sm:$0xf]
  %v427 = vld [vmem:[%s408 + $0x48] sm:$0xf]
  %v428 = vld [vmem:[%s408 + $0x4c] sm:$0xf]
  %v429 = vld [vmem:[%s408 + $0x50] sm:$0xf]
  %v430 = vld [vmem:[%s408 + $0x54] sm:$0xf]
  %v431 = vld [vmem:[%s408 + $0x58] sm:$0xf]
  %v432 = vld [vmem:[%s408 + $0x5c] sm:$0xf]
  %v433 = vld [vmem:[%s408 + $0x60] sm:$0xf]
  %v434 = vld [vmem:[%s408 + $0x64] sm:$0xf]
  %v435 = vld [vmem:[%s408 + $0x68] sm:$0xf]
  %v436 = vld [vmem:[%s408 + $0x6c] sm:$0xf]
  %v437 = vld [vmem:[%s408 + $0x70] sm:$0xf]
  %v438 = vld [vmem:[%s408 + $0x74] sm:$0xf]
  %v439 = vld [vmem:[%s408 + $0x78] sm:$0xf]
  %v440 = vld [vmem:[%s408 + $0x7c] sm:$0xf]
  %v441 = vld [vmem:[%s408 + $0x80] sm:$0xf]
  %v442 = vld [vmem:[%s408 + $0x84] sm:$0xf]
  %v443 = vld [vmem:[%s408 + $0x88] sm:$0xf]
  %v444 = vld [vmem:[%s408 + $0x8c] sm:$0xf]
  %v445 = vld [vmem:[%s408 + $0x90] sm:$0xf]
  %v446 = vld [vmem:[%s408 + $0x94] sm:$0xf]
  %v447 = vld [vmem:[%s408 + $0x98] sm:$0xf]
  %v448 = vld [vmem:[%s408 + $0x9c] sm:$0xf]
  %v449 = vld [vmem:[%s408 + $0xa0] sm:$0xf]
  %v450 = vld [vmem:[%s408 + $0xa4] sm:$0xf]
  %v451 = vld [vmem:[%s408 + $0xa8] sm:$0xf]
  %v452 = vld [vmem:[%s408 + $0xac] sm:$0xf]
  %v453 = vld [vmem:[%s408 + $0xb0] sm:$0xf]
  %v454 = vld [vmem:[%s408 + $0xb4] sm:$0xf]
  %v455 = vld [vmem:[%s408 + $0xb8] sm:$0xf]
  %v456 = vld [vmem:[%s408 + $0xbc] sm:$0xf]
  %v457 = vld [vmem:[%s408 + $0xc0] sm:$0xf]
  %v507 = vunpack.c.l.b16 %v409
  %v508 = vunpack.c.l.b16 %v410
  %v509 = vunpack.c.l.b16 %v411
  %v510 = vunpack.c.l.b16 %v412
  %v511 = vunpack.c.l.b16 %v413
  %v512 = vunpack.c.l.b16 %v414
  %v513 = vunpack.c.l.b16 %v415
  %v514 = vunpack.c.l.b16 %v416
  %v515 = vunpack.c.l.b16 %v417
  %v516 = vunpack.c.l.b16 %v418
  %v517 = vunpack.c.l.b16 %v419
  %v518 = vunpack.c.l.b16 %v420
  %v519 = vunpack.c.l.b16 %v421
  %v520 = vunpack.c.l.b16 %v422
  %v521 = vunpack.c.l.b16 %v423
  %v522 = vunpack.c.l.b16 %v424
  %v523 = vunpack.c.l.b16 %v425
  %v524 = vunpack.c.l.b16 %v426
  %v525 = vunpack.c.l.b16 %v427
  %v526 = vunpack.c.l.b16 %v428
  %v527 = vunpack.c.l.b16 %v429
  %v528 = vunpack.c.l.b16 %v430
  %v529 = vunpack.c.l.b16 %v431
  %v530 = vunpack.c.l.b16 %v432
  %v531 = vunpack.c.l.b16 %v433
  %v532 = vunpack.c.l.b16 %v434
  %v533 = vunpack.c.l.b16 %v435
  %v534 = vunpack.c.l.b16 %v436
  %v535 = vunpack.c.l.b16 %v437
  %v536 = vunpack.c.l.b16 %v438
  %v537 = vunpack.c.l.b16 %v439
  %v538 = vunpack.c.l.b16 %v440
  %v539 = vunpack.c.l.b16 %v441
  %v540 = vunpack.c.l.b16 %v442
  %v541 = vunpack.c.l.b16 %v443
  %v542 = vunpack.c.l.b16 %v444
  %v543 = vunpack.c.l.b16 %v445
  %v544 = vunpack.c.l.b16 %v446
  %v545 = vunpack.c.l.b16 %v447
  %v546 = vunpack.c.l.b16 %v448
  %v547 = vunpack.c.l.b16 %v449
  %v548 = vunpack.c.l.b16 %v450
  %v549 = vunpack.c.l.b16 %v451
  %v550 = vunpack.c.l.b16 %v452
  %v551 = vunpack.c.l.b16 %v453
  %v552 = vunpack.c.l.b16 %v454
  %v553 = vunpack.c.l.b16 %v455
  %v554 = vunpack.c.l.b16 %v456
  %v555 = vunpack.c.l.b16 %v457
  %v556 = vpack.c.b16 %v508, %v507
  %v557 = vpack.c.b16 %v510, %v509
  %v558 = vpack.c.b16 %v512, %v511
  %v559 = vpack.c.b16 %v514, %v513
  %v560 = vpack.c.b16 %v516, %v515
  %v561 = vpack.c.b16 %v518, %v517
  %v562 = vpack.c.b16 %v520, %v519
  %v563 = vpack.c.b16 %v522, %v521
  %v564 = vpack.c.b16 %v524, %v523
  %v565 = vpack.c.b16 %v526, %v525
  %v566 = vpack.c.b16 %v528, %v527
  %v567 = vpack.c.b16 %v530, %v529
  %v568 = vpack.c.b16 %v532, %v531
  %v569 = vpack.c.b16 %v534, %v533
  %v570 = vpack.c.b16 %v536, %v535
  %v571 = vpack.c.b16 %v538, %v537
  %v572 = vpack.c.b16 %v540, %v539
  %v573 = vpack.c.b16 %v542, %v541
  %v574 = vpack.c.b16 %v544, %v543
  %v575 = vpack.c.b16 %v546, %v545
  %v576 = vpack.c.b16 %v548, %v547
  %v577 = vpack.c.b16 %v550, %v549
  %v578 = vpack.c.b16 %v552, %v551
  %v579 = vpack.c.b16 %v554, %v553
  %v580 = vpack.c.b16 %v555, %v555
  %606 = vmatpush.bf16.msra.mxu0 %v266
  %607 = vmatpush.bf16.msra.mxu0 %v265
  %608 = vmatpush.bf16.msra.mxu0 %v264
  %609 = vmatpush.bf16.msra.mxu0 %v263
  %610 = vmatpush.bf16.msra.mxu0 %v262
  %611 = vmatpush.bf16.msra.mxu0 %v261
  %612 = vmatpush.bf16.msra.mxu0 %v260
  %613 = vmatpush.bf16.msra.mxu0 %v259
  %614 = vmatmul.bf16.gmra.mxu0 %v556
  %v615 = vpop.f32.mrf.mxu0
  %v616 = vadd.f32 0.0, %v615
  %v617 = vpop.f32.mrf.mxu0
  %v618 = vadd.f32 0.0, %v617
  %619 = vmatmul.bf16.gmra.mxu0 %v557
  %v620 = vpop.f32.mrf.mxu0
  %v621 = vadd.f32 0.0, %v620
  %v622 = vpop.f32.mrf.mxu0
  %v623 = vadd.f32 0.0, %v622
  %624 = vmatmul.bf16.gmra.mxu0 %v558
  %v625 = vpop.f32.mrf.mxu0
  %v626 = vadd.f32 0.0, %v625
  %v627 = vpop.f32.mrf.mxu0
  %v628 = vadd.f32 0.0, %v627
  %629 = vmatmul.bf16.gmra.mxu0 %v559
  %v630 = vpop.f32.mrf.mxu0
  %v631 = vadd.f32 0.0, %v630
  %v632 = vpop.f32.mrf.mxu0
  %v633 = vadd.f32 0.0, %v632
  %634 = vmatmul.bf16.gmra.mxu0 %v560
  %v635 = vpop.f32.mrf.mxu0
  %v636 = vadd.f32 0.0, %v635
  %v637 = vpop.f32.mrf.mxu0
  %v638 = vadd.f32 0.0, %v637
  %639 = vmatmul.bf16.gmra.mxu0 %v561
  %v640 = vpop.f32.mrf.mxu0
  %v641 = vadd.f32 0.0, %v640
  %v642 = vpop.f32.mrf.mxu0
  %v643 = vadd.f32 0.0, %v642
  %644 = vmatmul.bf16.gmra.mxu0 %v562
  %v645 = vpop.f32.mrf.mxu0
  %v646 = vadd.f32 0.0, %v645
  %v647 = vpop.f32.mrf.mxu0
  %v648 = vadd.f32 0.0, %v647
  %649 = vmatmul.bf16.gmra.mxu0 %v563
  %v650 = vpop.f32.mrf.mxu0
  %v651 = vadd.f32 0.0, %v650
  %v652 = vpop.f32.mrf.mxu0
  %v653 = vadd.f32 0.0, %v652
  %654 = vmatmul.bf16.gmra.mxu0 %v564
  %v655 = vpop.f32.mrf.mxu0
  %v656 = vadd.f32 0.0, %v655
  %v657 = vpop.f32.mrf.mxu0
  %v658 = vadd.f32 0.0, %v657
  %659 = vmatmul.bf16.gmra.mxu0 %v565
  %v660 = vpop.f32.mrf.mxu0
  %v661 = vadd.f32 0.0, %v660
  %v662 = vpop.f32.mrf.mxu0
  %v663 = vadd.f32 0.0, %v662
  %664 = vmatmul.bf16.gmra.mxu0 %v566
  %v665 = vpop.f32.mrf.mxu0
  %v666 = vadd.f32 0.0, %v665
  %v667 = vpop.f32.mrf.mxu0
  %v668 = vadd.f32 0.0, %v667
  %669 = vmatmul.bf16.gmra.mxu0 %v567
  %v670 = vpop.f32.mrf.mxu0
  %v671 = vadd.f32 0.0, %v670
  %v672 = vpop.f32.mrf.mxu0
  %v673 = vadd.f32 0.0, %v672
  %674 = vmatmul.bf16.gmra.mxu0 %v568
  %v675 = vpop.f32.mrf.mxu0
  %v676 = vadd.f32 0.0, %v675
  %v677 = vpop.f32.mrf.mxu0
  %v678 = vadd.f32 0.0, %v677
  %679 = vmatmul.bf16.gmra.mxu0 %v569
  %v680 = vpop.f32.mrf.mxu0
  %v681 = vadd.f32 0.0, %v680
  %v682 = vpop.f32.mrf.mxu0
  %v683 = vadd.f32 0.0, %v682
  %684 = vmatmul.bf16.gmra.mxu0 %v570
  %v685 = vpop.f32.mrf.mxu0
  %v686 = vadd.f32 0.0, %v685
  %v687 = vpop.f32.mrf.mxu0
  %v688 = vadd.f32 0.0, %v687
  %689 = vmatmul.bf16.gmra.mxu0 %v571
  %v690 = vpop.f32.mrf.mxu0
  %v691 = vadd.f32 0.0, %v690
  %v692 = vpop.f32.mrf.mxu0
  %v693 = vadd.f32 0.0, %v692
  %694 = vmatmul.bf16.gmra.mxu0 %v572
  %v695 = vpop.f32.mrf.mxu0
  %v696 = vadd.f32 0.0, %v695
  %v697 = vpop.f32.mrf.mxu0
  %v698 = vadd.f32 0.0, %v697
  %699 = vmatmul.bf16.gmra.mxu0 %v573
  %v700 = vpop.f32.mrf.mxu0
  %v701 = vadd.f32 0.0, %v700
  %v702 = vpop.f32.mrf.mxu0
  %v703 = vadd.f32 0.0, %v702
  %704 = vmatmul.bf16.gmra.mxu0 %v574
  %v705 = vpop.f32.mrf.mxu0
  %v706 = vadd.f32 0.0, %v705
  %v707 = vpop.f32.mrf.mxu0
  %v708 = vadd.f32 0.0, %v707
  %709 = vmatmul.bf16.gmra.mxu0 %v575
  %v710 = vpop.f32.mrf.mxu0
  %v711 = vadd.f32 0.0, %v710
  %v712 = vpop.f32.mrf.mxu0
  %v713 = vadd.f32 0.0, %v712
  %714 = vmatmul.bf16.gmra.mxu0 %v576
  %v715 = vpop.f32.mrf.mxu0
  %v716 = vadd.f32 0.0, %v715
  %v717 = vpop.f32.mrf.mxu0
  %v718 = vadd.f32 0.0, %v717
  %719 = vmatmul.bf16.gmra.mxu0 %v577
  %v720 = vpop.f32.mrf.mxu0
  %v721 = vadd.f32 0.0, %v720
  %v722 = vpop.f32.mrf.mxu0
  %v723 = vadd.f32 0.0, %v722
  %724 = vmatmul.bf16.gmra.mxu0 %v578
  %v725 = vpop.f32.mrf.mxu0
  %v726 = vadd.f32 0.0, %v725
  %v727 = vpop.f32.mrf.mxu0
  %v728 = vadd.f32 0.0, %v727
  %729 = vmatmul.bf16.gmra.mxu0 %v579
  %v730 = vpop.f32.mrf.mxu0
  %v731 = vadd.f32 0.0, %v730
  %v732 = vpop.f32.mrf.mxu0
  %v733 = vadd.f32 0.0, %v732
  %734 = vmatmul.bf16.gmra.mxu0 %v580
  %v735 = vpop.f32.mrf.mxu0
  %v736 = vadd.f32 0.0, %v735
  %v737 = vpop.f32.mrf.mxu0
  %738 = vdwg.mxu0
  %v739 = vmax.f32 %v285, %v616
  %v740 = vmax.f32 %v287, %v618
  %v741 = vmax.f32 %v290, %v621
  %v742 = vmax.f32 %v292, %v623
  %v743 = vmax.f32 %v295, %v626
  %v744 = vmax.f32 %v297, %v628
  %v745 = vmax.f32 %v300, %v631
  %v746 = vmax.f32 %v302, %v633
  %v747 = vmax.f32 %v305, %v636
  %v748 = vmax.f32 %v307, %v638
  %v749 = vmax.f32 %v310, %v641
  %v750 = vmax.f32 %v312, %v643
  %v751 = vmax.f32 %v315, %v646
  %v752 = vmax.f32 %v317, %v648
  %v753 = vmax.f32 %v320, %v651
  %v754 = vmax.f32 %v322, %v653
  %v755 = vmax.f32 %v325, %v656
  %v756 = vmax.f32 %v327, %v658
  %v757 = vmax.f32 %v330, %v661
  %v758 = vmax.f32 %v332, %v663
  %v759 = vmax.f32 %v335, %v666
  %v760 = vmax.f32 %v337, %v668
  %v761 = vmax.f32 %v340, %v671
  %v762 = vmax.f32 %v342, %v673
  %v763 = vmax.f32 %v345, %v676
  %v764 = vmax.f32 %v347, %v678
  %v765 = vmax.f32 %v350, %v681
  %v766 = vmax.f32 %v352, %v683
  %v767 = vmax.f32 %v355, %v686
  %v768 = vmax.f32 %v357, %v688
  %v769 = vmax.f32 %v360, %v691
  %v770 = vmax.f32 %v362, %v693
  %v771 = vmax.f32 %v365, %v696
  %v772 = vmax.f32 %v367, %v698
  %v773 = vmax.f32 %v370, %v701
  %v774 = vmax.f32 %v372, %v703
  %v775 = vmax.f32 %v375, %v706
  %v776 = vmax.f32 %v377, %v708
  %v777 = vmax.f32 %v380, %v711
  %v778 = vmax.f32 %v382, %v713
  %v779 = vmax.f32 %v385, %v716
  %v780 = vmax.f32 %v387, %v718
  %v781 = vmax.f32 %v390, %v721
  %v782 = vmax.f32 %v392, %v723
  %v783 = vmax.f32 %v395, %v726
  %v784 = vmax.f32 %v397, %v728
  %v785 = vmax.f32 %v400, %v731
  %v786 = vmax.f32 %v402, %v733
  %v787 = vmax.f32 %v405, %v736
  %s788 = scalar_lea.vmem %s0, 392
  %v789 = vld [vmem:[%s788] sm:$0xf]
  %v790 = vld [vmem:[%s788 + $0x4] sm:$0xf]
  %v791 = vld [vmem:[%s788 + $0x8] sm:$0xf]
  %v792 = vld [vmem:[%s788 + $0xc] sm:$0xf]
  %v793 = vld [vmem:[%s788 + $0x10] sm:$0xf]
  %v794 = vld [vmem:[%s788 + $0x14] sm:$0xf]
  %v795 = vld [vmem:[%s788 + $0x18] sm:$0xf]
  %v796 = vld [vmem:[%s788 + $0x1c] sm:$0xf]
  %v797 = vld [vmem:[%s788 + $0x20] sm:$0xf]
  %v798 = vld [vmem:[%s788 + $0x24] sm:$0xf]
  %v799 = vld [vmem:[%s788 + $0x28] sm:$0xf]
  %v800 = vld [vmem:[%s788 + $0x2c] sm:$0xf]
  %v801 = vld [vmem:[%s788 + $0x30] sm:$0xf]
  %v802 = vld [vmem:[%s788 + $0x34] sm:$0xf]
  %v803 = vld [vmem:[%s788 + $0x38] sm:$0xf]
  %v804 = vld [vmem:[%s788 + $0x3c] sm:$0xf]
  %v805 = vld [vmem:[%s788 + $0x40] sm:$0xf]
  %v806 = vld [vmem:[%s788 + $0x44] sm:$0xf]
  %v807 = vld [vmem:[%s788 + $0x48] sm:$0xf]
  %v808 = vld [vmem:[%s788 + $0x4c] sm:$0xf]
  %v809 = vld [vmem:[%s788 + $0x50] sm:$0xf]
  %v810 = vld [vmem:[%s788 + $0x54] sm:$0xf]
  %v811 = vld [vmem:[%s788 + $0x58] sm:$0xf]
  %v812 = vld [vmem:[%s788 + $0x5c] sm:$0xf]
  %v813 = vld [vmem:[%s788 + $0x60] sm:$0xf]
  %v814 = vld [vmem:[%s788 + $0x64] sm:$0xf]
  %v815 = vld [vmem:[%s788 + $0x68] sm:$0xf]
  %v816 = vld [vmem:[%s788 + $0x6c] sm:$0xf]
  %v817 = vld [vmem:[%s788 + $0x70] sm:$0xf]
  %v818 = vld [vmem:[%s788 + $0x74] sm:$0xf]
  %v819 = vld [vmem:[%s788 + $0x78] sm:$0xf]
  %v820 = vld [vmem:[%s788 + $0x7c] sm:$0xf]
  %v821 = vld [vmem:[%s788 + $0x80] sm:$0xf]
  %v822 = vld [vmem:[%s788 + $0x84] sm:$0xf]
  %v823 = vld [vmem:[%s788 + $0x88] sm:$0xf]
  %v824 = vld [vmem:[%s788 + $0x8c] sm:$0xf]
  %v825 = vld [vmem:[%s788 + $0x90] sm:$0xf]
  %v826 = vld [vmem:[%s788 + $0x94] sm:$0xf]
  %v827 = vld [vmem:[%s788 + $0x98] sm:$0xf]
  %v828 = vld [vmem:[%s788 + $0x9c] sm:$0xf]
  %v829 = vld [vmem:[%s788 + $0xa0] sm:$0xf]
  %v830 = vld [vmem:[%s788 + $0xa4] sm:$0xf]
  %v831 = vld [vmem:[%s788 + $0xa8] sm:$0xf]
  %v832 = vld [vmem:[%s788 + $0xac] sm:$0xf]
  %v833 = vld [vmem:[%s788 + $0xb0] sm:$0xf]
  %v834 = vld [vmem:[%s788 + $0xb4] sm:$0xf]
  %v835 = vld [vmem:[%s788 + $0xb8] sm:$0xf]
  %v836 = vld [vmem:[%s788 + $0xbc] sm:$0xf]
  %v837 = vld [vmem:[%s788 + $0xc0] sm:$0xf]
  %v887 = vunpack.c.l.b16 %v789
  %v888 = vunpack.c.l.b16 %v790
  %v889 = vunpack.c.l.b16 %v791
  %v890 = vunpack.c.l.b16 %v792
  %v891 = vunpack.c.l.b16 %v793
  %v892 = vunpack.c.l.b16 %v794
  %v893 = vunpack.c.l.b16 %v795
  %v894 = vunpack.c.l.b16 %v796
  %v895 = vunpack.c.l.b16 %v797
  %v896 = vunpack.c.l.b16 %v798
  %v897 = vunpack.c.l.b16 %v799
  %v898 = vunpack.c.l.b16 %v800
  %v899 = vunpack.c.l.b16 %v801
  %v900 = vunpack.c.l.b16 %v802
  %v901 = vunpack.c.l.b16 %v803
  %v902 = vunpack.c.l.b16 %v804
  %v903 = vunpack.c.l.b16 %v805
  %v904 = vunpack.c.l.b16 %v806
  %v905 = vunpack.c.l.b16 %v807
  %v906 = vunpack.c.l.b16 %v808
  %v907 = vunpack.c.l.b16 %v809
  %v908 = vunpack.c.l.b16 %v810
  %v909 = vunpack.c.l.b16 %v811
  %v910 = vunpack.c.l.b16 %v812
  %v911 = vunpack.c.l.b16 %v813
  %v912 = vunpack.c.l.b16 %v814
  %v913 = vunpack.c.l.b16 %v815
  %v914 = vunpack.c.l.b16 %v816
  %v915 = vunpack.c.l.b16 %v817
  %v916 = vunpack.c.l.b16 %v818
  %v917 = vunpack.c.l.b16 %v819
  %v918 = vunpack.c.l.b16 %v820
  %v919 = vunpack.c.l.b16 %v821
  %v920 = vunpack.c.l.b16 %v822
  %v921 = vunpack.c.l.b16 %v823
  %v922 = vunpack.c.l.b16 %v824
  %v923 = vunpack.c.l.b16 %v825
  %v924 = vunpack.c.l.b16 %v826
  %v925 = vunpack.c.l.b16 %v827
  %v926 = vunpack.c.l.b16 %v828
  %v927 = vunpack.c.l.b16 %v829
  %v928 = vunpack.c.l.b16 %v830
  %v929 = vunpack.c.l.b16 %v831
  %v930 = vunpack.c.l.b16 %v832
  %v931 = vunpack.c.l.b16 %v833
  %v932 = vunpack.c.l.b16 %v834
  %v933 = vunpack.c.l.b16 %v835
  %v934 = vunpack.c.l.b16 %v836
  %v935 = vunpack.c.l.b16 %v837
  %v936 = vpack.c.b16 %v888, %v887
  %v937 = vpack.c.b16 %v890, %v889
  %v938 = vpack.c.b16 %v892, %v891
  %v939 = vpack.c.b16 %v894, %v893
  %v940 = vpack.c.b16 %v896, %v895
  %v941 = vpack.c.b16 %v898, %v897
  %v942 = vpack.c.b16 %v900, %v899
  %v943 = vpack.c.b16 %v902, %v901
  %v944 = vpack.c.b16 %v904, %v903
  %v945 = vpack.c.b16 %v906, %v905
  %v946 = vpack.c.b16 %v908, %v907
  %v947 = vpack.c.b16 %v910, %v909
  %v948 = vpack.c.b16 %v912, %v911
  %v949 = vpack.c.b16 %v914, %v913
  %v950 = vpack.c.b16 %v916, %v915
  %v951 = vpack.c.b16 %v918, %v917
  %v952 = vpack.c.b16 %v920, %v919
  %v953 = vpack.c.b16 %v922, %v921
  %v954 = vpack.c.b16 %v924, %v923
  %v955 = vpack.c.b16 %v926, %v925
  %v956 = vpack.c.b16 %v928, %v927
  %v957 = vpack.c.b16 %v930, %v929
  %v958 = vpack.c.b16 %v932, %v931
  %v959 = vpack.c.b16 %v934, %v933
  %v960 = vpack.c.b16 %v935, %v935
  %986 = vmatpush.bf16.msra.mxu0 %v266
  %987 = vmatpush.bf16.msra.mxu0 %v265
  %988 = vmatpush.bf16.msra.mxu0 %v264
  %989 = vmatpush.bf16.msra.mxu0 %v263
  %990 = vmatpush.bf16.msra.mxu0 %v262
  %991 = vmatpush.bf16.msra.mxu0 %v261
  %992 = vmatpush.bf16.msra.mxu0 %v260
  %993 = vmatpush.bf16.msra.mxu0 %v259
  %994 = vmatmul.bf16.gmra.mxu0 %v936
  %v995 = vpop.f32.mrf.mxu0
  %v996 = vadd.f32 0.0, %v995
  %v997 = vpop.f32.mrf.mxu0
  %v998 = vadd.f32 0.0, %v997
  %999 = vmatmul.bf16.gmra.mxu0 %v937
  %v1000 = vpop.f32.mrf.mxu0
  %v1001 = vadd.f32 0.0, %v1000
  %v1002 = vpop.f32.mrf.mxu0
  %v1003 = vadd.f32 0.0, %v1002
  %1004 = vmatmul.bf16.gmra.mxu0 %v938
  %v1005 = vpop.f32.mrf.mxu0
  %v1006 = vadd.f32 0.0, %v1005
  %v1007 = vpop.f32.mrf.mxu0
  %v1008 = vadd.f32 0.0, %v1007
  %1009 = vmatmul.bf16.gmra.mxu0 %v939
  %v1010 = vpop.f32.mrf.mxu0
  %v1011 = vadd.f32 0.0, %v1010
  %v1012 = vpop.f32.mrf.mxu0
  %v1013 = vadd.f32 0.0, %v1012
  %1014 = vmatmul.bf16.gmra.mxu0 %v940
  %v1015 = vpop.f32.mrf.mxu0
  %v1016 = vadd.f32 0.0, %v1015
  %v1017 = vpop.f32.mrf.mxu0
  %v1018 = vadd.f32 0.0, %v1017
  %1019 = vmatmul.bf16.gmra.mxu0 %v941
  %v1020 = vpop.f32.mrf.mxu0
  %v1021 = vadd.f32 0.0, %v1020
  %v1022 = vpop.f32.mrf.mxu0
  %v1023 = vadd.f32 0.0, %v1022
  %1024 = vmatmul.bf16.gmra.mxu0 %v942
  %v1025 = vpop.f32.mrf.mxu0
  %v1026 = vadd.f32 0.0, %v1025
  %v1027 = vpop.f32.mrf.mxu0
  %v1028 = vadd.f32 0.0, %v1027
  %1029 = vmatmul.bf16.gmra.mxu0 %v943
  %v1030 = vpop.f32.mrf.mxu0
  %v1031 = vadd.f32 0.0, %v1030
  %v1032 = vpop.f32.mrf.mxu0
  %v1033 = vadd.f32 0.0, %v1032
  %1034 = vmatmul.bf16.gmra.mxu0 %v944
  %v1035 = vpop.f32.mrf.mxu0
  %v1036 = vadd.f32 0.0, %v1035
  %v1037 = vpop.f32.mrf.mxu0
  %v1038 = vadd.f32 0.0, %v1037
  %1039 = vmatmul.bf16.gmra.mxu0 %v945
  %v1040 = vpop.f32.mrf.mxu0
  %v1041 = vadd.f32 0.0, %v1040
  %v1042 = vpop.f32.mrf.mxu0
  %v1043 = vadd.f32 0.0, %v1042
  %1044 = vmatmul.bf16.gmra.mxu0 %v946
  %v1045 = vpop.f32.mrf.mxu0
  %v1046 = vadd.f32 0.0, %v1045
  %v1047 = vpop.f32.mrf.mxu0
  %v1048 = vadd.f32 0.0, %v1047
  %1049 = vmatmul.bf16.gmra.mxu0 %v947
  %v1050 = vpop.f32.mrf.mxu0
  %v1051 = vadd.f32 0.0, %v1050
  %v1052 = vpop.f32.mrf.mxu0
  %v1053 = vadd.f32 0.0, %v1052
  %1054 = vmatmul.bf16.gmra.mxu0 %v948
  %v1055 = vpop.f32.mrf.mxu0
  %v1056 = vadd.f32 0.0, %v1055
  %v1057 = vpop.f32.mrf.mxu0
  %v1058 = vadd.f32 0.0, %v1057
  %1059 = vmatmul.bf16.gmra.mxu0 %v949
  %v1060 = vpop.f32.mrf.mxu0
  %v1061 = vadd.f32 0.0, %v1060
  %v1062 = vpop.f32.mrf.mxu0
  %v1063 = vadd.f32 0.0, %v1062
  %1064 = vmatmul.bf16.gmra.mxu0 %v950
  %v1065 = vpop.f32.mrf.mxu0
  %v1066 = vadd.f32 0.0, %v1065
  %v1067 = vpop.f32.mrf.mxu0
  %v1068 = vadd.f32 0.0, %v1067
  %1069 = vmatmul.bf16.gmra.mxu0 %v951
  %v1070 = vpop.f32.mrf.mxu0
  %v1071 = vadd.f32 0.0, %v1070
  %v1072 = vpop.f32.mrf.mxu0
  %v1073 = vadd.f32 0.0, %v1072
  %1074 = vmatmul.bf16.gmra.mxu0 %v952
  %v1075 = vpop.f32.mrf.mxu0
  %v1076 = vadd.f32 0.0, %v1075
  %v1077 = vpop.f32.mrf.mxu0
  %v1078 = vadd.f32 0.0, %v1077
  %1079 = vmatmul.bf16.gmra.mxu0 %v953
  %v1080 = vpop.f32.mrf.mxu0
  %v1081 = vadd.f32 0.0, %v1080
  %v1082 = vpop.f32.mrf.mxu0
  %v1083 = vadd.f32 0.0, %v1082
  %1084 = vmatmul.bf16.gmra.mxu0 %v954
  %v1085 = vpop.f32.mrf.mxu0
  %v1086 = vadd.f32 0.0, %v1085
  %v1087 = vpop.f32.mrf.mxu0
  %v1088 = vadd.f32 0.0, %v1087
  %1089 = vmatmul.bf16.gmra.mxu0 %v955
  %v1090 = vpop.f32.mrf.mxu0
  %v1091 = vadd.f32 0.0, %v1090
  %v1092 = vpop.f32.mrf.mxu0
  %v1093 = vadd.f32 0.0, %v1092
  %1094 = vmatmul.bf16.gmra.mxu0 %v956
  %v1095 = vpop.f32.mrf.mxu0
  %v1096 = vadd.f32 0.0, %v1095
  %v1097 = vpop.f32.mrf.mxu0
  %v1098 = vadd.f32 0.0, %v1097
  %1099 = vmatmul.bf16.gmra.mxu0 %v957
  %v1100 = vpop.f32.mrf.mxu0
  %v1101 = vadd.f32 0.0, %v1100
  %v1102 = vpop.f32.mrf.mxu0
  %v1103 = vadd.f32 0.0, %v1102
  %1104 = vmatmul.bf16.gmra.mxu0 %v958
  %v1105 = vpop.f32.mrf.mxu0
  %v1106 = vadd.f32 0.0, %v1105
  %v1107 = vpop.f32.mrf.mxu0
  %v1108 = vadd.f32 0.0, %v1107
  %1109 = vmatmul.bf16.gmra.mxu0 %v959
  %v1110 = vpop.f32.mrf.mxu0
  %v1111 = vadd.f32 0.0, %v1110
  %v1112 = vpop.f32.mrf.mxu0
  %v1113 = vadd.f32 0.0, %v1112
  %1114 = vmatmul.bf16.gmra.mxu0 %v960
  %v1115 = vpop.f32.mrf.mxu0
  %v1116 = vadd.f32 0.0, %v1115
  %v1117 = vpop.f32.mrf.mxu0
  %1118 = vdwg.mxu0
  %v1119 = vmax.f32 %v739, %v996
  %v1120 = vmax.f32 %v740, %v998
  %v1121 = vmax.f32 %v741, %v1001
  %v1122 = vmax.f32 %v742, %v1003
  %v1123 = vmax.f32 %v743, %v1006
  %v1124 = vmax.f32 %v744, %v1008
  %v1125 = vmax.f32 %v745, %v1011
  %v1126 = vmax.f32 %v746, %v1013
  %v1127 = vmax.f32 %v747, %v1016
  %v1128 = vmax.f32 %v748, %v1018
  %v1129 = vmax.f32 %v749, %v1021
  %v1130 = vmax.f32 %v750, %v1023
  %v1131 = vmax.f32 %v751, %v1026
  %v1132 = vmax.f32 %v752, %v1028
  %v1133 = vmax.f32 %v753, %v1031
  %v1134 = vmax.f32 %v754, %v1033
  %v1135 = vmax.f32 %v755, %v1036
  %v1136 = vmax.f32 %v756, %v1038
  %v1137 = vmax.f32 %v757, %v1041
  %v1138 = vmax.f32 %v758, %v1043
  %v1139 = vmax.f32 %v759, %v1046
  %v1140 = vmax.f32 %v760, %v1048
  %v1141 = vmax.f32 %v761, %v1051
  %v1142 = vmax.f32 %v762, %v1053
  %v1143 = vmax.f32 %v763, %v1056
  %v1144 = vmax.f32 %v764, %v1058
  %v1145 = vmax.f32 %v765, %v1061
  %v1146 = vmax.f32 %v766, %v1063
  %v1147 = vmax.f32 %v767, %v1066
  %v1148 = vmax.f32 %v768, %v1068
  %v1149 = vmax.f32 %v769, %v1071
  %v1150 = vmax.f32 %v770, %v1073
  %v1151 = vmax.f32 %v771, %v1076
  %v1152 = vmax.f32 %v772, %v1078
  %v1153 = vmax.f32 %v773, %v1081
  %v1154 = vmax.f32 %v774, %v1083
  %v1155 = vmax.f32 %v775, %v1086
  %v1156 = vmax.f32 %v776, %v1088
  %v1157 = vmax.f32 %v777, %v1091
  %v1158 = vmax.f32 %v778, %v1093
  %v1159 = vmax.f32 %v779, %v1096
  %v1160 = vmax.f32 %v780, %v1098
  %v1161 = vmax.f32 %v781, %v1101
  %v1162 = vmax.f32 %v782, %v1103
  %v1163 = vmax.f32 %v783, %v1106
  %v1164 = vmax.f32 %v784, %v1108
  %v1165 = vmax.f32 %v785, %v1111
  %v1166 = vmax.f32 %v786, %v1113
  %v1167 = vmax.f32 %v787, %v1116
  %s1168 = scalar_lea.vmem %s0, 588
  %v1169 = vld [vmem:[%s1168] sm:$0xf]
  %v1170 = vld [vmem:[%s1168 + $0x4] sm:$0xf]
  %v1171 = vld [vmem:[%s1168 + $0x8] sm:$0xf]
  %v1172 = vld [vmem:[%s1168 + $0xc] sm:$0xf]
  %v1173 = vld [vmem:[%s1168 + $0x10] sm:$0xf]
  %v1174 = vld [vmem:[%s1168 + $0x14] sm:$0xf]
  %v1175 = vld [vmem:[%s1168 + $0x18] sm:$0xf]
  %v1176 = vld [vmem:[%s1168 + $0x1c] sm:$0xf]
  %v1177 = vld [vmem:[%s1168 + $0x20] sm:$0xf]
  %v1178 = vld [vmem:[%s1168 + $0x24] sm:$0xf]
  %v1179 = vld [vmem:[%s1168 + $0x28] sm:$0xf]
  %v1180 = vld [vmem:[%s1168 + $0x2c] sm:$0xf]
  %v1181 = vld [vmem:[%s1168 + $0x30] sm:$0xf]
  %v1182 = vld [vmem:[%s1168 + $0x34] sm:$0xf]
  %v1183 = vld [vmem:[%s1168 + $0x38] sm:$0xf]
  %v1184 = vld [vmem:[%s1168 + $0x3c] sm:$0xf]
  %v1185 = vld [vmem:[%s1168 + $0x40] sm:$0xf]
  %v1186 = vld [vmem:[%s1168 + $0x44] sm:$0xf]
  %v1187 = vld [vmem:[%s1168 + $0x48] sm:$0xf]
  %v1188 = vld [vmem:[%s1168 + $0x4c] sm:$0xf]
  %v1189 = vld [vmem:[%s1168 + $0x50] sm:$0xf]
  %v1190 = vld [vmem:[%s1168 + $0x54] sm:$0xf]
  %v1191 = vld [vmem:[%s1168 + $0x58] sm:$0xf]
  %v1192 = vld [vmem:[%s1168 + $0x5c] sm:$0xf]
  %v1193 = vld [vmem:[%s1168 + $0x60] sm:$0xf]
  %v1194 = vld [vmem:[%s1168 + $0x64] sm:$0xf]
  %v1195 = vld [vmem:[%s1168 + $0x68] sm:$0xf]
  %v1196 = vld [vmem:[%s1168 + $0x6c] sm:$0xf]
  %v1197 = vld [vmem:[%s1168 + $0x70] sm:$0xf]
  %v1198 = vld [vmem:[%s1168 + $0x74] sm:$0xf]
  %v1199 = vld [vmem:[%s1168 + $0x78] sm:$0xf]
  %v1200 = vld [vmem:[%s1168 + $0x7c] sm:$0xf]
  %v1201 = vld [vmem:[%s1168 + $0x80] sm:$0xf]
  %v1202 = vld [vmem:[%s1168 + $0x84] sm:$0xf]
  %v1203 = vld [vmem:[%s1168 + $0x88] sm:$0xf]
  %v1204 = vld [vmem:[%s1168 + $0x8c] sm:$0xf]
  %v1205 = vld [vmem:[%s1168 + $0x90] sm:$0xf]
  %v1206 = vld [vmem:[%s1168 + $0x94] sm:$0xf]
  %v1207 = vld [vmem:[%s1168 + $0x98] sm:$0xf]
  %v1208 = vld [vmem:[%s1168 + $0x9c] sm:$0xf]
  %v1209 = vld [vmem:[%s1168 + $0xa0] sm:$0xf]
  %v1210 = vld [vmem:[%s1168 + $0xa4] sm:$0xf]
  %v1211 = vld [vmem:[%s1168 + $0xa8] sm:$0xf]
  %v1212 = vld [vmem:[%s1168 + $0xac] sm:$0xf]
  %v1213 = vld [vmem:[%s1168 + $0xb0] sm:$0xf]
  %v1214 = vld [vmem:[%s1168 + $0xb4] sm:$0xf]
  %v1215 = vld [vmem:[%s1168 + $0xb8] sm:$0xf]
  %v1216 = vld [vmem:[%s1168 + $0xbc] sm:$0xf]
  %v1217 = vld [vmem:[%s1168 + $0xc0] sm:$0xf]
  %v1267 = vunpack.c.l.b16 %v1169
  %v1268 = vunpack.c.l.b16 %v1170
  %v1269 = vunpack.c.l.b16 %v1171
  %v1270 = vunpack.c.l.b16 %v1172
  %v1271 = vunpack.c.l.b16 %v1173
  %v1272 = vunpack.c.l.b16 %v1174
  %v1273 = vunpack.c.l.b16 %v1175
  %v1274 = vunpack.c.l.b16 %v1176
  %v1275 = vunpack.c.l.b16 %v1177
  %v1276 = vunpack.c.l.b16 %v1178
  %v1277 = vunpack.c.l.b16 %v1179
  %v1278 = vunpack.c.l.b16 %v1180
  %v1279 = vunpack.c.l.b16 %v1181
  %v1280 = vunpack.c.l.b16 %v1182
  %v1281 = vunpack.c.l.b16 %v1183
  %v1282 = vunpack.c.l.b16 %v1184
  %v1283 = vunpack.c.l.b16 %v1185
  %v1284 = vunpack.c.l.b16 %v1186
  %v1285 = vunpack.c.l.b16 %v1187
  %v1286 = vunpack.c.l.b16 %v1188
  %v1287 = vunpack.c.l.b16 %v1189
  %v1288 = vunpack.c.l.b16 %v1190
  %v1289 = vunpack.c.l.b16 %v1191
  %v1290 = vunpack.c.l.b16 %v1192
  %v1291 = vunpack.c.l.b16 %v1193
  %v1292 = vunpack.c.l.b16 %v1194
  %v1293 = vunpack.c.l.b16 %v1195
  %v1294 = vunpack.c.l.b16 %v1196
  %v1295 = vunpack.c.l.b16 %v1197
  %v1296 = vunpack.c.l.b16 %v1198
  %v1297 = vunpack.c.l.b16 %v1199
  %v1298 = vunpack.c.l.b16 %v1200
  %v1299 = vunpack.c.l.b16 %v1201
  %v1300 = vunpack.c.l.b16 %v1202
  %v1301 = vunpack.c.l.b16 %v1203
  %v1302 = vunpack.c.l.b16 %v1204
  %v1303 = vunpack.c.l.b16 %v1205
  %v1304 = vunpack.c.l.b16 %v1206
  %v1305 = vunpack.c.l.b16 %v1207
  %v1306 = vunpack.c.l.b16 %v1208
  %v1307 = vunpack.c.l.b16 %v1209
  %v1308 = vunpack.c.l.b16 %v1210
  %v1309 = vunpack.c.l.b16 %v1211
  %v1310 = vunpack.c.l.b16 %v1212
  %v1311 = vunpack.c.l.b16 %v1213
  %v1312 = vunpack.c.l.b16 %v1214
  %v1313 = vunpack.c.l.b16 %v1215
  %v1314 = vunpack.c.l.b16 %v1216
  %v1315 = vunpack.c.l.b16 %v1217
  %v1316 = vpack.c.b16 %v1268, %v1267
  %v1317 = vpack.c.b16 %v1270, %v1269
  %v1318 = vpack.c.b16 %v1272, %v1271
  %v1319 = vpack.c.b16 %v1274, %v1273
  %v1320 = vpack.c.b16 %v1276, %v1275
  %v1321 = vpack.c.b16 %v1278, %v1277
  %v1322 = vpack.c.b16 %v1280, %v1279
  %v1323 = vpack.c.b16 %v1282, %v1281
  %v1324 = vpack.c.b16 %v1284, %v1283
  %v1325 = vpack.c.b16 %v1286, %v1285
  %v1326 = vpack.c.b16 %v1288, %v1287
  %v1327 = vpack.c.b16 %v1290, %v1289
  %v1328 = vpack.c.b16 %v1292, %v1291
  %v1329 = vpack.c.b16 %v1294, %v1293
  %v1330 = vpack.c.b16 %v1296, %v1295
  %v1331 = vpack.c.b16 %v1298, %v1297
  %v1332 = vpack.c.b16 %v1300, %v1299
  %v1333 = vpack.c.b16 %v1302, %v1301
  %v1334 = vpack.c.b16 %v1304, %v1303
  %v1335 = vpack.c.b16 %v1306, %v1305
  %v1336 = vpack.c.b16 %v1308, %v1307
  %v1337 = vpack.c.b16 %v1310, %v1309
  %v1338 = vpack.c.b16 %v1312, %v1311
  %v1339 = vpack.c.b16 %v1314, %v1313
  %v1340 = vpack.c.b16 %v1315, %v1315
  %1366 = vmatpush.bf16.msra.mxu0 %v266
  %1367 = vmatpush.bf16.msra.mxu0 %v265
  %1368 = vmatpush.bf16.msra.mxu0 %v264
  %1369 = vmatpush.bf16.msra.mxu0 %v263
  %1370 = vmatpush.bf16.msra.mxu0 %v262
  %1371 = vmatpush.bf16.msra.mxu0 %v261
  %1372 = vmatpush.bf16.msra.mxu0 %v260
  %1373 = vmatpush.bf16.msra.mxu0 %v259
  %1374 = vmatmul.bf16.gmra.mxu0 %v1316
  %v1375 = vpop.f32.mrf.mxu0
  %v1376 = vadd.f32 0.0, %v1375
  %v1377 = vpop.f32.mrf.mxu0
  %v1378 = vadd.f32 0.0, %v1377
  %1379 = vmatmul.bf16.gmra.mxu0 %v1317
  %v1380 = vpop.f32.mrf.mxu0
  %v1381 = vadd.f32 0.0, %v1380
  %v1382 = vpop.f32.mrf.mxu0
  %v1383 = vadd.f32 0.0, %v1382
  %1384 = vmatmul.bf16.gmra.mxu0 %v1318
  %v1385 = vpop.f32.mrf.mxu0
  %v1386 = vadd.f32 0.0, %v1385
  %v1387 = vpop.f32.mrf.mxu0
  %v1388 = vadd.f32 0.0, %v1387
  %1389 = vmatmul.bf16.gmra.mxu0 %v1319
  %v1390 = vpop.f32.mrf.mxu0
  %v1391 = vadd.f32 0.0, %v1390
  %v1392 = vpop.f32.mrf.mxu0
  %v1393 = vadd.f32 0.0, %v1392
  %1394 = vmatmul.bf16.gmra.mxu0 %v1320
  %v1395 = vpop.f32.mrf.mxu0
  %v1396 = vadd.f32 0.0, %v1395
  %v1397 = vpop.f32.mrf.mxu0
  %v1398 = vadd.f32 0.0, %v1397
  %1399 = vmatmul.bf16.gmra.mxu0 %v1321
  %v1400 = vpop.f32.mrf.mxu0
  %v1401 = vadd.f32 0.0, %v1400
  %v1402 = vpop.f32.mrf.mxu0
  %v1403 = vadd.f32 0.0, %v1402
  %1404 = vmatmul.bf16.gmra.mxu0 %v1322
  %v1405 = vpop.f32.mrf.mxu0
  %v1406 = vadd.f32 0.0, %v1405
  %v1407 = vpop.f32.mrf.mxu0
  %v1408 = vadd.f32 0.0, %v1407
  %1409 = vmatmul.bf16.gmra.mxu0 %v1323
  %v1410 = vpop.f32.mrf.mxu0
  %v1411 = vadd.f32 0.0, %v1410
  %v1412 = vpop.f32.mrf.mxu0
  %v1413 = vadd.f32 0.0, %v1412
  %1414 = vmatmul.bf16.gmra.mxu0 %v1324
  %v1415 = vpop.f32.mrf.mxu0
  %v1416 = vadd.f32 0.0, %v1415
  %v1417 = vpop.f32.mrf.mxu0
  %v1418 = vadd.f32 0.0, %v1417
  %1419 = vmatmul.bf16.gmra.mxu0 %v1325
  %v1420 = vpop.f32.mrf.mxu0
  %v1421 = vadd.f32 0.0, %v1420
  %v1422 = vpop.f32.mrf.mxu0
  %v1423 = vadd.f32 0.0, %v1422
  %1424 = vmatmul.bf16.gmra.mxu0 %v1326
  %v1425 = vpop.f32.mrf.mxu0
  %v1426 = vadd.f32 0.0, %v1425
  %v1427 = vpop.f32.mrf.mxu0
  %v1428 = vadd.f32 0.0, %v1427
  %1429 = vmatmul.bf16.gmra.mxu0 %v1327
  %v1430 = vpop.f32.mrf.mxu0
  %v1431 = vadd.f32 0.0, %v1430
  %v1432 = vpop.f32.mrf.mxu0
  %v1433 = vadd.f32 0.0, %v1432
  %1434 = vmatmul.bf16.gmra.mxu0 %v1328
  %v1435 = vpop.f32.mrf.mxu0
  %v1436 = vadd.f32 0.0, %v1435
  %v1437 = vpop.f32.mrf.mxu0
  %v1438 = vadd.f32 0.0, %v1437
  %1439 = vmatmul.bf16.gmra.mxu0 %v1329
  %v1440 = vpop.f32.mrf.mxu0
  %v1441 = vadd.f32 0.0, %v1440
  %v1442 = vpop.f32.mrf.mxu0
  %v1443 = vadd.f32 0.0, %v1442
  %1444 = vmatmul.bf16.gmra.mxu0 %v1330
  %v1445 = vpop.f32.mrf.mxu0
  %v1446 = vadd.f32 0.0, %v1445
  %v1447 = vpop.f32.mrf.mxu0
  %v1448 = vadd.f32 0.0, %v1447
  %1449 = vmatmul.bf16.gmra.mxu0 %v1331
  %v1450 = vpop.f32.mrf.mxu0
  %v1451 = vadd.f32 0.0, %v1450
  %v1452 = vpop.f32.mrf.mxu0
  %v1453 = vadd.f32 0.0, %v1452
  %1454 = vmatmul.bf16.gmra.mxu0 %v1332
  %v1455 = vpop.f32.mrf.mxu0
  %v1456 = vadd.f32 0.0, %v1455
  %v1457 = vpop.f32.mrf.mxu0
  %v1458 = vadd.f32 0.0, %v1457
  %1459 = vmatmul.bf16.gmra.mxu0 %v1333
  %v1460 = vpop.f32.mrf.mxu0
  %v1461 = vadd.f32 0.0, %v1460
  %v1462 = vpop.f32.mrf.mxu0
  %v1463 = vadd.f32 0.0, %v1462
  %1464 = vmatmul.bf16.gmra.mxu0 %v1334
  %v1465 = vpop.f32.mrf.mxu0
  %v1466 = vadd.f32 0.0, %v1465
  %v1467 = vpop.f32.mrf.mxu0
  %v1468 = vadd.f32 0.0, %v1467
  %1469 = vmatmul.bf16.gmra.mxu0 %v1335
  %v1470 = vpop.f32.mrf.mxu0
  %v1471 = vadd.f32 0.0, %v1470
  %v1472 = vpop.f32.mrf.mxu0
  %v1473 = vadd.f32 0.0, %v1472
  %1474 = vmatmul.bf16.gmra.mxu0 %v1336
  %v1475 = vpop.f32.mrf.mxu0
  %v1476 = vadd.f32 0.0, %v1475
  %v1477 = vpop.f32.mrf.mxu0
  %v1478 = vadd.f32 0.0, %v1477
  %1479 = vmatmul.bf16.gmra.mxu0 %v1337
  %v1480 = vpop.f32.mrf.mxu0
  %v1481 = vadd.f32 0.0, %v1480
  %v1482 = vpop.f32.mrf.mxu0
  %v1483 = vadd.f32 0.0, %v1482
  %1484 = vmatmul.bf16.gmra.mxu0 %v1338
  %v1485 = vpop.f32.mrf.mxu0
  %v1486 = vadd.f32 0.0, %v1485
  %v1487 = vpop.f32.mrf.mxu0
  %v1488 = vadd.f32 0.0, %v1487
  %1489 = vmatmul.bf16.gmra.mxu0 %v1339
  %v1490 = vpop.f32.mrf.mxu0
  %v1491 = vadd.f32 0.0, %v1490
  %v1492 = vpop.f32.mrf.mxu0
  %v1493 = vadd.f32 0.0, %v1492
  %1494 = vmatmul.bf16.gmra.mxu0 %v1340
  %v1495 = vpop.f32.mrf.mxu0
  %v1496 = vadd.f32 0.0, %v1495
  %v1497 = vpop.f32.mrf.mxu0
  %1498 = vdwg.mxu0
  %v1499 = vmax.f32 %v1119, %v1376
  %v1500 = vmax.f32 %v1120, %v1378
  %v1501 = vmax.f32 %v1121, %v1381
  %v1502 = vmax.f32 %v1122, %v1383
  %v1503 = vmax.f32 %v1123, %v1386
  %v1504 = vmax.f32 %v1124, %v1388
  %v1505 = vmax.f32 %v1125, %v1391
  %v1506 = vmax.f32 %v1126, %v1393
  %v1507 = vmax.f32 %v1127, %v1396
  %v1508 = vmax.f32 %v1128, %v1398
  %v1509 = vmax.f32 %v1129, %v1401
  %v1510 = vmax.f32 %v1130, %v1403
  %v1511 = vmax.f32 %v1131, %v1406
  %v1512 = vmax.f32 %v1132, %v1408
  %v1513 = vmax.f32 %v1133, %v1411
  %v1514 = vmax.f32 %v1134, %v1413
  %v1515 = vmax.f32 %v1135, %v1416
  %v1516 = vmax.f32 %v1136, %v1418
  %v1517 = vmax.f32 %v1137, %v1421
  %v1518 = vmax.f32 %v1138, %v1423
  %v1519 = vmax.f32 %v1139, %v1426
  %v1520 = vmax.f32 %v1140, %v1428
  %v1521 = vmax.f32 %v1141, %v1431
  %v1522 = vmax.f32 %v1142, %v1433
  %v1523 = vmax.f32 %v1143, %v1436
  %v1524 = vmax.f32 %v1144, %v1438
  %v1525 = vmax.f32 %v1145, %v1441
  %v1526 = vmax.f32 %v1146, %v1443
  %v1527 = vmax.f32 %v1147, %v1446
  %v1528 = vmax.f32 %v1148, %v1448
  %v1529 = vmax.f32 %v1149, %v1451
  %v1530 = vmax.f32 %v1150, %v1453
  %v1531 = vmax.f32 %v1151, %v1456
  %v1532 = vmax.f32 %v1152, %v1458
  %v1533 = vmax.f32 %v1153, %v1461
  %v1534 = vmax.f32 %v1154, %v1463
  %v1535 = vmax.f32 %v1155, %v1466
  %v1536 = vmax.f32 %v1156, %v1468
  %v1537 = vmax.f32 %v1157, %v1471
  %v1538 = vmax.f32 %v1158, %v1473
  %v1539 = vmax.f32 %v1159, %v1476
  %v1540 = vmax.f32 %v1160, %v1478
  %v1541 = vmax.f32 %v1161, %v1481
  %v1542 = vmax.f32 %v1162, %v1483
  %v1543 = vmax.f32 %v1163, %v1486
  %v1544 = vmax.f32 %v1164, %v1488
  %v1545 = vmax.f32 %v1165, %v1491
  %v1546 = vmax.f32 %v1166, %v1493
  %v1547 = vmax.f32 %v1167, %v1496
  %v1548 = vld [vmem:[%s2] sm:$0x1]
  %v1550 = vperm.slane %v1548, 0
  %v1552 = vadd.f32 %v1499, %v1550
  %v1553 = vadd.f32 %v1500, %v1550
  %v1554 = vadd.f32 %v1501, %v1550
  %v1555 = vadd.f32 %v1502, %v1550
  %v1556 = vadd.f32 %v1503, %v1550
  %v1557 = vadd.f32 %v1504, %v1550
  %v1558 = vadd.f32 %v1505, %v1550
  %v1559 = vadd.f32 %v1506, %v1550
  %v1560 = vadd.f32 %v1507, %v1550
  %v1561 = vadd.f32 %v1508, %v1550
  %v1562 = vadd.f32 %v1509, %v1550
  %v1563 = vadd.f32 %v1510, %v1550
  %v1564 = vadd.f32 %v1511, %v1550
  %v1565 = vadd.f32 %v1512, %v1550
  %v1566 = vadd.f32 %v1513, %v1550
  %v1567 = vadd.f32 %v1514, %v1550
  %v1568 = vadd.f32 %v1515, %v1550
  %v1569 = vadd.f32 %v1516, %v1550
  %v1570 = vadd.f32 %v1517, %v1550
  %v1571 = vadd.f32 %v1518, %v1550
  %v1572 = vadd.f32 %v1519, %v1550
  %v1573 = vadd.f32 %v1520, %v1550
  %v1574 = vadd.f32 %v1521, %v1550
  %v1575 = vadd.f32 %v1522, %v1550
  %v1576 = vadd.f32 %v1523, %v1550
  %v1577 = vadd.f32 %v1524, %v1550
  %v1578 = vadd.f32 %v1525, %v1550
  %v1579 = vadd.f32 %v1526, %v1550
  %v1580 = vadd.f32 %v1527, %v1550
  %v1581 = vadd.f32 %v1528, %v1550
  %v1582 = vadd.f32 %v1529, %v1550
  %v1583 = vadd.f32 %v1530, %v1550
  %v1584 = vadd.f32 %v1531, %v1550
  %v1585 = vadd.f32 %v1532, %v1550
  %v1586 = vadd.f32 %v1533, %v1550
  %v1587 = vadd.f32 %v1534, %v1550
  %v1588 = vadd.f32 %v1535, %v1550
  %v1589 = vadd.f32 %v1536, %v1550
  %v1590 = vadd.f32 %v1537, %v1550
  %v1591 = vadd.f32 %v1538, %v1550
  %v1592 = vadd.f32 %v1539, %v1550
  %v1593 = vadd.f32 %v1540, %v1550
  %v1594 = vadd.f32 %v1541, %v1550
  %v1595 = vadd.f32 %v1542, %v1550
  %v1596 = vadd.f32 %v1543, %v1550
  %v1597 = vadd.f32 %v1544, %v1550
  %v1598 = vadd.f32 %v1545, %v1550
  %v1599 = vadd.f32 %v1546, %v1550
  %v1600 = vadd.f32 %v1547, %v1550
  %v1601 = vtanh.pop %v1552
  %v1602 = vtanh.pop %v1553
  %v1603 = vtanh.pop %v1554
  %v1604 = vtanh.pop %v1555
  %v1605 = vtanh.pop %v1556
  %v1606 = vtanh.pop %v1557
  %v1607 = vtanh.pop %v1558
  %v1608 = vtanh.pop %v1559
  %v1609 = vtanh.pop %v1560
  %v1610 = vtanh.pop %v1561
  %v1611 = vtanh.pop %v1562
  %v1612 = vtanh.pop %v1563
  %v1613 = vtanh.pop %v1564
  %v1614 = vtanh.pop %v1565
  %v1615 = vtanh.pop %v1566
  %v1616 = vtanh.pop %v1567
  %v1617 = vtanh.pop %v1568
  %v1618 = vtanh.pop %v1569
  %v1619 = vtanh.pop %v1570
  %v1620 = vtanh.pop %v1571
  %v1621 = vtanh.pop %v1572
  %v1622 = vtanh.pop %v1573
  %v1623 = vtanh.pop %v1574
  %v1624 = vtanh.pop %v1575
  %v1625 = vtanh.pop %v1576
  %v1626 = vtanh.pop %v1577
  %v1627 = vtanh.pop %v1578
  %v1628 = vtanh.pop %v1579
  %v1629 = vtanh.pop %v1580
  %v1630 = vtanh.pop %v1581
  %v1631 = vtanh.pop %v1582
  %v1632 = vtanh.pop %v1583
  %v1633 = vtanh.pop %v1584
  %v1634 = vtanh.pop %v1585
  %v1635 = vtanh.pop %v1586
  %v1636 = vtanh.pop %v1587
  %v1637 = vtanh.pop %v1588
  %v1638 = vtanh.pop %v1589
  %v1639 = vtanh.pop %v1590
  %v1640 = vtanh.pop %v1591
  %v1641 = vtanh.pop %v1592
  %v1642 = vtanh.pop %v1593
  %v1643 = vtanh.pop %v1594
  %v1644 = vtanh.pop %v1595
  %v1645 = vtanh.pop %v1596
  %v1646 = vtanh.pop %v1597
  %v1647 = vtanh.pop %v1598
  %v1648 = vtanh.pop %v1599
  %v1649 = vtanh.pop %v1600
  %v1650 = vpack.c.bf16 %v1601, %v1601
  %v1651 = vpack.c.bf16 %v1602, %v1602
  %v1652 = vpack.c.bf16 %v1603, %v1603
  %v1653 = vpack.c.bf16 %v1604, %v1604
  %v1654 = vpack.c.bf16 %v1605, %v1605
  %v1655 = vpack.c.bf16 %v1606, %v1606
  %v1656 = vpack.c.bf16 %v1607, %v1607
  %v1657 = vpack.c.bf16 %v1608, %v1608
  %v1658 = vpack.c.bf16 %v1609, %v1609
  %v1659 = vpack.c.bf16 %v1610, %v1610
  %v1660 = vpack.c.bf16 %v1611, %v1611
  %v1661 = vpack.c.bf16 %v1612, %v1612
  %v1662 = vpack.c.bf16 %v1613, %v1613
  %v1663 = vpack.c.bf16 %v1614, %v1614
  %v1664 = vpack.c.bf16 %v1615, %v1615
  %v1665 = vpack.c.bf16 %v1616, %v1616
  %v1666 = vpack.c.bf16 %v1617, %v1617
  %v1667 = vpack.c.bf16 %v1618, %v1618
  %v1668 = vpack.c.bf16 %v1619, %v1619
  %v1669 = vpack.c.bf16 %v1620, %v1620
  %v1670 = vpack.c.bf16 %v1621, %v1621
  %v1671 = vpack.c.bf16 %v1622, %v1622
  %v1672 = vpack.c.bf16 %v1623, %v1623
  %v1673 = vpack.c.bf16 %v1624, %v1624
  %v1674 = vpack.c.bf16 %v1625, %v1625
  %v1675 = vpack.c.bf16 %v1626, %v1626
  %v1676 = vpack.c.bf16 %v1627, %v1627
  %v1677 = vpack.c.bf16 %v1628, %v1628
  %v1678 = vpack.c.bf16 %v1629, %v1629
  %v1679 = vpack.c.bf16 %v1630, %v1630
  %v1680 = vpack.c.bf16 %v1631, %v1631
  %v1681 = vpack.c.bf16 %v1632, %v1632
  %v1682 = vpack.c.bf16 %v1633, %v1633
  %v1683 = vpack.c.bf16 %v1634, %v1634
  %v1684 = vpack.c.bf16 %v1635, %v1635
  %v1685 = vpack.c.bf16 %v1636, %v1636
  %v1686 = vpack.c.bf16 %v1637, %v1637
  %v1687 = vpack.c.bf16 %v1638, %v1638
  %v1688 = vpack.c.bf16 %v1639, %v1639
  %v1689 = vpack.c.bf16 %v1640, %v1640
  %v1690 = vpack.c.bf16 %v1641, %v1641
  %v1691 = vpack.c.bf16 %v1642, %v1642
  %v1692 = vpack.c.bf16 %v1643, %v1643
  %v1693 = vpack.c.bf16 %v1644, %v1644
  %v1694 = vpack.c.bf16 %v1645, %v1645
  %v1695 = vpack.c.bf16 %v1646, %v1646
  %v1696 = vpack.c.bf16 %v1647, %v1647
  %v1697 = vpack.c.bf16 %v1648, %v1648
  %v1698 = vpack.c.bf16 %v1649, %v1649
  %1699 = vst [vmem:[%s3] sm:$0xf] %v1650
  %1700 = vst [vmem:[%s3 + $0x4] sm:$0xf] %v1651
  %1701 = vst [vmem:[%s3 + $0x8] sm:$0xf] %v1652
  %1702 = vst [vmem:[%s3 + $0xc] sm:$0xf] %v1653
  %1703 = vst [vmem:[%s3 + $0x10] sm:$0xf] %v1654
  %1704 = vst [vmem:[%s3 + $0x14] sm:$0xf] %v1655
  %1705 = vst [vmem:[%s3 + $0x18] sm:$0xf] %v1656
  %1706 = vst [vmem:[%s3 + $0x1c] sm:$0xf] %v1657
  %1707 = vst [vmem:[%s3 + $0x20] sm:$0xf] %v1658
  %1708 = vst [vmem:[%s3 + $0x24] sm:$0xf] %v1659
  %1709 = vst [vmem:[%s3 + $0x28] sm:$0xf] %v1660
  %1710 = vst [vmem:[%s3 + $0x2c] sm:$0xf] %v1661
  %1711 = vst [vmem:[%s3 + $0x30] sm:$0xf] %v1662
  %1712 = vst [vmem:[%s3 + $0x34] sm:$0xf] %v1663
  %1713 = vst [vmem:[%s3 + $0x38] sm:$0xf] %v1664
  %1714 = vst [vmem:[%s3 + $0x3c] sm:$0xf] %v1665
  %1715 = vst [vmem:[%s3 + $0x40] sm:$0xf] %v1666
  %1716 = vst [vmem:[%s3 + $0x44] sm:$0xf] %v1667
  %1717 = vst [vmem:[%s3 + $0x48] sm:$0xf] %v1668
  %1718 = vst [vmem:[%s3 + $0x4c] sm:$0xf] %v1669
  %1719 = vst [vmem:[%s3 + $0x50] sm:$0xf] %v1670
  %1720 = vst [vmem:[%s3 + $0x54] sm:$0xf] %v1671
  %1721 = vst [vmem:[%s3 + $0x58] sm:$0xf] %v1672
  %1722 = vst [vmem:[%s3 + $0x5c] sm:$0xf] %v1673
  %1723 = vst [vmem:[%s3 + $0x60] sm:$0xf] %v1674
  %1724 = vst [vmem:[%s3 + $0x64] sm:$0xf] %v1675
  %1725 = vst [vmem:[%s3 + $0x68] sm:$0xf] %v1676
  %1726 = vst [vmem:[%s3 + $0x6c] sm:$0xf] %v1677
  %1727 = vst [vmem:[%s3 + $0x70] sm:$0xf] %v1678
  %1728 = vst [vmem:[%s3 + $0x74] sm:$0xf] %v1679
  %1729 = vst [vmem:[%s3 + $0x78] sm:$0xf] %v1680
  %1730 = vst [vmem:[%s3 + $0x7c] sm:$0xf] %v1681
  %1731 = vst [vmem:[%s3 + $0x80] sm:$0xf] %v1682
  %1732 = vst [vmem:[%s3 + $0x84] sm:$0xf] %v1683
  %1733 = vst [vmem:[%s3 + $0x88] sm:$0xf] %v1684
  %1734 = vst [vmem:[%s3 + $0x8c] sm:$0xf] %v1685
  %1735 = vst [vmem:[%s3 + $0x90] sm:$0xf] %v1686
  %1736 = vst [vmem:[%s3 + $0x94] sm:$0xf] %v1687
  %1737 = vst [vmem:[%s3 + $0x98] sm:$0xf] %v1688
  %1738 = vst [vmem:[%s3 + $0x9c] sm:$0xf] %v1689
  %1739 = vst [vmem:[%s3 + $0xa0] sm:$0xf] %v1690
  %1740 = vst [vmem:[%s3 + $0xa4] sm:$0xf] %v1691
  %1741 = vst [vmem:[%s3 + $0xa8] sm:$0xf] %v1692
  %1742 = vst [vmem:[%s3 + $0xac] sm:$0xf] %v1693
  %1743 = vst [vmem:[%s3 + $0xb0] sm:$0xf] %v1694
  %1744 = vst [vmem:[%s3 + $0xb4] sm:$0xf] %v1695
  %1745 = vst [vmem:[%s3 + $0xb8] sm:$0xf] %v1696
  %1746 = vst [vmem:[%s3 + $0xbc] sm:$0xf] %v1697
  %1747 = vst [vmem:[%s3 + $0xc0] sm:$0xf] %v1698
  // Predicated region
  $region14: #{lenet5b_forward.3} parent=0 // pred_check
    _
  $region15: #{lenet5b_forward.3} parent=0 // pred_check_branch
    %1749 = sbr.rel (0) target = $region17
  $region16: #{lenet5b_forward.3} parent=0 // pred_region
    _
  $region17: #{lenet5b_forward.3} parent=0 // pred_fallthru
    _
  // Predicated region
  $region18: #{lenet5b_forward.3} parent=0 // pred_check
    _
  $region19: #{lenet5b_forward.3} parent=0 // pred_check_branch
    %1751 = sbr.rel (0) target = $region21
  $region20: #{lenet5b_forward.3} parent=0 // pred_region
    _
  $region21: #{lenet5b_forward.3} parent=0 // pred_fallthru
    _

// kernel: lenet5b_forward.4
$region0: #{lenet5b_forward.4}
  #allocation0 [shape = 'u32[]', space=smem, size = 0x4, offset = 0x4, fixed_abs, tag = 'smem constant byte address 0x4 - core index']
  #allocation1 [shape = 'u32[72,128]{1,0:T(1,128)}', space=vmem, size = 0x9000, scoped, tag = 'internal scratch']
  %s0 = inlined_call_operand.vmem [shape: bf16[4,50,768], index: 0, kind: input, shape index: {}]
  %s1 = inlined_call_operand.vmem [shape: bf16[768,128], index: 1, kind: input, shape index: {}]
  %s2 = inlined_call_operand.vmem [shape: f32[1,128], index: 2, kind: input, shape index: {}]
  %s3 = inlined_call_operand.vmem [shape: bf16[50,128], index: 3, kind: output, shape index: {}]
  %s4 = sld [smem:[#allocation0]]
  $region22: #{lenet5b_forward.4} parent=0
    _
  %s6 = ssub.s32 1, %s4
  %s7 = scalar_select 0, %s6, %s4
  // Predicated region
  $region2: #{lenet5b_forward.4} parent=0 // pred_check
    _
  $region3: #{lenet5b_forward.4} parent=0 // pred_check_branch
    %9 = sbr.rel (0) target = $region5
  $region4: #{lenet5b_forward.4} parent=0 // pred_region
    _
  $region5: #{lenet5b_forward.4} parent=0 // pred_fallthru
    _
  // Predicated region
  $region6: #{lenet5b_forward.4} parent=0 // pred_check
    _
  $region7: #{lenet5b_forward.4} parent=0 // pred_check_branch
    %11 = sbr.rel (0) target = $region9
  $region8: #{lenet5b_forward.4} parent=0 // pred_region
    _
  $region9: #{lenet5b_forward.4} parent=0 // pred_fallthru
    _
  // Predicated region
  $region10: #{lenet5b_forward.4} parent=0 // pred_check
    _
  $region11: #{lenet5b_forward.4} parent=0 // pred_check_branch
    %13 = sbr.rel (0) target = $region13
  $region12: #{lenet5b_forward.4} parent=0 // pred_region
    _
  $region13: #{lenet5b_forward.4} parent=0 // pred_fallthru
    _
  %v14 = vld [vmem:[%s1] sm:$0xf]
  %v15 = vld [vmem:[%s1 + $0x4] sm:$0xf]
  %v16 = vld [vmem:[%s1 + $0x8] sm:$0xf]
  %v17 = vld [vmem:[%s1 + $0xc] sm:$0xf]
  %v18 = vld [vmem:[%s1 + $0x10] sm:$0xf]
  %v19 = vld [vmem:[%s1 + $0x14] sm:$0xf]
  %v20 = vld [vmem:[%s1 + $0x18] sm:$0xf]
  %v21 = vld [vmem:[%s1 + $0x1c] sm:$0xf]
  %v22 = vld [vmem:[%s1 + $0x20] sm:$0xf]
  %v23 = vld [vmem:[%s1 + $0x24] sm:$0xf]
  %v24 = vld [vmem:[%s1 + $0x28] sm:$0xf]
  %v25 = vld [vmem:[%s1 + $0x2c] sm:$0xf]
  %v26 = vld [vmem:[%s1 + $0x30] sm:$0xf]
  %v27 = vld [vmem:[%s1 + $0x34] sm:$0xf]
  %v28 = vld [vmem:[%s1 + $0x38] sm:$0xf]
  %v29 = vld [vmem:[%s1 + $0x3c] sm:$0xf]
  %v30 = vld [vmem:[%s1 + $0x40] sm:$0xf]
  %v31 = vld [vmem:[%s1 + $0x44] sm:$0xf]
  %v32 = vld [vmem:[%s1 + $0x48] sm:$0xf]
  %v33 = vld [vmem:[%s1 + $0x4c] sm:$0xf]
  %v34 = vld [vmem:[%s1 + $0x50] sm:$0xf]
  %v35 = vld [vmem:[%s1 + $0x54] sm:$0xf]
  %v36 = vld [vmem:[%s1 + $0x58] sm:$0xf]
  %v37 = vld [vmem:[%s1 + $0x5c] sm:$0xf]
  %v38 = vld [vmem:[%s1 + $0x60] sm:$0xf]
  %v39 = vld [vmem:[%s1 + $0x64] sm:$0xf]
  %v40 = vld [vmem:[%s1 + $0x68] sm:$0xf]
  %v41 = vld [vmem:[%s1 + $0x6c] sm:$0xf]
  %v42 = vld [vmem:[%s1 + $0x70] sm:$0xf]
  %v43 = vld [vmem:[%s1 + $0x74] sm:$0xf]
  %v44 = vld [vmem:[%s1 + $0x78] sm:$0xf]
  %v45 = vld [vmem:[%s1 + $0x7c] sm:$0xf]
  %v46 = vld [vmem:[%s1 + $0x80] sm:$0xf]
  %v47 = vld [vmem:[%s1 + $0x84] sm:$0xf]
  %v48 = vld [vmem:[%s1 + $0x88] sm:$0xf]
  %v49 = vld [vmem:[%s1 + $0x8c] sm:$0xf]
  %v50 = vld [vmem:[%s1 + $0x90] sm:$0xf]
  %v51 = vld [vmem:[%s1 + $0x94] sm:$0xf]
  %v52 = vld [vmem:[%s1 + $0x98] sm:$0xf]
  %v53 = vld [vmem:[%s1 + $0x9c] sm:$0xf]
  %v54 = vld [vmem:[%s1 + $0xa0] sm:$0xf]
  %v55 = vld [vmem:[%s1 + $0xa4] sm:$0xf]
  %v56 = vld [vmem:[%s1 + $0xa8] sm:$0xf]
  %v57 = vld [vmem:[%s1 + $0xac] sm:$0xf]
  %v58 = vld [vmem:[%s1 + $0xb0] sm:$0xf]
  %v59 = vld [vmem:[%s1 + $0xb4] sm:$0xf]
  %v60 = vld [vmem:[%s1 + $0xb8] sm:$0xf]
  %v61 = vld [vmem:[%s1 + $0xbc] sm:$0xf]
  %v62 = vld [vmem:[%s1 + $0xc0] sm:$0xf]
  %v63 = vld [vmem:[%s1 + $0xc4] sm:$0xf]
  %v64 = vld [vmem:[%s1 + $0xc8] sm:$0xf]
  %v65 = vld [vmem:[%s1 + $0xcc] sm:$0xf]
  %v66 = vld [vmem:[%s1 + $0xd0] sm:$0xf]
  %v67 = vld [vmem:[%s1 + $0xd4] sm:$0xf]
  %v68 = vld [vmem:[%s1 + $0xd8] sm:$0xf]
  %v69 = vld [vmem:[%s1 + $0xdc] sm:$0xf]
  %v70 = vld [vmem:[%s1 + $0xe0] sm:$0xf]
  %v71 = vld [vmem:[%s1 + $0xe4] sm:$0xf]
  %v72 = vld [vmem:[%s1 + $0xe8] sm:$0xf]
  %v73 = vld [vmem:[%s1 + $0xec] sm:$0xf]
  %v74 = vld [vmem:[%s1 + $0xf0] sm:$0xf]
  %v75 = vld [vmem:[%s1 + $0xf4] sm:$0xf]
  %v76 = vld [vmem:[%s1 + $0xf8] sm:$0xf]
  %v77 = vld [vmem:[%s1 + $0xfc] sm:$0xf]
  %v78 = vld [vmem:[%s1 + $0x100] sm:$0xf]
  %v79 = vld [vmem:[%s1 + $0x104] sm:$0xf]
  %v80 = vld [vmem:[%s1 + $0x108] sm:$0xf]
  %v81 = vld [vmem:[%s1 + $0x10c] sm:$0xf]
  %v82 = vld [vmem:[%s1 + $0x110] sm:$0xf]
  %v83 = vld [vmem:[%s1 + $0x114] sm:$0xf]
  %v84 = vld [vmem:[%s1 + $0x118] sm:$0xf]
  %v85 = vld [vmem:[%s1 + $0x11c] sm:$0xf]
  %v86 = vld [vmem:[%s1 + $0x120] sm:$0xf]
  %v87 = vld [vmem:[%s1 + $0x124] sm:$0xf]
  %v88 = vld [vmem:[%s1 + $0x128] sm:$0xf]
  %v89 = vld [vmem:[%s1 + $0x12c] sm:$0xf]
  %v90 = vld [vmem:[%s1 + $0x130] sm:$0xf]
  %v91 = vld [vmem:[%s1 + $0x134] sm:$0xf]
  %v92 = vld [vmem:[%s1 + $0x138] sm:$0xf]
  %v93 = vld [vmem:[%s1 + $0x13c] sm:$0xf]
  %v94 = vld [vmem:[%s1 + $0x140] sm:$0xf]
  %v95 = vld [vmem:[%s1 + $0x144] sm:$0xf]
  %v96 = vld [vmem:[%s1 + $0x148] sm:$0xf]
  %v97 = vld [vmem:[%s1 + $0x14c] sm:$0xf]
  %v98 = vld [vmem:[%s1 + $0x150] sm:$0xf]
  %v99 = vld [vmem:[%s1 + $0x154] sm:$0xf]
  %v100 = vld [vmem:[%s1 + $0x158] sm:$0xf]
  %v101 = vld [vmem:[%s1 + $0x15c] sm:$0xf]
  %v102 = vld [vmem:[%s1 + $0x160] sm:$0xf]
  %v103 = vld [vmem:[%s1 + $0x164] sm:$0xf]
  %v104 = vld [vmem:[%s1 + $0x168] sm:$0xf]
  %v105 = vld [vmem:[%s1 + $0x16c] sm:$0xf]
  %v106 = vld [vmem:[%s1 + $0x170] sm:$0xf]
  %v107 = vld [vmem:[%s1 + $0x174] sm:$0xf]
  %v108 = vld [vmem:[%s1 + $0x178] sm:$0xf]
  %v109 = vld [vmem:[%s1 + $0x17c] sm:$0xf]
  %v110 = vld [vmem:[%s0] sm:$0xff]
  %v111 = vld [vmem:[%s0 + $0x8] sm:$0xff]
  %v112 = vld [vmem:[%s0 + $0x10] sm:$0xff]
  %v113 = vld [vmem:[%s0 + $0x18] sm:$0xff]
  %v114 = vld [vmem:[%s0 + $0x20] sm:$0xff]
  %v115 = vld [vmem:[%s0 + $0x28] sm:$0xff]
  %v116 = vld [vmem:[%s0 + $0x30] sm:$0xff]
  %v117 = vld [vmem:[%s0 + $0x38] sm:$0xff]
  %v118 = vld [vmem:[%s0 + $0x40] sm:$0xff]
  %v119 = vld [vmem:[%s0 + $0x48] sm:$0xff]
  %v120 = vld [vmem:[%s0 + $0x50] sm:$0xff]
  %v121 = vld [vmem:[%s0 + $0x58] sm:$0xff]
  %v122 = vld [vmem:[%s0 + $0x60] sm:$0xff]
  %v123 = vld [vmem:[%s0 + $0x68] sm:$0xff]
  %v124 = vld [vmem:[%s0 + $0x70] sm:$0xff]
  %v125 = vld [vmem:[%s0 + $0x78] sm:$0xff]
  %v126 = vld [vmem:[%s0 + $0x80] sm:$0xff]
  %v127 = vld [vmem:[%s0 + $0x88] sm:$0xff]
  %v128 = vld [vmem:[%s0 + $0x90] sm:$0x11]
  %v129 = vld [vmem:[%s0 + $0x98] sm:$0x11]
  %v130 = vld [vmem:[%s0 + $0xa0] sm:$0x11]
  %v152 = vunpack.c.l.b16 %v110
  %v153 = vunpack.c.h.b16 %v110
  %v154 = vunpack.c.l.b16 %v111
  %v155 = vunpack.c.h.b16 %v111
  %v156 = vunpack.c.l.b16 %v112
  %v157 = vunpack.c.h.b16 %v112
  %v158 = vunpack.c.l.b16 %v113
  %v159 = vunpack.c.h.b16 %v113
  %v160 = vunpack.c.l.b16 %v114
  %v161 = vunpack.c.h.b16 %v114
  %v162 = vunpack.c.l.b16 %v115
  %v163 = vunpack.c.h.b16 %v115
  %v164 = vunpack.c.l.b16 %v116
  %v165 = vunpack.c.h.b16 %v116
  %v166 = vunpack.c.l.b16 %v117
  %v167 = vunpack.c.h.b16 %v117
  %v168 = vunpack.c.l.b16 %v118
  %v169 = vunpack.c.h.b16 %v118
  %v170 = vunpack.c.l.b16 %v119
  %v171 = vunpack.c.h.b16 %v119
  %v172 = vunpack.c.l.b16 %v120
  %v173 = vunpack.c.h.b16 %v120
  %v174 = vunpack.c.l.b16 %v121
  %v175 = vunpack.c.h.b16 %v121
  %v176 = vunpack.c.l.b16 %v122
  %v177 = vunpack.c.h.b16 %v122
  %v178 = vunpack.c.l.b16 %v123
  %v179 = vunpack.c.h.b16 %v123
  %v180 = vunpack.c.l.b16 %v124
  %v181 = vunpack.c.h.b16 %v124
  %v182 = vunpack.c.l.b16 %v125
  %v183 = vunpack.c.h.b16 %v125
  %v184 = vunpack.c.l.b16 %v126
  %v185 = vunpack.c.h.b16 %v126
  %v186 = vunpack.c.l.b16 %v127
  %v187 = vunpack.c.h.b16 %v127
  %v188 = vunpack.c.l.b16 %v128
  %v189 = vunpack.c.h.b16 %v128
  %v190 = vunpack.c.l.b16 %v129
  %v191 = vunpack.c.h.b16 %v129
  %v192 = vunpack.c.l.b16 %v130
  %v193 = vunpack.c.h.b16 %v130
  %v194 = vpack.c.b16 %v158, %v152
  %v195 = vpack.c.b16 %v159, %v153
  %v196 = vpack.c.b16 %v160, %v154
  %v197 = vpack.c.b16 %v161, %v155
  %v198 = vpack.c.b16 %v162, %v156
  %v199 = vpack.c.b16 %v163, %v157
  %v200 = vpack.c.b16 %v170, %v164
  %v201 = vpack.c.b16 %v171, %v165
  %v202 = vpack.c.b16 %v172, %v166
  %v203 = vpack.c.b16 %v173, %v167
  %v204 = vpack.c.b16 %v174, %v168
  %v205 = vpack.c.b16 %v175, %v169
  %v206 = vpack.c.b16 %v182, %v176
  %v207 = vpack.c.b16 %v183, %v177
  %v208 = vpack.c.b16 %v184, %v178
  %v209 = vpack.c.b16 %v185, %v179
  %v210 = vpack.c.b16 %v186, %v180
  %v211 = vpack.c.b16 %v187, %v181
  %v212 = vpack.c.b16 %v188, %v188
  %v213 = vpack.c.b16 %v189, %v189
  %v214 = vpack.c.b16 %v190, %v190
  %v215 = vpack.c.b16 %v191, %v191
  %v216 = vpack.c.b16 %v192, %v192
  %v217 = vpack.c.b16 %v193, %v193
  %v338 = vunpack.c.l.b16 %v14
  %v339 = vunpack.c.l.b16 %v15
  %v340 = vunpack.c.l.b16 %v16
  %v341 = vunpack.c.l.b16 %v17
  %v342 = vunpack.c.l.b16 %v18
  %v343 = vunpack.c.l.b16 %v19
  %v344 = vunpack.c.l.b16 %v20
  %v345 = vunpack.c.l.b16 %v21
  %v346 = vunpack.c.l.b16 %v22
  %v347 = vunpack.c.l.b16 %v23
  %v348 = vunpack.c.l.b16 %v24
  %v349 = vunpack.c.l.b16 %v25
  %v350 = vunpack.c.l.b16 %v26
  %v351 = vunpack.c.l.b16 %v27
  %v352 = vunpack.c.l.b16 %v28
  %v353 = vunpack.c.l.b16 %v29
  %v354 = vunpack.c.l.b16 %v30
  %v355 = vunpack.c.l.b16 %v31
  %v356 = vunpack.c.l.b16 %v32
  %v357 = vunpack.c.l.b16 %v33
  %v358 = vunpack.c.l.b16 %v34
  %v359 = vunpack.c.l.b16 %v35
  %v360 = vunpack.c.l.b16 %v36
  %v361 = vunpack.c.l.b16 %v37
  %v362 = vunpack.c.l.b16 %v38
  %v363 = vunpack.c.l.b16 %v39
  %v364 = vunpack.c.l.b16 %v40
  %v365 = vunpack.c.l.b16 %v41
  %v366 = vunpack.c.l.b16 %v42
  %v367 = vunpack.c.l.b16 %v43
  %v368 = vunpack.c.l.b16 %v44
  %v369 = vunpack.c.l.b16 %v45
  %v370 = vunpack.c.l.b16 %v46
  %v371 = vunpack.c.l.b16 %v47
  %v372 = vunpack.c.l.b16 %v48
  %v373 = vunpack.c.l.b16 %v49
  %v374 = vunpack.c.l.b16 %v50
  %v375 = vunpack.c.l.b16 %v51
  %v376 = vunpack.c.l.b16 %v52
  %v377 = vunpack.c.l.b16 %v53
  %v378 = vunpack.c.l.b16 %v54
  %v379 = vunpack.c.l.b16 %v55
  %v380 = vunpack.c.l.b16 %v56
  %v381 = vunpack.c.l.b16 %v57
  %v382 = vunpack.c.l.b16 %v58
  %v383 = vunpack.c.l.b16 %v59
  %v384 = vunpack.c.l.b16 %v60
  %v385 = vunpack.c.l.b16 %v61
  %v386 = vunpack.c.l.b16 %v62
  %v387 = vunpack.c.l.b16 %v63
  %v388 = vunpack.c.l.b16 %v64
  %v389 = vunpack.c.l.b16 %v65
  %v390 = vunpack.c.l.b16 %v66
  %v391 = vunpack.c.l.b16 %v67
  %v392 = vunpack.c.l.b16 %v68
  %v393 = vunpack.c.l.b16 %v69
  %v394 = vunpack.c.l.b16 %v70
  %v395 = vunpack.c.l.b16 %v71
  %v396 = vunpack.c.l.b16 %v72
  %v397 = vunpack.c.l.b16 %v73
  %v398 = vunpack.c.l.b16 %v74
  %v399 = vunpack.c.l.b16 %v75
  %v400 = vunpack.c.l.b16 %v76
  %v401 = vunpack.c.l.b16 %v77
  %v402 = vunpack.c.l.b16 %v78
  %v403 = vunpack.c.l.b16 %v79
  %v404 = vunpack.c.l.b16 %v80
  %v405 = vunpack.c.l.b16 %v81
  %v406 = vunpack.c.l.b16 %v82
  %v407 = vunpack.c.l.b16 %v83
  %v408 = vunpack.c.l.b16 %v84
  %v409 = vunpack.c.l.b16 %v85
  %v410 = vunpack.c.l.b16 %v86
  %v411 = vunpack.c.l.b16 %v87
  %v412 = vunpack.c.l.b16 %v88
  %v413 = vunpack.c.l.b16 %v89
  %v414 = vunpack.c.l.b16 %v90
  %v415 = vunpack.c.l.b16 %v91
  %v416 = vunpack.c.l.b16 %v92
  %v417 = vunpack.c.l.b16 %v93
  %v418 = vunpack.c.l.b16 %v94
  %v419 = vunpack.c.l.b16 %v95
  %v420 = vunpack.c.l.b16 %v96
  %v421 = vunpack.c.l.b16 %v97
  %v422 = vunpack.c.l.b16 %v98
  %v423 = vunpack.c.l.b16 %v99
  %v424 = vunpack.c.l.b16 %v100
  %v425 = vunpack.c.l.b16 %v101
  %v426 = vunpack.c.l.b16 %v102
  %v427 = vunpack.c.l.b16 %v103
  %v428 = vunpack.c.l.b16 %v104
  %v429 = vunpack.c.l.b16 %v105
  %v430 = vunpack.c.l.b16 %v106
  %v431 = vunpack.c.l.b16 %v107
  %v432 = vunpack.c.l.b16 %v108
  %v433 = vunpack.c.l.b16 %v109
  %v434 = vpack.c.b16 %v339, %v338
  %v435 = vpack.c.b16 %v341, %v340
  %v436 = vpack.c.b16 %v343, %v342
  %v437 = vpack.c.b16 %v345, %v344
  %v438 = vpack.c.b16 %v347, %v346
  %v439 = vpack.c.b16 %v349, %v348
  %v440 = vpack.c.b16 %v351, %v350
  %v441 = vpack.c.b16 %v353, %v352
  %v442 = vpack.c.b16 %v355, %v354
  %v443 = vpack.c.b16 %v357, %v356
  %v444 = vpack.c.b16 %v359, %v358
  %v445 = vpack.c.b16 %v361, %v360
  %v446 = vpack.c.b16 %v363, %v362
  %v447 = vpack.c.b16 %v365, %v364
  %v448 = vpack.c.b16 %v367, %v366
  %v449 = vpack.c.b16 %v369, %v368
  %v450 = vpack.c.b16 %v371, %v370
  %v451 = vpack.c.b16 %v373, %v372
  %v452 = vpack.c.b16 %v375, %v374
  %v453 = vpack.c.b16 %v377, %v376
  %v454 = vpack.c.b16 %v379, %v378
  %v455 = vpack.c.b16 %v381, %v380
  %v456 = vpack.c.b16 %v383, %v382
  %v457 = vpack.c.b16 %v385, %v384
  %v458 = vpack.c.b16 %v387, %v386
  %v459 = vpack.c.b16 %v389, %v388
  %v460 = vpack.c.b16 %v391, %v390
  %v461 = vpack.c.b16 %v393, %v392
  %v462 = vpack.c.b16 %v395, %v394
  %v463 = vpack.c.b16 %v397, %v396
  %v464 = vpack.c.b16 %v399, %v398
  %v465 = vpack.c.b16 %v401, %v400
  %v466 = vpack.c.b16 %v403, %v402
  %v467 = vpack.c.b16 %v405, %v404
  %v468 = vpack.c.b16 %v407, %v406
  %v469 = vpack.c.b16 %v409, %v408
  %v470 = vpack.c.b16 %v411, %v410
  %v471 = vpack.c.b16 %v413, %v412
  %v472 = vpack.c.b16 %v415, %v414
  %v473 = vpack.c.b16 %v417, %v416
  %v474 = vpack.c.b16 %v419, %v418
  %v475 = vpack.c.b16 %v421, %v420
  %v476 = vpack.c.b16 %v423, %v422
  %v477 = vpack.c.b16 %v425, %v424
  %v478 = vpack.c.b16 %v427, %v426
  %v479 = vpack.c.b16 %v429, %v428
  %v480 = vpack.c.b16 %v431, %v430
  %v481 = vpack.c.b16 %v433, %v432
  %530 = vmatpush.bf16.msra.mxu0 %v441
  %531 = vmatpush.bf16.msra.mxu0 %v440
  %532 = vmatpush.bf16.msra.mxu0 %v439
  %533 = vmatpush.bf16.msra.mxu0 %v438
  %534 = vmatpush.bf16.msra.mxu0 %v437
  %535 = vmatpush.bf16.msra.mxu0 %v436
  %536 = vmatpush.bf16.msra.mxu0 %v435
  %537 = vmatpush.bf16.msra.mxu0 %v434
  %538 = vmatmul.bf16.gmra.mxu0 %v194
  %v539 = vpop.f32.mrf.mxu0
  %v540 = vadd.f32 0.0, %v539
  %v541 = vpop.f32.mrf.mxu0
  %v542 = vadd.f32 0.0, %v541
  %543 = vmatmul.bf16.gmra.mxu0 %v200
  %v544 = vpop.f32.mrf.mxu0
  %v545 = vadd.f32 0.0, %v544
  %v546 = vpop.f32.mrf.mxu0
  %v547 = vadd.f32 0.0, %v546
  %548 = vmatmul.bf16.gmra.mxu0 %v206
  %v549 = vpop.f32.mrf.mxu0
  %v550 = vadd.f32 0.0, %v549
  %v551 = vpop.f32.mrf.mxu0
  %v552 = vadd.f32 0.0, %v551
  %553 = vmatmul.bf16.gmra.mxu0 %v212
  %v554 = vpop.f32.mrf.mxu0
  %v555 = vadd.f32 0.0, %v554
  %v556 = vpop.f32.mrf.mxu0
  %557 = vdwg.mxu0
  %558 = vmatpush.bf16.msra.mxu0 %v449
  %559 = vmatpush.bf16.msra.mxu0 %v448
  %560 = vmatpush.bf16.msra.mxu0 %v447
  %561 = vmatpush.bf16.msra.mxu0 %v446
  %562 = vmatpush.bf16.msra.mxu0 %v445
  %563 = vmatpush.bf16.msra.mxu0 %v444
  %564 = vmatpush.bf16.msra.mxu0 %v443
  %565 = vmatpush.bf16.msra.mxu0 %v442
  %566 = vmatmul.bf16.gmra.mxu0 %v195
  %v567 = vpop.f32.mrf.mxu0
  %v568 = vadd.f32 %v540, %v567
  %v569 = vpop.f32.mrf.mxu0
  %v570 = vadd.f32 %v542, %v569
  %571 = vmatmul.bf16.gmra.mxu0 %v201
  %v572 = vpop.f32.mrf.mxu0
  %v573 = vadd.f32 %v545, %v572
  %v574 = vpop.f32.mrf.mxu0
  %v575 = vadd.f32 %v547, %v574
  %576 = vmatmul.bf16.gmra.mxu0 %v207
  %v577 = vpop.f32.mrf.mxu0
  %v578 = vadd.f32 %v550, %v577
  %v579 = vpop.f32.mrf.mxu0
  %v580 = vadd.f32 %v552, %v579
  %581 = vmatmul.bf16.gmra.mxu0 %v213
  %v582 = vpop.f32.mrf.mxu0
  %v583 = vadd.f32 %v555, %v582
  %v584 = vpop.f32.mrf.mxu0
  %585 = vdwg.mxu0
  %586 = vmatpush.bf16.msra.mxu0 %v457
  %587 = vmatpush.bf16.msra.mxu0 %v456
  %588 = vmatpush.bf16.msra.mxu0 %v455
  %589 = vmatpush.bf16.msra.mxu0 %v454
  %590 = vmatpush.bf16.msra.mxu0 %v453
  %591 = vmatpush.bf16.msra.mxu0 %v452
  %592 = vmatpush.bf16.msra.mxu0 %v451
  %593 = vmatpush.bf16.msra.mxu0 %v450
  %594 = vmatmul.bf16.gmra.mxu0 %v196
  %v595 = vpop.f32.mrf.mxu0
  %v596 = vadd.f32 %v568, %v595
  %v597 = vpop.f32.mrf.mxu0
  %v598 = vadd.f32 %v570, %v597
  %599 = vmatmul.bf16.gmra.mxu0 %v202
  %v600 = vpop.f32.mrf.mxu0
  %v601 = vadd.f32 %v573, %v600
  %v602 = vpop.f32.mrf.mxu0
  %v603 = vadd.f32 %v575, %v602
  %604 = vmatmul.bf16.gmra.mxu0 %v208
  %v605 = vpop.f32.mrf.mxu0
  %v606 = vadd.f32 %v578, %v605
  %v607 = vpop.f32.mrf.mxu0
  %v608 = vadd.f32 %v580, %v607
  %609 = vmatmul.bf16.gmra.mxu0 %v214
  %v610 = vpop.f32.mrf.mxu0
  %v611 = vadd.f32 %v583, %v610
  %v612 = vpop.f32.mrf.mxu0
  %613 = vdwg.mxu0
  %614 = vmatpush.bf16.msra.mxu0 %v465
  %615 = vmatpush.bf16.msra.mxu0 %v464
  %616 = vmatpush.bf16.msra.mxu0 %v463
  %617 = vmatpush.bf16.msra.mxu0 %v462
  %618 = vmatpush.bf16.msra.mxu0 %v461
  %619 = vmatpush.bf16.msra.mxu0 %v460
  %620 = vmatpush.bf16.msra.mxu0 %v459
  %621 = vmatpush.bf16.msra.mxu0 %v458
  %622 = vmatmul.bf16.gmra.mxu0 %v197
  %v623 = vpop.f32.mrf.mxu0
  %v624 = vadd.f32 %v596, %v623
  %v625 = vpop.f32.mrf.mxu0
  %v626 = vadd.f32 %v598, %v625
  %627 = vmatmul.bf16.gmra.mxu0 %v203
  %v628 = vpop.f32.mrf.mxu0
  %v629 = vadd.f32 %v601, %v628
  %v630 = vpop.f32.mrf.mxu0
  %v631 = vadd.f32 %v603, %v630
  %632 = vmatmul.bf16.gmra.mxu0 %v209
  %v633 = vpop.f32.mrf.mxu0
  %v634 = vadd.f32 %v606, %v633
  %v635 = vpop.f32.mrf.mxu0
  %v636 = vadd.f32 %v608, %v635
  %637 = vmatmul.bf16.gmra.mxu0 %v215
  %v638 = vpop.f32.mrf.mxu0
  %v639 = vadd.f32 %v611, %v638
  %v640 = vpop.f32.mrf.mxu0
  %641 = vdwg.mxu0
  %642 = vmatpush.bf16.msra.mxu0 %v473
  %643 = vmatpush.bf16.msra.mxu0 %v472
  %644 = vmatpush.bf16.msra.mxu0 %v471
  %645 = vmatpush.bf16.msra.mxu0 %v470
  %646 = vmatpush.bf16.msra.mxu0 %v469
  %647 = vmatpush.bf16.msra.mxu0 %v468
  %648 = vmatpush.bf16.msra.mxu0 %v467
  %649 = vmatpush.bf16.msra.mxu0 %v466
  %650 = vmatmul.bf16.gmra.mxu0 %v198
  %v651 = vpop.f32.mrf.mxu0
  %v652 = vadd.f32 %v624, %v651
  %v653 = vpop.f32.mrf.mxu0
  %v654 = vadd.f32 %v626, %v653
  %655 = vmatmul.bf16.gmra.mxu0 %v204
  %v656 = vpop.f32.mrf.mxu0
  %v657 = vadd.f32 %v629, %v656
  %v658 = vpop.f32.mrf.mxu0
  %v659 = vadd.f32 %v631, %v658
  %660 = vmatmul.bf16.gmra.mxu0 %v210
  %v661 = vpop.f32.mrf.mxu0
  %v662 = vadd.f32 %v634, %v661
  %v663 = vpop.f32.mrf.mxu0
  %v664 = vadd.f32 %v636, %v663
  %665 = vmatmul.bf16.gmra.mxu0 %v216
  %v666 = vpop.f32.mrf.mxu0
  %v667 = vadd.f32 %v639, %v666
  %v668 = vpop.f32.mrf.mxu0
  %669 = vdwg.mxu0
  %670 = vmatpush.bf16.msra.mxu0 %v481
  %671 = vmatpush.bf16.msra.mxu0 %v480
  %672 = vmatpush.bf16.msra.mxu0 %v479
  %673 = vmatpush.bf16.msra.mxu0 %v478
  %674 = vmatpush.bf16.msra.mxu0 %v477
  %675 = vmatpush.bf16.msra.mxu0 %v476
  %676 = vmatpush.bf16.msra.mxu0 %v475
  %677 = vmatpush.bf16.msra.mxu0 %v474
  %678 = vmatmul.bf16.gmra.mxu0 %v199
  %v679 = vpop.f32.mrf.mxu0
  %v680 = vadd.f32 %v652, %v679
  %v681 = vpop.f32.mrf.mxu0
  %v682 = vadd.f32 %v654, %v681
  %683 = vmatmul.bf16.gmra.mxu0 %v205
  %v684 = vpop.f32.mrf.mxu0
  %v685 = vadd.f32 %v657, %v684
  %v686 = vpop.f32.mrf.mxu0
  %v687 = vadd.f32 %v659, %v686
  %688 = vmatmul.bf16.gmra.mxu0 %v211
  %v689 = vpop.f32.mrf.mxu0
  %v690 = vadd.f32 %v662, %v689
  %v691 = vpop.f32.mrf.mxu0
  %v692 = vadd.f32 %v664, %v691
  %693 = vmatmul.bf16.gmra.mxu0 %v217
  %v694 = vpop.f32.mrf.mxu0
  %v695 = vadd.f32 %v667, %v694
  %v696 = vpop.f32.mrf.mxu0
  %697 = vdwg.mxu0
  %s698 = scalar_lea.vmem %s0, 168
  %v699 = vld [vmem:[%s698] sm:$0xff]
  %v700 = vld [vmem:[%s698 + $0x8] sm:$0xff]
  %v701 = vld [vmem:[%s698 + $0x10] sm:$0xff]
  %v702 = vld [vmem:[%s698 + $0x18] sm:$0xff]
  %v703 = vld [vmem:[%s698 + $0x20] sm:$0xff]
  %v704 = vld [vmem:[%s698 + $0x28] sm:$0xff]
  %v705 = vld [vmem:[%s698 + $0x30] sm:$0xff]
  %v706 = vld [vmem:[%s698 + $0x38] sm:$0xff]
  %v707 = vld [vmem:[%s698 + $0x40] sm:$0xff]
  %v708 = vld [vmem:[%s698 + $0x48] sm:$0xff]
  %v709 = vld [vmem:[%s698 + $0x50] sm:$0xff]
  %v710 = vld [vmem:[%s698 + $0x58] sm:$0xff]
  %v711 = vld [vmem:[%s698 + $0x60] sm:$0xff]
  %v712 = vld [vmem:[%s698 + $0x68] sm:$0xff]
  %v713 = vld [vmem:[%s698 + $0x70] sm:$0xff]
  %v714 = vld [vmem:[%s698 + $0x78] sm:$0xff]
  %v715 = vld [vmem:[%s698 + $0x80] sm:$0xff]
  %v716 = vld [vmem:[%s698 + $0x88] sm:$0xff]
  %v717 = vld [vmem:[%s698 + $0x90] sm:$0x11]
  %v718 = vld [vmem:[%s698 + $0x98] sm:$0x11]
  %v719 = vld [vmem:[%s698 + $0xa0] sm:$0x11]
  %v741 = vunpack.c.l.b16 %v699
  %v742 = vunpack.c.h.b16 %v699
  %v743 = vunpack.c.l.b16 %v700
  %v744 = vunpack.c.h.b16 %v700
  %v745 = vunpack.c.l.b16 %v701
  %v746 = vunpack.c.h.b16 %v701
  %v747 = vunpack.c.l.b16 %v702
  %v748 = vunpack.c.h.b16 %v702
  %v749 = vunpack.c.l.b16 %v703
  %v750 = vunpack.c.h.b16 %v703
  %v751 = vunpack.c.l.b16 %v704
  %v752 = vunpack.c.h.b16 %v704
  %v753 = vunpack.c.l.b16 %v705
  %v754 = vunpack.c.h.b16 %v705
  %v755 = vunpack.c.l.b16 %v706
  %v756 = vunpack.c.h.b16 %v706
  %v757 = vunpack.c.l.b16 %v707
  %v758 = vunpack.c.h.b16 %v707
  %v759 = vunpack.c.l.b16 %v708
  %v760 = vunpack.c.h.b16 %v708
  %v761 = vunpack.c.l.b16 %v709
  %v762 = vunpack.c.h.b16 %v709
  %v763 = vunpack.c.l.b16 %v710
  %v764 = vunpack.c.h.b16 %v710
  %v765 = vunpack.c.l.b16 %v711
  %v766 = vunpack.c.h.b16 %v711
  %v767 = vunpack.c.l.b16 %v712
  %v768 = vunpack.c.h.b16 %v712
  %v769 = vunpack.c.l.b16 %v713
  %v770 = vunpack.c.h.b16 %v713
  %v771 = vunpack.c.l.b16 %v714
  %v772 = vunpack.c.h.b16 %v714
  %v773 = vunpack.c.l.b16 %v715
  %v774 = vunpack.c.h.b16 %v715
  %v775 = vunpack.c.l.b16 %v716
  %v776 = vunpack.c.h.b16 %v716
  %v777 = vunpack.c.l.b16 %v717
  %v778 = vunpack.c.h.b16 %v717
  %v779 = vunpack.c.l.b16 %v718
  %v780 = vunpack.c.h.b16 %v718
  %v781 = vunpack.c.l.b16 %v719
  %v782 = vunpack.c.h.b16 %v719
  %v783 = vpack.c.b16 %v747, %v741
  %v784 = vpack.c.b16 %v748, %v742
  %v785 = vpack.c.b16 %v749, %v743
  %v786 = vpack.c.b16 %v750, %v744
  %v787 = vpack.c.b16 %v751, %v745
  %v788 = vpack.c.b16 %v752, %v746
  %v789 = vpack.c.b16 %v759, %v753
  %v790 = vpack.c.b16 %v760, %v754
  %v791 = vpack.c.b16 %v761, %v755
  %v792 = vpack.c.b16 %v762, %v756
  %v793 = vpack.c.b16 %v763, %v757
  %v794 = vpack.c.b16 %v764, %v758
  %v795 = vpack.c.b16 %v771, %v765
  %v796 = vpack.c.b16 %v772, %v766
  %v797 = vpack.c.b16 %v773, %v767
  %v798 = vpack.c.b16 %v774, %v768
  %v799 = vpack.c.b16 %v775, %v769
  %v800 = vpack.c.b16 %v776, %v770
  %v801 = vpack.c.b16 %v777, %v777
  %v802 = vpack.c.b16 %v778, %v778
  %v803 = vpack.c.b16 %v779, %v779
  %v804 = vpack.c.b16 %v780, %v780
  %v805 = vpack.c.b16 %v781, %v781
  %v806 = vpack.c.b16 %v782, %v782
  %831 = vmatpush.bf16.msra.mxu0 %v441
  %832 = vmatpush.bf16.msra.mxu0 %v440
  %833 = vmatpush.bf16.msra.mxu0 %v439
  %834 = vmatpush.bf16.msra.mxu0 %v438
  %835 = vmatpush.bf16.msra.mxu0 %v437
  %836 = vmatpush.bf16.msra.mxu0 %v436
  %837 = vmatpush.bf16.msra.mxu0 %v435
  %838 = vmatpush.bf16.msra.mxu0 %v434
  %839 = vmatmul.bf16.gmra.mxu0 %v783
  %v840 = vpop.f32.mrf.mxu0
  %v841 = vadd.f32 0.0, %v840
  %v842 = vpop.f32.mrf.mxu0
  %v843 = vadd.f32 0.0, %v842
  %844 = vmatmul.bf16.gmra.mxu0 %v789
  %v845 = vpop.f32.mrf.mxu0
  %v846 = vadd.f32 0.0, %v845
  %v847 = vpop.f32.mrf.mxu0
  %v848 = vadd.f32 0.0, %v847
  %849 = vmatmul.bf16.gmra.mxu0 %v795
  %v850 = vpop.f32.mrf.mxu0
  %v851 = vadd.f32 0.0, %v850
  %v852 = vpop.f32.mrf.mxu0
  %v853 = vadd.f32 0.0, %v852
  %854 = vmatmul.bf16.gmra.mxu0 %v801
  %v855 = vpop.f32.mrf.mxu0
  %v856 = vadd.f32 0.0, %v855
  %v857 = vpop.f32.mrf.mxu0
  %858 = vdwg.mxu0
  %859 = vmatpush.bf16.msra.mxu0 %v449
  %860 = vmatpush.bf16.msra.mxu0 %v448
  %861 = vmatpush.bf16.msra.mxu0 %v447
  %862 = vmatpush.bf16.msra.mxu0 %v446
  %863 = vmatpush.bf16.msra.mxu0 %v445
  %864 = vmatpush.bf16.msra.mxu0 %v444
  %865 = vmatpush.bf16.msra.mxu0 %v443
  %866 = vmatpush.bf16.msra.mxu0 %v442
  %867 = vmatmul.bf16.gmra.mxu0 %v784
  %v868 = vpop.f32.mrf.mxu0
  %v869 = vadd.f32 %v841, %v868
  %v870 = vpop.f32.mrf.mxu0
  %v871 = vadd.f32 %v843, %v870
  %872 = vmatmul.bf16.gmra.mxu0 %v790
  %v873 = vpop.f32.mrf.mxu0
  %v874 = vadd.f32 %v846, %v873
  %v875 = vpop.f32.mrf.mxu0
  %v876 = vadd.f32 %v848, %v875
  %877 = vmatmul.bf16.gmra.mxu0 %v796
  %v878 = vpop.f32.mrf.mxu0
  %v879 = vadd.f32 %v851, %v878
  %v880 = vpop.f32.mrf.mxu0
  %v881 = vadd.f32 %v853, %v880
  %882 = vmatmul.bf16.gmra.mxu0 %v802
  %v883 = vpop.f32.mrf.mxu0
  %v884 = vadd.f32 %v856, %v883
  %v885 = vpop.f32.mrf.mxu0
  %886 = vdwg.mxu0
  %887 = vmatpush.bf16.msra.mxu0 %v457
  %888 = vmatpush.bf16.msra.mxu0 %v456
  %889 = vmatpush.bf16.msra.mxu0 %v455
  %890 = vmatpush.bf16.msra.mxu0 %v454
  %891 = vmatpush.bf16.msra.mxu0 %v453
  %892 = vmatpush.bf16.msra.mxu0 %v452
  %893 = vmatpush.bf16.msra.mxu0 %v451
  %894 = vmatpush.bf16.msra.mxu0 %v450
  %895 = vmatmul.bf16.gmra.mxu0 %v785
  %v896 = vpop.f32.mrf.mxu0
  %v897 = vadd.f32 %v869, %v896
  %v898 = vpop.f32.mrf.mxu0
  %v899 = vadd.f32 %v871, %v898
  %900 = vmatmul.bf16.gmra.mxu0 %v791
  %v901 = vpop.f32.mrf.mxu0
  %v902 = vadd.f32 %v874, %v901
  %v903 = vpop.f32.mrf.mxu0
  %v904 = vadd.f32 %v876, %v903
  %905 = vmatmul.bf16.gmra.mxu0 %v797
  %v906 = vpop.f32.mrf.mxu0
  %v907 = vadd.f32 %v879, %v906
  %v908 = vpop.f32.mrf.mxu0
  %v909 = vadd.f32 %v881, %v908
  %910 = vmatmul.bf16.gmra.mxu0 %v803
  %v911 = vpop.f32.mrf.mxu0
  %v912 = vadd.f32 %v884, %v911
  %v913 = vpop.f32.mrf.mxu0
  %914 = vdwg.mxu0
  %915 = vmatpush.bf16.msra.mxu0 %v465
  %916 = vmatpush.bf16.msra.mxu0 %v464
  %917 = vmatpush.bf16.msra.mxu0 %v463
  %918 = vmatpush.bf16.msra.mxu0 %v462
  %919 = vmatpush.bf16.msra.mxu0 %v461
  %920 = vmatpush.bf16.msra.mxu0 %v460
  %921 = vmatpush.bf16.msra.mxu0 %v459
  %922 = vmatpush.bf16.msra.mxu0 %v458
  %923 = vmatmul.bf16.gmra.mxu0 %v786
  %v924 = vpop.f32.mrf.mxu0
  %v925 = vadd.f32 %v897, %v924
  %v926 = vpop.f32.mrf.mxu0
  %v927 = vadd.f32 %v899, %v926
  %928 = vmatmul.bf16.gmra.mxu0 %v792
  %v929 = vpop.f32.mrf.mxu0
  %v930 = vadd.f32 %v902, %v929
  %v931 = vpop.f32.mrf.mxu0
  %v932 = vadd.f32 %v904, %v931
  %933 = vmatmul.bf16.gmra.mxu0 %v798
  %v934 = vpop.f32.mrf.mxu0
  %v935 = vadd.f32 %v907, %v934
  %v936 = vpop.f32.mrf.mxu0
  %v937 = vadd.f32 %v909, %v936
  %938 = vmatmul.bf16.gmra.mxu0 %v804
  %v939 = vpop.f32.mrf.mxu0
  %v940 = vadd.f32 %v912, %v939
  %v941 = vpop.f32.mrf.mxu0
  %942 = vdwg.mxu0
  %943 = vmatpush.bf16.msra.mxu0 %v473
  %944 = vmatpush.bf16.msra.mxu0 %v472
  %945 = vmatpush.bf16.msra.mxu0 %v471
  %946 = vmatpush.bf16.msra.mxu0 %v470
  %947 = vmatpush.bf16.msra.mxu0 %v469
  %948 = vmatpush.bf16.msra.mxu0 %v468
  %949 = vmatpush.bf16.msra.mxu0 %v467
  %950 = vmatpush.bf16.msra.mxu0 %v466
  %951 = vmatmul.bf16.gmra.mxu0 %v787
  %v952 = vpop.f32.mrf.mxu0
  %v953 = vadd.f32 %v925, %v952
  %v954 = vpop.f32.mrf.mxu0
  %v955 = vadd.f32 %v927, %v954
  %956 = vmatmul.bf16.gmra.mxu0 %v793
  %v957 = vpop.f32.mrf.mxu0
  %v958 = vadd.f32 %v930, %v957
  %v959 = vpop.f32.mrf.mxu0
  %v960 = vadd.f32 %v932, %v959
  %961 = vmatmul.bf16.gmra.mxu0 %v799
  %v962 = vpop.f32.mrf.mxu0
  %v963 = vadd.f32 %v935, %v962
  %v964 = vpop.f32.mrf.mxu0
  %v965 = vadd.f32 %v937, %v964
  %966 = vmatmul.bf16.gmra.mxu0 %v805
  %v967 = vpop.f32.mrf.mxu0
  %v968 = vadd.f32 %v940, %v967
  %v969 = vpop.f32.mrf.mxu0
  %970 = vdwg.mxu0
  %971 = vmatpush.bf16.msra.mxu0 %v481
  %972 = vmatpush.bf16.msra.mxu0 %v480
  %973 = vmatpush.bf16.msra.mxu0 %v479
  %974 = vmatpush.bf16.msra.mxu0 %v478
  %975 = vmatpush.bf16.msra.mxu0 %v477
  %976 = vmatpush.bf16.msra.mxu0 %v476
  %977 = vmatpush.bf16.msra.mxu0 %v475
  %978 = vmatpush.bf16.msra.mxu0 %v474
  %979 = vmatmul.bf16.gmra.mxu0 %v788
  %v980 = vpop.f32.mrf.mxu0
  %v981 = vadd.f32 %v953, %v980
  %v982 = vpop.f32.mrf.mxu0
  %v983 = vadd.f32 %v955, %v982
  %984 = vmatmul.bf16.gmra.mxu0 %v794
  %v985 = vpop.f32.mrf.mxu0
  %v986 = vadd.f32 %v958, %v985
  %v987 = vpop.f32.mrf.mxu0
  %v988 = vadd.f32 %v960, %v987
  %989 = vmatmul.bf16.gmra.mxu0 %v800
  %v990 = vpop.f32.mrf.mxu0
  %v991 = vadd.f32 %v963, %v990
  %v992 = vpop.f32.mrf.mxu0
  %v993 = vadd.f32 %v965, %v992
  %994 = vmatmul.bf16.gmra.mxu0 %v806
  %v995 = vpop.f32.mrf.mxu0
  %v996 = vadd.f32 %v968, %v995
  %v997 = vpop.f32.mrf.mxu0
  %998 = vdwg.mxu0
  %v999 = vmax.f32 %v680, %v981
  %v1000 = vmax.f32 %v682, %v983
  %v1001 = vmax.f32 %v685, %v986
  %v1002 = vmax.f32 %v687, %v988
  %v1003 = vmax.f32 %v690, %v991
  %v1004 = vmax.f32 %v692, %v993
  %v1005 = vmax.f32 %v695, %v996
  %s1006 = scalar_lea.vmem %s0, 336
  %v1007 = vld [vmem:[%s1006] sm:$0xff]
  %v1008 = vld [vmem:[%s1006 + $0x8] sm:$0xff]
  %v1009 = vld [vmem:[%s1006 + $0x10] sm:$0xff]
  %v1010 = vld [vmem:[%s1006 + $0x18] sm:$0xff]
  %v1011 = vld [vmem:[%s1006 + $0x20] sm:$0xff]
  %v1012 = vld [vmem:[%s1006 + $0x28] sm:$0xff]
  %v1013 = vld [vmem:[%s1006 + $0x30] sm:$0xff]
  %v1014 = vld [vmem:[%s1006 + $0x38] sm:$0xff]
  %v1015 = vld [vmem:[%s1006 + $0x40] sm:$0xff]
  %v1016 = vld [vmem:[%s1006 + $0x48] sm:$0xff]
  %v1017 = vld [vmem:[%s1006 + $0x50] sm:$0xff]
  %v1018 = vld [vmem:[%s1006 + $0x58] sm:$0xff]
  %v1019 = vld [vmem:[%s1006 + $0x60] sm:$0xff]
  %v1020 = vld [vmem:[%s1006 + $0x68] sm:$0xff]
  %v1021 = vld [vmem:[%s1006 + $0x70] sm:$0xff]
  %v1022 = vld [vmem:[%s1006 + $0x78] sm:$0xff]
  %v1023 = vld [vmem:[%s1006 + $0x80] sm:$0xff]
  %v1024 = vld [vmem:[%s1006 + $0x88] sm:$0xff]
  %v1025 = vld [vmem:[%s1006 + $0x90] sm:$0x11]
  %v1026 = vld [vmem:[%s1006 + $0x98] sm:$0x11]
  %v1027 = vld [vmem:[%s1006 + $0xa0] sm:$0x11]
  %v1049 = vunpack.c.l.b16 %v1007
  %v1050 = vunpack.c.h.b16 %v1007
  %v1051 = vunpack.c.l.b16 %v1008
  %v1052 = vunpack.c.h.b16 %v1008
  %v1053 = vunpack.c.l.b16 %v1009
  %v1054 = vunpack.c.h.b16 %v1009
  %v1055 = vunpack.c.l.b16 %v1010
  %v1056 = vunpack.c.h.b16 %v1010
  %v1057 = vunpack.c.l.b16 %v1011
  %v1058 = vunpack.c.h.b16 %v1011
  %v1059 = vunpack.c.l.b16 %v1012
  %v1060 = vunpack.c.h.b16 %v1012
  %v1061 = vunpack.c.l.b16 %v1013
  %v1062 = vunpack.c.h.b16 %v1013
  %v1063 = vunpack.c.l.b16 %v1014
  %v1064 = vunpack.c.h.b16 %v1014
  %v1065 = vunpack.c.l.b16 %v1015
  %v1066 = vunpack.c.h.b16 %v1015
  %v1067 = vunpack.c.l.b16 %v1016
  %v1068 = vunpack.c.h.b16 %v1016
  %v1069 = vunpack.c.l.b16 %v1017
  %v1070 = vunpack.c.h.b16 %v1017
  %v1071 = vunpack.c.l.b16 %v1018
  %v1072 = vunpack.c.h.b16 %v1018
  %v1073 = vunpack.c.l.b16 %v1019
  %v1074 = vunpack.c.h.b16 %v1019
  %v1075 = vunpack.c.l.b16 %v1020
  %v1076 = vunpack.c.h.b16 %v1020
  %v1077 = vunpack.c.l.b16 %v1021
  %v1078 = vunpack.c.h.b16 %v1021
  %v1079 = vunpack.c.l.b16 %v1022
  %v1080 = vunpack.c.h.b16 %v1022
  %v1081 = vunpack.c.l.b16 %v1023
  %v1082 = vunpack.c.h.b16 %v1023
  %v1083 = vunpack.c.l.b16 %v1024
  %v1084 = vunpack.c.h.b16 %v1024
  %v1085 = vunpack.c.l.b16 %v1025
  %v1086 = vunpack.c.h.b16 %v1025
  %v1087 = vunpack.c.l.b16 %v1026
  %v1088 = vunpack.c.h.b16 %v1026
  %v1089 = vunpack.c.l.b16 %v1027
  %v1090 = vunpack.c.h.b16 %v1027
  %v1091 = vpack.c.b16 %v1055, %v1049
  %v1092 = vpack.c.b16 %v1056, %v1050
  %v1093 = vpack.c.b16 %v1057, %v1051
  %v1094 = vpack.c.b16 %v1058, %v1052
  %v1095 = vpack.c.b16 %v1059, %v1053
  %v1096 = vpack.c.b16 %v1060, %v1054
  %v1097 = vpack.c.b16 %v1067, %v1061
  %v1098 = vpack.c.b16 %v1068, %v1062
  %v1099 = vpack.c.b16 %v1069, %v1063
  %v1100 = vpack.c.b16 %v1070, %v1064
  %v1101 = vpack.c.b16 %v1071, %v1065
  %v1102 = vpack.c.b16 %v1072, %v1066
  %v1103 = vpack.c.b16 %v1079, %v1073
  %v1104 = vpack.c.b16 %v1080, %v1074
  %v1105 = vpack.c.b16 %v1081, %v1075
  %v1106 = vpack.c.b16 %v1082, %v1076
  %v1107 = vpack.c.b16 %v1083, %v1077
  %v1108 = vpack.c.b16 %v1084, %v1078
  %v1109 = vpack.c.b16 %v1085, %v1085
  %v1110 = vpack.c.b16 %v1086, %v1086
  %v1111 = vpack.c.b16 %v1087, %v1087
  %v1112 = vpack.c.b16 %v1088, %v1088
  %v1113 = vpack.c.b16 %v1089, %v1089
  %v1114 = vpack.c.b16 %v1090, %v1090
  %1139 = vmatpush.bf16.msra.mxu0 %v441
  %1140 = vmatpush.bf16.msra.mxu0 %v440
  %1141 = vmatpush.bf16.msra.mxu0 %v439
  %1142 = vmatpush.bf16.msra.mxu0 %v438
  %1143 = vmatpush.bf16.msra.mxu0 %v437
  %1144 = vmatpush.bf16.msra.mxu0 %v436
  %1145 = vmatpush.bf16.msra.mxu0 %v435
  %1146 = vmatpush.bf16.msra.mxu0 %v434
  %1147 = vmatmul.bf16.gmra.mxu0 %v1091
  %v1148 = vpop.f32.mrf.mxu0
  %v1149 = vadd.f32 0.0, %v1148
  %v1150 = vpop.f32.mrf.mxu0
  %v1151 = vadd.f32 0.0, %v1150
  %1152 = vmatmul.bf16.gmra.mxu0 %v1097
  %v1153 = vpop.f32.mrf.mxu0
  %v1154 = vadd.f32 0.0, %v1153
  %v1155 = vpop.f32.mrf.mxu0
  %v1156 = vadd.f32 0.0, %v1155
  %1157 = vmatmul.bf16.gmra.mxu0 %v1103
  %v1158 = vpop.f32.mrf.mxu0
  %v1159 = vadd.f32 0.0, %v1158
  %v1160 = vpop.f32.mrf.mxu0
  %v1161 = vadd.f32 0.0, %v1160
  %1162 = vmatmul.bf16.gmra.mxu0 %v1109
  %v1163 = vpop.f32.mrf.mxu0
  %v1164 = vadd.f32 0.0, %v1163
  %v1165 = vpop.f32.mrf.mxu0
  %1166 = vdwg.mxu0
  %1167 = vmatpush.bf16.msra.mxu0 %v449
  %1168 = vmatpush.bf16.msra.mxu0 %v448
  %1169 = vmatpush.bf16.msra.mxu0 %v447
  %1170 = vmatpush.bf16.msra.mxu0 %v446
  %1171 = vmatpush.bf16.msra.mxu0 %v445
  %1172 = vmatpush.bf16.msra.mxu0 %v444
  %1173 = vmatpush.bf16.msra.mxu0 %v443
  %1174 = vmatpush.bf16.msra.mxu0 %v442
  %1175 = vmatmul.bf16.gmra.mxu0 %v1092
  %v1176 = vpop.f32.mrf.mxu0
  %v1177 = vadd.f32 %v1149, %v1176
  %v1178 = vpop.f32.mrf.mxu0
  %v1179 = vadd.f32 %v1151, %v1178
  %1180 = vmatmul.bf16.gmra.mxu0 %v1098
  %v1181 = vpop.f32.mrf.mxu0
  %v1182 = vadd.f32 %v1154, %v1181
  %v1183 = vpop.f32.mrf.mxu0
  %v1184 = vadd.f32 %v1156, %v1183
  %1185 = vmatmul.bf16.gmra.mxu0 %v1104
  %v1186 = vpop.f32.mrf.mxu0
  %v1187 = vadd.f32 %v1159, %v1186
  %v1188 = vpop.f32.mrf.mxu0
  %v1189 = vadd.f32 %v1161, %v1188
  %1190 = vmatmul.bf16.gmra.mxu0 %v1110
  %v1191 = vpop.f32.mrf.mxu0
  %v1192 = vadd.f32 %v1164, %v1191
  %v1193 = vpop.f32.mrf.mxu0
  %1194 = vdwg.mxu0
  %1195 = vmatpush.bf16.msra.mxu0 %v457
  %1196 = vmatpush.bf16.msra.mxu0 %v456
  %1197 = vmatpush.bf16.msra.mxu0 %v455
  %1198 = vmatpush.bf16.msra.mxu0 %v454
  %1199 = vmatpush.bf16.msra.mxu0 %v453
  %1200 = vmatpush.bf16.msra.mxu0 %v452
  %1201 = vmatpush.bf16.msra.mxu0 %v451
  %1202 = vmatpush.bf16.msra.mxu0 %v450
  %1203 = vmatmul.bf16.gmra.mxu0 %v1093
  %v1204 = vpop.f32.mrf.mxu0
  %v1205 = vadd.f32 %v1177, %v1204
  %v1206 = vpop.f32.mrf.mxu0
  %v1207 = vadd.f32 %v1179, %v1206
  %1208 = vmatmul.bf16.gmra.mxu0 %v1099
  %v1209 = vpop.f32.mrf.mxu0
  %v1210 = vadd.f32 %v1182, %v1209
  %v1211 = vpop.f32.mrf.mxu0
  %v1212 = vadd.f32 %v1184, %v1211
  %1213 = vmatmul.bf16.gmra.mxu0 %v1105
  %v1214 = vpop.f32.mrf.mxu0
  %v1215 = vadd.f32 %v1187, %v1214
  %v1216 = vpop.f32.mrf.mxu0
  %v1217 = vadd.f32 %v1189, %v1216
  %1218 = vmatmul.bf16.gmra.mxu0 %v1111
  %v1219 = vpop.f32.mrf.mxu0
  %v1220 = vadd.f32 %v1192, %v1219
  %v1221 = vpop.f32.mrf.mxu0
  %1222 = vdwg.mxu0
  %1223 = vmatpush.bf16.msra.mxu0 %v465
  %1224 = vmatpush.bf16.msra.mxu0 %v464
  %1225 = vmatpush.bf16.msra.mxu0 %v463
  %1226 = vmatpush.bf16.msra.mxu0 %v462
  %1227 = vmatpush.bf16.msra.mxu0 %v461
  %1228 = vmatpush.bf16.msra.mxu0 %v460
  %1229 = vmatpush.bf16.msra.mxu0 %v459
  %1230 = vmatpush.bf16.msra.mxu0 %v458
  %1231 = vmatmul.bf16.gmra.mxu0 %v1094
  %v1232 = vpop.f32.mrf.mxu0
  %v1233 = vadd.f32 %v1205, %v1232
  %v1234 = vpop.f32.mrf.mxu0
  %v1235 = vadd.f32 %v1207, %v1234
  %1236 = vmatmul.bf16.gmra.mxu0 %v1100
  %v1237 = vpop.f32.mrf.mxu0
  %v1238 = vadd.f32 %v1210, %v1237
  %v1239 = vpop.f32.mrf.mxu0
  %v1240 = vadd.f32 %v1212, %v1239
  %1241 = vmatmul.bf16.gmra.mxu0 %v1106
  %v1242 = vpop.f32.mrf.mxu0
  %v1243 = vadd.f32 %v1215, %v1242
  %v1244 = vpop.f32.mrf.mxu0
  %v1245 = vadd.f32 %v1217, %v1244
  %1246 = vmatmul.bf16.gmra.mxu0 %v1112
  %v1247 = vpop.f32.mrf.mxu0
  %v1248 = vadd.f32 %v1220, %v1247
  %v1249 = vpop.f32.mrf.mxu0
  %1250 = vdwg.mxu0
  %1251 = vmatpush.bf16.msra.mxu0 %v473
  %1252 = vmatpush.bf16.msra.mxu0 %v472
  %1253 = vmatpush.bf16.msra.mxu0 %v471
  %1254 = vmatpush.bf16.msra.mxu0 %v470
  %1255 = vmatpush.bf16.msra.mxu0 %v469
  %1256 = vmatpush.bf16.msra.mxu0 %v468
  %1257 = vmatpush.bf16.msra.mxu0 %v467
  %1258 = vmatpush.bf16.msra.mxu0 %v466
  %1259 = vmatmul.bf16.gmra.mxu0 %v1095
  %v1260 = vpop.f32.mrf.mxu0
  %v1261 = vadd.f32 %v1233, %v1260
  %v1262 = vpop.f32.mrf.mxu0
  %v1263 = vadd.f32 %v1235, %v1262
  %1264 = vmatmul.bf16.gmra.mxu0 %v1101
  %v1265 = vpop.f32.mrf.mxu0
  %v1266 = vadd.f32 %v1238, %v1265
  %v1267 = vpop.f32.mrf.mxu0
  %v1268 = vadd.f32 %v1240, %v1267
  %1269 = vmatmul.bf16.gmra.mxu0 %v1107
  %v1270 = vpop.f32.mrf.mxu0
  %v1271 = vadd.f32 %v1243, %v1270
  %v1272 = vpop.f32.mrf.mxu0
  %v1273 = vadd.f32 %v1245, %v1272
  %1274 = vmatmul.bf16.gmra.mxu0 %v1113
  %v1275 = vpop.f32.mrf.mxu0
  %v1276 = vadd.f32 %v1248, %v1275
  %v1277 = vpop.f32.mrf.mxu0
  %1278 = vdwg.mxu0
  %1279 = vmatpush.bf16.msra.mxu0 %v481
  %1280 = vmatpush.bf16.msra.mxu0 %v480
  %1281 = vmatpush.bf16.msra.mxu0 %v479
  %1282 = vmatpush.bf16.msra.mxu0 %v478
  %1283 = vmatpush.bf16.msra.mxu0 %v477
  %1284 = vmatpush.bf16.msra.mxu0 %v476
  %1285 = vmatpush.bf16.msra.mxu0 %v475
  %1286 = vmatpush.bf16.msra.mxu0 %v474
  %1287 = vmatmul.bf16.gmra.mxu0 %v1096
  %v1288 = vpop.f32.mrf.mxu0
  %v1289 = vadd.f32 %v1261, %v1288
  %v1290 = vpop.f32.mrf.mxu0
  %v1291 = vadd.f32 %v1263, %v1290
  %1292 = vmatmul.bf16.gmra.mxu0 %v1102
  %v1293 = vpop.f32.mrf.mxu0
  %v1294 = vadd.f32 %v1266, %v1293
  %v1295 = vpop.f32.mrf.mxu0
  %v1296 = vadd.f32 %v1268, %v1295
  %1297 = vmatmul.bf16.gmra.mxu0 %v1108
  %v1298 = vpop.f32.mrf.mxu0
  %v1299 = vadd.f32 %v1271, %v1298
  %v1300 = vpop.f32.mrf.mxu0
  %v1301 = vadd.f32 %v1273, %v1300
  %1302 = vmatmul.bf16.gmra.mxu0 %v1114
  %v1303 = vpop.f32.mrf.mxu0
  %v1304 = vadd.f32 %v1276, %v1303
  %v1305 = vpop.f32.mrf.mxu0
  %1306 = vdwg.mxu0
  %v1307 = vmax.f32 %v999, %v1289
  %v1308 = vmax.f32 %v1000, %v1291
  %v1309 = vmax.f32 %v1001, %v1294
  %v1310 = vmax.f32 %v1002, %v1296
  %v1311 = vmax.f32 %v1003, %v1299
  %v1312 = vmax.f32 %v1004, %v1301
  %v1313 = vmax.f32 %v1005, %v1304
  %s1314 = scalar_lea.vmem %s0, 504
  %v1315 = vld [vmem:[%s1314] sm:$0xff]
  %v1316 = vld [vmem:[%s1314 + $0x8] sm:$0xff]
  %v1317 = vld [vmem:[%s1314 + $0x10] sm:$0xff]
  %v1318 = vld [vmem:[%s1314 + $0x18] sm:$0xff]
  %v1319 = vld [vmem:[%s1314 + $0x20] sm:$0xff]
  %v1320 = vld [vmem:[%s1314 + $0x28] sm:$0xff]
  %v1321 = vld [vmem:[%s1314 + $0x30] sm:$0xff]
  %v1322 = vld [vmem:[%s1314 + $0x38] sm:$0xff]
  %v1323 = vld [vmem:[%s1314 + $0x40] sm:$0xff]
  %v1324 = vld [vmem:[%s1314 + $0x48] sm:$0xff]
  %v1325 = vld [vmem:[%s1314 + $0x50] sm:$0xff]
  %v1326 = vld [vmem:[%s1314 + $0x58] sm:$0xff]
  %v1327 = vld [vmem:[%s1314 + $0x60] sm:$0xff]
  %v1328 = vld [vmem:[%s1314 + $0x68] sm:$0xff]
  %v1329 = vld [vmem:[%s1314 + $0x70] sm:$0xff]
  %v1330 = vld [vmem:[%s1314 + $0x78] sm:$0xff]
  %v1331 = vld [vmem:[%s1314 + $0x80] sm:$0xff]
  %v1332 = vld [vmem:[%s1314 + $0x88] sm:$0xff]
  %v1333 = vld [vmem:[%s1314 + $0x90] sm:$0x11]
  %v1334 = vld [vmem:[%s1314 + $0x98] sm:$0x11]
  %v1335 = vld [vmem:[%s1314 + $0xa0] sm:$0x11]
  %v1357 = vunpack.c.l.b16 %v1315
  %v1358 = vunpack.c.h.b16 %v1315
  %v1359 = vunpack.c.l.b16 %v1316
  %v1360 = vunpack.c.h.b16 %v1316
  %v1361 = vunpack.c.l.b16 %v1317
  %v1362 = vunpack.c.h.b16 %v1317
  %v1363 = vunpack.c.l.b16 %v1318
  %v1364 = vunpack.c.h.b16 %v1318
  %v1365 = vunpack.c.l.b16 %v1319
  %v1366 = vunpack.c.h.b16 %v1319
  %v1367 = vunpack.c.l.b16 %v1320
  %v1368 = vunpack.c.h.b16 %v1320
  %v1369 = vunpack.c.l.b16 %v1321
  %v1370 = vunpack.c.h.b16 %v1321
  %v1371 = vunpack.c.l.b16 %v1322
  %v1372 = vunpack.c.h.b16 %v1322
  %v1373 = vunpack.c.l.b16 %v1323
  %v1374 = vunpack.c.h.b16 %v1323
  %v1375 = vunpack.c.l.b16 %v1324
  %v1376 = vunpack.c.h.b16 %v1324
  %v1377 = vunpack.c.l.b16 %v1325
  %v1378 = vunpack.c.h.b16 %v1325
  %v1379 = vunpack.c.l.b16 %v1326
  %v1380 = vunpack.c.h.b16 %v1326
  %v1381 = vunpack.c.l.b16 %v1327
  %v1382 = vunpack.c.h.b16 %v1327
  %v1383 = vunpack.c.l.b16 %v1328
  %v1384 = vunpack.c.h.b16 %v1328
  %v1385 = vunpack.c.l.b16 %v1329
  %v1386 = vunpack.c.h.b16 %v1329
  %v1387 = vunpack.c.l.b16 %v1330
  %v1388 = vunpack.c.h.b16 %v1330
  %v1389 = vunpack.c.l.b16 %v1331
  %v1390 = vunpack.c.h.b16 %v1331
  %v1391 = vunpack.c.l.b16 %v1332
  %v1392 = vunpack.c.h.b16 %v1332
  %v1393 = vunpack.c.l.b16 %v1333
  %v1394 = vunpack.c.h.b16 %v1333
  %v1395 = vunpack.c.l.b16 %v1334
  %v1396 = vunpack.c.h.b16 %v1334
  %v1397 = vunpack.c.l.b16 %v1335
  %v1398 = vunpack.c.h.b16 %v1335
  %v1399 = vpack.c.b16 %v1363, %v1357
  %v1400 = vpack.c.b16 %v1364, %v1358
  %v1401 = vpack.c.b16 %v1365, %v1359
  %v1402 = vpack.c.b16 %v1366, %v1360
  %v1403 = vpack.c.b16 %v1367, %v1361
  %v1404 = vpack.c.b16 %v1368, %v1362
  %v1405 = vpack.c.b16 %v1375, %v1369
  %v1406 = vpack.c.b16 %v1376, %v1370
  %v1407 = vpack.c.b16 %v1377, %v1371
  %v1408 = vpack.c.b16 %v1378, %v1372
  %v1409 = vpack.c.b16 %v1379, %v1373
  %v1410 = vpack.c.b16 %v1380, %v1374
  %v1411 = vpack.c.b16 %v1387, %v1381
  %v1412 = vpack.c.b16 %v1388, %v1382
  %v1413 = vpack.c.b16 %v1389, %v1383
  %v1414 = vpack.c.b16 %v1390, %v1384
  %v1415 = vpack.c.b16 %v1391, %v1385
  %v1416 = vpack.c.b16 %v1392, %v1386
  %v1417 = vpack.c.b16 %v1393, %v1393
  %v1418 = vpack.c.b16 %v1394, %v1394
  %v1419 = vpack.c.b16 %v1395, %v1395
  %v1420 = vpack.c.b16 %v1396, %v1396
  %v1421 = vpack.c.b16 %v1397, %v1397
  %v1422 = vpack.c.b16 %v1398, %v1398
  %1447 = vmatpush.bf16.msra.mxu0 %v441
  %1448 = vmatpush.bf16.msra.mxu0 %v440
  %1449 = vmatpush.bf16.msra.mxu0 %v439
  %1450 = vmatpush.bf16.msra.mxu0 %v438
  %1451 = vmatpush.bf16.msra.mxu0 %v437
  %1452 = vmatpush.bf16.msra.mxu0 %v436
  %1453 = vmatpush.bf16.msra.mxu0 %v435
  %1454 = vmatpush.bf16.msra.mxu0 %v434
  %1455 = vmatmul.bf16.gmra.mxu0 %v1399
  %v1456 = vpop.f32.mrf.mxu0
  %v1457 = vadd.f32 0.0, %v1456
  %v1458 = vpop.f32.mrf.mxu0
  %v1459 = vadd.f32 0.0, %v1458
  %1460 = vmatmul.bf16.gmra.mxu0 %v1405
  %v1461 = vpop.f32.mrf.mxu0
  %v1462 = vadd.f32 0.0, %v1461
  %v1463 = vpop.f32.mrf.mxu0
  %v1464 = vadd.f32 0.0, %v1463
  %1465 = vmatmul.bf16.gmra.mxu0 %v1411
  %v1466 = vpop.f32.mrf.mxu0
  %v1467 = vadd.f32 0.0, %v1466
  %v1468 = vpop.f32.mrf.mxu0
  %v1469 = vadd.f32 0.0, %v1468
  %1470 = vmatmul.bf16.gmra.mxu0 %v1417
  %v1471 = vpop.f32.mrf.mxu0
  %v1472 = vadd.f32 0.0, %v1471
  %v1473 = vpop.f32.mrf.mxu0
  %1474 = vdwg.mxu0
  %1475 = vmatpush.bf16.msra.mxu0 %v449
  %1476 = vmatpush.bf16.msra.mxu0 %v448
  %1477 = vmatpush.bf16.msra.mxu0 %v447
  %1478 = vmatpush.bf16.msra.mxu0 %v446
  %1479 = vmatpush.bf16.msra.mxu0 %v445
  %1480 = vmatpush.bf16.msra.mxu0 %v444
  %1481 = vmatpush.bf16.msra.mxu0 %v443
  %1482 = vmatpush.bf16.msra.mxu0 %v442
  %1483 = vmatmul.bf16.gmra.mxu0 %v1400
  %v1484 = vpop.f32.mrf.mxu0
  %v1485 = vadd.f32 %v1457, %v1484
  %v1486 = vpop.f32.mrf.mxu0
  %v1487 = vadd.f32 %v1459, %v1486
  %1488 = vmatmul.bf16.gmra.mxu0 %v1406
  %v1489 = vpop.f32.mrf.mxu0
  %v1490 = vadd.f32 %v1462, %v1489
  %v1491 = vpop.f32.mrf.mxu0
  %v1492 = vadd.f32 %v1464, %v1491
  %1493 = vmatmul.bf16.gmra.mxu0 %v1412
  %v1494 = vpop.f32.mrf.mxu0
  %v1495 = vadd.f32 %v1467, %v1494
  %v1496 = vpop.f32.mrf.mxu0
  %v1497 = vadd.f32 %v1469, %v1496
  %1498 = vmatmul.bf16.gmra.mxu0 %v1418
  %v1499 = vpop.f32.mrf.mxu0
  %v1500 = vadd.f32 %v1472, %v1499
  %v1501 = vpop.f32.mrf.mxu0
  %1502 = vdwg.mxu0
  %1503 = vmatpush.bf16.msra.mxu0 %v457
  %1504 = vmatpush.bf16.msra.mxu0 %v456
  %1505 = vmatpush.bf16.msra.mxu0 %v455
  %1506 = vmatpush.bf16.msra.mxu0 %v454
  %1507 = vmatpush.bf16.msra.mxu0 %v453
  %1508 = vmatpush.bf16.msra.mxu0 %v452
  %1509 = vmatpush.bf16.msra.mxu0 %v451
  %1510 = vmatpush.bf16.msra.mxu0 %v450
  %1511 = vmatmul.bf16.gmra.mxu0 %v1401
  %v1512 = vpop.f32.mrf.mxu0
  %v1513 = vadd.f32 %v1485, %v1512
  %v1514 = vpop.f32.mrf.mxu0
  %v1515 = vadd.f32 %v1487, %v1514
  %1516 = vmatmul.bf16.gmra.mxu0 %v1407
  %v1517 = vpop.f32.mrf.mxu0
  %v1518 = vadd.f32 %v1490, %v1517
  %v1519 = vpop.f32.mrf.mxu0
  %v1520 = vadd.f32 %v1492, %v1519
  %1521 = vmatmul.bf16.gmra.mxu0 %v1413
  %v1522 = vpop.f32.mrf.mxu0
  %v1523 = vadd.f32 %v1495, %v1522
  %v1524 = vpop.f32.mrf.mxu0
  %v1525 = vadd.f32 %v1497, %v1524
  %1526 = vmatmul.bf16.gmra.mxu0 %v1419
  %v1527 = vpop.f32.mrf.mxu0
  %v1528 = vadd.f32 %v1500, %v1527
  %v1529 = vpop.f32.mrf.mxu0
  %1530 = vdwg.mxu0
  %1531 = vmatpush.bf16.msra.mxu0 %v465
  %1532 = vmatpush.bf16.msra.mxu0 %v464
  %1533 = vmatpush.bf16.msra.mxu0 %v463
  %1534 = vmatpush.bf16.msra.mxu0 %v462
  %1535 = vmatpush.bf16.msra.mxu0 %v461
  %1536 = vmatpush.bf16.msra.mxu0 %v460
  %1537 = vmatpush.bf16.msra.mxu0 %v459
  %1538 = vmatpush.bf16.msra.mxu0 %v458
  %1539 = vmatmul.bf16.gmra.mxu0 %v1402
  %v1540 = vpop.f32.mrf.mxu0
  %v1541 = vadd.f32 %v1513, %v1540
  %v1542 = vpop.f32.mrf.mxu0
  %v1543 = vadd.f32 %v1515, %v1542
  %1544 = vmatmul.bf16.gmra.mxu0 %v1408
  %v1545 = vpop.f32.mrf.mxu0
  %v1546 = vadd.f32 %v1518, %v1545
  %v1547 = vpop.f32.mrf.mxu0
  %v1548 = vadd.f32 %v1520, %v1547
  %1549 = vmatmul.bf16.gmra.mxu0 %v1414
  %v1550 = vpop.f32.mrf.mxu0
  %v1551 = vadd.f32 %v1523, %v1550
  %v1552 = vpop.f32.mrf.mxu0
  %v1553 = vadd.f32 %v1525, %v1552
  %1554 = vmatmul.bf16.gmra.mxu0 %v1420
  %v1555 = vpop.f32.mrf.mxu0
  %v1556 = vadd.f32 %v1528, %v1555
  %v1557 = vpop.f32.mrf.mxu0
  %1558 = vdwg.mxu0
  %1559 = vmatpush.bf16.msra.mxu0 %v473
  %1560 = vmatpush.bf16.msra.mxu0 %v472
  %1561 = vmatpush.bf16.msra.mxu0 %v471
  %1562 = vmatpush.bf16.msra.mxu0 %v470
  %1563 = vmatpush.bf16.msra.mxu0 %v469
  %1564 = vmatpush.bf16.msra.mxu0 %v468
  %1565 = vmatpush.bf16.msra.mxu0 %v467
  %1566 = vmatpush.bf16.msra.mxu0 %v466
  %1567 = vmatmul.bf16.gmra.mxu0 %v1403
  %v1568 = vpop.f32.mrf.mxu0
  %v1569 = vadd.f32 %v1541, %v1568
  %v1570 = vpop.f32.mrf.mxu0
  %v1571 = vadd.f32 %v1543, %v1570
  %1572 = vmatmul.bf16.gmra.mxu0 %v1409
  %v1573 = vpop.f32.mrf.mxu0
  %v1574 = vadd.f32 %v1546, %v1573
  %v1575 = vpop.f32.mrf.mxu0
  %v1576 = vadd.f32 %v1548, %v1575
  %1577 = vmatmul.bf16.gmra.mxu0 %v1415
  %v1578 = vpop.f32.mrf.mxu0
  %v1579 = vadd.f32 %v1551, %v1578
  %v1580 = vpop.f32.mrf.mxu0
  %v1581 = vadd.f32 %v1553, %v1580
  %1582 = vmatmul.bf16.gmra.mxu0 %v1421
  %v1583 = vpop.f32.mrf.mxu0
  %v1584 = vadd.f32 %v1556, %v1583
  %v1585 = vpop.f32.mrf.mxu0
  %1586 = vdwg.mxu0
  %1587 = vmatpush.bf16.msra.mxu0 %v481
  %1588 = vmatpush.bf16.msra.mxu0 %v480
  %1589 = vmatpush.bf16.msra.mxu0 %v479
  %1590 = vmatpush.bf16.msra.mxu0 %v478
  %1591 = vmatpush.bf16.msra.mxu0 %v477
  %1592 = vmatpush.bf16.msra.mxu0 %v476
  %1593 = vmatpush.bf16.msra.mxu0 %v475
  %1594 = vmatpush.bf16.msra.mxu0 %v474
  %1595 = vmatmul.bf16.gmra.mxu0 %v1404
  %v1596 = vpop.f32.mrf.mxu0
  %v1597 = vadd.f32 %v1569, %v1596
  %v1598 = vpop.f32.mrf.mxu0
  %v1599 = vadd.f32 %v1571, %v1598
  %1600 = vmatmul.bf16.gmra.mxu0 %v1410
  %v1601 = vpop.f32.mrf.mxu0
  %v1602 = vadd.f32 %v1574, %v1601
  %v1603 = vpop.f32.mrf.mxu0
  %v1604 = vadd.f32 %v1576, %v1603
  %1605 = vmatmul.bf16.gmra.mxu0 %v1416
  %v1606 = vpop.f32.mrf.mxu0
  %v1607 = vadd.f32 %v1579, %v1606
  %v1608 = vpop.f32.mrf.mxu0
  %v1609 = vadd.f32 %v1581, %v1608
  %1610 = vmatmul.bf16.gmra.mxu0 %v1422
  %v1611 = vpop.f32.mrf.mxu0
  %v1612 = vadd.f32 %v1584, %v1611
  %v1613 = vpop.f32.mrf.mxu0
  %1614 = vdwg.mxu0
  %v1615 = vmax.f32 %v1307, %v1597
  %v1616 = vmax.f32 %v1308, %v1599
  %v1617 = vmax.f32 %v1309, %v1602
  %v1618 = vmax.f32 %v1310, %v1604
  %v1619 = vmax.f32 %v1311, %v1607
  %v1620 = vmax.f32 %v1312, %v1609
  %v1621 = vmax.f32 %v1313, %v1612
  %v1622 = vld [vmem:[%s2] sm:$0x1]
  %v1624 = vperm.slane %v1622, 0
  %v1626 = vadd.f32 %v1615, %v1624
  %v1627 = vadd.f32 %v1616, %v1624
  %v1628 = vadd.f32 %v1617, %v1624
  %v1629 = vadd.f32 %v1618, %v1624
  %v1630 = vadd.f32 %v1619, %v1624
  %v1631 = vadd.f32 %v1620, %v1624
  %v1632 = vadd.f32 %v1621, %v1624
  %v1633 = vtanh.pop %v1626
  %v1634 = vtanh.pop %v1627
  %v1635 = vtanh.pop %v1628
  %v1636 = vtanh.pop %v1629
  %v1637 = vtanh.pop %v1630
  %v1638 = vtanh.pop %v1631
  %v1639 = vtanh.pop %v1632
  %v1640 = vpack.c.bf16 %v1633, %v1633
  %v1641 = vpack.c.bf16 %v1634, %v1634
  %v1642 = vpack.c.bf16 %v1635, %v1635
  %v1643 = vpack.c.bf16 %v1636, %v1636
  %v1644 = vpack.c.bf16 %v1637, %v1637
  %v1645 = vpack.c.bf16 %v1638, %v1638
  %v1646 = vpack.c.bf16 %v1639, %v1639
  %1647 = vst [vmem:[%s3] sm:$0xf] %v1640
  %1648 = vst [vmem:[%s3 + $0x4] sm:$0xf] %v1641
  %1649 = vst [vmem:[%s3 + $0x8] sm:$0xf] %v1642
  %1650 = vst [vmem:[%s3 + $0xc] sm:$0xf] %v1643
  %1651 = vst [vmem:[%s3 + $0x10] sm:$0xf] %v1644
  %1652 = vst [vmem:[%s3 + $0x14] sm:$0xf] %v1645
  %1653 = vst [vmem:[%s3 + $0x18] sm:$0x1] %v1646
  // Predicated region
  $region14: #{lenet5b_forward.4} parent=0 // pred_check
    _
  $region15: #{lenet5b_forward.4} parent=0 // pred_check_branch
    %1655 = sbr.rel (0) target = $region17
  $region16: #{lenet5b_forward.4} parent=0 // pred_region
    _
  $region17: #{lenet5b_forward.4} parent=0 // pred_fallthru
    _
  // Predicated region
  $region18: #{lenet5b_forward.4} parent=0 // pred_check
    _
  $region19: #{lenet5b_forward.4} parent=0 // pred_check_branch
    %1657 = sbr.rel (0) target = $region21
  $region20: #{lenet5b_forward.4} parent=0 // pred_region
    _
  $region21: #{lenet5b_forward.4} parent=0 // pred_fallthru
    _

// kernel: lenet5b_forward.5
$region0: #{lenet5b_forward.5}
  #allocation0 [shape = 'u32[]', space=smem, size = 0x4, offset = 0x4, fixed_abs, tag = 'smem constant byte address 0x4 - core index']
  #allocation1 [shape = 'u32[72,128]{1,0:T(1,128)}', space=vmem, size = 0x9000, scoped, tag = 'internal scratch']
  %s0 = inlined_call_operand.vmem [shape: bf16[2,1280], index: 0, kind: input, shape index: {}]
  %s1 = inlined_call_operand.vmem [shape: bf16[1280,640], index: 1, kind: input, shape index: {}]
  %s2 = inlined_call_operand.vmem [shape: f32[1,640], index: 2, kind: input, shape index: {}]
  %s3 = inlined_call_operand.vmem [shape: bf16[640,256], index: 3, kind: input, shape index: {}]
  %s4 = inlined_call_operand.vmem [shape: f32[1,256], index: 4, kind: input, shape index: {}]
  %s5 = inlined_call_operand.vmem [shape: bf16[256,128], index: 5, kind: input, shape index: {}]
  %s6 = inlined_call_operand.vmem [shape: f32[1,128], index: 6, kind: input, shape index: {}]
  %s7 = inlined_call_operand.vmem [shape: bf16[128,128], index: 7, kind: input, shape index: {}]
  %s8 = inlined_call_operand.vmem [shape: f32[1,128], index: 8, kind: input, shape index: {}]
  %s9 = inlined_call_operand.hbm [shape: f32[2,128], index: 9, kind: output, shape index: {}]
  %s10 = sld [smem:[#allocation0]]
  $region46: #{lenet5b_forward.5} parent=0
    _
  %s12 = ssub.s32 1, %s10
  %s13 = scalar_select 0, %s12, %s10
  $region1: #{lenet5b_forward.5} parent=0
    #allocation2 [shape = 'u8[1024]{0}', space=vmem, size = 0x400, scoped, tag = 'output window, operand 0, single buffered']
    #allocation3 [shape = 's32[1]{0}', space=sflag, size = 0x4, scoped, tag = 'scoped memory for lenet5b_forward.5']
    %14 = vsyncpa [#allocation3], 0
    // Predicated region
    $region2: #{lenet5b_forward.5} parent=1 // pred_check
      _
    $region3: #{lenet5b_forward.5} parent=1 // pred_check_branch
      %16 = sbr.rel (0) target = $region5
    $region4: #{lenet5b_forward.5} parent=1 // pred_region
      _
    $region5: #{lenet5b_forward.5} parent=1 // pred_fallthru
      _
    // Predicated region
    $region6: #{lenet5b_forward.5} parent=1 // pred_check
      _
    $region7: #{lenet5b_forward.5} parent=1 // pred_check_branch
      %18 = sbr.rel (0) target = $region9
    $region8: #{lenet5b_forward.5} parent=1 // pred_region
      _
    $region9: #{lenet5b_forward.5} parent=1 // pred_fallthru
      _
    // Predicated region
    $region10: #{lenet5b_forward.5} parent=1 // pred_check
      _
    $region11: #{lenet5b_forward.5} parent=1 // pred_check_branch
      %20 = sbr.rel (0) target = $region13
    $region12: #{lenet5b_forward.5} parent=1 // pred_region
      _
    $region13: #{lenet5b_forward.5} parent=1 // pred_fallthru
      _
    // Predicated region
    $region14: #{lenet5b_forward.5} parent=1 // pred_check
      _
    $region15: #{lenet5b_forward.5} parent=1 // pred_check_branch
      %22 = sbr.rel (0) target = $region17
    $region16: #{lenet5b_forward.5} parent=1 // pred_region
      _
    $region17: #{lenet5b_forward.5} parent=1 // pred_fallthru
      _
    // Predicated region
    $region18: #{lenet5b_forward.5} parent=1 // pred_check
      _
    $region19: #{lenet5b_forward.5} parent=1 // pred_check_branch
      %24 = sbr.rel (0) target = $region21
    $region20: #{lenet5b_forward.5} parent=1 // pred_region
      _
    $region21: #{lenet5b_forward.5} parent=1 // pred_fallthru
      _
    // Predicated region
    $region22: #{lenet5b_forward.5} parent=1 // pred_check
      _
    $region23: #{lenet5b_forward.5} parent=1 // pred_check_branch
      %26 = sbr.rel (0) target = $region25
    $region24: #{lenet5b_forward.5} parent=1 // pred_region
      _
    $region25: #{lenet5b_forward.5} parent=1 // pred_fallthru
      _
    // Predicated region
    $region26: #{lenet5b_forward.5} parent=1 // pred_check
      _
    $region27: #{lenet5b_forward.5} parent=1 // pred_check_branch
      %28 = sbr.rel (0) target = $region29
    $region28: #{lenet5b_forward.5} parent=1 // pred_region
      _
    $region29: #{lenet5b_forward.5} parent=1 // pred_fallthru
      _
    // Predicated region
    $region30: #{lenet5b_forward.5} parent=1 // pred_check
      _
    $region31: #{lenet5b_forward.5} parent=1 // pred_check_branch
      %30 = sbr.rel (0) target = $region33
    $region32: #{lenet5b_forward.5} parent=1 // pred_region
      _
    $region33: #{lenet5b_forward.5} parent=1 // pred_fallthru
      _
    // Predicated region
    $region34: #{lenet5b_forward.5} parent=1 // pred_check
      _
    $region35: #{lenet5b_forward.5} parent=1 // pred_check_branch
      %32 = sbr.rel (0) target = $region37
    $region36: #{lenet5b_forward.5} parent=1 // pred_region
      _
    $region37: #{lenet5b_forward.5} parent=1 // pred_fallthru
      _
    %v33 = vld [vmem:[%s0] sm:$0xff]
    %v34 = vld [vmem:[%s0 + $0x8] sm:$0x3]
    %v35 = vld [vmem:[%s1] sm:$0xff]
    %v36 = vld [vmem:[%s1 + $0x8] sm:$0xff]
    %v37 = vld [vmem:[%s1 + $0x10] sm:$0xf]
    %v38 = vld [vmem:[%s1 + $0x14] sm:$0xff]
    %v39 = vld [vmem:[%s1 + $0x1c] sm:$0xff]
    %v40 = vld [vmem:[%s1 + $0x24] sm:$0xf]
    %v41 = vld [vmem:[%s1 + $0x28] sm:$0xff]
    %v42 = vld [vmem:[%s1 + $0x30] sm:$0xff]
    %v43 = vld [vmem:[%s1 + $0x38] sm:$0xf]
    %v44 = vld [vmem:[%s1 + $0x3c] sm:$0xff]
    %v45 = vld [vmem:[%s1 + $0x44] sm:$0xff]
    %v46 = vld [vmem:[%s1 + $0x4c] sm:$0xf]
    %v47 = vld [vmem:[%s1 + $0x50] sm:$0xff]
    %v48 = vld [vmem:[%s1 + $0x58] sm:$0xff]
    %v49 = vld [vmem:[%s1 + $0x60] sm:$0xf]
    %v50 = vld [vmem:[%s1 + $0x64] sm:$0xff]
    %v51 = vld [vmem:[%s1 + $0x6c] sm:$0xff]
    %v52 = vld [vmem:[%s1 + $0x74] sm:$0xf]
    %v53 = vld [vmem:[%s1 + $0x78] sm:$0xff]
    %v54 = vld [vmem:[%s1 + $0x80] sm:$0xff]
    %v55 = vld [vmem:[%s1 + $0x88] sm:$0xf]
    %v56 = vld [vmem:[%s1 + $0x8c] sm:$0xff]
    %v57 = vld [vmem:[%s1 + $0x94] sm:$0xff]
    %v58 = vld [vmem:[%s1 + $0x9c] sm:$0xf]
    %v59 = vld [vmem:[%s1 + $0xa0] sm:$0xff]
    %v60 = vld [vmem:[%s1 + $0xa8] sm:$0xff]
    %v61 = vld [vmem:[%s1 + $0xb0] sm:$0xf]
    %v62 = vld [vmem:[%s1 + $0xb4] sm:$0xff]
    %v63 = vld [vmem:[%s1 + $0xbc] sm:$0xff]
    %v64 = vld [vmem:[%s1 + $0xc4] sm:$0xf]
    %v65 = vld [vmem:[%s1 + $0xc8] sm:$0xff]
    %v66 = vld [vmem:[%s1 + $0xd0] sm:$0xff]
    %v67 = vld [vmem:[%s1 + $0xd8] sm:$0xf]
    %v68 = vld [vmem:[%s1 + $0xdc] sm:$0xff]
    %v69 = vld [vmem:[%s1 + $0xe4] sm:$0xff]
    %v70 = vld [vmem:[%s1 + $0xec] sm:$0xf]
    %v71 = vld [vmem:[%s1 + $0xf0] sm:$0xff]
    %v72 = vld [vmem:[%s1 + $0xf8] sm:$0xff]
    %v73 = vld [vmem:[%s1 + $0x100] sm:$0xf]
    %v74 = vld [vmem:[%s1 + $0x104] sm:$0xff]
    %v75 = vld [vmem:[%s1 + $0x10c] sm:$0xff]
    %v76 = vld [vmem:[%s1 + $0x114] sm:$0xf]
    %v77 = vld [vmem:[%s1 + $0x118] sm:$0xff]
    %v78 = vld [vmem:[%s1 + $0x120] sm:$0xff]
    %v79 = vld [vmem:[%s1 + $0x128] sm:$0xf]
    %v80 = vld [vmem:[%s1 + $0x12c] sm:$0xff]
    %v81 = vld [vmem:[%s1 + $0x134] sm:$0xff]
    %v82 = vld [vmem:[%s1 + $0x13c] sm:$0xf]
    %v83 = vld [vmem:[%s1 + $0x140] sm:$0xff]
    %v84 = vld [vmem:[%s1 + $0x148] sm:$0xff]
    %v85 = vld [vmem:[%s1 + $0x150] sm:$0xf]
    %v86 = vld [vmem:[%s1 + $0x154] sm:$0xff]
    %v87 = vld [vmem:[%s1 + $0x15c] sm:$0xff]
    %v88 = vld [vmem:[%s1 + $0x164] sm:$0xf]
    %v89 = vld [vmem:[%s1 + $0x168] sm:$0xff]
    %v90 = vld [vmem:[%s1 + $0x170] sm:$0xff]
    %v91 = vld [vmem:[%s1 + $0x178] sm:$0xf]
    %v92 = vld [vmem:[%s1 + $0x17c] sm:$0xff]
    %v93 = vld [vmem:[%s1 + $0x184] sm:$0xff]
    %v94 = vld [vmem:[%s1 + $0x18c] sm:$0xf]
    %v95 = vld [vmem:[%s1 + $0x190] sm:$0xff]
    %v96 = vld [vmem:[%s1 + $0x198] sm:$0xff]
    %v97 = vld [vmem:[%s1 + $0x1a0] sm:$0xf]
    %v98 = vld [vmem:[%s1 + $0x1a4] sm:$0xff]
    %v99 = vld [vmem:[%s1 + $0x1ac] sm:$0xff]
    %v100 = vld [vmem:[%s1 + $0x1b4] sm:$0xf]
    %v101 = vld [vmem:[%s1 + $0x1b8] sm:$0xff]
    %v102 = vld [vmem:[%s1 + $0x1c0] sm:$0xff]
    %v103 = vld [vmem:[%s1 + $0x1c8] sm:$0xf]
    %v104 = vld [vmem:[%s1 + $0x1cc] sm:$0xff]
    %v105 = vld [vmem:[%s1 + $0x1d4] sm:$0xff]
    %v106 = vld [vmem:[%s1 + $0x1dc] sm:$0xf]
    %v107 = vld [vmem:[%s1 + $0x1e0] sm:$0xff]
    %v108 = vld [vmem:[%s1 + $0x1e8] sm:$0xff]
    %v109 = vld [vmem:[%s1 + $0x1f0] sm:$0xf]
    %v110 = vld [vmem:[%s1 + $0x1f4] sm:$0xff]
    %v111 = vld [vmem:[%s1 + $0x1fc] sm:$0xff]
    %v112 = vld [vmem:[%s1 + $0x204] sm:$0xf]
    %v113 = vld [vmem:[%s1 + $0x208] sm:$0xff]
    %v114 = vld [vmem:[%s1 + $0x210] sm:$0xff]
    %v115 = vld [vmem:[%s1 + $0x218] sm:$0xf]
    %v116 = vld [vmem:[%s1 + $0x21c] sm:$0xff]
    %v117 = vld [vmem:[%s1 + $0x224] sm:$0xff]
    %v118 = vld [vmem:[%s1 + $0x22c] sm:$0xf]
    %v119 = vld [vmem:[%s1 + $0x230] sm:$0xff]
    %v120 = vld [vmem:[%s1 + $0x238] sm:$0xff]
    %v121 = vld [vmem:[%s1 + $0x240] sm:$0xf]
    %v122 = vld [vmem:[%s1 + $0x244] sm:$0xff]
    %v123 = vld [vmem:[%s1 + $0x24c] sm:$0xff]
    %v124 = vld [vmem:[%s1 + $0x254] sm:$0xf]
    %v125 = vld [vmem:[%s1 + $0x258] sm:$0xff]
    %v126 = vld [vmem:[%s1 + $0x260] sm:$0xff]
    %v127 = vld [vmem:[%s1 + $0x268] sm:$0xf]
    %v128 = vld [vmem:[%s1 + $0x26c] sm:$0xff]
    %v129 = vld [vmem:[%s1 + $0x274] sm:$0xff]
    %v130 = vld [vmem:[%s1 + $0x27c] sm:$0xf]
    %v131 = vld [vmem:[%s1 + $0x280] sm:$0xff]
    %v132 = vld [vmem:[%s1 + $0x288] sm:$0xff]
    %v133 = vld [vmem:[%s1 + $0x290] sm:$0xf]
    %v134 = vld [vmem:[%s1 + $0x294] sm:$0xff]
    %v135 = vld [vmem:[%s1 + $0x29c] sm:$0xff]
    %v136 = vld [vmem:[%s1 + $0x2a4] sm:$0xf]
    %v137 = vld [vmem:[%s1 + $0x2a8] sm:$0xff]
    %v138 = vld [vmem:[%s1 + $0x2b0] sm:$0xff]
    %v139 = vld [vmem:[%s1 + $0x2b8] sm:$0xf]
    %v140 = vld [vmem:[%s1 + $0x2bc] sm:$0xff]
    %v141 = vld [vmem:[%s1 + $0x2c4] sm:$0xff]
    %v142 = vld [vmem:[%s1 + $0x2cc] sm:$0xf]
    %v143 = vld [vmem:[%s1 + $0x2d0] sm:$0xff]
    %v144 = vld [vmem:[%s1 + $0x2d8] sm:$0xff]
    %v145 = vld [vmem:[%s1 + $0x2e0] sm:$0xf]
    %v146 = vld [vmem:[%s1 + $0x2e4] sm:$0xff]
    %v147 = vld [vmem:[%s1 + $0x2ec] sm:$0xff]
    %v148 = vld [vmem:[%s1 + $0x2f4] sm:$0xf]
    %v149 = vld [vmem:[%s1 + $0x2f8] sm:$0xff]
    %v150 = vld [vmem:[%s1 + $0x300] sm:$0xff]
    %v151 = vld [vmem:[%s1 + $0x308] sm:$0xf]
    %v152 = vld [vmem:[%s1 + $0x30c] sm:$0xff]
    %v153 = vld [vmem:[%s1 + $0x314] sm:$0xff]
    %v154 = vld [vmem:[%s1 + $0x31c] sm:$0xf]
    %v155 = vld [vmem:[%s1 + $0x320] sm:$0xff]
    %v156 = vld [vmem:[%s1 + $0x328] sm:$0xff]
    %v157 = vld [vmem:[%s1 + $0x330] sm:$0xf]
    %v158 = vld [vmem:[%s1 + $0x334] sm:$0xff]
    %v159 = vld [vmem:[%s1 + $0x33c] sm:$0xff]
    %v160 = vld [vmem:[%s1 + $0x344] sm:$0xf]
    %v161 = vld [vmem:[%s1 + $0x348] sm:$0xff]
    %v162 = vld [vmem:[%s1 + $0x350] sm:$0xff]
    %v163 = vld [vmem:[%s1 + $0x358] sm:$0xf]
    %v164 = vld [vmem:[%s1 + $0x35c] sm:$0xff]
    %v165 = vld [vmem:[%s1 + $0x364] sm:$0xff]
    %v166 = vld [vmem:[%s1 + $0x36c] sm:$0xf]
    %v167 = vld [vmem:[%s1 + $0x370] sm:$0xff]
    %v168 = vld [vmem:[%s1 + $0x378] sm:$0xff]
    %v169 = vld [vmem:[%s1 + $0x380] sm:$0xf]
    %v170 = vld [vmem:[%s1 + $0x384] sm:$0xff]
    %v171 = vld [vmem:[%s1 + $0x38c] sm:$0xff]
    %v172 = vld [vmem:[%s1 + $0x394] sm:$0xf]
    %v173 = vld [vmem:[%s1 + $0x398] sm:$0xff]
    %v174 = vld [vmem:[%s1 + $0x3a0] sm:$0xff]
    %v175 = vld [vmem:[%s1 + $0x3a8] sm:$0xf]
    %v176 = vld [vmem:[%s1 + $0x3ac] sm:$0xff]
    %v177 = vld [vmem:[%s1 + $0x3b4] sm:$0xff]
    %v178 = vld [vmem:[%s1 + $0x3bc] sm:$0xf]
    %v179 = vld [vmem:[%s1 + $0x3c0] sm:$0xff]
    %v180 = vld [vmem:[%s1 + $0x3c8] sm:$0xff]
    %v181 = vld [vmem:[%s1 + $0x3d0] sm:$0xf]
    %v182 = vld [vmem:[%s1 + $0x3d4] sm:$0xff]
    %v183 = vld [vmem:[%s1 + $0x3dc] sm:$0xff]
    %v184 = vld [vmem:[%s1 + $0x3e4] sm:$0xf]
    %v185 = vld [vmem:[%s1 + $0x3e8] sm:$0xff]
    %v186 = vld [vmem:[%s1 + $0x3f0] sm:$0xff]
    %v187 = vld [vmem:[%s1 + $0x3f8] sm:$0xf]
    %v188 = vld [vmem:[%s1 + $0x3fc] sm:$0xff]
    %v189 = vld [vmem:[%s1 + $0x404] sm:$0xff]
    %v190 = vld [vmem:[%s1 + $0x40c] sm:$0xf]
    %v191 = vld [vmem:[%s1 + $0x410] sm:$0xff]
    %v192 = vld [vmem:[%s1 + $0x418] sm:$0xff]
    %v193 = vld [vmem:[%s1 + $0x420] sm:$0xf]
    %v194 = vld [vmem:[%s1 + $0x424] sm:$0xff]
    %v195 = vld [vmem:[%s1 + $0x42c] sm:$0xff]
    %v196 = vld [vmem:[%s1 + $0x434] sm:$0xf]
    %v197 = vld [vmem:[%s1 + $0x438] sm:$0xff]
    %v198 = vld [vmem:[%s1 + $0x440] sm:$0xff]
    %v199 = vld [vmem:[%s1 + $0x448] sm:$0xf]
    %v200 = vld [vmem:[%s1 + $0x44c] sm:$0xff]
    %v201 = vld [vmem:[%s1 + $0x454] sm:$0xff]
    %v202 = vld [vmem:[%s1 + $0x45c] sm:$0xf]
    %v203 = vld [vmem:[%s1 + $0x460] sm:$0xff]
    %v204 = vld [vmem:[%s1 + $0x468] sm:$0xff]
    %v205 = vld [vmem:[%s1 + $0x470] sm:$0xf]
    %v206 = vld [vmem:[%s1 + $0x474] sm:$0xff]
    %v207 = vld [vmem:[%s1 + $0x47c] sm:$0xff]
    %v208 = vld [vmem:[%s1 + $0x484] sm:$0xf]
    %v209 = vld [vmem:[%s1 + $0x488] sm:$0xff]
    %v210 = vld [vmem:[%s1 + $0x490] sm:$0xff]
    %v211 = vld [vmem:[%s1 + $0x498] sm:$0xf]
    %v212 = vld [vmem:[%s1 + $0x49c] sm:$0xff]
    %v213 = vld [vmem:[%s1 + $0x4a4] sm:$0xff]
    %v214 = vld [vmem:[%s1 + $0x4ac] sm:$0xf]
    %v215 = vld [vmem:[%s1 + $0x4b0] sm:$0xff]
    %v216 = vld [vmem:[%s1 + $0x4b8] sm:$0xff]
    %v217 = vld [vmem:[%s1 + $0x4c0] sm:$0xf]
    %v218 = vld [vmem:[%s1 + $0x4c4] sm:$0xff]
    %v219 = vld [vmem:[%s1 + $0x4cc] sm:$0xff]
    %v220 = vld [vmem:[%s1 + $0x4d4] sm:$0xf]
    %v221 = vld [vmem:[%s1 + $0x4d8] sm:$0xff]
    %v222 = vld [vmem:[%s1 + $0x4e0] sm:$0xff]
    %v223 = vld [vmem:[%s1 + $0x4e8] sm:$0xf]
    %v224 = vld [vmem:[%s1 + $0x4ec] sm:$0xff]
    %v225 = vld [vmem:[%s1 + $0x4f4] sm:$0xff]
    %v226 = vld [vmem:[%s1 + $0x4fc] sm:$0xf]
    %v227 = vld [vmem:[%s1 + $0x500] sm:$0xff]
    %v228 = vld [vmem:[%s1 + $0x508] sm:$0xff]
    %v229 = vld [vmem:[%s1 + $0x510] sm:$0xf]
    %v230 = vld [vmem:[%s1 + $0x514] sm:$0xff]
    %v231 = vld [vmem:[%s1 + $0x51c] sm:$0xff]
    %v232 = vld [vmem:[%s1 + $0x524] sm:$0xf]
    %v233 = vld [vmem:[%s1 + $0x528] sm:$0xff]
    %v234 = vld [vmem:[%s1 + $0x530] sm:$0xff]
    %v235 = vld [vmem:[%s1 + $0x538] sm:$0xf]
    %v236 = vld [vmem:[%s1 + $0x53c] sm:$0xff]
    %v237 = vld [vmem:[%s1 + $0x544] sm:$0xff]
    %v238 = vld [vmem:[%s1 + $0x54c] sm:$0xf]
    %v239 = vld [vmem:[%s1 + $0x550] sm:$0xff]
    %v240 = vld [vmem:[%s1 + $0x558] sm:$0xff]
    %v241 = vld [vmem:[%s1 + $0x560] sm:$0xf]
    %v242 = vld [vmem:[%s1 + $0x564] sm:$0xff]
    %v243 = vld [vmem:[%s1 + $0x56c] sm:$0xff]
    %v244 = vld [vmem:[%s1 + $0x574] sm:$0xf]
    %v245 = vld [vmem:[%s1 + $0x578] sm:$0xff]
    %v246 = vld [vmem:[%s1 + $0x580] sm:$0xff]
    %v247 = vld [vmem:[%s1 + $0x588] sm:$0xf]
    %v248 = vld [vmem:[%s1 + $0x58c] sm:$0xff]
    %v249 = vld [vmem:[%s1 + $0x594] sm:$0xff]
    %v250 = vld [vmem:[%s1 + $0x59c] sm:$0xf]
    %v251 = vld [vmem:[%s1 + $0x5a0] sm:$0xff]
    %v252 = vld [vmem:[%s1 + $0x5a8] sm:$0xff]
    %v253 = vld [vmem:[%s1 + $0x5b0] sm:$0xf]
    %v254 = vld [vmem:[%s1 + $0x5b4] sm:$0xff]
    %v255 = vld [vmem:[%s1 + $0x5bc] sm:$0xff]
    %v256 = vld [vmem:[%s1 + $0x5c4] sm:$0xf]
    %v257 = vld [vmem:[%s1 + $0x5c8] sm:$0xff]
    %v258 = vld [vmem:[%s1 + $0x5d0] sm:$0xff]
    %v259 = vld [vmem:[%s1 + $0x5d8] sm:$0xf]
    %v260 = vld [vmem:[%s1 + $0x5dc] sm:$0xff]
    %v261 = vld [vmem:[%s1 + $0x5e4] sm:$0xff]
    %v262 = vld [vmem:[%s1 + $0x5ec] sm:$0xf]
    %v263 = vld [vmem:[%s1 + $0x5f0] sm:$0xff]
    %v264 = vld [vmem:[%s1 + $0x5f8] sm:$0xff]
    %v265 = vld [vmem:[%s1 + $0x600] sm:$0xf]
    %v266 = vld [vmem:[%s1 + $0x604] sm:$0xff]
    %v267 = vld [vmem:[%s1 + $0x60c] sm:$0xff]
    %v268 = vld [vmem:[%s1 + $0x614] sm:$0xf]
    %v269 = vld [vmem:[%s1 + $0x618] sm:$0xff]
    %v270 = vld [vmem:[%s1 + $0x620] sm:$0xff]
    %v271 = vld [vmem:[%s1 + $0x628] sm:$0xf]
    %v272 = vld [vmem:[%s1 + $0x62c] sm:$0xff]
    %v273 = vld [vmem:[%s1 + $0x634] sm:$0xff]
    %v274 = vld [vmem:[%s1 + $0x63c] sm:$0xf]
    %v275 = vld [vmem:[%s1 + $0x640] sm:$0xff]
    %v276 = vld [vmem:[%s1 + $0x648] sm:$0xff]
    %v277 = vld [vmem:[%s1 + $0x650] sm:$0xf]
    %v278 = vld [vmem:[%s1 + $0x654] sm:$0xff]
    %v279 = vld [vmem:[%s1 + $0x65c] sm:$0xff]
    %v280 = vld [vmem:[%s1 + $0x664] sm:$0xf]
    %v281 = vld [vmem:[%s1 + $0x668] sm:$0xff]
    %v282 = vld [vmem:[%s1 + $0x670] sm:$0xff]
    %v283 = vld [vmem:[%s1 + $0x678] sm:$0xf]
    %v284 = vld [vmem:[%s1 + $0x67c] sm:$0xff]
    %v285 = vld [vmem:[%s1 + $0x684] sm:$0xff]
    %v286 = vld [vmem:[%s1 + $0x68c] sm:$0xf]
    %v287 = vld [vmem:[%s1 + $0x690] sm:$0xff]
    %v288 = vld [vmem:[%s1 + $0x698] sm:$0xff]
    %v289 = vld [vmem:[%s1 + $0x6a0] sm:$0xf]
    %v290 = vld [vmem:[%s1 + $0x6a4] sm:$0xff]
    %v291 = vld [vmem:[%s1 + $0x6ac] sm:$0xff]
    %v292 = vld [vmem:[%s1 + $0x6b4] sm:$0xf]
    %v293 = vld [vmem:[%s1 + $0x6b8] sm:$0xff]
    %v294 = vld [vmem:[%s1 + $0x6c0] sm:$0xff]
    %v295 = vld [vmem:[%s1 + $0x6c8] sm:$0xf]
    %v296 = vld [vmem:[%s1 + $0x6cc] sm:$0xff]
    %v297 = vld [vmem:[%s1 + $0x6d4] sm:$0xff]
    %v298 = vld [vmem:[%s1 + $0x6dc] sm:$0xf]
    %v299 = vld [vmem:[%s1 + $0x6e0] sm:$0xff]
    %v300 = vld [vmem:[%s1 + $0x6e8] sm:$0xff]
    %v301 = vld [vmem:[%s1 + $0x6f0] sm:$0xf]
    %v302 = vld [vmem:[%s1 + $0x6f4] sm:$0xff]
    %v303 = vld [vmem:[%s1 + $0x6fc] sm:$0xff]
    %v304 = vld [vmem:[%s1 + $0x704] sm:$0xf]
    %v305 = vld [vmem:[%s1 + $0x708] sm:$0xff]
    %v306 = vld [vmem:[%s1 + $0x710] sm:$0xff]
    %v307 = vld [vmem:[%s1 + $0x718] sm:$0xf]
    %v308 = vld [vmem:[%s1 + $0x71c] sm:$0xff]
    %v309 = vld [vmem:[%s1 + $0x724] sm:$0xff]
    %v310 = vld [vmem:[%s1 + $0x72c] sm:$0xf]
    %v311 = vld [vmem:[%s1 + $0x730] sm:$0xff]
    %v312 = vld [vmem:[%s1 + $0x738] sm:$0xff]
    %v313 = vld [vmem:[%s1 + $0x740] sm:$0xf]
    %v314 = vld [vmem:[%s1 + $0x744] sm:$0xff]
    %v315 = vld [vmem:[%s1 + $0x74c] sm:$0xff]
    %v316 = vld [vmem:[%s1 + $0x754] sm:$0xf]
    %v317 = vld [vmem:[%s1 + $0x758] sm:$0xff]
    %v318 = vld [vmem:[%s1 + $0x760] sm:$0xff]
    %v319 = vld [vmem:[%s1 + $0x768] sm:$0xf]
    %v320 = vld [vmem:[%s1 + $0x76c] sm:$0xff]
    %v321 = vld [vmem:[%s1 + $0x774] sm:$0xff]
    %v322 = vld [vmem:[%s1 + $0x77c] sm:$0xf]
    %v323 = vld [vmem:[%s1 + $0x780] sm:$0xff]
    %v324 = vld [vmem:[%s1 + $0x788] sm:$0xff]
    %v325 = vld [vmem:[%s1 + $0x790] sm:$0xf]
    %v326 = vld [vmem:[%s1 + $0x794] sm:$0xff]
    %v327 = vld [vmem:[%s1 + $0x79c] sm:$0xff]
    %v328 = vld [vmem:[%s1 + $0x7a4] sm:$0xf]
    %v329 = vld [vmem:[%s1 + $0x7a8] sm:$0xff]
    %v330 = vld [vmem:[%s1 + $0x7b0] sm:$0xff]
    %v331 = vld [vmem:[%s1 + $0x7b8] sm:$0xf]
    %v332 = vld [vmem:[%s1 + $0x7bc] sm:$0xff]
    %v333 = vld [vmem:[%s1 + $0x7c4] sm:$0xff]
    %v334 = vld [vmem:[%s1 + $0x7cc] sm:$0xf]
    %v335 = vld [vmem:[%s1 + $0x7d0] sm:$0xff]
    %v336 = vld [vmem:[%s1 + $0x7d8] sm:$0xff]
    %v337 = vld [vmem:[%s1 + $0x7e0] sm:$0xf]
    %v338 = vld [vmem:[%s1 + $0x7e4] sm:$0xff]
    %v339 = vld [vmem:[%s1 + $0x7ec] sm:$0xff]
    %v340 = vld [vmem:[%s1 + $0x7f4] sm:$0xf]
    %v341 = vld [vmem:[%s1 + $0x7f8] sm:$0xff]
    %v342 = vld [vmem:[%s1 + $0x800] sm:$0xff]
    %v343 = vld [vmem:[%s1 + $0x808] sm:$0xf]
    %v344 = vld [vmem:[%s1 + $0x80c] sm:$0xff]
    %v345 = vld [vmem:[%s1 + $0x814] sm:$0xff]
    %v346 = vld [vmem:[%s1 + $0x81c] sm:$0xf]
    %v347 = vld [vmem:[%s1 + $0x820] sm:$0xff]
    %v348 = vld [vmem:[%s1 + $0x828] sm:$0xff]
    %v349 = vld [vmem:[%s1 + $0x830] sm:$0xf]
    %v350 = vld [vmem:[%s1 + $0x834] sm:$0xff]
    %v351 = vld [vmem:[%s1 + $0x83c] sm:$0xff]
    %v352 = vld [vmem:[%s1 + $0x844] sm:$0xf]
    %v353 = vld [vmem:[%s1 + $0x848] sm:$0xff]
    %v354 = vld [vmem:[%s1 + $0x850] sm:$0xff]
    %v355 = vld [vmem:[%s1 + $0x858] sm:$0xf]
    %v356 = vld [vmem:[%s1 + $0x85c] sm:$0xff]
    %v357 = vld [vmem:[%s1 + $0x864] sm:$0xff]
    %v358 = vld [vmem:[%s1 + $0x86c] sm:$0xf]
    %v359 = vld [vmem:[%s1 + $0x870] sm:$0xff]
    %v360 = vld [vmem:[%s1 + $0x878] sm:$0xff]
    %v361 = vld [vmem:[%s1 + $0x880] sm:$0xf]
    %v362 = vld [vmem:[%s1 + $0x884] sm:$0xff]
    %v363 = vld [vmem:[%s1 + $0x88c] sm:$0xff]
    %v364 = vld [vmem:[%s1 + $0x894] sm:$0xf]
    %v365 = vld [vmem:[%s1 + $0x898] sm:$0xff]
    %v366 = vld [vmem:[%s1 + $0x8a0] sm:$0xff]
    %v367 = vld [vmem:[%s1 + $0x8a8] sm:$0xf]
    %v368 = vld [vmem:[%s1 + $0x8ac] sm:$0xff]
    %v369 = vld [vmem:[%s1 + $0x8b4] sm:$0xff]
    %v370 = vld [vmem:[%s1 + $0x8bc] sm:$0xf]
    %v371 = vld [vmem:[%s1 + $0x8c0] sm:$0xff]
    %v372 = vld [vmem:[%s1 + $0x8c8] sm:$0xff]
    %v373 = vld [vmem:[%s1 + $0x8d0] sm:$0xf]
    %v374 = vld [vmem:[%s1 + $0x8d4] sm:$0xff]
    %v375 = vld [vmem:[%s1 + $0x8dc] sm:$0xff]
    %v376 = vld [vmem:[%s1 + $0x8e4] sm:$0xf]
    %v377 = vld [vmem:[%s1 + $0x8e8] sm:$0xff]
    %v378 = vld [vmem:[%s1 + $0x8f0] sm:$0xff]
    %v379 = vld [vmem:[%s1 + $0x8f8] sm:$0xf]
    %v380 = vld [vmem:[%s1 + $0x8fc] sm:$0xff]
    %v381 = vld [vmem:[%s1 + $0x904] sm:$0xff]
    %v382 = vld [vmem:[%s1 + $0x90c] sm:$0xf]
    %v383 = vld [vmem:[%s1 + $0x910] sm:$0xff]
    %v384 = vld [vmem:[%s1 + $0x918] sm:$0xff]
    %v385 = vld [vmem:[%s1 + $0x920] sm:$0xf]
    %v386 = vld [vmem:[%s1 + $0x924] sm:$0xff]
    %v387 = vld [vmem:[%s1 + $0x92c] sm:$0xff]
    %v388 = vld [vmem:[%s1 + $0x934] sm:$0xf]
    %v389 = vld [vmem:[%s1 + $0x938] sm:$0xff]
    %v390 = vld [vmem:[%s1 + $0x940] sm:$0xff]
    %v391 = vld [vmem:[%s1 + $0x948] sm:$0xf]
    %v392 = vld [vmem:[%s1 + $0x94c] sm:$0xff]
    %v393 = vld [vmem:[%s1 + $0x954] sm:$0xff]
    %v394 = vld [vmem:[%s1 + $0x95c] sm:$0xf]
    %v395 = vld [vmem:[%s1 + $0x960] sm:$0xff]
    %v396 = vld [vmem:[%s1 + $0x968] sm:$0xff]
    %v397 = vld [vmem:[%s1 + $0x970] sm:$0xf]
    %v398 = vld [vmem:[%s1 + $0x974] sm:$0xff]
    %v399 = vld [vmem:[%s1 + $0x97c] sm:$0xff]
    %v400 = vld [vmem:[%s1 + $0x984] sm:$0xf]
    %v401 = vld [vmem:[%s1 + $0x988] sm:$0xff]
    %v402 = vld [vmem:[%s1 + $0x990] sm:$0xff]
    %v403 = vld [vmem:[%s1 + $0x998] sm:$0xf]
    %v404 = vld [vmem:[%s1 + $0x99c] sm:$0xff]
    %v405 = vld [vmem:[%s1 + $0x9a4] sm:$0xff]
    %v406 = vld [vmem:[%s1 + $0x9ac] sm:$0xf]
    %v407 = vld [vmem:[%s1 + $0x9b0] sm:$0xff]
    %v408 = vld [vmem:[%s1 + $0x9b8] sm:$0xff]
    %v409 = vld [vmem:[%s1 + $0x9c0] sm:$0xf]
    %v410 = vld [vmem:[%s1 + $0x9c4] sm:$0xff]
    %v411 = vld [vmem:[%s1 + $0x9cc] sm:$0xff]
    %v412 = vld [vmem:[%s1 + $0x9d4] sm:$0xf]
    %v413 = vld [vmem:[%s1 + $0x9d8] sm:$0xff]
    %v414 = vld [vmem:[%s1 + $0x9e0] sm:$0xff]
    %v415 = vld [vmem:[%s1 + $0x9e8] sm:$0xf]
    %v416 = vld [vmem:[%s1 + $0x9ec] sm:$0xff]
    %v417 = vld [vmem:[%s1 + $0x9f4] sm:$0xff]
    %v418 = vld [vmem:[%s1 + $0x9fc] sm:$0xf]
    %v419 = vld [vmem:[%s1 + $0xa00] sm:$0xff]
    %v420 = vld [vmem:[%s1 + $0xa08] sm:$0xff]
    %v421 = vld [vmem:[%s1 + $0xa10] sm:$0xf]
    %v422 = vld [vmem:[%s1 + $0xa14] sm:$0xff]
    %v423 = vld [vmem:[%s1 + $0xa1c] sm:$0xff]
    %v424 = vld [vmem:[%s1 + $0xa24] sm:$0xf]
    %v425 = vld [vmem:[%s1 + $0xa28] sm:$0xff]
    %v426 = vld [vmem:[%s1 + $0xa30] sm:$0xff]
    %v427 = vld [vmem:[%s1 + $0xa38] sm:$0xf]
    %v428 = vld [vmem:[%s1 + $0xa3c] sm:$0xff]
    %v429 = vld [vmem:[%s1 + $0xa44] sm:$0xff]
    %v430 = vld [vmem:[%s1 + $0xa4c] sm:$0xf]
    %v431 = vld [vmem:[%s1 + $0xa50] sm:$0xff]
    %v432 = vld [vmem:[%s1 + $0xa58] sm:$0xff]
    %v433 = vld [vmem:[%s1 + $0xa60] sm:$0xf]
    %v434 = vld [vmem:[%s1 + $0xa64] sm:$0xff]
    %v435 = vld [vmem:[%s1 + $0xa6c] sm:$0xff]
    %v436 = vld [vmem:[%s1 + $0xa74] sm:$0xf]
    %v437 = vld [vmem:[%s1 + $0xa78] sm:$0xff]
    %v438 = vld [vmem:[%s1 + $0xa80] sm:$0xff]
    %v439 = vld [vmem:[%s1 + $0xa88] sm:$0xf]
    %v440 = vld [vmem:[%s1 + $0xa8c] sm:$0xff]
    %v441 = vld [vmem:[%s1 + $0xa94] sm:$0xff]
    %v442 = vld [vmem:[%s1 + $0xa9c] sm:$0xf]
    %v443 = vld [vmem:[%s1 + $0xaa0] sm:$0xff]
    %v444 = vld [vmem:[%s1 + $0xaa8] sm:$0xff]
    %v445 = vld [vmem:[%s1 + $0xab0] sm:$0xf]
    %v446 = vld [vmem:[%s1 + $0xab4] sm:$0xff]
    %v447 = vld [vmem:[%s1 + $0xabc] sm:$0xff]
    %v448 = vld [vmem:[%s1 + $0xac4] sm:$0xf]
    %v449 = vld [vmem:[%s1 + $0xac8] sm:$0xff]
    %v450 = vld [vmem:[%s1 + $0xad0] sm:$0xff]
    %v451 = vld [vmem:[%s1 + $0xad8] sm:$0xf]
    %v452 = vld [vmem:[%s1 + $0xadc] sm:$0xff]
    %v453 = vld [vmem:[%s1 + $0xae4] sm:$0xff]
    %v454 = vld [vmem:[%s1 + $0xaec] sm:$0xf]
    %v455 = vld [vmem:[%s1 + $0xaf0] sm:$0xff]
    %v456 = vld [vmem:[%s1 + $0xaf8] sm:$0xff]
    %v457 = vld [vmem:[%s1 + $0xb00] sm:$0xf]
    %v458 = vld [vmem:[%s1 + $0xb04] sm:$0xff]
    %v459 = vld [vmem:[%s1 + $0xb0c] sm:$0xff]
    %v460 = vld [vmem:[%s1 + $0xb14] sm:$0xf]
    %v461 = vld [vmem:[%s1 + $0xb18] sm:$0xff]
    %v462 = vld [vmem:[%s1 + $0xb20] sm:$0xff]
    %v463 = vld [vmem:[%s1 + $0xb28] sm:$0xf]
    %v464 = vld [vmem:[%s1 + $0xb2c] sm:$0xff]
    %v465 = vld [vmem:[%s1 + $0xb34] sm:$0xff]
    %v466 = vld [vmem:[%s1 + $0xb3c] sm:$0xf]
    %v467 = vld [vmem:[%s1 + $0xb40] sm:$0xff]
    %v468 = vld [vmem:[%s1 + $0xb48] sm:$0xff]
    %v469 = vld [vmem:[%s1 + $0xb50] sm:$0xf]
    %v470 = vld [vmem:[%s1 + $0xb54] sm:$0xff]
    %v471 = vld [vmem:[%s1 + $0xb5c] sm:$0xff]
    %v472 = vld [vmem:[%s1 + $0xb64] sm:$0xf]
    %v473 = vld [vmem:[%s1 + $0xb68] sm:$0xff]
    %v474 = vld [vmem:[%s1 + $0xb70] sm:$0xff]
    %v475 = vld [vmem:[%s1 + $0xb78] sm:$0xf]
    %v476 = vld [vmem:[%s1 + $0xb7c] sm:$0xff]
    %v477 = vld [vmem:[%s1 + $0xb84] sm:$0xff]
    %v478 = vld [vmem:[%s1 + $0xb8c] sm:$0xf]
    %v479 = vld [vmem:[%s1 + $0xb90] sm:$0xff]
    %v480 = vld [vmem:[%s1 + $0xb98] sm:$0xff]
    %v481 = vld [vmem:[%s1 + $0xba0] sm:$0xf]
    %v482 = vld [vmem:[%s1 + $0xba4] sm:$0xff]
    %v483 = vld [vmem:[%s1 + $0xbac] sm:$0xff]
    %v484 = vld [vmem:[%s1 + $0xbb4] sm:$0xf]
    %v485 = vld [vmem:[%s1 + $0xbb8] sm:$0xff]
    %v486 = vld [vmem:[%s1 + $0xbc0] sm:$0xff]
    %v487 = vld [vmem:[%s1 + $0xbc8] sm:$0xf]
    %v488 = vld [vmem:[%s1 + $0xbcc] sm:$0xff]
    %v489 = vld [vmem:[%s1 + $0xbd4] sm:$0xff]
    %v490 = vld [vmem:[%s1 + $0xbdc] sm:$0xf]
    %v491 = vld [vmem:[%s1 + $0xbe0] sm:$0xff]
    %v492 = vld [vmem:[%s1 + $0xbe8] sm:$0xff]
    %v493 = vld [vmem:[%s1 + $0xbf0] sm:$0xf]
    %v494 = vld [vmem:[%s1 + $0xbf4] sm:$0xff]
    %v495 = vld [vmem:[%s1 + $0xbfc] sm:$0xff]
    %v496 = vld [vmem:[%s1 + $0xc04] sm:$0xf]
    %v497 = vld [vmem:[%s1 + $0xc08] sm:$0xff]
    %v498 = vld [vmem:[%s1 + $0xc10] sm:$0xff]
    %v499 = vld [vmem:[%s1 + $0xc18] sm:$0xf]
    %v500 = vld [vmem:[%s1 + $0xc1c] sm:$0xff]
    %v501 = vld [vmem:[%s1 + $0xc24] sm:$0xff]
    %v502 = vld [vmem:[%s1 + $0xc2c] sm:$0xf]
    %v503 = vld [vmem:[%s1 + $0xc30] sm:$0xff]
    %v504 = vld [vmem:[%s1 + $0xc38] sm:$0xff]
    %v505 = vld [vmem:[%s1 + $0xc40] sm:$0xf]
    %v506 = vld [vmem:[%s1 + $0xc44] sm:$0xff]
    %v507 = vld [vmem:[%s1 + $0xc4c] sm:$0xff]
    %v508 = vld [vmem:[%s1 + $0xc54] sm:$0xf]
    %v509 = vld [vmem:[%s1 + $0xc58] sm:$0xff]
    %v510 = vld [vmem:[%s1 + $0xc60] sm:$0xff]
    %v511 = vld [vmem:[%s1 + $0xc68] sm:$0xf]
    %v512 = vld [vmem:[%s1 + $0xc6c] sm:$0xff]
    %v513 = vld [vmem:[%s1 + $0xc74] sm:$0xff]
    %v514 = vld [vmem:[%s1 + $0xc7c] sm:$0xf]
    %v515 = vld [vmem:[%s2] sm:$0x1f]
    %v517 = vperm.slane %v515, 0
    %v518 = vperm.slane %v515, 1
    %v519 = vperm.slane %v515, 2
    %v520 = vperm.slane %v515, 3
    %v521 = vperm.slane %v515, 4
    %528 = vst [vmem:[#allocation1] ss:$9 sm:$0xff] %v33
    %v529 = vld [vmem:[#allocation1] sm:$0xff]
    %v530 = vld [vmem:[#allocation1 + $0x9] sm:$0xff]
    %v531 = vld [vmem:[#allocation1 + $0x12] sm:$0xff]
    %v532 = vld [vmem:[#allocation1 + $0x1b] sm:$0xff]
    %v533 = vld [vmem:[#allocation1 + $0x24] sm:$0xff]
    %v534 = vld [vmem:[#allocation1 + $0x2d] sm:$0xff]
    %v535 = vld [vmem:[#allocation1 + $0x36] sm:$0xff]
    %v536 = vld [vmem:[#allocation1 + $0x3f] sm:$0xff]
    %538 = vst [vmem:[#allocation1] ss:$9 sm:$0xff] %v34
    %v539 = vld [vmem:[#allocation1] sm:$0xff]
    %v540 = vld [vmem:[#allocation1 + $0x9] sm:$0xff]
    %v1031 = vunpack.c.l.b16 %v35
    %v1032 = vunpack.c.h.b16 %v35
    %v1033 = vunpack.c.l.b16 %v36
    %v1034 = vunpack.c.h.b16 %v36
    %v1035 = vunpack.c.l.b16 %v37
    %v1036 = vunpack.c.l.b16 %v38
    %v1037 = vunpack.c.h.b16 %v38
    %v1038 = vunpack.c.l.b16 %v39
    %v1039 = vunpack.c.h.b16 %v39
    %v1040 = vunpack.c.l.b16 %v40
    %v1041 = vunpack.c.l.b16 %v41
    %v1042 = vunpack.c.h.b16 %v41
    %v1043 = vunpack.c.l.b16 %v42
    %v1044 = vunpack.c.h.b16 %v42
    %v1045 = vunpack.c.l.b16 %v43
    %v1046 = vunpack.c.l.b16 %v44
    %v1047 = vunpack.c.h.b16 %v44
    %v1048 = vunpack.c.l.b16 %v45
    %v1049 = vunpack.c.h.b16 %v45
    %v1050 = vunpack.c.l.b16 %v46
    %v1051 = vunpack.c.l.b16 %v47
    %v1052 = vunpack.c.h.b16 %v47
    %v1053 = vunpack.c.l.b16 %v48
    %v1054 = vunpack.c.h.b16 %v48
    %v1055 = vunpack.c.l.b16 %v49
    %v1056 = vunpack.c.l.b16 %v50
    %v1057 = vunpack.c.h.b16 %v50
    %v1058 = vunpack.c.l.b16 %v51
    %v1059 = vunpack.c.h.b16 %v51
    %v1060 = vunpack.c.l.b16 %v52
    %v1061 = vunpack.c.l.b16 %v53
    %v1062 = vunpack.c.h.b16 %v53
    %v1063 = vunpack.c.l.b16 %v54
    %v1064 = vunpack.c.h.b16 %v54
    %v1065 = vunpack.c.l.b16 %v55
    %v1066 = vunpack.c.l.b16 %v56
    %v1067 = vunpack.c.h.b16 %v56
    %v1068 = vunpack.c.l.b16 %v57
    %v1069 = vunpack.c.h.b16 %v57
    %v1070 = vunpack.c.l.b16 %v58
    %v1071 = vunpack.c.l.b16 %v59
    %v1072 = vunpack.c.h.b16 %v59
    %v1073 = vunpack.c.l.b16 %v60
    %v1074 = vunpack.c.h.b16 %v60
    %v1075 = vunpack.c.l.b16 %v61
    %v1076 = vunpack.c.l.b16 %v62
    %v1077 = vunpack.c.h.b16 %v62
    %v1078 = vunpack.c.l.b16 %v63
    %v1079 = vunpack.c.h.b16 %v63
    %v1080 = vunpack.c.l.b16 %v64
    %v1081 = vunpack.c.l.b16 %v65
    %v1082 = vunpack.c.h.b16 %v65
    %v1083 = vunpack.c.l.b16 %v66
    %v1084 = vunpack.c.h.b16 %v66
    %v1085 = vunpack.c.l.b16 %v67
    %v1086 = vunpack.c.l.b16 %v68
    %v1087 = vunpack.c.h.b16 %v68
    %v1088 = vunpack.c.l.b16 %v69
    %v1089 = vunpack.c.h.b16 %v69
    %v1090 = vunpack.c.l.b16 %v70
    %v1091 = vunpack.c.l.b16 %v71
    %v1092 = vunpack.c.h.b16 %v71
    %v1093 = vunpack.c.l.b16 %v72
    %v1094 = vunpack.c.h.b16 %v72
    %v1095 = vunpack.c.l.b16 %v73
    %v1096 = vunpack.c.l.b16 %v74
    %v1097 = vunpack.c.h.b16 %v74
    %v1098 = vunpack.c.l.b16 %v75
    %v1099 = vunpack.c.h.b16 %v75
    %v1100 = vunpack.c.l.b16 %v76
    %v1101 = vunpack.c.l.b16 %v77
    %v1102 = vunpack.c.h.b16 %v77
    %v1103 = vunpack.c.l.b16 %v78
    %v1104 = vunpack.c.h.b16 %v78
    %v1105 = vunpack.c.l.b16 %v79
    %v1106 = vunpack.c.l.b16 %v80
    %v1107 = vunpack.c.h.b16 %v80
    %v1108 = vunpack.c.l.b16 %v81
    %v1109 = vunpack.c.h.b16 %v81
    %v1110 = vunpack.c.l.b16 %v82
    %v1111 = vunpack.c.l.b16 %v83
    %v1112 = vunpack.c.h.b16 %v83
    %v1113 = vunpack.c.l.b16 %v84
    %v1114 = vunpack.c.h.b16 %v84
    %v1115 = vunpack.c.l.b16 %v85
    %v1116 = vunpack.c.l.b16 %v86
    %v1117 = vunpack.c.h.b16 %v86
    %v1118 = vunpack.c.l.b16 %v87
    %v1119 = vunpack.c.h.b16 %v87
    %v1120 = vunpack.c.l.b16 %v88
    %v1121 = vunpack.c.l.b16 %v89
    %v1122 = vunpack.c.h.b16 %v89
    %v1123 = vunpack.c.l.b16 %v90
    %v1124 = vunpack.c.h.b16 %v90
    %v1125 = vunpack.c.l.b16 %v91
    %v1126 = vunpack.c.l.b16 %v92
    %v1127 = vunpack.c.h.b16 %v92
    %v1128 = vunpack.c.l.b16 %v93
    %v1129 = vunpack.c.h.b16 %v93
    %v1130 = vunpack.c.l.b16 %v94
    %v1131 = vunpack.c.l.b16 %v95
    %v1132 = vunpack.c.h.b16 %v95
    %v1133 = vunpack.c.l.b16 %v96
    %v1134 = vunpack.c.h.b16 %v96
    %v1135 = vunpack.c.l.b16 %v97
    %v1136 = vunpack.c.l.b16 %v98
    %v1137 = vunpack.c.h.b16 %v98
    %v1138 = vunpack.c.l.b16 %v99
    %v1139 = vunpack.c.h.b16 %v99
    %v1140 = vunpack.c.l.b16 %v100
    %v1141 = vunpack.c.l.b16 %v101
    %v1142 = vunpack.c.h.b16 %v101
    %v1143 = vunpack.c.l.b16 %v102
    %v1144 = vunpack.c.h.b16 %v102
    %v1145 = vunpack.c.l.b16 %v103
    %v1146 = vunpack.c.l.b16 %v104
    %v1147 = vunpack.c.h.b16 %v104
    %v1148 = vunpack.c.l.b16 %v105
    %v1149 = vunpack.c.h.b16 %v105
    %v1150 = vunpack.c.l.b16 %v106
    %v1151 = vunpack.c.l.b16 %v107
    %v1152 = vunpack.c.h.b16 %v107
    %v1153 = vunpack.c.l.b16 %v108
    %v1154 = vunpack.c.h.b16 %v108
    %v1155 = vunpack.c.l.b16 %v109
    %v1156 = vunpack.c.l.b16 %v110
    %v1157 = vunpack.c.h.b16 %v110
    %v1158 = vunpack.c.l.b16 %v111
    %v1159 = vunpack.c.h.b16 %v111
    %v1160 = vunpack.c.l.b16 %v112
    %v1161 = vunpack.c.l.b16 %v113
    %v1162 = vunpack.c.h.b16 %v113
    %v1163 = vunpack.c.l.b16 %v114
    %v1164 = vunpack.c.h.b16 %v114
    %v1165 = vunpack.c.l.b16 %v115
    %v1166 = vunpack.c.l.b16 %v116
    %v1167 = vunpack.c.h.b16 %v116
    %v1168 = vunpack.c.l.b16 %v117
    %v1169 = vunpack.c.h.b16 %v117
    %v1170 = vunpack.c.l.b16 %v118
    %v1171 = vunpack.c.l.b16 %v119
    %v1172 = vunpack.c.h.b16 %v119
    %v1173 = vunpack.c.l.b16 %v120
    %v1174 = vunpack.c.h.b16 %v120
    %v1175 = vunpack.c.l.b16 %v121
    %v1176 = vunpack.c.l.b16 %v122
    %v1177 = vunpack.c.h.b16 %v122
    %v1178 = vunpack.c.l.b16 %v123
    %v1179 = vunpack.c.h.b16 %v123
    %v1180 = vunpack.c.l.b16 %v124
    %v1181 = vunpack.c.l.b16 %v125
    %v1182 = vunpack.c.h.b16 %v125
    %v1183 = vunpack.c.l.b16 %v126
    %v1184 = vunpack.c.h.b16 %v126
    %v1185 = vunpack.c.l.b16 %v127
    %v1186 = vunpack.c.l.b16 %v128
    %v1187 = vunpack.c.h.b16 %v128
    %v1188 = vunpack.c.l.b16 %v129
    %v1189 = vunpack.c.h.b16 %v129
    %v1190 = vunpack.c.l.b16 %v130
    %v1191 = vunpack.c.l.b16 %v131
    %v1192 = vunpack.c.h.b16 %v131
    %v1193 = vunpack.c.l.b16 %v132
    %v1194 = vunpack.c.h.b16 %v132
    %v1195 = vunpack.c.l.b16 %v133
    %v1196 = vunpack.c.l.b16 %v134
    %v1197 = vunpack.c.h.b16 %v134
    %v1198 = vunpack.c.l.b16 %v135
    %v1199 = vunpack.c.h.b16 %v135
    %v1200 = vunpack.c.l.b16 %v136
    %v1201 = vunpack.c.l.b16 %v137
    %v1202 = vunpack.c.h.b16 %v137
    %v1203 = vunpack.c.l.b16 %v138
    %v1204 = vunpack.c.h.b16 %v138
    %v1205 = vunpack.c.l.b16 %v139
    %v1206 = vunpack.c.l.b16 %v140
    %v1207 = vunpack.c.h.b16 %v140
    %v1208 = vunpack.c.l.b16 %v141
    %v1209 = vunpack.c.h.b16 %v141
    %v1210 = vunpack.c.l.b16 %v142
    %v1211 = vunpack.c.l.b16 %v143
    %v1212 = vunpack.c.h.b16 %v143
    %v1213 = vunpack.c.l.b16 %v144
    %v1214 = vunpack.c.h.b16 %v144
    %v1215 = vunpack.c.l.b16 %v145
    %v1216 = vunpack.c.l.b16 %v146
    %v1217 = vunpack.c.h.b16 %v146
    %v1218 = vunpack.c.l.b16 %v147
    %v1219 = vunpack.c.h.b16 %v147
    %v1220 = vunpack.c.l.b16 %v148
    %v1221 = vunpack.c.l.b16 %v149
    %v1222 = vunpack.c.h.b16 %v149
    %v1223 = vunpack.c.l.b16 %v150
    %v1224 = vunpack.c.h.b16 %v150
    %v1225 = vunpack.c.l.b16 %v151
    %v1226 = vunpack.c.l.b16 %v152
    %v1227 = vunpack.c.h.b16 %v152
    %v1228 = vunpack.c.l.b16 %v153
    %v1229 = vunpack.c.h.b16 %v153
    %v1230 = vunpack.c.l.b16 %v154
    %v1231 = vunpack.c.l.b16 %v155
    %v1232 = vunpack.c.h.b16 %v155
    %v1233 = vunpack.c.l.b16 %v156
    %v1234 = vunpack.c.h.b16 %v156
    %v1235 = vunpack.c.l.b16 %v157
    %v1236 = vunpack.c.l.b16 %v158
    %v1237 = vunpack.c.h.b16 %v158
    %v1238 = vunpack.c.l.b16 %v159
    %v1239 = vunpack.c.h.b16 %v159
    %v1240 = vunpack.c.l.b16 %v160
    %v1241 = vunpack.c.l.b16 %v161
    %v1242 = vunpack.c.h.b16 %v161
    %v1243 = vunpack.c.l.b16 %v162
    %v1244 = vunpack.c.h.b16 %v162
    %v1245 = vunpack.c.l.b16 %v163
    %v1246 = vunpack.c.l.b16 %v164
    %v1247 = vunpack.c.h.b16 %v164
    %v1248 = vunpack.c.l.b16 %v165
    %v1249 = vunpack.c.h.b16 %v165
    %v1250 = vunpack.c.l.b16 %v166
    %v1251 = vunpack.c.l.b16 %v167
    %v1252 = vunpack.c.h.b16 %v167
    %v1253 = vunpack.c.l.b16 %v168
    %v1254 = vunpack.c.h.b16 %v168
    %v1255 = vunpack.c.l.b16 %v169
    %v1256 = vunpack.c.l.b16 %v170
    %v1257 = vunpack.c.h.b16 %v170
    %v1258 = vunpack.c.l.b16 %v171
    %v1259 = vunpack.c.h.b16 %v171
    %v1260 = vunpack.c.l.b16 %v172
    %v1261 = vunpack.c.l.b16 %v173
    %v1262 = vunpack.c.h.b16 %v173
    %v1263 = vunpack.c.l.b16 %v174
    %v1264 = vunpack.c.h.b16 %v174
    %v1265 = vunpack.c.l.b16 %v175
    %v1266 = vunpack.c.l.b16 %v176
    %v1267 = vunpack.c.h.b16 %v176
    %v1268 = vunpack.c.l.b16 %v177
    %v1269 = vunpack.c.h.b16 %v177
    %v1270 = vunpack.c.l.b16 %v178
    %v1271 = vunpack.c.l.b16 %v179
    %v1272 = vunpack.c.h.b16 %v179
    %v1273 = vunpack.c.l.b16 %v180
    %v1274 = vunpack.c.h.b16 %v180
    %v1275 = vunpack.c.l.b16 %v181
    %v1276 = vunpack.c.l.b16 %v182
    %v1277 = vunpack.c.h.b16 %v182
    %v1278 = vunpack.c.l.b16 %v183
    %v1279 = vunpack.c.h.b16 %v183
    %v1280 = vunpack.c.l.b16 %v184
    %v1281 = vunpack.c.l.b16 %v185
    %v1282 = vunpack.c.h.b16 %v185
    %v1283 = vunpack.c.l.b16 %v186
    %v1284 = vunpack.c.h.b16 %v186
    %v1285 = vunpack.c.l.b16 %v187
    %v1286 = vunpack.c.l.b16 %v188
    %v1287 = vunpack.c.h.b16 %v188
    %v1288 = vunpack.c.l.b16 %v189
    %v1289 = vunpack.c.h.b16 %v189
    %v1290 = vunpack.c.l.b16 %v190
    %v1291 = vunpack.c.l.b16 %v191
    %v1292 = vunpack.c.h.b16 %v191
    %v1293 = vunpack.c.l.b16 %v192
    %v1294 = vunpack.c.h.b16 %v192
    %v1295 = vunpack.c.l.b16 %v193
    %v1296 = vunpack.c.l.b16 %v194
    %v1297 = vunpack.c.h.b16 %v194
    %v1298 = vunpack.c.l.b16 %v195
    %v1299 = vunpack.c.h.b16 %v195
    %v1300 = vunpack.c.l.b16 %v196
    %v1301 = vunpack.c.l.b16 %v197
    %v1302 = vunpack.c.h.b16 %v197
    %v1303 = vunpack.c.l.b16 %v198
    %v1304 = vunpack.c.h.b16 %v198
    %v1305 = vunpack.c.l.b16 %v199
    %v1306 = vunpack.c.l.b16 %v200
    %v1307 = vunpack.c.h.b16 %v200
    %v1308 = vunpack.c.l.b16 %v201
    %v1309 = vunpack.c.h.b16 %v201
    %v1310 = vunpack.c.l.b16 %v202
    %v1311 = vunpack.c.l.b16 %v203
    %v1312 = vunpack.c.h.b16 %v203
    %v1313 = vunpack.c.l.b16 %v204
    %v1314 = vunpack.c.h.b16 %v204
    %v1315 = vunpack.c.l.b16 %v205
    %v1316 = vunpack.c.l.b16 %v206
    %v1317 = vunpack.c.h.b16 %v206
    %v1318 = vunpack.c.l.b16 %v207
    %v1319 = vunpack.c.h.b16 %v207
    %v1320 = vunpack.c.l.b16 %v208
    %v1321 = vunpack.c.l.b16 %v209
    %v1322 = vunpack.c.h.b16 %v209
    %v1323 = vunpack.c.l.b16 %v210
    %v1324 = vunpack.c.h.b16 %v210
    %v1325 = vunpack.c.l.b16 %v211
    %v1326 = vunpack.c.l.b16 %v212
    %v1327 = vunpack.c.h.b16 %v212
    %v1328 = vunpack.c.l.b16 %v213
    %v1329 = vunpack.c.h.b16 %v213
    %v1330 = vunpack.c.l.b16 %v214
    %v1331 = vunpack.c.l.b16 %v215
    %v1332 = vunpack.c.h.b16 %v215
    %v1333 = vunpack.c.l.b16 %v216
    %v1334 = vunpack.c.h.b16 %v216
    %v1335 = vunpack.c.l.b16 %v217
    %v1336 = vunpack.c.l.b16 %v218
    %v1337 = vunpack.c.h.b16 %v218
    %v1338 = vunpack.c.l.b16 %v219
    %v1339 = vunpack.c.h.b16 %v219
    %v1340 = vunpack.c.l.b16 %v220
    %v1341 = vunpack.c.l.b16 %v221
    %v1342 = vunpack.c.h.b16 %v221
    %v1343 = vunpack.c.l.b16 %v222
    %v1344 = vunpack.c.h.b16 %v222
    %v1345 = vunpack.c.l.b16 %v223
    %v1346 = vunpack.c.l.b16 %v224
    %v1347 = vunpack.c.h.b16 %v224
    %v1348 = vunpack.c.l.b16 %v225
    %v1349 = vunpack.c.h.b16 %v225
    %v1350 = vunpack.c.l.b16 %v226
    %v1351 = vunpack.c.l.b16 %v227
    %v1352 = vunpack.c.h.b16 %v227
    %v1353 = vunpack.c.l.b16 %v228
    %v1354 = vunpack.c.h.b16 %v228
    %v1355 = vunpack.c.l.b16 %v229
    %v1356 = vunpack.c.l.b16 %v230
    %v1357 = vunpack.c.h.b16 %v230
    %v1358 = vunpack.c.l.b16 %v231
    %v1359 = vunpack.c.h.b16 %v231
    %v1360 = vunpack.c.l.b16 %v232
    %v1361 = vunpack.c.l.b16 %v233
    %v1362 = vunpack.c.h.b16 %v233
    %v1363 = vunpack.c.l.b16 %v234
    %v1364 = vunpack.c.h.b16 %v234
    %v1365 = vunpack.c.l.b16 %v235
    %v1366 = vunpack.c.l.b16 %v236
    %v1367 = vunpack.c.h.b16 %v236
    %v1368 = vunpack.c.l.b16 %v237
    %v1369 = vunpack.c.h.b16 %v237
    %v1370 = vunpack.c.l.b16 %v238
    %v1371 = vunpack.c.l.b16 %v239
    %v1372 = vunpack.c.h.b16 %v239
    %v1373 = vunpack.c.l.b16 %v240
    %v1374 = vunpack.c.h.b16 %v240
    %v1375 = vunpack.c.l.b16 %v241
    %v1376 = vunpack.c.l.b16 %v242
    %v1377 = vunpack.c.h.b16 %v242
    %v1378 = vunpack.c.l.b16 %v243
    %v1379 = vunpack.c.h.b16 %v243
    %v1380 = vunpack.c.l.b16 %v244
    %v1381 = vunpack.c.l.b16 %v245
    %v1382 = vunpack.c.h.b16 %v245
    %v1383 = vunpack.c.l.b16 %v246
    %v1384 = vunpack.c.h.b16 %v246
    %v1385 = vunpack.c.l.b16 %v247
    %v1386 = vunpack.c.l.b16 %v248
    %v1387 = vunpack.c.h.b16 %v248
    %v1388 = vunpack.c.l.b16 %v249
    %v1389 = vunpack.c.h.b16 %v249
    %v1390 = vunpack.c.l.b16 %v250
    %v1391 = vunpack.c.l.b16 %v251
    %v1392 = vunpack.c.h.b16 %v251
    %v1393 = vunpack.c.l.b16 %v252
    %v1394 = vunpack.c.h.b16 %v252
    %v1395 = vunpack.c.l.b16 %v253
    %v1396 = vunpack.c.l.b16 %v254
    %v1397 = vunpack.c.h.b16 %v254
    %v1398 = vunpack.c.l.b16 %v255
    %v1399 = vunpack.c.h.b16 %v255
    %v1400 = vunpack.c.l.b16 %v256
    %v1401 = vunpack.c.l.b16 %v257
    %v1402 = vunpack.c.h.b16 %v257
    %v1403 = vunpack.c.l.b16 %v258
    %v1404 = vunpack.c.h.b16 %v258
    %v1405 = vunpack.c.l.b16 %v259
    %v1406 = vunpack.c.l.b16 %v260
    %v1407 = vunpack.c.h.b16 %v260
    %v1408 = vunpack.c.l.b16 %v261
    %v1409 = vunpack.c.h.b16 %v261
    %v1410 = vunpack.c.l.b16 %v262
    %v1411 = vunpack.c.l.b16 %v263
    %v1412 = vunpack.c.h.b16 %v263
    %v1413 = vunpack.c.l.b16 %v264
    %v1414 = vunpack.c.h.b16 %v264
    %v1415 = vunpack.c.l.b16 %v265
    %v1416 = vunpack.c.l.b16 %v266
    %v1417 = vunpack.c.h.b16 %v266
    %v1418 = vunpack.c.l.b16 %v267
    %v1419 = vunpack.c.h.b16 %v267
    %v1420 = vunpack.c.l.b16 %v268
    %v1421 = vunpack.c.l.b16 %v269
    %v1422 = vunpack.c.h.b16 %v269
    %v1423 = vunpack.c.l.b16 %v270
    %v1424 = vunpack.c.h.b16 %v270
    %v1425 = vunpack.c.l.b16 %v271
    %v1426 = vunpack.c.l.b16 %v272
    %v1427 = vunpack.c.h.b16 %v272
    %v1428 = vunpack.c.l.b16 %v273
    %v1429 = vunpack.c.h.b16 %v273
    %v1430 = vunpack.c.l.b16 %v274
    %v1431 = vunpack.c.l.b16 %v275
    %v1432 = vunpack.c.h.b16 %v275
    %v1433 = vunpack.c.l.b16 %v276
    %v1434 = vunpack.c.h.b16 %v276
    %v1435 = vunpack.c.l.b16 %v277
    %v1436 = vunpack.c.l.b16 %v278
    %v1437 = vunpack.c.h.b16 %v278
    %v1438 = vunpack.c.l.b16 %v279
    %v1439 = vunpack.c.h.b16 %v279
    %v1440 = vunpack.c.l.b16 %v280
    %v1441 = vunpack.c.l.b16 %v281
    %v1442 = vunpack.c.h.b16 %v281
    %v1443 = vunpack.c.l.b16 %v282
    %v1444 = vunpack.c.h.b16 %v282
    %v1445 = vunpack.c.l.b16 %v283
    %v1446 = vunpack.c.l.b16 %v284
    %v1447 = vunpack.c.h.b16 %v284
    %v1448 = vunpack.c.l.b16 %v285
    %v1449 = vunpack.c.h.b16 %v285
    %v1450 = vunpack.c.l.b16 %v286
    %v1451 = vunpack.c.l.b16 %v287
    %v1452 = vunpack.c.h.b16 %v287
    %v1453 = vunpack.c.l.b16 %v288
    %v1454 = vunpack.c.h.b16 %v288
    %v1455 = vunpack.c.l.b16 %v289
    %v1456 = vunpack.c.l.b16 %v290
    %v1457 = vunpack.c.h.b16 %v290
    %v1458 = vunpack.c.l.b16 %v291
    %v1459 = vunpack.c.h.b16 %v291
    %v1460 = vunpack.c.l.b16 %v292
    %v1461 = vunpack.c.l.b16 %v293
    %v1462 = vunpack.c.h.b16 %v293
    %v1463 = vunpack.c.l.b16 %v294
    %v1464 = vunpack.c.h.b16 %v294
    %v1465 = vunpack.c.l.b16 %v295
    %v1466 = vunpack.c.l.b16 %v296
    %v1467 = vunpack.c.h.b16 %v296
    %v1468 = vunpack.c.l.b16 %v297
    %v1469 = vunpack.c.h.b16 %v297
    %v1470 = vunpack.c.l.b16 %v298
    %v1471 = vunpack.c.l.b16 %v299
    %v1472 = vunpack.c.h.b16 %v299
    %v1473 = vunpack.c.l.b16 %v300
    %v1474 = vunpack.c.h.b16 %v300
    %v1475 = vunpack.c.l.b16 %v301
    %v1476 = vunpack.c.l.b16 %v302
    %v1477 = vunpack.c.h.b16 %v302
    %v1478 = vunpack.c.l.b16 %v303
    %v1479 = vunpack.c.h.b16 %v303
    %v1480 = vunpack.c.l.b16 %v304
    %v1481 = vunpack.c.l.b16 %v305
    %v1482 = vunpack.c.h.b16 %v305
    %v1483 = vunpack.c.l.b16 %v306
    %v1484 = vunpack.c.h.b16 %v306
    %v1485 = vunpack.c.l.b16 %v307
    %v1486 = vunpack.c.l.b16 %v308
    %v1487 = vunpack.c.h.b16 %v308
    %v1488 = vunpack.c.l.b16 %v309
    %v1489 = vunpack.c.h.b16 %v309
    %v1490 = vunpack.c.l.b16 %v310
    %v1491 = vunpack.c.l.b16 %v311
    %v1492 = vunpack.c.h.b16 %v311
    %v1493 = vunpack.c.l.b16 %v312
    %v1494 = vunpack.c.h.b16 %v312
    %v1495 = vunpack.c.l.b16 %v313
    %v1496 = vunpack.c.l.b16 %v314
    %v1497 = vunpack.c.h.b16 %v314
    %v1498 = vunpack.c.l.b16 %v315
    %v1499 = vunpack.c.h.b16 %v315
    %v1500 = vunpack.c.l.b16 %v316
    %v1501 = vunpack.c.l.b16 %v317
    %v1502 = vunpack.c.h.b16 %v317
    %v1503 = vunpack.c.l.b16 %v318
    %v1504 = vunpack.c.h.b16 %v318
    %v1505 = vunpack.c.l.b16 %v319
    %v1506 = vunpack.c.l.b16 %v320
    %v1507 = vunpack.c.h.b16 %v320
    %v1508 = vunpack.c.l.b16 %v321
    %v1509 = vunpack.c.h.b16 %v321
    %v1510 = vunpack.c.l.b16 %v322
    %v1511 = vunpack.c.l.b16 %v323
    %v1512 = vunpack.c.h.b16 %v323
    %v1513 = vunpack.c.l.b16 %v324
    %v1514 = vunpack.c.h.b16 %v324
    %v1515 = vunpack.c.l.b16 %v325
    %v1516 = vunpack.c.l.b16 %v326
    %v1517 = vunpack.c.h.b16 %v326
    %v1518 = vunpack.c.l.b16 %v327
    %v1519 = vunpack.c.h.b16 %v327
    %v1520 = vunpack.c.l.b16 %v328
    %v1521 = vunpack.c.l.b16 %v329
    %v1522 = vunpack.c.h.b16 %v329
    %v1523 = vunpack.c.l.b16 %v330
    %v1524 = vunpack.c.h.b16 %v330
    %v1525 = vunpack.c.l.b16 %v331
    %v1526 = vunpack.c.l.b16 %v332
    %v1527 = vunpack.c.h.b16 %v332
    %v1528 = vunpack.c.l.b16 %v333
    %v1529 = vunpack.c.h.b16 %v333
    %v1530 = vunpack.c.l.b16 %v334
    %v1531 = vunpack.c.l.b16 %v335
    %v1532 = vunpack.c.h.b16 %v335
    %v1533 = vunpack.c.l.b16 %v336
    %v1534 = vunpack.c.h.b16 %v336
    %v1535 = vunpack.c.l.b16 %v337
    %v1536 = vunpack.c.l.b16 %v338
    %v1537 = vunpack.c.h.b16 %v338
    %v1538 = vunpack.c.l.b16 %v339
    %v1539 = vunpack.c.h.b16 %v339
    %v1540 = vunpack.c.l.b16 %v340
    %v1541 = vunpack.c.l.b16 %v341
    %v1542 = vunpack.c.h.b16 %v341
    %v1543 = vunpack.c.l.b16 %v342
    %v1544 = vunpack.c.h.b16 %v342
    %v1545 = vunpack.c.l.b16 %v343
    %v1546 = vunpack.c.l.b16 %v344
    %v1547 = vunpack.c.h.b16 %v344
    %v1548 = vunpack.c.l.b16 %v345
    %v1549 = vunpack.c.h.b16 %v345
    %v1550 = vunpack.c.l.b16 %v346
    %v1551 = vunpack.c.l.b16 %v347
    %v1552 = vunpack.c.h.b16 %v347
    %v1553 = vunpack.c.l.b16 %v348
    %v1554 = vunpack.c.h.b16 %v348
    %v1555 = vunpack.c.l.b16 %v349
    %v1556 = vunpack.c.l.b16 %v350
    %v1557 = vunpack.c.h.b16 %v350
    %v1558 = vunpack.c.l.b16 %v351
    %v1559 = vunpack.c.h.b16 %v351
    %v1560 = vunpack.c.l.b16 %v352
    %v1561 = vunpack.c.l.b16 %v353
    %v1562 = vunpack.c.h.b16 %v353
    %v1563 = vunpack.c.l.b16 %v354
    %v1564 = vunpack.c.h.b16 %v354
    %v1565 = vunpack.c.l.b16 %v355
    %v1566 = vunpack.c.l.b16 %v356
    %v1567 = vunpack.c.h.b16 %v356
    %v1568 = vunpack.c.l.b16 %v357
    %v1569 = vunpack.c.h.b16 %v357
    %v1570 = vunpack.c.l.b16 %v358
    %v1571 = vunpack.c.l.b16 %v359
    %v1572 = vunpack.c.h.b16 %v359
    %v1573 = vunpack.c.l.b16 %v360
    %v1574 = vunpack.c.h.b16 %v360
    %v1575 = vunpack.c.l.b16 %v361
    %v1576 = vunpack.c.l.b16 %v362
    %v1577 = vunpack.c.h.b16 %v362
    %v1578 = vunpack.c.l.b16 %v363
    %v1579 = vunpack.c.h.b16 %v363
    %v1580 = vunpack.c.l.b16 %v364
    %v1581 = vunpack.c.l.b16 %v365
    %v1582 = vunpack.c.h.b16 %v365
    %v1583 = vunpack.c.l.b16 %v366
    %v1584 = vunpack.c.h.b16 %v366
    %v1585 = vunpack.c.l.b16 %v367
    %v1586 = vunpack.c.l.b16 %v368
    %v1587 = vunpack.c.h.b16 %v368
    %v1588 = vunpack.c.l.b16 %v369
    %v1589 = vunpack.c.h.b16 %v369
    %v1590 = vunpack.c.l.b16 %v370
    %v1591 = vunpack.c.l.b16 %v371
    %v1592 = vunpack.c.h.b16 %v371
    %v1593 = vunpack.c.l.b16 %v372
    %v1594 = vunpack.c.h.b16 %v372
    %v1595 = vunpack.c.l.b16 %v373
    %v1596 = vunpack.c.l.b16 %v374
    %v1597 = vunpack.c.h.b16 %v374
    %v1598 = vunpack.c.l.b16 %v375
    %v1599 = vunpack.c.h.b16 %v375
    %v1600 = vunpack.c.l.b16 %v376
    %v1601 = vunpack.c.l.b16 %v377
    %v1602 = vunpack.c.h.b16 %v377
    %v1603 = vunpack.c.l.b16 %v378
    %v1604 = vunpack.c.h.b16 %v378
    %v1605 = vunpack.c.l.b16 %v379
    %v1606 = vunpack.c.l.b16 %v380
    %v1607 = vunpack.c.h.b16 %v380
    %v1608 = vunpack.c.l.b16 %v381
    %v1609 = vunpack.c.h.b16 %v381
    %v1610 = vunpack.c.l.b16 %v382
    %v1611 = vunpack.c.l.b16 %v383
    %v1612 = vunpack.c.h.b16 %v383
    %v1613 = vunpack.c.l.b16 %v384
    %v1614 = vunpack.c.h.b16 %v384
    %v1615 = vunpack.c.l.b16 %v385
    %v1616 = vunpack.c.l.b16 %v386
    %v1617 = vunpack.c.h.b16 %v386
    %v1618 = vunpack.c.l.b16 %v387
    %v1619 = vunpack.c.h.b16 %v387
    %v1620 = vunpack.c.l.b16 %v388
    %v1621 = vunpack.c.l.b16 %v389
    %v1622 = vunpack.c.h.b16 %v389
    %v1623 = vunpack.c.l.b16 %v390
    %v1624 = vunpack.c.h.b16 %v390
    %v1625 = vunpack.c.l.b16 %v391
    %v1626 = vunpack.c.l.b16 %v392
    %v1627 = vunpack.c.h.b16 %v392
    %v1628 = vunpack.c.l.b16 %v393
    %v1629 = vunpack.c.h.b16 %v393
    %v1630 = vunpack.c.l.b16 %v394
    %v1631 = vunpack.c.l.b16 %v395
    %v1632 = vunpack.c.h.b16 %v395
    %v1633 = vunpack.c.l.b16 %v396
    %v1634 = vunpack.c.h.b16 %v396
    %v1635 = vunpack.c.l.b16 %v397
    %v1636 = vunpack.c.l.b16 %v398
    %v1637 = vunpack.c.h.b16 %v398
    %v1638 = vunpack.c.l.b16 %v399
    %v1639 = vunpack.c.h.b16 %v399
    %v1640 = vunpack.c.l.b16 %v400
    %v1641 = vunpack.c.l.b16 %v401
    %v1642 = vunpack.c.h.b16 %v401
    %v1643 = vunpack.c.l.b16 %v402
    %v1644 = vunpack.c.h.b16 %v402
    %v1645 = vunpack.c.l.b16 %v403
    %v1646 = vunpack.c.l.b16 %v404
    %v1647 = vunpack.c.h.b16 %v404
    %v1648 = vunpack.c.l.b16 %v405
    %v1649 = vunpack.c.h.b16 %v405
    %v1650 = vunpack.c.l.b16 %v406
    %v1651 = vunpack.c.l.b16 %v407
    %v1652 = vunpack.c.h.b16 %v407
    %v1653 = vunpack.c.l.b16 %v408
    %v1654 = vunpack.c.h.b16 %v408
    %v1655 = vunpack.c.l.b16 %v409
    %v1656 = vunpack.c.l.b16 %v410
    %v1657 = vunpack.c.h.b16 %v410
    %v1658 = vunpack.c.l.b16 %v411
    %v1659 = vunpack.c.h.b16 %v411
    %v1660 = vunpack.c.l.b16 %v412
    %v1661 = vunpack.c.l.b16 %v413
    %v1662 = vunpack.c.h.b16 %v413
    %v1663 = vunpack.c.l.b16 %v414
    %v1664 = vunpack.c.h.b16 %v414
    %v1665 = vunpack.c.l.b16 %v415
    %v1666 = vunpack.c.l.b16 %v416
    %v1667 = vunpack.c.h.b16 %v416
    %v1668 = vunpack.c.l.b16 %v417
    %v1669 = vunpack.c.h.b16 %v417
    %v1670 = vunpack.c.l.b16 %v418
    %v1671 = vunpack.c.l.b16 %v419
    %v1672 = vunpack.c.h.b16 %v419
    %v1673 = vunpack.c.l.b16 %v420
    %v1674 = vunpack.c.h.b16 %v420
    %v1675 = vunpack.c.l.b16 %v421
    %v1676 = vunpack.c.l.b16 %v422
    %v1677 = vunpack.c.h.b16 %v422
    %v1678 = vunpack.c.l.b16 %v423
    %v1679 = vunpack.c.h.b16 %v423
    %v1680 = vunpack.c.l.b16 %v424
    %v1681 = vunpack.c.l.b16 %v425
    %v1682 = vunpack.c.h.b16 %v425
    %v1683 = vunpack.c.l.b16 %v426
    %v1684 = vunpack.c.h.b16 %v426
    %v1685 = vunpack.c.l.b16 %v427
    %v1686 = vunpack.c.l.b16 %v428
    %v1687 = vunpack.c.h.b16 %v428
    %v1688 = vunpack.c.l.b16 %v429
    %v1689 = vunpack.c.h.b16 %v429
    %v1690 = vunpack.c.l.b16 %v430
    %v1691 = vunpack.c.l.b16 %v431
    %v1692 = vunpack.c.h.b16 %v431
    %v1693 = vunpack.c.l.b16 %v432
    %v1694 = vunpack.c.h.b16 %v432
    %v1695 = vunpack.c.l.b16 %v433
    %v1696 = vunpack.c.l.b16 %v434
    %v1697 = vunpack.c.h.b16 %v434
    %v1698 = vunpack.c.l.b16 %v435
    %v1699 = vunpack.c.h.b16 %v435
    %v1700 = vunpack.c.l.b16 %v436
    %v1701 = vunpack.c.l.b16 %v437
    %v1702 = vunpack.c.h.b16 %v437
    %v1703 = vunpack.c.l.b16 %v438
    %v1704 = vunpack.c.h.b16 %v438
    %v1705 = vunpack.c.l.b16 %v439
    %v1706 = vunpack.c.l.b16 %v440
    %v1707 = vunpack.c.h.b16 %v440
    %v1708 = vunpack.c.l.b16 %v441
    %v1709 = vunpack.c.h.b16 %v441
    %v1710 = vunpack.c.l.b16 %v442
    %v1711 = vunpack.c.l.b16 %v443
    %v1712 = vunpack.c.h.b16 %v443
    %v1713 = vunpack.c.l.b16 %v444
    %v1714 = vunpack.c.h.b16 %v444
    %v1715 = vunpack.c.l.b16 %v445
    %v1716 = vunpack.c.l.b16 %v446
    %v1717 = vunpack.c.h.b16 %v446
    %v1718 = vunpack.c.l.b16 %v447
    %v1719 = vunpack.c.h.b16 %v447
    %v1720 = vunpack.c.l.b16 %v448
    %v1721 = vunpack.c.l.b16 %v449
    %v1722 = vunpack.c.h.b16 %v449
    %v1723 = vunpack.c.l.b16 %v450
    %v1724 = vunpack.c.h.b16 %v450
    %v1725 = vunpack.c.l.b16 %v451
    %v1726 = vunpack.c.l.b16 %v452
    %v1727 = vunpack.c.h.b16 %v452
    %v1728 = vunpack.c.l.b16 %v453
    %v1729 = vunpack.c.h.b16 %v453
    %v1730 = vunpack.c.l.b16 %v454
    %v1731 = vunpack.c.l.b16 %v455
    %v1732 = vunpack.c.h.b16 %v455
    %v1733 = vunpack.c.l.b16 %v456
    %v1734 = vunpack.c.h.b16 %v456
    %v1735 = vunpack.c.l.b16 %v457
    %v1736 = vunpack.c.l.b16 %v458
    %v1737 = vunpack.c.h.b16 %v458
    %v1738 = vunpack.c.l.b16 %v459
    %v1739 = vunpack.c.h.b16 %v459
    %v1740 = vunpack.c.l.b16 %v460
    %v1741 = vunpack.c.l.b16 %v461
    %v1742 = vunpack.c.h.b16 %v461
    %v1743 = vunpack.c.l.b16 %v462
    %v1744 = vunpack.c.h.b16 %v462
    %v1745 = vunpack.c.l.b16 %v463
    %v1746 = vunpack.c.l.b16 %v464
    %v1747 = vunpack.c.h.b16 %v464
    %v1748 = vunpack.c.l.b16 %v465
    %v1749 = vunpack.c.h.b16 %v465
    %v1750 = vunpack.c.l.b16 %v466
    %v1751 = vunpack.c.l.b16 %v467
    %v1752 = vunpack.c.h.b16 %v467
    %v1753 = vunpack.c.l.b16 %v468
    %v1754 = vunpack.c.h.b16 %v468
    %v1755 = vunpack.c.l.b16 %v469
    %v1756 = vunpack.c.l.b16 %v470
    %v1757 = vunpack.c.h.b16 %v470
    %v1758 = vunpack.c.l.b16 %v471
    %v1759 = vunpack.c.h.b16 %v471
    %v1760 = vunpack.c.l.b16 %v472
    %v1761 = vunpack.c.l.b16 %v473
    %v1762 = vunpack.c.h.b16 %v473
    %v1763 = vunpack.c.l.b16 %v474
    %v1764 = vunpack.c.h.b16 %v474
    %v1765 = vunpack.c.l.b16 %v475
    %v1766 = vunpack.c.l.b16 %v476
    %v1767 = vunpack.c.h.b16 %v476
    %v1768 = vunpack.c.l.b16 %v477
    %v1769 = vunpack.c.h.b16 %v477
    %v1770 = vunpack.c.l.b16 %v478
    %v1771 = vunpack.c.l.b16 %v479
    %v1772 = vunpack.c.h.b16 %v479
    %v1773 = vunpack.c.l.b16 %v480
    %v1774 = vunpack.c.h.b16 %v480
    %v1775 = vunpack.c.l.b16 %v481
    %v1776 = vunpack.c.l.b16 %v482
    %v1777 = vunpack.c.h.b16 %v482
    %v1778 = vunpack.c.l.b16 %v483
    %v1779 = vunpack.c.h.b16 %v483
    %v1780 = vunpack.c.l.b16 %v484
    %v1781 = vunpack.c.l.b16 %v485
    %v1782 = vunpack.c.h.b16 %v485
    %v1783 = vunpack.c.l.b16 %v486
    %v1784 = vunpack.c.h.b16 %v486
    %v1785 = vunpack.c.l.b16 %v487
    %v1786 = vunpack.c.l.b16 %v488
    %v1787 = vunpack.c.h.b16 %v488
    %v1788 = vunpack.c.l.b16 %v489
    %v1789 = vunpack.c.h.b16 %v489
    %v1790 = vunpack.c.l.b16 %v490
    %v1791 = vunpack.c.l.b16 %v491
    %v1792 = vunpack.c.h.b16 %v491
    %v1793 = vunpack.c.l.b16 %v492
    %v1794 = vunpack.c.h.b16 %v492
    %v1795 = vunpack.c.l.b16 %v493
    %v1796 = vunpack.c.l.b16 %v494
    %v1797 = vunpack.c.h.b16 %v494
    %v1798 = vunpack.c.l.b16 %v495
    %v1799 = vunpack.c.h.b16 %v495
    %v1800 = vunpack.c.l.b16 %v496
    %v1801 = vunpack.c.l.b16 %v497
    %v1802 = vunpack.c.h.b16 %v497
    %v1803 = vunpack.c.l.b16 %v498
    %v1804 = vunpack.c.h.b16 %v498
    %v1805 = vunpack.c.l.b16 %v499
    %v1806 = vunpack.c.l.b16 %v500
    %v1807 = vunpack.c.h.b16 %v500
    %v1808 = vunpack.c.l.b16 %v501
    %v1809 = vunpack.c.h.b16 %v501
    %v1810 = vunpack.c.l.b16 %v502
    %v1811 = vunpack.c.l.b16 %v503
    %v1812 = vunpack.c.h.b16 %v503
    %v1813 = vunpack.c.l.b16 %v504
    %v1814 = vunpack.c.h.b16 %v504
    %v1815 = vunpack.c.l.b16 %v505
    %v1816 = vunpack.c.l.b16 %v506
    %v1817 = vunpack.c.h.b16 %v506
    %v1818 = vunpack.c.l.b16 %v507
    %v1819 = vunpack.c.h.b16 %v507
    %v1820 = vunpack.c.l.b16 %v508
    %v1821 = vunpack.c.l.b16 %v509
    %v1822 = vunpack.c.h.b16 %v509
    %v1823 = vunpack.c.l.b16 %v510
    %v1824 = vunpack.c.h.b16 %v510
    %v1825 = vunpack.c.l.b16 %v511
    %v1826 = vunpack.c.l.b16 %v512
    %v1827 = vunpack.c.h.b16 %v512
    %v1828 = vunpack.c.l.b16 %v513
    %v1829 = vunpack.c.h.b16 %v513
    %v1830 = vunpack.c.l.b16 %v514
    %v1831 = vpack.c.b16 %v1036, %v1031
    %v1832 = vpack.c.b16 %v1037, %v1032
    %v1833 = vpack.c.b16 %v1038, %v1033
    %v1834 = vpack.c.b16 %v1039, %v1034
    %v1835 = vpack.c.b16 %v1040, %v1035
    %v1836 = vpack.c.b16 %v1046, %v1041
    %v1837 = vpack.c.b16 %v1047, %v1042
    %v1838 = vpack.c.b16 %v1048, %v1043
    %v1839 = vpack.c.b16 %v1049, %v1044
    %v1840 = vpack.c.b16 %v1050, %v1045
    %v1841 = vpack.c.b16 %v1056, %v1051
    %v1842 = vpack.c.b16 %v1057, %v1052
    %v1843 = vpack.c.b16 %v1058, %v1053
    %v1844 = vpack.c.b16 %v1059, %v1054
    %v1845 = vpack.c.b16 %v1060, %v1055
    %v1846 = vpack.c.b16 %v1066, %v1061
    %v1847 = vpack.c.b16 %v1067, %v1062
    %v1848 = vpack.c.b16 %v1068, %v1063
    %v1849 = vpack.c.b16 %v1069, %v1064
    %v1850 = vpack.c.b16 %v1070, %v1065
    %v1851 = vpack.c.b16 %v1076, %v1071
    %v1852 = vpack.c.b16 %v1077, %v1072
    %v1853 = vpack.c.b16 %v1078, %v1073
    %v1854 = vpack.c.b16 %v1079, %v1074
    %v1855 = vpack.c.b16 %v1080, %v1075
    %v1856 = vpack.c.b16 %v1086, %v1081
    %v1857 = vpack.c.b16 %v1087, %v1082
    %v1858 = vpack.c.b16 %v1088, %v1083
    %v1859 = vpack.c.b16 %v1089, %v1084
    %v1860 = vpack.c.b16 %v1090, %v1085
    %v1861 = vpack.c.b16 %v1096, %v1091
    %v1862 = vpack.c.b16 %v1097, %v1092
    %v1863 = vpack.c.b16 %v1098, %v1093
    %v1864 = vpack.c.b16 %v1099, %v1094
    %v1865 = vpack.c.b16 %v1100, %v1095
    %v1866 = vpack.c.b16 %v1106, %v1101
    %v1867 = vpack.c.b16 %v1107, %v1102
    %v1868 = vpack.c.b16 %v1108, %v1103
    %v1869 = vpack.c.b16 %v1109, %v1104
    %v1870 = vpack.c.b16 %v1110, %v1105
    %v1871 = vpack.c.b16 %v1116, %v1111
    %v1872 = vpack.c.b16 %v1117, %v1112
    %v1873 = vpack.c.b16 %v1118, %v1113
    %v1874 = vpack.c.b16 %v1119, %v1114
    %v1875 = vpack.c.b16 %v1120, %v1115
    %v1876 = vpack.c.b16 %v1126, %v1121
    %v1877 = vpack.c.b16 %v1127, %v1122
    %v1878 = vpack.c.b16 %v1128, %v1123
    %v1879 = vpack.c.b16 %v1129, %v1124
    %v1880 = vpack.c.b16 %v1130, %v1125
    %v1881 = vpack.c.b16 %v1136, %v1131
    %v1882 = vpack.c.b16 %v1137, %v1132
    %v1883 = vpack.c.b16 %v1138, %v1133
    %v1884 = vpack.c.b16 %v1139, %v1134
    %v1885 = vpack.c.b16 %v1140, %v1135
    %v1886 = vpack.c.b16 %v1146, %v1141
    %v1887 = vpack.c.b16 %v1147, %v1142
    %v1888 = vpack.c.b16 %v1148, %v1143
    %v1889 = vpack.c.b16 %v1149, %v1144
    %v1890 = vpack.c.b16 %v1150, %v1145
    %v1891 = vpack.c.b16 %v1156, %v1151
    %v1892 = vpack.c.b16 %v1157, %v1152
    %v1893 = vpack.c.b16 %v1158, %v1153
    %v1894 = vpack.c.b16 %v1159, %v1154
    %v1895 = vpack.c.b16 %v1160, %v1155
    %v1896 = vpack.c.b16 %v1166, %v1161
    %v1897 = vpack.c.b16 %v1167, %v1162
    %v1898 = vpack.c.b16 %v1168, %v1163
    %v1899 = vpack.c.b16 %v1169, %v1164
    %v1900 = vpack.c.b16 %v1170, %v1165
    %v1901 = vpack.c.b16 %v1176, %v1171
    %v1902 = vpack.c.b16 %v1177, %v1172
    %v1903 = vpack.c.b16 %v1178, %v1173
    %v1904 = vpack.c.b16 %v1179, %v1174
    %v1905 = vpack.c.b16 %v1180, %v1175
    %v1906 = vpack.c.b16 %v1186, %v1181
    %v1907 = vpack.c.b16 %v1187, %v1182
    %v1908 = vpack.c.b16 %v1188, %v1183
    %v1909 = vpack.c.b16 %v1189, %v1184
    %v1910 = vpack.c.b16 %v1190, %v1185
    %v1911 = vpack.c.b16 %v1196, %v1191
    %v1912 = vpack.c.b16 %v1197, %v1192
    %v1913 = vpack.c.b16 %v1198, %v1193
    %v1914 = vpack.c.b16 %v1199, %v1194
    %v1915 = vpack.c.b16 %v1200, %v1195
    %v1916 = vpack.c.b16 %v1206, %v1201
    %v1917 = vpack.c.b16 %v1207, %v1202
    %v1918 = vpack.c.b16 %v1208, %v1203
    %v1919 = vpack.c.b16 %v1209, %v1204
    %v1920 = vpack.c.b16 %v1210, %v1205
    %v1921 = vpack.c.b16 %v1216, %v1211
    %v1922 = vpack.c.b16 %v1217, %v1212
    %v1923 = vpack.c.b16 %v1218, %v1213
    %v1924 = vpack.c.b16 %v1219, %v1214
    %v1925 = vpack.c.b16 %v1220, %v1215
    %v1926 = vpack.c.b16 %v1226, %v1221
    %v1927 = vpack.c.b16 %v1227, %v1222
    %v1928 = vpack.c.b16 %v1228, %v1223
    %v1929 = vpack.c.b16 %v1229, %v1224
    %v1930 = vpack.c.b16 %v1230, %v1225
    %v1931 = vpack.c.b16 %v1236, %v1231
    %v1932 = vpack.c.b16 %v1237, %v1232
    %v1933 = vpack.c.b16 %v1238, %v1233
    %v1934 = vpack.c.b16 %v1239, %v1234
    %v1935 = vpack.c.b16 %v1240, %v1235
    %v1936 = vpack.c.b16 %v1246, %v1241
    %v1937 = vpack.c.b16 %v1247, %v1242
    %v1938 = vpack.c.b16 %v1248, %v1243
    %v1939 = vpack.c.b16 %v1249, %v1244
    %v1940 = vpack.c.b16 %v1250, %v1245
    %v1941 = vpack.c.b16 %v1256, %v1251
    %v1942 = vpack.c.b16 %v1257, %v1252
    %v1943 = vpack.c.b16 %v1258, %v1253
    %v1944 = vpack.c.b16 %v1259, %v1254
    %v1945 = vpack.c.b16 %v1260, %v1255
    %v1946 = vpack.c.b16 %v1266, %v1261
    %v1947 = vpack.c.b16 %v1267, %v1262
    %v1948 = vpack.c.b16 %v1268, %v1263
    %v1949 = vpack.c.b16 %v1269, %v1264
    %v1950 = vpack.c.b16 %v1270, %v1265
    %v1951 = vpack.c.b16 %v1276, %v1271
    %v1952 = vpack.c.b16 %v1277, %v1272
    %v1953 = vpack.c.b16 %v1278, %v1273
    %v1954 = vpack.c.b16 %v1279, %v1274
    %v1955 = vpack.c.b16 %v1280, %v1275
    %v1956 = vpack.c.b16 %v1286, %v1281
    %v1957 = vpack.c.b16 %v1287, %v1282
    %v1958 = vpack.c.b16 %v1288, %v1283
    %v1959 = vpack.c.b16 %v1289, %v1284
    %v1960 = vpack.c.b16 %v1290, %v1285
    %v1961 = vpack.c.b16 %v1296, %v1291
    %v1962 = vpack.c.b16 %v1297, %v1292
    %v1963 = vpack.c.b16 %v1298, %v1293
    %v1964 = vpack.c.b16 %v1299, %v1294
    %v1965 = vpack.c.b16 %v1300, %v1295
    %v1966 = vpack.c.b16 %v1306, %v1301
    %v1967 = vpack.c.b16 %v1307, %v1302
    %v1968 = vpack.c.b16 %v1308, %v1303
    %v1969 = vpack.c.b16 %v1309, %v1304
    %v1970 = vpack.c.b16 %v1310, %v1305
    %v1971 = vpack.c.b16 %v1316, %v1311
    %v1972 = vpack.c.b16 %v1317, %v1312
    %v1973 = vpack.c.b16 %v1318, %v1313
    %v1974 = vpack.c.b16 %v1319, %v1314
    %v1975 = vpack.c.b16 %v1320, %v1315
    %v1976 = vpack.c.b16 %v1326, %v1321
    %v1977 = vpack.c.b16 %v1327, %v1322
    %v1978 = vpack.c.b16 %v1328, %v1323
    %v1979 = vpack.c.b16 %v1329, %v1324
    %v1980 = vpack.c.b16 %v1330, %v1325
    %v1981 = vpack.c.b16 %v1336, %v1331
    %v1982 = vpack.c.b16 %v1337, %v1332
    %v1983 = vpack.c.b16 %v1338, %v1333
    %v1984 = vpack.c.b16 %v1339, %v1334
    %v1985 = vpack.c.b16 %v1340, %v1335
    %v1986 = vpack.c.b16 %v1346, %v1341
    %v1987 = vpack.c.b16 %v1347, %v1342
    %v1988 = vpack.c.b16 %v1348, %v1343
    %v1989 = vpack.c.b16 %v1349, %v1344
    %v1990 = vpack.c.b16 %v1350, %v1345
    %v1991 = vpack.c.b16 %v1356, %v1351
    %v1992 = vpack.c.b16 %v1357, %v1352
    %v1993 = vpack.c.b16 %v1358, %v1353
    %v1994 = vpack.c.b16 %v1359, %v1354
    %v1995 = vpack.c.b16 %v1360, %v1355
    %v1996 = vpack.c.b16 %v1366, %v1361
    %v1997 = vpack.c.b16 %v1367, %v1362
    %v1998 = vpack.c.b16 %v1368, %v1363
    %v1999 = vpack.c.b16 %v1369, %v1364
    %v2000 = vpack.c.b16 %v1370, %v1365
    %v2001 = vpack.c.b16 %v1376, %v1371
    %v2002 = vpack.c.b16 %v1377, %v1372
    %v2003 = vpack.c.b16 %v1378, %v1373
    %v2004 = vpack.c.b16 %v1379, %v1374
    %v2005 = vpack.c.b16 %v1380, %v1375
    %v2006 = vpack.c.b16 %v1386, %v1381
    %v2007 = vpack.c.b16 %v1387, %v1382
    %v2008 = vpack.c.b16 %v1388, %v1383
    %v2009 = vpack.c.b16 %v1389, %v1384
    %v2010 = vpack.c.b16 %v1390, %v1385
    %v2011 = vpack.c.b16 %v1396, %v1391
    %v2012 = vpack.c.b16 %v1397, %v1392
    %v2013 = vpack.c.b16 %v1398, %v1393
    %v2014 = vpack.c.b16 %v1399, %v1394
    %v2015 = vpack.c.b16 %v1400, %v1395
    %v2016 = vpack.c.b16 %v1406, %v1401
    %v2017 = vpack.c.b16 %v1407, %v1402
    %v2018 = vpack.c.b16 %v1408, %v1403
    %v2019 = vpack.c.b16 %v1409, %v1404
    %v2020 = vpack.c.b16 %v1410, %v1405
    %v2021 = vpack.c.b16 %v1416, %v1411
    %v2022 = vpack.c.b16 %v1417, %v1412
    %v2023 = vpack.c.b16 %v1418, %v1413
    %v2024 = vpack.c.b16 %v1419, %v1414
    %v2025 = vpack.c.b16 %v1420, %v1415
    %v2026 = vpack.c.b16 %v1426, %v1421
    %v2027 = vpack.c.b16 %v1427, %v1422
    %v2028 = vpack.c.b16 %v1428, %v1423
    %v2029 = vpack.c.b16 %v1429, %v1424
    %v2030 = vpack.c.b16 %v1430, %v1425
    %v2031 = vpack.c.b16 %v1436, %v1431
    %v2032 = vpack.c.b16 %v1437, %v1432
    %v2033 = vpack.c.b16 %v1438, %v1433
    %v2034 = vpack.c.b16 %v1439, %v1434
    %v2035 = vpack.c.b16 %v1440, %v1435
    %v2036 = vpack.c.b16 %v1446, %v1441
    %v2037 = vpack.c.b16 %v1447, %v1442
    %v2038 = vpack.c.b16 %v1448, %v1443
    %v2039 = vpack.c.b16 %v1449, %v1444
    %v2040 = vpack.c.b16 %v1450, %v1445
    %v2041 = vpack.c.b16 %v1456, %v1451
    %v2042 = vpack.c.b16 %v1457, %v1452
    %v2043 = vpack.c.b16 %v1458, %v1453
    %v2044 = vpack.c.b16 %v1459, %v1454
    %v2045 = vpack.c.b16 %v1460, %v1455
    %v2046 = vpack.c.b16 %v1466, %v1461
    %v2047 = vpack.c.b16 %v1467, %v1462
    %v2048 = vpack.c.b16 %v1468, %v1463
    %v2049 = vpack.c.b16 %v1469, %v1464
    %v2050 = vpack.c.b16 %v1470, %v1465
    %v2051 = vpack.c.b16 %v1476, %v1471
    %v2052 = vpack.c.b16 %v1477, %v1472
    %v2053 = vpack.c.b16 %v1478, %v1473
    %v2054 = vpack.c.b16 %v1479, %v1474
    %v2055 = vpack.c.b16 %v1480, %v1475
    %v2056 = vpack.c.b16 %v1486, %v1481
    %v2057 = vpack.c.b16 %v1487, %v1482
    %v2058 = vpack.c.b16 %v1488, %v1483
    %v2059 = vpack.c.b16 %v1489, %v1484
    %v2060 = vpack.c.b16 %v1490, %v1485
    %v2061 = vpack.c.b16 %v1496, %v1491
    %v2062 = vpack.c.b16 %v1497, %v1492
    %v2063 = vpack.c.b16 %v1498, %v1493
    %v2064 = vpack.c.b16 %v1499, %v1494
    %v2065 = vpack.c.b16 %v1500, %v1495
    %v2066 = vpack.c.b16 %v1506, %v1501
    %v2067 = vpack.c.b16 %v1507, %v1502
    %v2068 = vpack.c.b16 %v1508, %v1503
    %v2069 = vpack.c.b16 %v1509, %v1504
    %v2070 = vpack.c.b16 %v1510, %v1505
    %v2071 = vpack.c.b16 %v1516, %v1511
    %v2072 = vpack.c.b16 %v1517, %v1512
    %v2073 = vpack.c.b16 %v1518, %v1513
    %v2074 = vpack.c.b16 %v1519, %v1514
    %v2075 = vpack.c.b16 %v1520, %v1515
    %v2076 = vpack.c.b16 %v1526, %v1521
    %v2077 = vpack.c.b16 %v1527, %v1522
    %v2078 = vpack.c.b16 %v1528, %v1523
    %v2079 = vpack.c.b16 %v1529, %v1524
    %v2080 = vpack.c.b16 %v1530, %v1525
    %v2081 = vpack.c.b16 %v1536, %v1531
    %v2082 = vpack.c.b16 %v1537, %v1532
    %v2083 = vpack.c.b16 %v1538, %v1533
    %v2084 = vpack.c.b16 %v1539, %v1534
    %v2085 = vpack.c.b16 %v1540, %v1535
    %v2086 = vpack.c.b16 %v1546, %v1541
    %v2087 = vpack.c.b16 %v1547, %v1542
    %v2088 = vpack.c.b16 %v1548, %v1543
    %v2089 = vpack.c.b16 %v1549, %v1544
    %v2090 = vpack.c.b16 %v1550, %v1545
    %v2091 = vpack.c.b16 %v1556, %v1551
    %v2092 = vpack.c.b16 %v1557, %v1552
    %v2093 = vpack.c.b16 %v1558, %v1553
    %v2094 = vpack.c.b16 %v1559, %v1554
    %v2095 = vpack.c.b16 %v1560, %v1555
    %v2096 = vpack.c.b16 %v1566, %v1561
    %v2097 = vpack.c.b16 %v1567, %v1562
    %v2098 = vpack.c.b16 %v1568, %v1563
    %v2099 = vpack.c.b16 %v1569, %v1564
    %v2100 = vpack.c.b16 %v1570, %v1565
    %v2101 = vpack.c.b16 %v1576, %v1571
    %v2102 = vpack.c.b16 %v1577, %v1572
    %v2103 = vpack.c.b16 %v1578, %v1573
    %v2104 = vpack.c.b16 %v1579, %v1574
    %v2105 = vpack.c.b16 %v1580, %v1575
    %v2106 = vpack.c.b16 %v1586, %v1581
    %v2107 = vpack.c.b16 %v1587, %v1582
    %v2108 = vpack.c.b16 %v1588, %v1583
    %v2109 = vpack.c.b16 %v1589, %v1584
    %v2110 = vpack.c.b16 %v1590, %v1585
    %v2111 = vpack.c.b16 %v1596, %v1591
    %v2112 = vpack.c.b16 %v1597, %v1592
    %v2113 = vpack.c.b16 %v1598, %v1593
    %v2114 = vpack.c.b16 %v1599, %v1594
    %v2115 = vpack.c.b16 %v1600, %v1595
    %v2116 = vpack.c.b16 %v1606, %v1601
    %v2117 = vpack.c.b16 %v1607, %v1602
    %v2118 = vpack.c.b16 %v1608, %v1603
    %v2119 = vpack.c.b16 %v1609, %v1604
    %v2120 = vpack.c.b16 %v1610, %v1605
    %v2121 = vpack.c.b16 %v1616, %v1611
    %v2122 = vpack.c.b16 %v1617, %v1612
    %v2123 = vpack.c.b16 %v1618, %v1613
    %v2124 = vpack.c.b16 %v1619, %v1614
    %v2125 = vpack.c.b16 %v1620, %v1615
    %v2126 = vpack.c.b16 %v1626, %v1621
    %v2127 = vpack.c.b16 %v1627, %v1622
    %v2128 = vpack.c.b16 %v1628, %v1623
    %v2129 = vpack.c.b16 %v1629, %v1624
    %v2130 = vpack.c.b16 %v1630, %v1625
    %v2131 = vpack.c.b16 %v1636, %v1631
    %v2132 = vpack.c.b16 %v1637, %v1632
    %v2133 = vpack.c.b16 %v1638, %v1633
    %v2134 = vpack.c.b16 %v1639, %v1634
    %v2135 = vpack.c.b16 %v1640, %v1635
    %v2136 = vpack.c.b16 %v1646, %v1641
    %v2137 = vpack.c.b16 %v1647, %v1642
    %v2138 = vpack.c.b16 %v1648, %v1643
    %v2139 = vpack.c.b16 %v1649, %v1644
    %v2140 = vpack.c.b16 %v1650, %v1645
    %v2141 = vpack.c.b16 %v1656, %v1651
    %v2142 = vpack.c.b16 %v1657, %v1652
    %v2143 = vpack.c.b16 %v1658, %v1653
    %v2144 = vpack.c.b16 %v1659, %v1654
    %v2145 = vpack.c.b16 %v1660, %v1655
    %v2146 = vpack.c.b16 %v1666, %v1661
    %v2147 = vpack.c.b16 %v1667, %v1662
    %v2148 = vpack.c.b16 %v1668, %v1663
    %v2149 = vpack.c.b16 %v1669, %v1664
    %v2150 = vpack.c.b16 %v1670, %v1665
    %v2151 = vpack.c.b16 %v1676, %v1671
    %v2152 = vpack.c.b16 %v1677, %v1672
    %v2153 = vpack.c.b16 %v1678, %v1673
    %v2154 = vpack.c.b16 %v1679, %v1674
    %v2155 = vpack.c.b16 %v1680, %v1675
    %v2156 = vpack.c.b16 %v1686, %v1681
    %v2157 = vpack.c.b16 %v1687, %v1682
    %v2158 = vpack.c.b16 %v1688, %v1683
    %v2159 = vpack.c.b16 %v1689, %v1684
    %v2160 = vpack.c.b16 %v1690, %v1685
    %v2161 = vpack.c.b16 %v1696, %v1691
    %v2162 = vpack.c.b16 %v1697, %v1692
    %v2163 = vpack.c.b16 %v1698, %v1693
    %v2164 = vpack.c.b16 %v1699, %v1694
    %v2165 = vpack.c.b16 %v1700, %v1695
    %v2166 = vpack.c.b16 %v1706, %v1701
    %v2167 = vpack.c.b16 %v1707, %v1702
    %v2168 = vpack.c.b16 %v1708, %v1703
    %v2169 = vpack.c.b16 %v1709, %v1704
    %v2170 = vpack.c.b16 %v1710, %v1705
    %v2171 = vpack.c.b16 %v1716, %v1711
    %v2172 = vpack.c.b16 %v1717, %v1712
    %v2173 = vpack.c.b16 %v1718, %v1713
    %v2174 = vpack.c.b16 %v1719, %v1714
    %v2175 = vpack.c.b16 %v1720, %v1715
    %v2176 = vpack.c.b16 %v1726, %v1721
    %v2177 = vpack.c.b16 %v1727, %v1722
    %v2178 = vpack.c.b16 %v1728, %v1723
    %v2179 = vpack.c.b16 %v1729, %v1724
    %v2180 = vpack.c.b16 %v1730, %v1725
    %v2181 = vpack.c.b16 %v1736, %v1731
    %v2182 = vpack.c.b16 %v1737, %v1732
    %v2183 = vpack.c.b16 %v1738, %v1733
    %v2184 = vpack.c.b16 %v1739, %v1734
    %v2185 = vpack.c.b16 %v1740, %v1735
    %v2186 = vpack.c.b16 %v1746, %v1741
    %v2187 = vpack.c.b16 %v1747, %v1742
    %v2188 = vpack.c.b16 %v1748, %v1743
    %v2189 = vpack.c.b16 %v1749, %v1744
    %v2190 = vpack.c.b16 %v1750, %v1745
    %v2191 = vpack.c.b16 %v1756, %v1751
    %v2192 = vpack.c.b16 %v1757, %v1752
    %v2193 = vpack.c.b16 %v1758, %v1753
    %v2194 = vpack.c.b16 %v1759, %v1754
    %v2195 = vpack.c.b16 %v1760, %v1755
    %v2196 = vpack.c.b16 %v1766, %v1761
    %v2197 = vpack.c.b16 %v1767, %v1762
    %v2198 = vpack.c.b16 %v1768, %v1763
    %v2199 = vpack.c.b16 %v1769, %v1764
    %v2200 = vpack.c.b16 %v1770, %v1765
    %v2201 = vpack.c.b16 %v1776, %v1771
    %v2202 = vpack.c.b16 %v1777, %v1772
    %v2203 = vpack.c.b16 %v1778, %v1773
    %v2204 = vpack.c.b16 %v1779, %v1774
    %v2205 = vpack.c.b16 %v1780, %v1775
    %v2206 = vpack.c.b16 %v1786, %v1781
    %v2207 = vpack.c.b16 %v1787, %v1782
    %v2208 = vpack.c.b16 %v1788, %v1783
    %v2209 = vpack.c.b16 %v1789, %v1784
    %v2210 = vpack.c.b16 %v1790, %v1785
    %v2211 = vpack.c.b16 %v1796, %v1791
    %v2212 = vpack.c.b16 %v1797, %v1792
    %v2213 = vpack.c.b16 %v1798, %v1793
    %v2214 = vpack.c.b16 %v1799, %v1794
    %v2215 = vpack.c.b16 %v1800, %v1795
    %v2216 = vpack.c.b16 %v1806, %v1801
    %v2217 = vpack.c.b16 %v1807, %v1802
    %v2218 = vpack.c.b16 %v1808, %v1803
    %v2219 = vpack.c.b16 %v1809, %v1804
    %v2220 = vpack.c.b16 %v1810, %v1805
    %v2221 = vpack.c.b16 %v1816, %v1811
    %v2222 = vpack.c.b16 %v1817, %v1812
    %v2223 = vpack.c.b16 %v1818, %v1813
    %v2224 = vpack.c.b16 %v1819, %v1814
    %v2225 = vpack.c.b16 %v1820, %v1815
    %v2226 = vpack.c.b16 %v1826, %v1821
    %v2227 = vpack.c.b16 %v1827, %v1822
    %v2228 = vpack.c.b16 %v1828, %v1823
    %v2229 = vpack.c.b16 %v1829, %v1824
    %v2230 = vpack.c.b16 %v1830, %v1825
    %2631 = vmatpush.bf16.msra.mxu0 %v1866
    %2632 = vmatpush.bf16.msra.mxu0 %v1861
    %2633 = vmatpush.bf16.msra.mxu0 %v1856
    %2634 = vmatpush.bf16.msra.mxu0 %v1851
    %2635 = vmatpush.bf16.msra.mxu0 %v1846
    %2636 = vmatpush.bf16.msra.mxu0 %v1841
    %2637 = vmatpush.bf16.msra.mxu0 %v1836
    %2638 = vmatpush.bf16.msra.mxu0 %v1831
    %2639 = vmatmul.bf16.gmra.mxu0 %v529
    %v2640 = vpop.f32.mrf.mxu0
    %v2641 = vadd.f32 %v517, %v2640
    %v2642 = vpop.f32.mrf.mxu0
    %2643 = vdwg.mxu0
    %2644 = vmatpush.bf16.msra.mxu0 %v1906
    %2645 = vmatpush.bf16.msra.mxu0 %v1901
    %2646 = vmatpush.bf16.msra.mxu0 %v1896
    %2647 = vmatpush.bf16.msra.mxu0 %v1891
    %2648 = vmatpush.bf16.msra.mxu0 %v1886
    %2649 = vmatpush.bf16.msra.mxu0 %v1881
    %2650 = vmatpush.bf16.msra.mxu0 %v1876
    %2651 = vmatpush.bf16.msra.mxu0 %v1871
    %2652 = vmatmul.bf16.gmra.mxu0 %v530
    %v2653 = vpop.f32.mrf.mxu0
    %v2654 = vadd.f32 %v2641, %v2653
    %v2655 = vpop.f32.mrf.mxu0
    %2656 = vdwg.mxu0
    %2657 = vmatpush.bf16.msra.mxu0 %v1946
    %2658 = vmatpush.bf16.msra.mxu0 %v1941
    %2659 = vmatpush.bf16.msra.mxu0 %v1936
    %2660 = vmatpush.bf16.msra.mxu0 %v1931
    %2661 = vmatpush.bf16.msra.mxu0 %v1926
    %2662 = vmatpush.bf16.msra.mxu0 %v1921
    %2663 = vmatpush.bf16.msra.mxu0 %v1916
    %2664 = vmatpush.bf16.msra.mxu0 %v1911
    %2665 = vmatmul.bf16.gmra.mxu0 %v531
    %v2666 = vpop.f32.mrf.mxu0
    %v2667 = vadd.f32 %v2654, %v2666
    %v2668 = vpop.f32.mrf.mxu0
    %2669 = vdwg.mxu0
    %2670 = vmatpush.bf16.msra.mxu0 %v1986
    %2671 = vmatpush.bf16.msra.mxu0 %v1981
    %2672 = vmatpush.bf16.msra.mxu0 %v1976
    %2673 = vmatpush.bf16.msra.mxu0 %v1971
    %2674 = vmatpush.bf16.msra.mxu0 %v1966
    %2675 = vmatpush.bf16.msra.mxu0 %v1961
    %2676 = vmatpush.bf16.msra.mxu0 %v1956
    %2677 = vmatpush.bf16.msra.mxu0 %v1951
    %2678 = vmatmul.bf16.gmra.mxu0 %v532
    %v2679 = vpop.f32.mrf.mxu0
    %v2680 = vadd.f32 %v2667, %v2679
    %v2681 = vpop.f32.mrf.mxu0
    %2682 = vdwg.mxu0
    %2683 = vmatpush.bf16.msra.mxu0 %v2026
    %2684 = vmatpush.bf16.msra.mxu0 %v2021
    %2685 = vmatpush.bf16.msra.mxu0 %v2016
    %2686 = vmatpush.bf16.msra.mxu0 %v2011
    %2687 = vmatpush.bf16.msra.mxu0 %v2006
    %2688 = vmatpush.bf16.msra.mxu0 %v2001
    %2689 = vmatpush.bf16.msra.mxu0 %v1996
    %2690 = vmatpush.bf16.msra.mxu0 %v1991
    %2691 = vmatmul.bf16.gmra.mxu0 %v533
    %v2692 = vpop.f32.mrf.mxu0
    %v2693 = vadd.f32 %v2680, %v2692
    %v2694 = vpop.f32.mrf.mxu0
    %2695 = vdwg.mxu0
    %2696 = vmatpush.bf16.msra.mxu0 %v2066
    %2697 = vmatpush.bf16.msra.mxu0 %v2061
    %2698 = vmatpush.bf16.msra.mxu0 %v2056
    %2699 = vmatpush.bf16.msra.mxu0 %v2051
    %2700 = vmatpush.bf16.msra.mxu0 %v2046
    %2701 = vmatpush.bf16.msra.mxu0 %v2041
    %2702 = vmatpush.bf16.msra.mxu0 %v2036
    %2703 = vmatpush.bf16.msra.mxu0 %v2031
    %2704 = vmatmul.bf16.gmra.mxu0 %v534
    %v2705 = vpop.f32.mrf.mxu0
    %v2706 = vadd.f32 %v2693, %v2705
    %v2707 = vpop.f32.mrf.mxu0
    %2708 = vdwg.mxu0
    %2709 = vmatpush.bf16.msra.mxu0 %v2106
    %2710 = vmatpush.bf16.msra.mxu0 %v2101
    %2711 = vmatpush.bf16.msra.mxu0 %v2096
    %2712 = vmatpush.bf16.msra.mxu0 %v2091
    %2713 = vmatpush.bf16.msra.mxu0 %v2086
    %2714 = vmatpush.bf16.msra.mxu0 %v2081
    %2715 = vmatpush.bf16.msra.mxu0 %v2076
    %2716 = vmatpush.bf16.msra.mxu0 %v2071
    %2717 = vmatmul.bf16.gmra.mxu0 %v535
    %v2718 = vpop.f32.mrf.mxu0
    %v2719 = vadd.f32 %v2706, %v2718
    %v2720 = vpop.f32.mrf.mxu0
    %2721 = vdwg.mxu0
    %2722 = vmatpush.bf16.msra.mxu0 %v2146
    %2723 = vmatpush.bf16.msra.mxu0 %v2141
    %2724 = vmatpush.bf16.msra.mxu0 %v2136
    %2725 = vmatpush.bf16.msra.mxu0 %v2131
    %2726 = vmatpush.bf16.msra.mxu0 %v2126
    %2727 = vmatpush.bf16.msra.mxu0 %v2121
    %2728 = vmatpush.bf16.msra.mxu0 %v2116
    %2729 = vmatpush.bf16.msra.mxu0 %v2111
    %2730 = vmatmul.bf16.gmra.mxu0 %v536
    %v2731 = vpop.f32.mrf.mxu0
    %v2732 = vadd.f32 %v2719, %v2731
    %v2733 = vpop.f32.mrf.mxu0
    %2734 = vdwg.mxu0
    %2735 = vmatpush.bf16.msra.mxu0 %v2186
    %2736 = vmatpush.bf16.msra.mxu0 %v2181
    %2737 = vmatpush.bf16.msra.mxu0 %v2176
    %2738 = vmatpush.bf16.msra.mxu0 %v2171
    %2739 = vmatpush.bf16.msra.mxu0 %v2166
    %2740 = vmatpush.bf16.msra.mxu0 %v2161
    %2741 = vmatpush.bf16.msra.mxu0 %v2156
    %2742 = vmatpush.bf16.msra.mxu0 %v2151
    %2743 = vmatmul.bf16.gmra.mxu0 %v539
    %v2744 = vpop.f32.mrf.mxu0
    %v2745 = vadd.f32 %v2732, %v2744
    %v2746 = vpop.f32.mrf.mxu0
    %2747 = vdwg.mxu0
    %2748 = vmatpush.bf16.msra.mxu0 %v2226
    %2749 = vmatpush.bf16.msra.mxu0 %v2221
    %2750 = vmatpush.bf16.msra.mxu0 %v2216
    %2751 = vmatpush.bf16.msra.mxu0 %v2211
    %2752 = vmatpush.bf16.msra.mxu0 %v2206
    %2753 = vmatpush.bf16.msra.mxu0 %v2201
    %2754 = vmatpush.bf16.msra.mxu0 %v2196
    %2755 = vmatpush.bf16.msra.mxu0 %v2191
    %2756 = vmatmul.bf16.gmra.mxu0 %v540
    %v2757 = vpop.f32.mrf.mxu0
    %v2758 = vadd.f32 %v2745, %v2757
    %v2759 = vpop.f32.mrf.mxu0
    %2760 = vdwg.mxu0
    %2761 = vmatpush.bf16.msra.mxu0 %v1867
    %2762 = vmatpush.bf16.msra.mxu0 %v1862
    %2763 = vmatpush.bf16.msra.mxu0 %v1857
    %2764 = vmatpush.bf16.msra.mxu0 %v1852
    %2765 = vmatpush.bf16.msra.mxu0 %v1847
    %2766 = vmatpush.bf16.msra.mxu0 %v1842
    %2767 = vmatpush.bf16.msra.mxu0 %v1837
    %2768 = vmatpush.bf16.msra.mxu0 %v1832
    %2769 = vmatmul.bf16.gmra.mxu0 %v529
    %v2770 = vpop.f32.mrf.mxu0
    %v2771 = vadd.f32 %v518, %v2770
    %v2772 = vpop.f32.mrf.mxu0
    %2773 = vdwg.mxu0
    %2774 = vmatpush.bf16.msra.mxu0 %v1907
    %2775 = vmatpush.bf16.msra.mxu0 %v1902
    %2776 = vmatpush.bf16.msra.mxu0 %v1897
    %2777 = vmatpush.bf16.msra.mxu0 %v1892
    %2778 = vmatpush.bf16.msra.mxu0 %v1887
    %2779 = vmatpush.bf16.msra.mxu0 %v1882
    %2780 = vmatpush.bf16.msra.mxu0 %v1877
    %2781 = vmatpush.bf16.msra.mxu0 %v1872
    %2782 = vmatmul.bf16.gmra.mxu0 %v530
    %v2783 = vpop.f32.mrf.mxu0
    %v2784 = vadd.f32 %v2771, %v2783
    %v2785 = vpop.f32.mrf.mxu0
    %2786 = vdwg.mxu0
    %2787 = vmatpush.bf16.msra.mxu0 %v1947
    %2788 = vmatpush.bf16.msra.mxu0 %v1942
    %2789 = vmatpush.bf16.msra.mxu0 %v1937
    %2790 = vmatpush.bf16.msra.mxu0 %v1932
    %2791 = vmatpush.bf16.msra.mxu0 %v1927
    %2792 = vmatpush.bf16.msra.mxu0 %v1922
    %2793 = vmatpush.bf16.msra.mxu0 %v1917
    %2794 = vmatpush.bf16.msra.mxu0 %v1912
    %2795 = vmatmul.bf16.gmra.mxu0 %v531
    %v2796 = vpop.f32.mrf.mxu0
    %v2797 = vadd.f32 %v2784, %v2796
    %v2798 = vpop.f32.mrf.mxu0
    %2799 = vdwg.mxu0
    %2800 = vmatpush.bf16.msra.mxu0 %v1987
    %2801 = vmatpush.bf16.msra.mxu0 %v1982
    %2802 = vmatpush.bf16.msra.mxu0 %v1977
    %2803 = vmatpush.bf16.msra.mxu0 %v1972
    %2804 = vmatpush.bf16.msra.mxu0 %v1967
    %2805 = vmatpush.bf16.msra.mxu0 %v1962
    %2806 = vmatpush.bf16.msra.mxu0 %v1957
    %2807 = vmatpush.bf16.msra.mxu0 %v1952
    %2808 = vmatmul.bf16.gmra.mxu0 %v532
    %v2809 = vpop.f32.mrf.mxu0
    %v2810 = vadd.f32 %v2797, %v2809
    %v2811 = vpop.f32.mrf.mxu0
    %2812 = vdwg.mxu0
    %2813 = vmatpush.bf16.msra.mxu0 %v2027
    %2814 = vmatpush.bf16.msra.mxu0 %v2022
    %2815 = vmatpush.bf16.msra.mxu0 %v2017
    %2816 = vmatpush.bf16.msra.mxu0 %v2012
    %2817 = vmatpush.bf16.msra.mxu0 %v2007
    %2818 = vmatpush.bf16.msra.mxu0 %v2002
    %2819 = vmatpush.bf16.msra.mxu0 %v1997
    %2820 = vmatpush.bf16.msra.mxu0 %v1992
    %2821 = vmatmul.bf16.gmra.mxu0 %v533
    %v2822 = vpop.f32.mrf.mxu0
    %v2823 = vadd.f32 %v2810, %v2822
    %v2824 = vpop.f32.mrf.mxu0
    %2825 = vdwg.mxu0
    %2826 = vmatpush.bf16.msra.mxu0 %v2067
    %2827 = vmatpush.bf16.msra.mxu0 %v2062
    %2828 = vmatpush.bf16.msra.mxu0 %v2057
    %2829 = vmatpush.bf16.msra.mxu0 %v2052
    %2830 = vmatpush.bf16.msra.mxu0 %v2047
    %2831 = vmatpush.bf16.msra.mxu0 %v2042
    %2832 = vmatpush.bf16.msra.mxu0 %v2037
    %2833 = vmatpush.bf16.msra.mxu0 %v2032
    %2834 = vmatmul.bf16.gmra.mxu0 %v534
    %v2835 = vpop.f32.mrf.mxu0
    %v2836 = vadd.f32 %v2823, %v2835
    %v2837 = vpop.f32.mrf.mxu0
    %2838 = vdwg.mxu0
    %2839 = vmatpush.bf16.msra.mxu0 %v2107
    %2840 = vmatpush.bf16.msra.mxu0 %v2102
    %2841 = vmatpush.bf16.msra.mxu0 %v2097
    %2842 = vmatpush.bf16.msra.mxu0 %v2092
    %2843 = vmatpush.bf16.msra.mxu0 %v2087
    %2844 = vmatpush.bf16.msra.mxu0 %v2082
    %2845 = vmatpush.bf16.msra.mxu0 %v2077
    %2846 = vmatpush.bf16.msra.mxu0 %v2072
    %2847 = vmatmul.bf16.gmra.mxu0 %v535
    %v2848 = vpop.f32.mrf.mxu0
    %v2849 = vadd.f32 %v2836, %v2848
    %v2850 = vpop.f32.mrf.mxu0
    %2851 = vdwg.mxu0
    %2852 = vmatpush.bf16.msra.mxu0 %v2147
    %2853 = vmatpush.bf16.msra.mxu0 %v2142
    %2854 = vmatpush.bf16.msra.mxu0 %v2137
    %2855 = vmatpush.bf16.msra.mxu0 %v2132
    %2856 = vmatpush.bf16.msra.mxu0 %v2127
    %2857 = vmatpush.bf16.msra.mxu0 %v2122
    %2858 = vmatpush.bf16.msra.mxu0 %v2117
    %2859 = vmatpush.bf16.msra.mxu0 %v2112
    %2860 = vmatmul.bf16.gmra.mxu0 %v536
    %v2861 = vpop.f32.mrf.mxu0
    %v2862 = vadd.f32 %v2849, %v2861
    %v2863 = vpop.f32.mrf.mxu0
    %2864 = vdwg.mxu0
    %2865 = vmatpush.bf16.msra.mxu0 %v2187
    %2866 = vmatpush.bf16.msra.mxu0 %v2182
    %2867 = vmatpush.bf16.msra.mxu0 %v2177
    %2868 = vmatpush.bf16.msra.mxu0 %v2172
    %2869 = vmatpush.bf16.msra.mxu0 %v2167
    %2870 = vmatpush.bf16.msra.mxu0 %v2162
    %2871 = vmatpush.bf16.msra.mxu0 %v2157
    %2872 = vmatpush.bf16.msra.mxu0 %v2152
    %2873 = vmatmul.bf16.gmra.mxu0 %v539
    %v2874 = vpop.f32.mrf.mxu0
    %v2875 = vadd.f32 %v2862, %v2874
    %v2876 = vpop.f32.mrf.mxu0
    %2877 = vdwg.mxu0
    %2878 = vmatpush.bf16.msra.mxu0 %v2227
    %2879 = vmatpush.bf16.msra.mxu0 %v2222
    %2880 = vmatpush.bf16.msra.mxu0 %v2217
    %2881 = vmatpush.bf16.msra.mxu0 %v2212
    %2882 = vmatpush.bf16.msra.mxu0 %v2207
    %2883 = vmatpush.bf16.msra.mxu0 %v2202
    %2884 = vmatpush.bf16.msra.mxu0 %v2197
    %2885 = vmatpush.bf16.msra.mxu0 %v2192
    %2886 = vmatmul.bf16.gmra.mxu0 %v540
    %v2887 = vpop.f32.mrf.mxu0
    %v2888 = vadd.f32 %v2875, %v2887
    %v2889 = vpop.f32.mrf.mxu0
    %2890 = vdwg.mxu0
    %2891 = vmatpush.bf16.msra.mxu0 %v1868
    %2892 = vmatpush.bf16.msra.mxu0 %v1863
    %2893 = vmatpush.bf16.msra.mxu0 %v1858
    %2894 = vmatpush.bf16.msra.mxu0 %v1853
    %2895 = vmatpush.bf16.msra.mxu0 %v1848
    %2896 = vmatpush.bf16.msra.mxu0 %v1843
    %2897 = vmatpush.bf16.msra.mxu0 %v1838
    %2898 = vmatpush.bf16.msra.mxu0 %v1833
    %2899 = vmatmul.bf16.gmra.mxu0 %v529
    %v2900 = vpop.f32.mrf.mxu0
    %v2901 = vadd.f32 %v519, %v2900
    %v2902 = vpop.f32.mrf.mxu0
    %2903 = vdwg.mxu0
    %2904 = vmatpush.bf16.msra.mxu0 %v1908
    %2905 = vmatpush.bf16.msra.mxu0 %v1903
    %2906 = vmatpush.bf16.msra.mxu0 %v1898
    %2907 = vmatpush.bf16.msra.mxu0 %v1893
    %2908 = vmatpush.bf16.msra.mxu0 %v1888
    %2909 = vmatpush.bf16.msra.mxu0 %v1883
    %2910 = vmatpush.bf16.msra.mxu0 %v1878
    %2911 = vmatpush.bf16.msra.mxu0 %v1873
    %2912 = vmatmul.bf16.gmra.mxu0 %v530
    %v2913 = vpop.f32.mrf.mxu0
    %v2914 = vadd.f32 %v2901, %v2913
    %v2915 = vpop.f32.mrf.mxu0
    %2916 = vdwg.mxu0
    %2917 = vmatpush.bf16.msra.mxu0 %v1948
    %2918 = vmatpush.bf16.msra.mxu0 %v1943
    %2919 = vmatpush.bf16.msra.mxu0 %v1938
    %2920 = vmatpush.bf16.msra.mxu0 %v1933
    %2921 = vmatpush.bf16.msra.mxu0 %v1928
    %2922 = vmatpush.bf16.msra.mxu0 %v1923
    %2923 = vmatpush.bf16.msra.mxu0 %v1918
    %2924 = vmatpush.bf16.msra.mxu0 %v1913
    %2925 = vmatmul.bf16.gmra.mxu0 %v531
    %v2926 = vpop.f32.mrf.mxu0
    %v2927 = vadd.f32 %v2914, %v2926
    %v2928 = vpop.f32.mrf.mxu0
    %2929 = vdwg.mxu0
    %2930 = vmatpush.bf16.msra.mxu0 %v1988
    %2931 = vmatpush.bf16.msra.mxu0 %v1983
    %2932 = vmatpush.bf16.msra.mxu0 %v1978
    %2933 = vmatpush.bf16.msra.mxu0 %v1973
    %2934 = vmatpush.bf16.msra.mxu0 %v1968
    %2935 = vmatpush.bf16.msra.mxu0 %v1963
    %2936 = vmatpush.bf16.msra.mxu0 %v1958
    %2937 = vmatpush.bf16.msra.mxu0 %v1953
    %2938 = vmatmul.bf16.gmra.mxu0 %v532
    %v2939 = vpop.f32.mrf.mxu0
    %v2940 = vadd.f32 %v2927, %v2939
    %v2941 = vpop.f32.mrf.mxu0
    %2942 = vdwg.mxu0
    %2943 = vmatpush.bf16.msra.mxu0 %v2028
    %2944 = vmatpush.bf16.msra.mxu0 %v2023
    %2945 = vmatpush.bf16.msra.mxu0 %v2018
    %2946 = vmatpush.bf16.msra.mxu0 %v2013
    %2947 = vmatpush.bf16.msra.mxu0 %v2008
    %2948 = vmatpush.bf16.msra.mxu0 %v2003
    %2949 = vmatpush.bf16.msra.mxu0 %v1998
    %2950 = vmatpush.bf16.msra.mxu0 %v1993
    %2951 = vmatmul.bf16.gmra.mxu0 %v533
    %v2952 = vpop.f32.mrf.mxu0
    %v2953 = vadd.f32 %v2940, %v2952
    %v2954 = vpop.f32.mrf.mxu0
    %2955 = vdwg.mxu0
    %2956 = vmatpush.bf16.msra.mxu0 %v2068
    %2957 = vmatpush.bf16.msra.mxu0 %v2063
    %2958 = vmatpush.bf16.msra.mxu0 %v2058
    %2959 = vmatpush.bf16.msra.mxu0 %v2053
    %2960 = vmatpush.bf16.msra.mxu0 %v2048
    %2961 = vmatpush.bf16.msra.mxu0 %v2043
    %2962 = vmatpush.bf16.msra.mxu0 %v2038
    %2963 = vmatpush.bf16.msra.mxu0 %v2033
    %2964 = vmatmul.bf16.gmra.mxu0 %v534
    %v2965 = vpop.f32.mrf.mxu0
    %v2966 = vadd.f32 %v2953, %v2965
    %v2967 = vpop.f32.mrf.mxu0
    %2968 = vdwg.mxu0
    %2969 = vmatpush.bf16.msra.mxu0 %v2108
    %2970 = vmatpush.bf16.msra.mxu0 %v2103
    %2971 = vmatpush.bf16.msra.mxu0 %v2098
    %2972 = vmatpush.bf16.msra.mxu0 %v2093
    %2973 = vmatpush.bf16.msra.mxu0 %v2088
    %2974 = vmatpush.bf16.msra.mxu0 %v2083
    %2975 = vmatpush.bf16.msra.mxu0 %v2078
    %2976 = vmatpush.bf16.msra.mxu0 %v2073
    %2977 = vmatmul.bf16.gmra.mxu0 %v535
    %v2978 = vpop.f32.mrf.mxu0
    %v2979 = vadd.f32 %v2966, %v2978
    %v2980 = vpop.f32.mrf.mxu0
    %2981 = vdwg.mxu0
    %2982 = vmatpush.bf16.msra.mxu0 %v2148
    %2983 = vmatpush.bf16.msra.mxu0 %v2143
    %2984 = vmatpush.bf16.msra.mxu0 %v2138
    %2985 = vmatpush.bf16.msra.mxu0 %v2133
    %2986 = vmatpush.bf16.msra.mxu0 %v2128
    %2987 = vmatpush.bf16.msra.mxu0 %v2123
    %2988 = vmatpush.bf16.msra.mxu0 %v2118
    %2989 = vmatpush.bf16.msra.mxu0 %v2113
    %2990 = vmatmul.bf16.gmra.mxu0 %v536
    %v2991 = vpop.f32.mrf.mxu0
    %v2992 = vadd.f32 %v2979, %v2991
    %v2993 = vpop.f32.mrf.mxu0
    %2994 = vdwg.mxu0
    %2995 = vmatpush.bf16.msra.mxu0 %v2188
    %2996 = vmatpush.bf16.msra.mxu0 %v2183
    %2997 = vmatpush.bf16.msra.mxu0 %v2178
    %2998 = vmatpush.bf16.msra.mxu0 %v2173
    %2999 = vmatpush.bf16.msra.mxu0 %v2168
    %3000 = vmatpush.bf16.msra.mxu0 %v2163
    %3001 = vmatpush.bf16.msra.mxu0 %v2158
    %3002 = vmatpush.bf16.msra.mxu0 %v2153
    %3003 = vmatmul.bf16.gmra.mxu0 %v539
    %v3004 = vpop.f32.mrf.mxu0
    %v3005 = vadd.f32 %v2992, %v3004
    %v3006 = vpop.f32.mrf.mxu0
    %3007 = vdwg.mxu0
    %3008 = vmatpush.bf16.msra.mxu0 %v2228
    %3009 = vmatpush.bf16.msra.mxu0 %v2223
    %3010 = vmatpush.bf16.msra.mxu0 %v2218
    %3011 = vmatpush.bf16.msra.mxu0 %v2213
    %3012 = vmatpush.bf16.msra.mxu0 %v2208
    %3013 = vmatpush.bf16.msra.mxu0 %v2203
    %3014 = vmatpush.bf16.msra.mxu0 %v2198
    %3015 = vmatpush.bf16.msra.mxu0 %v2193
    %3016 = vmatmul.bf16.gmra.mxu0 %v540
    %v3017 = vpop.f32.mrf.mxu0
    %v3018 = vadd.f32 %v3005, %v3017
    %v3019 = vpop.f32.mrf.mxu0
    %3020 = vdwg.mxu0
    %3021 = vmatpush.bf16.msra.mxu0 %v1869
    %3022 = vmatpush.bf16.msra.mxu0 %v1864
    %3023 = vmatpush.bf16.msra.mxu0 %v1859
    %3024 = vmatpush.bf16.msra.mxu0 %v1854
    %3025 = vmatpush.bf16.msra.mxu0 %v1849
    %3026 = vmatpush.bf16.msra.mxu0 %v1844
    %3027 = vmatpush.bf16.msra.mxu0 %v1839
    %3028 = vmatpush.bf16.msra.mxu0 %v1834
    %3029 = vmatmul.bf16.gmra.mxu0 %v529
    %v3030 = vpop.f32.mrf.mxu0
    %v3031 = vadd.f32 %v520, %v3030
    %v3032 = vpop.f32.mrf.mxu0
    %3033 = vdwg.mxu0
    %3034 = vmatpush.bf16.msra.mxu0 %v1909
    %3035 = vmatpush.bf16.msra.mxu0 %v1904
    %3036 = vmatpush.bf16.msra.mxu0 %v1899
    %3037 = vmatpush.bf16.msra.mxu0 %v1894
    %3038 = vmatpush.bf16.msra.mxu0 %v1889
    %3039 = vmatpush.bf16.msra.mxu0 %v1884
    %3040 = vmatpush.bf16.msra.mxu0 %v1879
    %3041 = vmatpush.bf16.msra.mxu0 %v1874
    %3042 = vmatmul.bf16.gmra.mxu0 %v530
    %v3043 = vpop.f32.mrf.mxu0
    %v3044 = vadd.f32 %v3031, %v3043
    %v3045 = vpop.f32.mrf.mxu0
    %3046 = vdwg.mxu0
    %3047 = vmatpush.bf16.msra.mxu0 %v1949
    %3048 = vmatpush.bf16.msra.mxu0 %v1944
    %3049 = vmatpush.bf16.msra.mxu0 %v1939
    %3050 = vmatpush.bf16.msra.mxu0 %v1934
    %3051 = vmatpush.bf16.msra.mxu0 %v1929
    %3052 = vmatpush.bf16.msra.mxu0 %v1924
    %3053 = vmatpush.bf16.msra.mxu0 %v1919
    %3054 = vmatpush.bf16.msra.mxu0 %v1914
    %3055 = vmatmul.bf16.gmra.mxu0 %v531
    %v3056 = vpop.f32.mrf.mxu0
    %v3057 = vadd.f32 %v3044, %v3056
    %v3058 = vpop.f32.mrf.mxu0
    %3059 = vdwg.mxu0
    %3060 = vmatpush.bf16.msra.mxu0 %v1989
    %3061 = vmatpush.bf16.msra.mxu0 %v1984
    %3062 = vmatpush.bf16.msra.mxu0 %v1979
    %3063 = vmatpush.bf16.msra.mxu0 %v1974
    %3064 = vmatpush.bf16.msra.mxu0 %v1969
    %3065 = vmatpush.bf16.msra.mxu0 %v1964
    %3066 = vmatpush.bf16.msra.mxu0 %v1959
    %3067 = vmatpush.bf16.msra.mxu0 %v1954
    %3068 = vmatmul.bf16.gmra.mxu0 %v532
    %v3069 = vpop.f32.mrf.mxu0
    %v3070 = vadd.f32 %v3057, %v3069
    %v3071 = vpop.f32.mrf.mxu0
    %3072 = vdwg.mxu0
    %3073 = vmatpush.bf16.msra.mxu0 %v2029
    %3074 = vmatpush.bf16.msra.mxu0 %v2024
    %3075 = vmatpush.bf16.msra.mxu0 %v2019
    %3076 = vmatpush.bf16.msra.mxu0 %v2014
    %3077 = vmatpush.bf16.msra.mxu0 %v2009
    %3078 = vmatpush.bf16.msra.mxu0 %v2004
    %3079 = vmatpush.bf16.msra.mxu0 %v1999
    %3080 = vmatpush.bf16.msra.mxu0 %v1994
    %3081 = vmatmul.bf16.gmra.mxu0 %v533
    %v3082 = vpop.f32.mrf.mxu0
    %v3083 = vadd.f32 %v3070, %v3082
    %v3084 = vpop.f32.mrf.mxu0
    %3085 = vdwg.mxu0
    %3086 = vmatpush.bf16.msra.mxu0 %v2069
    %3087 = vmatpush.bf16.msra.mxu0 %v2064
    %3088 = vmatpush.bf16.msra.mxu0 %v2059
    %3089 = vmatpush.bf16.msra.mxu0 %v2054
    %3090 = vmatpush.bf16.msra.mxu0 %v2049
    %3091 = vmatpush.bf16.msra.mxu0 %v2044
    %3092 = vmatpush.bf16.msra.mxu0 %v2039
    %3093 = vmatpush.bf16.msra.mxu0 %v2034
    %3094 = vmatmul.bf16.gmra.mxu0 %v534
    %v3095 = vpop.f32.mrf.mxu0
    %v3096 = vadd.f32 %v3083, %v3095
    %v3097 = vpop.f32.mrf.mxu0
    %3098 = vdwg.mxu0
    %3099 = vmatpush.bf16.msra.mxu0 %v2109
    %3100 = vmatpush.bf16.msra.mxu0 %v2104
    %3101 = vmatpush.bf16.msra.mxu0 %v2099
    %3102 = vmatpush.bf16.msra.mxu0 %v2094
    %3103 = vmatpush.bf16.msra.mxu0 %v2089
    %3104 = vmatpush.bf16.msra.mxu0 %v2084
    %3105 = vmatpush.bf16.msra.mxu0 %v2079
    %3106 = vmatpush.bf16.msra.mxu0 %v2074
    %3107 = vmatmul.bf16.gmra.mxu0 %v535
    %v3108 = vpop.f32.mrf.mxu0
    %v3109 = vadd.f32 %v3096, %v3108
    %v3110 = vpop.f32.mrf.mxu0
    %3111 = vdwg.mxu0
    %3112 = vmatpush.bf16.msra.mxu0 %v2149
    %3113 = vmatpush.bf16.msra.mxu0 %v2144
    %3114 = vmatpush.bf16.msra.mxu0 %v2139
    %3115 = vmatpush.bf16.msra.mxu0 %v2134
    %3116 = vmatpush.bf16.msra.mxu0 %v2129
    %3117 = vmatpush.bf16.msra.mxu0 %v2124
    %3118 = vmatpush.bf16.msra.mxu0 %v2119
    %3119 = vmatpush.bf16.msra.mxu0 %v2114
    %3120 = vmatmul.bf16.gmra.mxu0 %v536
    %v3121 = vpop.f32.mrf.mxu0
    %v3122 = vadd.f32 %v3109, %v3121
    %v3123 = vpop.f32.mrf.mxu0
    %3124 = vdwg.mxu0
    %3125 = vmatpush.bf16.msra.mxu0 %v2189
    %3126 = vmatpush.bf16.msra.mxu0 %v2184
    %3127 = vmatpush.bf16.msra.mxu0 %v2179
    %3128 = vmatpush.bf16.msra.mxu0 %v2174
    %3129 = vmatpush.bf16.msra.mxu0 %v2169
    %3130 = vmatpush.bf16.msra.mxu0 %v2164
    %3131 = vmatpush.bf16.msra.mxu0 %v2159
    %3132 = vmatpush.bf16.msra.mxu0 %v2154
    %3133 = vmatmul.bf16.gmra.mxu0 %v539
    %v3134 = vpop.f32.mrf.mxu0
    %v3135 = vadd.f32 %v3122, %v3134
    %v3136 = vpop.f32.mrf.mxu0
    %3137 = vdwg.mxu0
    %3138 = vmatpush.bf16.msra.mxu0 %v2229
    %3139 = vmatpush.bf16.msra.mxu0 %v2224
    %3140 = vmatpush.bf16.msra.mxu0 %v2219
    %3141 = vmatpush.bf16.msra.mxu0 %v2214
    %3142 = vmatpush.bf16.msra.mxu0 %v2209
    %3143 = vmatpush.bf16.msra.mxu0 %v2204
    %3144 = vmatpush.bf16.msra.mxu0 %v2199
    %3145 = vmatpush.bf16.msra.mxu0 %v2194
    %3146 = vmatmul.bf16.gmra.mxu0 %v540
    %v3147 = vpop.f32.mrf.mxu0
    %v3148 = vadd.f32 %v3135, %v3147
    %v3149 = vpop.f32.mrf.mxu0
    %3150 = vdwg.mxu0
    %3151 = vmatpush.bf16.msra.mxu0 %v1870
    %3152 = vmatpush.bf16.msra.mxu0 %v1865
    %3153 = vmatpush.bf16.msra.mxu0 %v1860
    %3154 = vmatpush.bf16.msra.mxu0 %v1855
    %3155 = vmatpush.bf16.msra.mxu0 %v1850
    %3156 = vmatpush.bf16.msra.mxu0 %v1845
    %3157 = vmatpush.bf16.msra.mxu0 %v1840
    %3158 = vmatpush.bf16.msra.mxu0 %v1835
    %3159 = vmatmul.bf16.gmra.mxu0 %v529
    %v3160 = vpop.f32.mrf.mxu0
    %v3161 = vadd.f32 %v521, %v3160
    %v3162 = vpop.f32.mrf.mxu0
    %3163 = vdwg.mxu0
    %3164 = vmatpush.bf16.msra.mxu0 %v1910
    %3165 = vmatpush.bf16.msra.mxu0 %v1905
    %3166 = vmatpush.bf16.msra.mxu0 %v1900
    %3167 = vmatpush.bf16.msra.mxu0 %v1895
    %3168 = vmatpush.bf16.msra.mxu0 %v1890
    %3169 = vmatpush.bf16.msra.mxu0 %v1885
    %3170 = vmatpush.bf16.msra.mxu0 %v1880
    %3171 = vmatpush.bf16.msra.mxu0 %v1875
    %3172 = vmatmul.bf16.gmra.mxu0 %v530
    %v3173 = vpop.f32.mrf.mxu0
    %v3174 = vadd.f32 %v3161, %v3173
    %v3175 = vpop.f32.mrf.mxu0
    %3176 = vdwg.mxu0
    %3177 = vmatpush.bf16.msra.mxu0 %v1950
    %3178 = vmatpush.bf16.msra.mxu0 %v1945
    %3179 = vmatpush.bf16.msra.mxu0 %v1940
    %3180 = vmatpush.bf16.msra.mxu0 %v1935
    %3181 = vmatpush.bf16.msra.mxu0 %v1930
    %3182 = vmatpush.bf16.msra.mxu0 %v1925
    %3183 = vmatpush.bf16.msra.mxu0 %v1920
    %3184 = vmatpush.bf16.msra.mxu0 %v1915
    %3185 = vmatmul.bf16.gmra.mxu0 %v531
    %v3186 = vpop.f32.mrf.mxu0
    %v3187 = vadd.f32 %v3174, %v3186
    %v3188 = vpop.f32.mrf.mxu0
    %3189 = vdwg.mxu0
    %3190 = vmatpush.bf16.msra.mxu0 %v1990
    %3191 = vmatpush.bf16.msra.mxu0 %v1985
    %3192 = vmatpush.bf16.msra.mxu0 %v1980
    %3193 = vmatpush.bf16.msra.mxu0 %v1975
    %3194 = vmatpush.bf16.msra.mxu0 %v1970
    %3195 = vmatpush.bf16.msra.mxu0 %v1965
    %3196 = vmatpush.bf16.msra.mxu0 %v1960
    %3197 = vmatpush.bf16.msra.mxu0 %v1955
    %3198 = vmatmul.bf16.gmra.mxu0 %v532
    %v3199 = vpop.f32.mrf.mxu0
    %v3200 = vadd.f32 %v3187, %v3199
    %v3201 = vpop.f32.mrf.mxu0
    %3202 = vdwg.mxu0
    %3203 = vmatpush.bf16.msra.mxu0 %v2030
    %3204 = vmatpush.bf16.msra.mxu0 %v2025
    %3205 = vmatpush.bf16.msra.mxu0 %v2020
    %3206 = vmatpush.bf16.msra.mxu0 %v2015
    %3207 = vmatpush.bf16.msra.mxu0 %v2010
    %3208 = vmatpush.bf16.msra.mxu0 %v2005
    %3209 = vmatpush.bf16.msra.mxu0 %v2000
    %3210 = vmatpush.bf16.msra.mxu0 %v1995
    %3211 = vmatmul.bf16.gmra.mxu0 %v533
    %v3212 = vpop.f32.mrf.mxu0
    %v3213 = vadd.f32 %v3200, %v3212
    %v3214 = vpop.f32.mrf.mxu0
    %3215 = vdwg.mxu0
    %3216 = vmatpush.bf16.msra.mxu0 %v2070
    %3217 = vmatpush.bf16.msra.mxu0 %v2065
    %3218 = vmatpush.bf16.msra.mxu0 %v2060
    %3219 = vmatpush.bf16.msra.mxu0 %v2055
    %3220 = vmatpush.bf16.msra.mxu0 %v2050
    %3221 = vmatpush.bf16.msra.mxu0 %v2045
    %3222 = vmatpush.bf16.msra.mxu0 %v2040
    %3223 = vmatpush.bf16.msra.mxu0 %v2035
    %3224 = vmatmul.bf16.gmra.mxu0 %v534
    %v3225 = vpop.f32.mrf.mxu0
    %v3226 = vadd.f32 %v3213, %v3225
    %v3227 = vpop.f32.mrf.mxu0
    %3228 = vdwg.mxu0
    %3229 = vmatpush.bf16.msra.mxu0 %v2110
    %3230 = vmatpush.bf16.msra.mxu0 %v2105
    %3231 = vmatpush.bf16.msra.mxu0 %v2100
    %3232 = vmatpush.bf16.msra.mxu0 %v2095
    %3233 = vmatpush.bf16.msra.mxu0 %v2090
    %3234 = vmatpush.bf16.msra.mxu0 %v2085
    %3235 = vmatpush.bf16.msra.mxu0 %v2080
    %3236 = vmatpush.bf16.msra.mxu0 %v2075
    %3237 = vmatmul.bf16.gmra.mxu0 %v535
    %v3238 = vpop.f32.mrf.mxu0
    %v3239 = vadd.f32 %v3226, %v3238
    %v3240 = vpop.f32.mrf.mxu0
    %3241 = vdwg.mxu0
    %3242 = vmatpush.bf16.msra.mxu0 %v2150
    %3243 = vmatpush.bf16.msra.mxu0 %v2145
    %3244 = vmatpush.bf16.msra.mxu0 %v2140
    %3245 = vmatpush.bf16.msra.mxu0 %v2135
    %3246 = vmatpush.bf16.msra.mxu0 %v2130
    %3247 = vmatpush.bf16.msra.mxu0 %v2125
    %3248 = vmatpush.bf16.msra.mxu0 %v2120
    %3249 = vmatpush.bf16.msra.mxu0 %v2115
    %3250 = vmatmul.bf16.gmra.mxu0 %v536
    %v3251 = vpop.f32.mrf.mxu0
    %v3252 = vadd.f32 %v3239, %v3251
    %v3253 = vpop.f32.mrf.mxu0
    %3254 = vdwg.mxu0
    %3255 = vmatpush.bf16.msra.mxu0 %v2190
    %3256 = vmatpush.bf16.msra.mxu0 %v2185
    %3257 = vmatpush.bf16.msra.mxu0 %v2180
    %3258 = vmatpush.bf16.msra.mxu0 %v2175
    %3259 = vmatpush.bf16.msra.mxu0 %v2170
    %3260 = vmatpush.bf16.msra.mxu0 %v2165
    %3261 = vmatpush.bf16.msra.mxu0 %v2160
    %3262 = vmatpush.bf16.msra.mxu0 %v2155
    %3263 = vmatmul.bf16.gmra.mxu0 %v539
    %v3264 = vpop.f32.mrf.mxu0
    %v3265 = vadd.f32 %v3252, %v3264
    %v3266 = vpop.f32.mrf.mxu0
    %3267 = vdwg.mxu0
    %3268 = vmatpush.bf16.msra.mxu0 %v2230
    %3269 = vmatpush.bf16.msra.mxu0 %v2225
    %3270 = vmatpush.bf16.msra.mxu0 %v2220
    %3271 = vmatpush.bf16.msra.mxu0 %v2215
    %3272 = vmatpush.bf16.msra.mxu0 %v2210
    %3273 = vmatpush.bf16.msra.mxu0 %v2205
    %3274 = vmatpush.bf16.msra.mxu0 %v2200
    %3275 = vmatpush.bf16.msra.mxu0 %v2195
    %3276 = vmatmul.bf16.gmra.mxu0 %v540
    %v3277 = vpop.f32.mrf.mxu0
    %v3278 = vadd.f32 %v3265, %v3277
    %v3279 = vpop.f32.mrf.mxu0
    %3280 = vdwg.mxu0
    %v3281 = vmax.f32 %v2758, 0.0
    %v3282 = vmax.f32 %v2888, 0.0
    %v3283 = vmax.f32 %v3018, 0.0
    %v3284 = vmax.f32 %v3148, 0.0
    %v3285 = vmax.f32 %v3278, 0.0
    %v3286 = vpack.c.bf16 %v3281, %v3281
    %v3287 = vpack.c.bf16 %v3282, %v3282
    %v3288 = vpack.c.bf16 %v3283, %v3283
    %v3289 = vpack.c.bf16 %v3284, %v3284
    %v3290 = vpack.c.bf16 %v3285, %v3285
    %v3291 = vld [vmem:[%s3] sm:$0xff]
    %v3292 = vld [vmem:[%s3 + $0x8] sm:$0xff]
    %v3293 = vld [vmem:[%s3 + $0x10] sm:$0xff]
    %v3294 = vld [vmem:[%s3 + $0x18] sm:$0xff]
    %v3295 = vld [vmem:[%s3 + $0x20] sm:$0xff]
    %v3296 = vld [vmem:[%s3 + $0x28] sm:$0xff]
    %v3297 = vld [vmem:[%s3 + $0x30] sm:$0xff]
    %v3298 = vld [vmem:[%s3 + $0x38] sm:$0xff]
    %v3299 = vld [vmem:[%s3 + $0x40] sm:$0xff]
    %v3300 = vld [vmem:[%s3 + $0x48] sm:$0xff]
    %v3301 = vld [vmem:[%s3 + $0x50] sm:$0xff]
    %v3302 = vld [vmem:[%s3 + $0x58] sm:$0xff]
    %v3303 = vld [vmem:[%s3 + $0x60] sm:$0xff]
    %v3304 = vld [vmem:[%s3 + $0x68] sm:$0xff]
    %v3305 = vld [vmem:[%s3 + $0x70] sm:$0xff]
    %v3306 = vld [vmem:[%s3 + $0x78] sm:$0xff]
    %v3307 = vld [vmem:[%s3 + $0x80] sm:$0xff]
    %v3308 = vld [vmem:[%s3 + $0x88] sm:$0xff]
    %v3309 = vld [vmem:[%s3 + $0x90] sm:$0xff]
    %v3310 = vld [vmem:[%s3 + $0x98] sm:$0xff]
    %v3311 = vld [vmem:[%s3 + $0xa0] sm:$0xff]
    %v3312 = vld [vmem:[%s3 + $0xa8] sm:$0xff]
    %v3313 = vld [vmem:[%s3 + $0xb0] sm:$0xff]
    %v3314 = vld [vmem:[%s3 + $0xb8] sm:$0xff]
    %v3315 = vld [vmem:[%s3 + $0xc0] sm:$0xff]
    %v3316 = vld [vmem:[%s3 + $0xc8] sm:$0xff]
    %v3317 = vld [vmem:[%s3 + $0xd0] sm:$0xff]
    %v3318 = vld [vmem:[%s3 + $0xd8] sm:$0xff]
    %v3319 = vld [vmem:[%s3 + $0xe0] sm:$0xff]
    %v3320 = vld [vmem:[%s3 + $0xe8] sm:$0xff]
    %v3321 = vld [vmem:[%s3 + $0xf0] sm:$0xff]
    %v3322 = vld [vmem:[%s3 + $0xf8] sm:$0xff]
    %v3323 = vld [vmem:[%s3 + $0x100] sm:$0xff]
    %v3324 = vld [vmem:[%s3 + $0x108] sm:$0xff]
    %v3325 = vld [vmem:[%s3 + $0x110] sm:$0xff]
    %v3326 = vld [vmem:[%s3 + $0x118] sm:$0xff]
    %v3327 = vld [vmem:[%s3 + $0x120] sm:$0xff]
    %v3328 = vld [vmem:[%s3 + $0x128] sm:$0xff]
    %v3329 = vld [vmem:[%s3 + $0x130] sm:$0xff]
    %v3330 = vld [vmem:[%s3 + $0x138] sm:$0xff]
    %v3331 = vld [vmem:[%s3 + $0x140] sm:$0xff]
    %v3332 = vld [vmem:[%s3 + $0x148] sm:$0xff]
    %v3333 = vld [vmem:[%s3 + $0x150] sm:$0xff]
    %v3334 = vld [vmem:[%s3 + $0x158] sm:$0xff]
    %v3335 = vld [vmem:[%s3 + $0x160] sm:$0xff]
    %v3336 = vld [vmem:[%s3 + $0x168] sm:$0xff]
    %v3337 = vld [vmem:[%s3 + $0x170] sm:$0xff]
    %v3338 = vld [vmem:[%s3 + $0x178] sm:$0xff]
    %v3339 = vld [vmem:[%s3 + $0x180] sm:$0xff]
    %v3340 = vld [vmem:[%s3 + $0x188] sm:$0xff]
    %v3341 = vld [vmem:[%s3 + $0x190] sm:$0xff]
    %v3342 = vld [vmem:[%s3 + $0x198] sm:$0xff]
    %v3343 = vld [vmem:[%s3 + $0x1a0] sm:$0xff]
    %v3344 = vld [vmem:[%s3 + $0x1a8] sm:$0xff]
    %v3345 = vld [vmem:[%s3 + $0x1b0] sm:$0xff]
    %v3346 = vld [vmem:[%s3 + $0x1b8] sm:$0xff]
    %v3347 = vld [vmem:[%s3 + $0x1c0] sm:$0xff]
    %v3348 = vld [vmem:[%s3 + $0x1c8] sm:$0xff]
    %v3349 = vld [vmem:[%s3 + $0x1d0] sm:$0xff]
    %v3350 = vld [vmem:[%s3 + $0x1d8] sm:$0xff]
    %v3351 = vld [vmem:[%s3 + $0x1e0] sm:$0xff]
    %v3352 = vld [vmem:[%s3 + $0x1e8] sm:$0xff]
    %v3353 = vld [vmem:[%s3 + $0x1f0] sm:$0xff]
    %v3354 = vld [vmem:[%s3 + $0x1f8] sm:$0xff]
    %v3355 = vld [vmem:[%s3 + $0x200] sm:$0xff]
    %v3356 = vld [vmem:[%s3 + $0x208] sm:$0xff]
    %v3357 = vld [vmem:[%s3 + $0x210] sm:$0xff]
    %v3358 = vld [vmem:[%s3 + $0x218] sm:$0xff]
    %v3359 = vld [vmem:[%s3 + $0x220] sm:$0xff]
    %v3360 = vld [vmem:[%s3 + $0x228] sm:$0xff]
    %v3361 = vld [vmem:[%s3 + $0x230] sm:$0xff]
    %v3362 = vld [vmem:[%s3 + $0x238] sm:$0xff]
    %v3363 = vld [vmem:[%s3 + $0x240] sm:$0xff]
    %v3364 = vld [vmem:[%s3 + $0x248] sm:$0xff]
    %v3365 = vld [vmem:[%s3 + $0x250] sm:$0xff]
    %v3366 = vld [vmem:[%s3 + $0x258] sm:$0xff]
    %v3367 = vld [vmem:[%s3 + $0x260] sm:$0xff]
    %v3368 = vld [vmem:[%s3 + $0x268] sm:$0xff]
    %v3369 = vld [vmem:[%s3 + $0x270] sm:$0xff]
    %v3370 = vld [vmem:[%s3 + $0x278] sm:$0xff]
    %v3371 = vld [vmem:[%s4] sm:$0x3]
    %v3373 = vperm.slane %v3371, 0
    %v3374 = vperm.slane %v3371, 1
    %v3457 = vunpack.c.l.b16 %v3291
    %v3458 = vunpack.c.h.b16 %v3291
    %v3459 = vunpack.c.l.b16 %v3292
    %v3460 = vunpack.c.h.b16 %v3292
    %v3461 = vunpack.c.l.b16 %v3293
    %v3462 = vunpack.c.h.b16 %v3293
    %v3463 = vunpack.c.l.b16 %v3294
    %v3464 = vunpack.c.h.b16 %v3294
    %v3465 = vunpack.c.l.b16 %v3295
    %v3466 = vunpack.c.h.b16 %v3295
    %v3467 = vunpack.c.l.b16 %v3296
    %v3468 = vunpack.c.h.b16 %v3296
    %v3469 = vunpack.c.l.b16 %v3297
    %v3470 = vunpack.c.h.b16 %v3297
    %v3471 = vunpack.c.l.b16 %v3298
    %v3472 = vunpack.c.h.b16 %v3298
    %v3473 = vunpack.c.l.b16 %v3299
    %v3474 = vunpack.c.h.b16 %v3299
    %v3475 = vunpack.c.l.b16 %v3300
    %v3476 = vunpack.c.h.b16 %v3300
    %v3477 = vunpack.c.l.b16 %v3301
    %v3478 = vunpack.c.h.b16 %v3301
    %v3479 = vunpack.c.l.b16 %v3302
    %v3480 = vunpack.c.h.b16 %v3302
    %v3481 = vunpack.c.l.b16 %v3303
    %v3482 = vunpack.c.h.b16 %v3303
    %v3483 = vunpack.c.l.b16 %v3304
    %v3484 = vunpack.c.h.b16 %v3304
    %v3485 = vunpack.c.l.b16 %v3305
    %v3486 = vunpack.c.h.b16 %v3305
    %v3487 = vunpack.c.l.b16 %v3306
    %v3488 = vunpack.c.h.b16 %v3306
    %v3489 = vunpack.c.l.b16 %v3307
    %v3490 = vunpack.c.h.b16 %v3307
    %v3491 = vunpack.c.l.b16 %v3308
    %v3492 = vunpack.c.h.b16 %v3308
    %v3493 = vunpack.c.l.b16 %v3309
    %v3494 = vunpack.c.h.b16 %v3309
    %v3495 = vunpack.c.l.b16 %v3310
    %v3496 = vunpack.c.h.b16 %v3310
    %v3497 = vunpack.c.l.b16 %v3311
    %v3498 = vunpack.c.h.b16 %v3311
    %v3499 = vunpack.c.l.b16 %v3312
    %v3500 = vunpack.c.h.b16 %v3312
    %v3501 = vunpack.c.l.b16 %v3313
    %v3502 = vunpack.c.h.b16 %v3313
    %v3503 = vunpack.c.l.b16 %v3314
    %v3504 = vunpack.c.h.b16 %v3314
    %v3505 = vunpack.c.l.b16 %v3315
    %v3506 = vunpack.c.h.b16 %v3315
    %v3507 = vunpack.c.l.b16 %v3316
    %v3508 = vunpack.c.h.b16 %v3316
    %v3509 = vunpack.c.l.b16 %v3317
    %v3510 = vunpack.c.h.b16 %v3317
    %v3511 = vunpack.c.l.b16 %v3318
    %v3512 = vunpack.c.h.b16 %v3318
    %v3513 = vunpack.c.l.b16 %v3319
    %v3514 = vunpack.c.h.b16 %v3319
    %v3515 = vunpack.c.l.b16 %v3320
    %v3516 = vunpack.c.h.b16 %v3320
    %v3517 = vunpack.c.l.b16 %v3321
    %v3518 = vunpack.c.h.b16 %v3321
    %v3519 = vunpack.c.l.b16 %v3322
    %v3520 = vunpack.c.h.b16 %v3322
    %v3521 = vunpack.c.l.b16 %v3323
    %v3522 = vunpack.c.h.b16 %v3323
    %v3523 = vunpack.c.l.b16 %v3324
    %v3524 = vunpack.c.h.b16 %v3324
    %v3525 = vunpack.c.l.b16 %v3325
    %v3526 = vunpack.c.h.b16 %v3325
    %v3527 = vunpack.c.l.b16 %v3326
    %v3528 = vunpack.c.h.b16 %v3326
    %v3529 = vunpack.c.l.b16 %v3327
    %v3530 = vunpack.c.h.b16 %v3327
    %v3531 = vunpack.c.l.b16 %v3328
    %v3532 = vunpack.c.h.b16 %v3328
    %v3533 = vunpack.c.l.b16 %v3329
    %v3534 = vunpack.c.h.b16 %v3329
    %v3535 = vunpack.c.l.b16 %v3330
    %v3536 = vunpack.c.h.b16 %v3330
    %v3537 = vunpack.c.l.b16 %v3331
    %v3538 = vunpack.c.h.b16 %v3331
    %v3539 = vunpack.c.l.b16 %v3332
    %v3540 = vunpack.c.h.b16 %v3332
    %v3541 = vunpack.c.l.b16 %v3333
    %v3542 = vunpack.c.h.b16 %v3333
    %v3543 = vunpack.c.l.b16 %v3334
    %v3544 = vunpack.c.h.b16 %v3334
    %v3545 = vunpack.c.l.b16 %v3335
    %v3546 = vunpack.c.h.b16 %v3335
    %v3547 = vunpack.c.l.b16 %v3336
    %v3548 = vunpack.c.h.b16 %v3336
    %v3549 = vunpack.c.l.b16 %v3337
    %v3550 = vunpack.c.h.b16 %v3337
    %v3551 = vunpack.c.l.b16 %v3338
    %v3552 = vunpack.c.h.b16 %v3338
    %v3553 = vunpack.c.l.b16 %v3339
    %v3554 = vunpack.c.h.b16 %v3339
    %v3555 = vunpack.c.l.b16 %v3340
    %v3556 = vunpack.c.h.b16 %v3340
    %v3557 = vunpack.c.l.b16 %v3341
    %v3558 = vunpack.c.h.b16 %v3341
    %v3559 = vunpack.c.l.b16 %v3342
    %v3560 = vunpack.c.h.b16 %v3342
    %v3561 = vunpack.c.l.b16 %v3343
    %v3562 = vunpack.c.h.b16 %v3343
    %v3563 = vunpack.c.l.b16 %v3344
    %v3564 = vunpack.c.h.b16 %v3344
    %v3565 = vunpack.c.l.b16 %v3345
    %v3566 = vunpack.c.h.b16 %v3345
    %v3567 = vunpack.c.l.b16 %v3346
    %v3568 = vunpack.c.h.b16 %v3346
    %v3569 = vunpack.c.l.b16 %v3347
    %v3570 = vunpack.c.h.b16 %v3347
    %v3571 = vunpack.c.l.b16 %v3348
    %v3572 = vunpack.c.h.b16 %v3348
    %v3573 = vunpack.c.l.b16 %v3349
    %v3574 = vunpack.c.h.b16 %v3349
    %v3575 = vunpack.c.l.b16 %v3350
    %v3576 = vunpack.c.h.b16 %v3350
    %v3577 = vunpack.c.l.b16 %v3351
    %v3578 = vunpack.c.h.b16 %v3351
    %v3579 = vunpack.c.l.b16 %v3352
    %v3580 = vunpack.c.h.b16 %v3352
    %v3581 = vunpack.c.l.b16 %v3353
    %v3582 = vunpack.c.h.b16 %v3353
    %v3583 = vunpack.c.l.b16 %v3354
    %v3584 = vunpack.c.h.b16 %v3354
    %v3585 = vunpack.c.l.b16 %v3355
    %v3586 = vunpack.c.h.b16 %v3355
    %v3587 = vunpack.c.l.b16 %v3356
    %v3588 = vunpack.c.h.b16 %v3356
    %v3589 = vunpack.c.l.b16 %v3357
    %v3590 = vunpack.c.h.b16 %v3357
    %v3591 = vunpack.c.l.b16 %v3358
    %v3592 = vunpack.c.h.b16 %v3358
    %v3593 = vunpack.c.l.b16 %v3359
    %v3594 = vunpack.c.h.b16 %v3359
    %v3595 = vunpack.c.l.b16 %v3360
    %v3596 = vunpack.c.h.b16 %v3360
    %v3597 = vunpack.c.l.b16 %v3361
    %v3598 = vunpack.c.h.b16 %v3361
    %v3599 = vunpack.c.l.b16 %v3362
    %v3600 = vunpack.c.h.b16 %v3362
    %v3601 = vunpack.c.l.b16 %v3363
    %v3602 = vunpack.c.h.b16 %v3363
    %v3603 = vunpack.c.l.b16 %v3364
    %v3604 = vunpack.c.h.b16 %v3364
    %v3605 = vunpack.c.l.b16 %v3365
    %v3606 = vunpack.c.h.b16 %v3365
    %v3607 = vunpack.c.l.b16 %v3366
    %v3608 = vunpack.c.h.b16 %v3366
    %v3609 = vunpack.c.l.b16 %v3367
    %v3610 = vunpack.c.h.b16 %v3367
    %v3611 = vunpack.c.l.b16 %v3368
    %v3612 = vunpack.c.h.b16 %v3368
    %v3613 = vunpack.c.l.b16 %v3369
    %v3614 = vunpack.c.h.b16 %v3369
    %v3615 = vunpack.c.l.b16 %v3370
    %v3616 = vunpack.c.h.b16 %v3370
    %v3617 = vpack.c.b16 %v3459, %v3457
    %v3618 = vpack.c.b16 %v3460, %v3458
    %v3619 = vpack.c.b16 %v3463, %v3461
    %v3620 = vpack.c.b16 %v3464, %v3462
    %v3621 = vpack.c.b16 %v3467, %v3465
    %v3622 = vpack.c.b16 %v3468, %v3466
    %v3623 = vpack.c.b16 %v3471, %v3469
    %v3624 = vpack.c.b16 %v3472, %v3470
    %v3625 = vpack.c.b16 %v3475, %v3473
    %v3626 = vpack.c.b16 %v3476, %v3474
    %v3627 = vpack.c.b16 %v3479, %v3477
    %v3628 = vpack.c.b16 %v3480, %v3478
    %v3629 = vpack.c.b16 %v3483, %v3481
    %v3630 = vpack.c.b16 %v3484, %v3482
    %v3631 = vpack.c.b16 %v3487, %v3485
    %v3632 = vpack.c.b16 %v3488, %v3486
    %v3633 = vpack.c.b16 %v3491, %v3489
    %v3634 = vpack.c.b16 %v3492, %v3490
    %v3635 = vpack.c.b16 %v3495, %v3493
    %v3636 = vpack.c.b16 %v3496, %v3494
    %v3637 = vpack.c.b16 %v3499, %v3497
    %v3638 = vpack.c.b16 %v3500, %v3498
    %v3639 = vpack.c.b16 %v3503, %v3501
    %v3640 = vpack.c.b16 %v3504, %v3502
    %v3641 = vpack.c.b16 %v3507, %v3505
    %v3642 = vpack.c.b16 %v3508, %v3506
    %v3643 = vpack.c.b16 %v3511, %v3509
    %v3644 = vpack.c.b16 %v3512, %v3510
    %v3645 = vpack.c.b16 %v3515, %v3513
    %v3646 = vpack.c.b16 %v3516, %v3514
    %v3647 = vpack.c.b16 %v3519, %v3517
    %v3648 = vpack.c.b16 %v3520, %v3518
    %v3649 = vpack.c.b16 %v3523, %v3521
    %v3650 = vpack.c.b16 %v3524, %v3522
    %v3651 = vpack.c.b16 %v3527, %v3525
    %v3652 = vpack.c.b16 %v3528, %v3526
    %v3653 = vpack.c.b16 %v3531, %v3529
    %v3654 = vpack.c.b16 %v3532, %v3530
    %v3655 = vpack.c.b16 %v3535, %v3533
    %v3656 = vpack.c.b16 %v3536, %v3534
    %v3657 = vpack.c.b16 %v3539, %v3537
    %v3658 = vpack.c.b16 %v3540, %v3538
    %v3659 = vpack.c.b16 %v3543, %v3541
    %v3660 = vpack.c.b16 %v3544, %v3542
    %v3661 = vpack.c.b16 %v3547, %v3545
    %v3662 = vpack.c.b16 %v3548, %v3546
    %v3663 = vpack.c.b16 %v3551, %v3549
    %v3664 = vpack.c.b16 %v3552, %v3550
    %v3665 = vpack.c.b16 %v3555, %v3553
    %v3666 = vpack.c.b16 %v3556, %v3554
    %v3667 = vpack.c.b16 %v3559, %v3557
    %v3668 = vpack.c.b16 %v3560, %v3558
    %v3669 = vpack.c.b16 %v3563, %v3561
    %v3670 = vpack.c.b16 %v3564, %v3562
    %v3671 = vpack.c.b16 %v3567, %v3565
    %v3672 = vpack.c.b16 %v3568, %v3566
    %v3673 = vpack.c.b16 %v3571, %v3569
    %v3674 = vpack.c.b16 %v3572, %v3570
    %v3675 = vpack.c.b16 %v3575, %v3573
    %v3676 = vpack.c.b16 %v3576, %v3574
    %v3677 = vpack.c.b16 %v3579, %v3577
    %v3678 = vpack.c.b16 %v3580, %v3578
    %v3679 = vpack.c.b16 %v3583, %v3581
    %v3680 = vpack.c.b16 %v3584, %v3582
    %v3681 = vpack.c.b16 %v3587, %v3585
    %v3682 = vpack.c.b16 %v3588, %v3586
    %v3683 = vpack.c.b16 %v3591, %v3589
    %v3684 = vpack.c.b16 %v3592, %v3590
    %v3685 = vpack.c.b16 %v3595, %v3593
    %v3686 = vpack.c.b16 %v3596, %v3594
    %v3687 = vpack.c.b16 %v3599, %v3597
    %v3688 = vpack.c.b16 %v3600, %v3598
    %v3689 = vpack.c.b16 %v3603, %v3601
    %v3690 = vpack.c.b16 %v3604, %v3602
    %v3691 = vpack.c.b16 %v3607, %v3605
    %v3692 = vpack.c.b16 %v3608, %v3606
    %v3693 = vpack.c.b16 %v3611, %v3609
    %v3694 = vpack.c.b16 %v3612, %v3610
    %v3695 = vpack.c.b16 %v3615, %v3613
    %v3696 = vpack.c.b16 %v3616, %v3614
    %3777 = vmatpush.bf16.msra.mxu0 %v3631
    %3778 = vmatpush.bf16.msra.mxu0 %v3629
    %3779 = vmatpush.bf16.msra.mxu0 %v3627
    %3780 = vmatpush.bf16.msra.mxu0 %v3625
    %3781 = vmatpush.bf16.msra.mxu0 %v3623
    %3782 = vmatpush.bf16.msra.mxu0 %v3621
    %3783 = vmatpush.bf16.msra.mxu0 %v3619
    %3784 = vmatpush.bf16.msra.mxu0 %v3617
    %3785 = vmatmul.bf16.gmra.mxu0 %v3286
    %v3786 = vpop.f32.mrf.mxu0
    %v3787 = vadd.f32 %v3373, %v3786
    %v3788 = vpop.f32.mrf.mxu0
    %3789 = vdwg.mxu0
    %3790 = vmatpush.bf16.msra.mxu0 %v3647
    %3791 = vmatpush.bf16.msra.mxu0 %v3645
    %3792 = vmatpush.bf16.msra.mxu0 %v3643
    %3793 = vmatpush.bf16.msra.mxu0 %v3641
    %3794 = vmatpush.bf16.msra.mxu0 %v3639
    %3795 = vmatpush.bf16.msra.mxu0 %v3637
    %3796 = vmatpush.bf16.msra.mxu0 %v3635
    %3797 = vmatpush.bf16.msra.mxu0 %v3633
    %3798 = vmatmul.bf16.gmra.mxu0 %v3287
    %v3799 = vpop.f32.mrf.mxu0
    %v3800 = vadd.f32 %v3787, %v3799
    %v3801 = vpop.f32.mrf.mxu0
    %3802 = vdwg.mxu0
    %3803 = vmatpush.bf16.msra.mxu0 %v3663
    %3804 = vmatpush.bf16.msra.mxu0 %v3661
    %3805 = vmatpush.bf16.msra.mxu0 %v3659
    %3806 = vmatpush.bf16.msra.mxu0 %v3657
    %3807 = vmatpush.bf16.msra.mxu0 %v3655
    %3808 = vmatpush.bf16.msra.mxu0 %v3653
    %3809 = vmatpush.bf16.msra.mxu0 %v3651
    %3810 = vmatpush.bf16.msra.mxu0 %v3649
    %3811 = vmatmul.bf16.gmra.mxu0 %v3288
    %v3812 = vpop.f32.mrf.mxu0
    %v3813 = vadd.f32 %v3800, %v3812
    %v3814 = vpop.f32.mrf.mxu0
    %3815 = vdwg.mxu0
    %3816 = vmatpush.bf16.msra.mxu0 %v3679
    %3817 = vmatpush.bf16.msra.mxu0 %v3677
    %3818 = vmatpush.bf16.msra.mxu0 %v3675
    %3819 = vmatpush.bf16.msra.mxu0 %v3673
    %3820 = vmatpush.bf16.msra.mxu0 %v3671
    %3821 = vmatpush.bf16.msra.mxu0 %v3669
    %3822 = vmatpush.bf16.msra.mxu0 %v3667
    %3823 = vmatpush.bf16.msra.mxu0 %v3665
    %3824 = vmatmul.bf16.gmra.mxu0 %v3289
    %v3825 = vpop.f32.mrf.mxu0
    %v3826 = vadd.f32 %v3813, %v3825
    %v3827 = vpop.f32.mrf.mxu0
    %3828 = vdwg.mxu0
    %3829 = vmatpush.bf16.msra.mxu0 %v3695
    %3830 = vmatpush.bf16.msra.mxu0 %v3693
    %3831 = vmatpush.bf16.msra.mxu0 %v3691
    %3832 = vmatpush.bf16.msra.mxu0 %v3689
    %3833 = vmatpush.bf16.msra.mxu0 %v3687
    %3834 = vmatpush.bf16.msra.mxu0 %v3685
    %3835 = vmatpush.bf16.msra.mxu0 %v3683
    %3836 = vmatpush.bf16.msra.mxu0 %v3681
    %3837 = vmatmul.bf16.gmra.mxu0 %v3290
    %v3838 = vpop.f32.mrf.mxu0
    %v3839 = vadd.f32 %v3826, %v3838
    %v3840 = vpop.f32.mrf.mxu0
    %3841 = vdwg.mxu0
    %3842 = vmatpush.bf16.msra.mxu0 %v3632
    %3843 = vmatpush.bf16.msra.mxu0 %v3630
    %3844 = vmatpush.bf16.msra.mxu0 %v3628
    %3845 = vmatpush.bf16.msra.mxu0 %v3626
    %3846 = vmatpush.bf16.msra.mxu0 %v3624
    %3847 = vmatpush.bf16.msra.mxu0 %v3622
    %3848 = vmatpush.bf16.msra.mxu0 %v3620
    %3849 = vmatpush.bf16.msra.mxu0 %v3618
    %3850 = vmatmul.bf16.gmra.mxu0 %v3286
    %v3851 = vpop.f32.mrf.mxu0
    %v3852 = vadd.f32 %v3374, %v3851
    %v3853 = vpop.f32.mrf.mxu0
    %3854 = vdwg.mxu0
    %3855 = vmatpush.bf16.msra.mxu0 %v3648
    %3856 = vmatpush.bf16.msra.mxu0 %v3646
    %3857 = vmatpush.bf16.msra.mxu0 %v3644
    %3858 = vmatpush.bf16.msra.mxu0 %v3642
    %3859 = vmatpush.bf16.msra.mxu0 %v3640
    %3860 = vmatpush.bf16.msra.mxu0 %v3638
    %3861 = vmatpush.bf16.msra.mxu0 %v3636
    %3862 = vmatpush.bf16.msra.mxu0 %v3634
    %3863 = vmatmul.bf16.gmra.mxu0 %v3287
    %v3864 = vpop.f32.mrf.mxu0
    %v3865 = vadd.f32 %v3852, %v3864
    %v3866 = vpop.f32.mrf.mxu0
    %3867 = vdwg.mxu0
    %3868 = vmatpush.bf16.msra.mxu0 %v3664
    %3869 = vmatpush.bf16.msra.mxu0 %v3662
    %3870 = vmatpush.bf16.msra.mxu0 %v3660
    %3871 = vmatpush.bf16.msra.mxu0 %v3658
    %3872 = vmatpush.bf16.msra.mxu0 %v3656
    %3873 = vmatpush.bf16.msra.mxu0 %v3654
    %3874 = vmatpush.bf16.msra.mxu0 %v3652
    %3875 = vmatpush.bf16.msra.mxu0 %v3650
    %3876 = vmatmul.bf16.gmra.mxu0 %v3288
    %v3877 = vpop.f32.mrf.mxu0
    %v3878 = vadd.f32 %v3865, %v3877
    %v3879 = vpop.f32.mrf.mxu0
    %3880 = vdwg.mxu0
    %3881 = vmatpush.bf16.msra.mxu0 %v3680
    %3882 = vmatpush.bf16.msra.mxu0 %v3678
    %3883 = vmatpush.bf16.msra.mxu0 %v3676
    %3884 = vmatpush.bf16.msra.mxu0 %v3674
    %3885 = vmatpush.bf16.msra.mxu0 %v3672
    %3886 = vmatpush.bf16.msra.mxu0 %v3670
    %3887 = vmatpush.bf16.msra.mxu0 %v3668
    %3888 = vmatpush.bf16.msra.mxu0 %v3666
    %3889 = vmatmul.bf16.gmra.mxu0 %v3289
    %v3890 = vpop.f32.mrf.mxu0
    %v3891 = vadd.f32 %v3878, %v3890
    %v3892 = vpop.f32.mrf.mxu0
    %3893 = vdwg.mxu0
    %3894 = vmatpush.bf16.msra.mxu0 %v3696
    %3895 = vmatpush.bf16.msra.mxu0 %v3694
    %3896 = vmatpush.bf16.msra.mxu0 %v3692
    %3897 = vmatpush.bf16.msra.mxu0 %v3690
    %3898 = vmatpush.bf16.msra.mxu0 %v3688
    %3899 = vmatpush.bf16.msra.mxu0 %v3686
    %3900 = vmatpush.bf16.msra.mxu0 %v3684
    %3901 = vmatpush.bf16.msra.mxu0 %v3682
    %3902 = vmatmul.bf16.gmra.mxu0 %v3290
    %v3903 = vpop.f32.mrf.mxu0
    %v3904 = vadd.f32 %v3891, %v3903
    %v3905 = vpop.f32.mrf.mxu0
    %3906 = vdwg.mxu0
    %v3907 = vmax.f32 %v3839, 0.0
    %v3908 = vmax.f32 %v3904, 0.0
    %v3909 = vpack.c.bf16 %v3907, %v3907
    %v3910 = vpack.c.bf16 %v3908, %v3908
    %v3911 = vld [vmem:[%s5] sm:$0xf]
    %v3912 = vld [vmem:[%s5 + $0x4] sm:$0xf]
    %v3913 = vld [vmem:[%s5 + $0x8] sm:$0xf]
    %v3914 = vld [vmem:[%s5 + $0xc] sm:$0xf]
    %v3915 = vld [vmem:[%s5 + $0x10] sm:$0xf]
    %v3916 = vld [vmem:[%s5 + $0x14] sm:$0xf]
    %v3917 = vld [vmem:[%s5 + $0x18] sm:$0xf]
    %v3918 = vld [vmem:[%s5 + $0x1c] sm:$0xf]
    %v3919 = vld [vmem:[%s5 + $0x20] sm:$0xf]
    %v3920 = vld [vmem:[%s5 + $0x24] sm:$0xf]
    %v3921 = vld [vmem:[%s5 + $0x28] sm:$0xf]
    %v3922 = vld [vmem:[%s5 + $0x2c] sm:$0xf]
    %v3923 = vld [vmem:[%s5 + $0x30] sm:$0xf]
    %v3924 = vld [vmem:[%s5 + $0x34] sm:$0xf]
    %v3925 = vld [vmem:[%s5 + $0x38] sm:$0xf]
    %v3926 = vld [vmem:[%s5 + $0x3c] sm:$0xf]
    %v3927 = vld [vmem:[%s5 + $0x40] sm:$0xf]
    %v3928 = vld [vmem:[%s5 + $0x44] sm:$0xf]
    %v3929 = vld [vmem:[%s5 + $0x48] sm:$0xf]
    %v3930 = vld [vmem:[%s5 + $0x4c] sm:$0xf]
    %v3931 = vld [vmem:[%s5 + $0x50] sm:$0xf]
    %v3932 = vld [vmem:[%s5 + $0x54] sm:$0xf]
    %v3933 = vld [vmem:[%s5 + $0x58] sm:$0xf]
    %v3934 = vld [vmem:[%s5 + $0x5c] sm:$0xf]
    %v3935 = vld [vmem:[%s5 + $0x60] sm:$0xf]
    %v3936 = vld [vmem:[%s5 + $0x64] sm:$0xf]
    %v3937 = vld [vmem:[%s5 + $0x68] sm:$0xf]
    %v3938 = vld [vmem:[%s5 + $0x6c] sm:$0xf]
    %v3939 = vld [vmem:[%s5 + $0x70] sm:$0xf]
    %v3940 = vld [vmem:[%s5 + $0x74] sm:$0xf]
    %v3941 = vld [vmem:[%s5 + $0x78] sm:$0xf]
    %v3942 = vld [vmem:[%s5 + $0x7c] sm:$0xf]
    %v3943 = vld [vmem:[%s6] sm:$0x1]
    %v3945 = vperm.slane %v3943, 0
    %v3979 = vunpack.c.l.b16 %v3911
    %v3980 = vunpack.c.l.b16 %v3912
    %v3981 = vunpack.c.l.b16 %v3913
    %v3982 = vunpack.c.l.b16 %v3914
    %v3983 = vunpack.c.l.b16 %v3915
    %v3984 = vunpack.c.l.b16 %v3916
    %v3985 = vunpack.c.l.b16 %v3917
    %v3986 = vunpack.c.l.b16 %v3918
    %v3987 = vunpack.c.l.b16 %v3919
    %v3988 = vunpack.c.l.b16 %v3920
    %v3989 = vunpack.c.l.b16 %v3921
    %v3990 = vunpack.c.l.b16 %v3922
    %v3991 = vunpack.c.l.b16 %v3923
    %v3992 = vunpack.c.l.b16 %v3924
    %v3993 = vunpack.c.l.b16 %v3925
    %v3994 = vunpack.c.l.b16 %v3926
    %v3995 = vunpack.c.l.b16 %v3927
    %v3996 = vunpack.c.l.b16 %v3928
    %v3997 = vunpack.c.l.b16 %v3929
    %v3998 = vunpack.c.l.b16 %v3930
    %v3999 = vunpack.c.l.b16 %v3931
    %v4000 = vunpack.c.l.b16 %v3932
    %v4001 = vunpack.c.l.b16 %v3933
    %v4002 = vunpack.c.l.b16 %v3934
    %v4003 = vunpack.c.l.b16 %v3935
    %v4004 = vunpack.c.l.b16 %v3936
    %v4005 = vunpack.c.l.b16 %v3937
    %v4006 = vunpack.c.l.b16 %v3938
    %v4007 = vunpack.c.l.b16 %v3939
    %v4008 = vunpack.c.l.b16 %v3940
    %v4009 = vunpack.c.l.b16 %v3941
    %v4010 = vunpack.c.l.b16 %v3942
    %v4011 = vpack.c.b16 %v3980, %v3979
    %v4012 = vpack.c.b16 %v3982, %v3981
    %v4013 = vpack.c.b16 %v3984, %v3983
    %v4014 = vpack.c.b16 %v3986, %v3985
    %v4015 = vpack.c.b16 %v3988, %v3987
    %v4016 = vpack.c.b16 %v3990, %v3989
    %v4017 = vpack.c.b16 %v3992, %v3991
    %v4018 = vpack.c.b16 %v3994, %v3993
    %v4019 = vpack.c.b16 %v3996, %v3995
    %v4020 = vpack.c.b16 %v3998, %v3997
    %v4021 = vpack.c.b16 %v4000, %v3999
    %v4022 = vpack.c.b16 %v4002, %v4001
    %v4023 = vpack.c.b16 %v4004, %v4003
    %v4024 = vpack.c.b16 %v4006, %v4005
    %v4025 = vpack.c.b16 %v4008, %v4007
    %v4026 = vpack.c.b16 %v4010, %v4009
    %4043 = vmatpush.bf16.msra.mxu0 %v4018
    %4044 = vmatpush.bf16.msra.mxu0 %v4017
    %4045 = vmatpush.bf16.msra.mxu0 %v4016
    %4046 = vmatpush.bf16.msra.mxu0 %v4015
    %4047 = vmatpush.bf16.msra.mxu0 %v4014
    %4048 = vmatpush.bf16.msra.mxu0 %v4013
    %4049 = vmatpush.bf16.msra.mxu0 %v4012
    %4050 = vmatpush.bf16.msra.mxu0 %v4011
    %4051 = vmatmul.bf16.gmra.mxu0 %v3909
    %v4052 = vpop.f32.mrf.mxu0
    %v4053 = vadd.f32 %v3945, %v4052
    %v4054 = vpop.f32.mrf.mxu0
    %4055 = vdwg.mxu0
    %4056 = vmatpush.bf16.msra.mxu0 %v4026
    %4057 = vmatpush.bf16.msra.mxu0 %v4025
    %4058 = vmatpush.bf16.msra.mxu0 %v4024
    %4059 = vmatpush.bf16.msra.mxu0 %v4023
    %4060 = vmatpush.bf16.msra.mxu0 %v4022
    %4061 = vmatpush.bf16.msra.mxu0 %v4021
    %4062 = vmatpush.bf16.msra.mxu0 %v4020
    %4063 = vmatpush.bf16.msra.mxu0 %v4019
    %4064 = vmatmul.bf16.gmra.mxu0 %v3910
    %v4065 = vpop.f32.mrf.mxu0
    %v4066 = vadd.f32 %v4053, %v4065
    %v4067 = vpop.f32.mrf.mxu0
    %4068 = vdwg.mxu0
    %v4069 = vmax.f32 %v4066, 0.0
    %v4070 = vpack.c.bf16 %v4069, %v4069
    %v4071 = vld [vmem:[%s7] sm:$0xf]
    %v4072 = vld [vmem:[%s7 + $0x4] sm:$0xf]
    %v4073 = vld [vmem:[%s7 + $0x8] sm:$0xf]
    %v4074 = vld [vmem:[%s7 + $0xc] sm:$0xf]
    %v4075 = vld [vmem:[%s7 + $0x10] sm:$0xf]
    %v4076 = vld [vmem:[%s7 + $0x14] sm:$0xf]
    %v4077 = vld [vmem:[%s7 + $0x18] sm:$0xf]
    %v4078 = vld [vmem:[%s7 + $0x1c] sm:$0xf]
    %v4079 = vld [vmem:[%s7 + $0x20] sm:$0xf]
    %v4080 = vld [vmem:[%s7 + $0x24] sm:$0xf]
    %v4081 = vld [vmem:[%s7 + $0x28] sm:$0xf]
    %v4082 = vld [vmem:[%s7 + $0x2c] sm:$0xf]
    %v4083 = vld [vmem:[%s7 + $0x30] sm:$0xf]
    %v4084 = vld [vmem:[%s7 + $0x34] sm:$0xf]
    %v4085 = vld [vmem:[%s7 + $0x38] sm:$0xf]
    %v4086 = vld [vmem:[%s7 + $0x3c] sm:$0xf]
    %v4087 = vld [vmem:[%s8] sm:$0x1]
    %v4089 = vperm.slane %v4087, 0
    %v4107 = vunpack.c.l.b16 %v4071
    %v4108 = vunpack.c.l.b16 %v4072
    %v4109 = vunpack.c.l.b16 %v4073
    %v4110 = vunpack.c.l.b16 %v4074
    %v4111 = vunpack.c.l.b16 %v4075
    %v4112 = vunpack.c.l.b16 %v4076
    %v4113 = vunpack.c.l.b16 %v4077
    %v4114 = vunpack.c.l.b16 %v4078
    %v4115 = vunpack.c.l.b16 %v4079
    %v4116 = vunpack.c.l.b16 %v4080
    %v4117 = vunpack.c.l.b16 %v4081
    %v4118 = vunpack.c.l.b16 %v4082
    %v4119 = vunpack.c.l.b16 %v4083
    %v4120 = vunpack.c.l.b16 %v4084
    %v4121 = vunpack.c.l.b16 %v4085
    %v4122 = vunpack.c.l.b16 %v4086
    %v4123 = vpack.c.b16 %v4108, %v4107
    %v4124 = vpack.c.b16 %v4110, %v4109
    %v4125 = vpack.c.b16 %v4112, %v4111
    %v4126 = vpack.c.b16 %v4114, %v4113
    %v4127 = vpack.c.b16 %v4116, %v4115
    %v4128 = vpack.c.b16 %v4118, %v4117
    %v4129 = vpack.c.b16 %v4120, %v4119
    %v4130 = vpack.c.b16 %v4122, %v4121
    %4139 = vmatpush.bf16.msra.mxu0 %v4130
    %4140 = vmatpush.bf16.msra.mxu0 %v4129
    %4141 = vmatpush.bf16.msra.mxu0 %v4128
    %4142 = vmatpush.bf16.msra.mxu0 %v4127
    %4143 = vmatpush.bf16.msra.mxu0 %v4126
    %4144 = vmatpush.bf16.msra.mxu0 %v4125
    %4145 = vmatpush.bf16.msra.mxu0 %v4124
    %4146 = vmatpush.bf16.msra.mxu0 %v4123
    %4147 = vmatmul.bf16.gmra.mxu0 %v4070
    %v4148 = vpop.f32.mrf.mxu0
    %v4149 = vadd.f32 %v4089, %v4148
    %v4150 = vpop.f32.mrf.mxu0
    %4151 = vdwg.mxu0
    %vm4152 = vcmask 1041408
    %v4153 = vsel %vm4152, %v4149, -inf
    %4154 = vmax.xlane.f32.xlu0 %v4153
    %v4155 = vpop.xlane.xlu0 %4154
    %v4156 = vsub.f32 %v4149, %v4155
    %v4157 = vmul.f32 %v4156, 1.442695
    %v4158 = vpow.pop %v4157
    %v4159 = vsel %vm4152, %v4158, 0.0
    %4160 = vadd.xlane.f32.xlu0 %v4159
    %v4161 = vpop.xlane.xlu0 %4160
    %v4162 = vlog2.pop %v4161
    %v4163 = vmul.f32 %v4162, 0.6931472
    %v4164 = vsub.f32 %v4156, %v4163
    %4165 = vst [vmem:[#allocation2] sm:$0x3] %v4164
    // Predicated region
    $region38: #{lenet5b_forward.5} parent=1 // pred_check
      _
    $region39: #{lenet5b_forward.5} parent=1 // pred_check_branch
      %4167 = sbr.rel (0) target = $region41
    $region40: #{lenet5b_forward.5} parent=1 // pred_region
      %4169 = vsyncadd [#allocation3], 0
      %s4171 = sshll.u32 [#allocation2], 4
      %s4172 = int_to_ptr.vmem [resolvable:$true] %s4171
      %s4173 = sshll.u32 %s9, 4
      %s4174 = int_to_ptr.hbm [resolvable:$true] %s4173
      %4176 = dma.vmem_to_hbm [thread:$0]  %s4172, 32, %s4174, [#allocation3]
    $region41: #{lenet5b_forward.5} parent=1 // pred_fallthru
      _
    // Predicated region
    $region42: #{lenet5b_forward.5} parent=1 // pred_check
      _
    $region43: #{lenet5b_forward.5} parent=1 // pred_check_branch
      %4178 = sbr.rel (0) target = $region45
    $region44: #{lenet5b_forward.5} parent=1 // pred_region
      %4180 = dma.done [#allocation3], 32
    $region45: #{lenet5b_forward.5} parent=1 // pred_fallthru
      _
    %4181 = vsyncpa [#allocation3], 1

</llo_original>
